<compile_context>
chip_gen: v7x
topology: tpu7x:2x2x1
jax: 0.10.0
libtpu: 0.0.40
codegen_flags: <defaults>
</compile_context>

<pallas_src>
import functools

import jax
import jax.numpy as jnp
from jax.experimental import pallas as pl
from jax.experimental.pallas import tpu as pltpu


_LANE = 128
_VMEM_LIMIT = 48 * 1024 * 1024   # headroom below v7x's 64 MiB physical VMEM


def _round_up(v, m):
    return ((v + m - 1) // m) * m


# --------------------------------------------------------------------------
# Kernel 1: fused (depthwise 3x3x3 ∘ pointwise 1x1x1) conv + partial BN stats.
# Grid: (N, n_db).  Input block = one (d_tile+2) halo window of one batch
# element; a single big-K matmul (K = 27*Cin_pad) produces the whole tile.
# --------------------------------------------------------------------------
def _fused_conv_stats_kernel(x_ref, wf_ref, z_ref, stats_ref, *,
                             d_tile, H, W, cin_pad, m_tile):
    # x_ref:     (d_tile+2, H+2, W+2, Cin_pad)   zero-padded halo window
    # wf_ref:    (27*Cin_pad, Cout_pad)          fused dw∘pw weight
    # z_ref:     (m_tile, Cout_pad)              pre-BN rows of this tile
    # stats_ref: (2, Cout_pad)                   [sum(z), sum((z - tile_mean)^2)]
    taps = []
    for kd in range(3):
        for kh in range(3):
            for kw in range(3):
                taps.append(x_ref[kd:kd + d_tile, kh:kh + H, kw:kw + W, :])
    # Lane-aligned concat (every tap is Cin_pad = multiple of 128 lanes wide),
    # one reshape -> the im2col patch, one MXU contraction.
    patch = jnp.concatenate(taps, axis=-1).reshape(m_tile, 27 * cin_pad)
    acc = jnp.dot(patch, wf_ref[...], preferred_element_type=jnp.float32)

    zq = acc.astype(z_ref.dtype)
    z_ref[...] = zq

    # Per-tile mean-centered partial statistics; combined across tiles in the
    # wrapper with the parallel-variance formula (no E[z^2]-mean^2 cancellation).
    zf = zq.astype(jnp.float32)
    s = jnp.sum(zf, axis=0, keepdims=True)
    centered = zf - s * (1.0 / m_tile)
    stats_ref[0:1, :] = s
    stats_ref[1:2, :] = jnp.sum(centered * centered, axis=0, keepdims=True)


# --------------------------------------------------------------------------
# Kernel 2: normalize + affine (+ Swish).  Writes transposed (Cout, m_tile)
# lane-dense blocks directly into the (N, Cout, D*H*W) output layout, so no
# final NDHWC->NCDHW transpose / channel un-pad pass is needed in XLA.
# --------------------------------------------------------------------------
def _bn_apply_kernel(z_ref, scale_ref, shift_ref, o_ref, *, cout, apply_swish):
    # z_ref: (m_tile, Cout_pad); scale/shift: (1, Cout_pad); o_ref: (Cout, m_tile)
    out = z_ref[...].astype(jnp.float32) * scale_ref[...] + shift_ref[...]
    if apply_swish:
        out = out * jax.nn.sigmoid(out)
    o_ref[...] = out.T[:cout, :].astype(o_ref.dtype)


# --------------------------------------------------------------------------
# Wrapper (layout, padding, halo windows, fused weight, global BN stats).
# --------------------------------------------------------------------------
def separable_conv_block_3d(x_ncdhw, dw_w, pw_w, pw_b, gamma, beta, *,
                            eps=1e-3, activation=False, d_tile=None,
                            compute_dtype=jnp.bfloat16):
    """x_ncdhw: (N, Cin, D, H, W)
       dw_w   : (Cin, 1, 3, 3, 3)     depthwise conv weight (groups=Cin, no bias)
       pw_w   : (Cout, Cin, 1, 1, 1)  pointwise conv weight
       pw_b   : (Cout,)               pointwise bias (cancelled by training BN)
       gamma, beta : (Cout,)          BatchNorm affine parameters
       returns (N, Cout, D, H, W)"""
    N, Cin, D, H, W = x_ncdhw.shape
    Cout = pw_w.shape[0]
    cin_pad = _round_up(Cin, _LANE)
    cout_pad = _round_up(Cout, _LANE)
    itemsize = jnp.dtype(compute_dtype).itemsize

    # ---- D-tile selection: lane-dense (m_tile % 128 == 0) and VMEM-bounded ----
    if d_tile is None:
        budget = 8 * 1024 * 1024          # im2col patch bytes per tile
        for cand in range(D, 0, -1):
            if (D % cand == 0 and (cand * H * W) % _LANE == 0
                    and cand * H * W * 27 * cin_pad * itemsize <= budget):
                d_tile = cand
                break
        if d_tile is None:
            raise ValueError("no valid d_tile (need d_tile*H*W % 128 == 0)")
    if D % d_tile != 0 or (d_tile * H * W) % _LANE != 0:
        raise ValueError("d_tile must divide D and satisfy d_tile*H*W % 128 == 0")
    n_db = D // d_tile
    m_tile = d_tile * H * W
    m_total = N * D * H * W

    # ---- input: NDHWC, zero "same" pad, channel pad to 128 lanes, overlapping
    #      halo windows along D (one fused XLA gather pass; blocks then pipeline)
    x = jnp.transpose(x_ncdhw, (0, 2, 3, 4, 1))
    xp = jnp.pad(x, ((0, 0), (1, 1), (1, 1), (1, 1), (0, cin_pad - Cin)))
    d_idx = jnp.arange(n_db)[:, None] * d_tile + jnp.arange(d_tile + 2)[None, :]
    x_halo = jnp.take(xp, d_idx, axis=1).astype(compute_dtype)
    # x_halo: (N, n_db, d_tile+2, H+2, W+2, cin_pad)

    # ---- fused weight: wf[t*cin_pad + c, co] = dw[c, t] * pw[c, co] ----
    dw_flat = dw_w.reshape(Cin, 27).astype(jnp.float32)        # tap t = kd*9+kh*3+kw
    pw2d = pw_w.reshape(Cout, Cin).T.astype(jnp.float32)       # (Cin, Cout)
    wf3 = dw_flat.T[:, :, None] * pw2d[None, :, :]             # (27, Cin, Cout)
    wf = jnp.zeros((27, cin_pad, cout_pad), jnp.float32)
    wf = wf.at[:, :Cin, :Cout].set(wf3).reshape(27 * cin_pad, cout_pad)
    wf = wf.astype(compute_dtype)
    # NOTE: pw_b is added before training-mode BN and is exactly cancelled by
    # the mean subtraction, so it is intentionally unused here.

    # ---- kernel 1: fused conv (single big-K MXU matmul) + per-tile stats ----
    conv_cost = pl.CostEstimate(
        flops=2 * m_total * 27 * cin_pad * cout_pad,
        transcendentals=0,
        bytes_accessed=(x_halo.size + wf.size + m_total * cout_pad) * itemsize
                       + N * n_db * 2 * cout_pad * 4)

    z2d, stats = pl.pallas_call(
        functools.partial(_fused_conv_stats_kernel, d_tile=d_tile, H=H, W=W,
                          cin_pad=cin_pad, m_tile=m_tile),
        grid=(N, n_db),
        in_specs=[
            pl.BlockSpec((None, None, d_tile + 2, H + 2, W + 2, cin_pad),
                         lambda n, j: (n, j, 0, 0, 0, 0)),
            pl.BlockSpec((27 * cin_pad, cout_pad), lambda n, j: (0, 0)),
        ],
        out_specs=[
            pl.BlockSpec((m_tile, cout_pad), lambda n, j: (n * n_db + j, 0)),
            pl.BlockSpec((None, 2, cout_pad), lambda n, j: (n * n_db + j, 0, 0)),
        ],
        out_shape=[
            jax.ShapeDtypeStruct((m_total, cout_pad), compute_dtype),
            jax.ShapeDtypeStruct((N * n_db, 2, cout_pad), jnp.float32),
        ],
        compiler_params=pltpu.CompilerParams(
            dimension_semantics=("parallel", "parallel"),
            vmem_limit_bytes=_VMEM_LIMIT),
        cost_estimate=conv_cost,
    )(x_halo, wf)

    # ---- global BatchNorm batch stats (training mode, biased variance) via
    #      parallel-variance combination of the per-tile centered partials ----
    sum_z = jnp.sum(stats[:, 0, :], axis=0)                    # (cout_pad,)
    mean = sum_z / m_total
    tile_mean = stats[:, 0, :] / m_tile                        # (tiles, cout_pad)
    var = (jnp.sum(stats[:, 1, :], axis=0)
           + m_tile * jnp.sum((tile_mean - mean[None, :]) ** 2, axis=0)) / m_total
    gamma_p = jnp.pad(gamma.astype(jnp.float32), (0, cout_pad - Cout))
    beta_p = jnp.pad(beta.astype(jnp.float32), (0, cout_pad - Cout))
    scale = gamma_p * jax.lax.rsqrt(var + eps)                 # (cout_pad,)
    shift = beta_p - mean * scale
    scale2d = scale.reshape(1, cout_pad)
    shift2d = shift.reshape(1, cout_pad)

    # ---- kernel 2: BN apply (+ Swish), transposed lane-dense writes ----
    out_dtype = x_ncdhw.dtype
    bn_cost = pl.CostEstimate(
        flops=(2 + (4 if activation else 0)) * m_total * cout_pad,
        transcendentals=(m_total * cout_pad if activation else 0),
        bytes_accessed=m_total * cout_pad * itemsize
                       + m_total * Cout * jnp.dtype(out_dtype).itemsize
                       + 2 * cout_pad * 4)

    out3d = pl.pallas_call(
        functools.partial(_bn_apply_kernel, cout=Cout, apply_swish=activation),
        grid=(N, n_db),
        in_specs=[
            pl.BlockSpec((m_tile, cout_pad), lambda n, j: (n * n_db + j, 0)),
            pl.BlockSpec((1, cout_pad), lambda n, j: (0, 0)),
            pl.BlockSpec((1, cout_pad), lambda n, j: (0, 0)),
        ],
        out_specs=pl.BlockSpec((None, Cout, m_tile), lambda n, j: (n, 0, j)),
        out_shape=jax.ShapeDtypeStruct((N, Cout, D * H * W), out_dtype),
        compiler_params=pltpu.CompilerParams(
            dimension_semantics=("parallel", "parallel"),
            vmem_limit_bytes=_VMEM_LIMIT),
        cost_estimate=bn_cost,
    )(z2d, scale2d, shift2d)

    return out3d.reshape(N, Cout, D, H, W)


# --------------------------------------------------------------------------
# Pure-JAX reference (correctness check only).
# --------------------------------------------------------------------------
def _reference(x, dw_w, pw_w, pw_b, gamma, beta, *, eps=1e-3, activation=False):
    C = x.shape[1]
    dn = jax.lax.conv_dimension_numbers(x.shape, dw_w.shape,
                                        ('NCDHW', 'OIDHW', 'NCDHW'))
    y = jax.lax.conv_general_dilated(x, dw_w, (1, 1, 1),
                                     [(1, 1), (1, 1), (1, 1)],
                                     dimension_numbers=dn,
                                     feature_group_count=C)
    dn2 = jax.lax.conv_dimension_numbers(y.shape, pw_w.shape,
                                         ('NCDHW', 'OIDHW', 'NCDHW'))
    z = jax.lax.conv_general_dilated(y, pw_w, (1, 1, 1),
                                     [(0, 0), (0, 0), (0, 0)],
                                     dimension_numbers=dn2)
    z = z + pw_b.reshape(1, -1, 1, 1, 1)
    mean = jnp.mean(z, axis=(0, 2, 3, 4), keepdims=True)
    var = jnp.mean((z - mean) ** 2, axis=(0, 2, 3, 4), keepdims=True)
    zn = (z - mean) / jnp.sqrt(var + eps)
    out = gamma.reshape(1, -1, 1, 1, 1) * zn + beta.reshape(1, -1, 1, 1, 1)
    if activation:
        out = out * jax.nn.sigmoid(out)
    return out


if __name__ == "__main__":
    key = jax.random.PRNGKey(0)
    k_x, k_dw, k_pw, k_b, k_g, k_be = jax.random.split(key, 6)

    N, Cin, Cout, D, H, W = 2, 4, 8, 8, 8, 8

    x = jax.random.normal(k_x, (N, Cin, D, H, W), dtype=jnp.float32)
    dw_w = jax.random.normal(k_dw, (Cin, 1, 3, 3, 3), dtype=jnp.float32) * 0.2
    pw_w = jax.random.normal(k_pw, (Cout, Cin, 1, 1, 1), dtype=jnp.float32) * 0.3
    pw_b = jax.random.normal(k_b, (Cout,), dtype=jnp.float32) * 0.1
    gamma = 1.0 + 0.1 * jax.random.normal(k_g, (Cout,), dtype=jnp.float32)
    beta = 0.1 * jax.random.normal(k_be, (Cout,), dtype=jnp.float32)

    # --- exact-math check: f32 compute path, activation off (module default),
    #     d_tile=4 -> 2 halo D-blocks per batch element (exercises the grid) ---
    fn_f32 = jax.jit(functools.partial(separable_conv_block_3d, eps=1e-3,
                                       activation=False, d_tile=4,
                                       compute_dtype=jnp.float32))
    out_f32 = jax.block_until_ready(fn_f32(x, dw_w, pw_w, pw_b, gamma, beta))
    ref = _reference(x, dw_w, pw_w, pw_b, gamma, beta, eps=1e-3, activation=False)
    assert out_f32.shape == (N, Cout, D, H, W)
    diff = float(jnp.max(jnp.abs(out_f32 - ref)))
    assert jnp.allclose(out_f32, ref, atol=2e-3, rtol=2e-3), \
        f"f32 path max abs diff {diff}"

    # --- bf16 fast path (default) with Swish; precision-limited sanity check
    #     against the f32 reference ---
    fn_bf16 = jax.jit(functools.partial(separable_conv_block_3d, eps=1e-3,
                                        activation=True, d_tile=4,
                                        compute_dtype=jnp.bfloat16))
    out_bf16 = jax.block_until_ready(fn_bf16(x, dw_w, pw_w, pw_b, gamma, beta))
    ref_sw = _reference(x, dw_w, pw_w, pw_b, gamma, beta, eps=1e-3, activation=True)
    diff_bf = float(jnp.max(jnp.abs(out_bf16 - ref_sw)))
    assert jnp.allclose(out_bf16, ref_sw, atol=1e-1, rtol=1e-1), \
        f"bf16 path max abs diff {diff_bf}"

    print("KERNEL_OK")
</pallas_src>

<mosaic_0001>
module attributes {stable_mosaic.version = 11 : i64} {
  func.func @_fused_conv_stats_kernel(%arg0: i32, %arg1: i32, %arg2: memref<1x1x6x10x10x128xf32, #tpu.memory_space<vmem>>, %arg3: memref<3456x128xf32, #tpu.memory_space<vmem>>, %arg4: memref<256x128xf32, #tpu.memory_space<vmem>>, %arg5: memref<1x2x128xf32, #tpu.memory_space<vmem>>) attributes {dimension_semantics = [#tpu.dimension_semantics<parallel>, #tpu.dimension_semantics<parallel>], iteration_bounds = array<i64: 2, 2>, scalar_prefetch = 0 : i64, scratch_operands = 0 : i64, tpu.core_type = #tpu.core_type<tc>, window_params = [{transform_indices = @transform_0, window_bounds = array<i64: 1, 1, 6, 10, 10, 128>}, {pipeline_mode = #tpu.pipeline_mode<synchronous>, transform_indices = @transform_1, window_bounds = array<i64: 3456, 128>}, {transform_indices = @transform_2, window_bounds = array<i64: 256, 128>}, {transform_indices = @transform_3, window_bounds = array<i64: 1, 2, 128>}]} {
    %c0 = arith.constant 0 : index
    %c0_0 = arith.constant 0 : index
    %c0_1 = arith.constant 0 : index
    %c0_2 = arith.constant 0 : index
    %c0_3 = arith.constant 0 : index
    %c0_4 = arith.constant 0 : index
    %0 = vector.load %arg2[%c0, %c0_0, %c0_1, %c0_2, %c0_3, %c0_4] : memref<1x1x6x10x10x128xf32, #tpu.memory_space<vmem>>, vector<1x1x4x8x8x128xf32>
    %1 = vector.shape_cast %0 : vector<1x1x4x8x8x128xf32> to vector<4x8x8x128xf32>
    %c0_5 = arith.constant 0 : index
    %c0_6 = arith.constant 0 : index
    %c0_7 = arith.constant 0 : index
    %c0_8 = arith.constant 0 : index
    %c1 = arith.constant 1 : index
    %c0_9 = arith.constant 0 : index
    %2 = vector.load %arg2[%c0_5, %c0_6, %c0_7, %c0_8, %c1, %c0_9] : memref<1x1x6x10x10x128xf32, #tpu.memory_space<vmem>>, vector<1x1x4x8x8x128xf32>
    %3 = vector.shape_cast %2 : vector<1x1x4x8x8x128xf32> to vector<4x8x8x128xf32>
    %c0_10 = arith.constant 0 : index
    %c0_11 = arith.constant 0 : index
    %c0_12 = arith.constant 0 : index
    %c0_13 = arith.constant 0 : index
    %c2 = arith.constant 2 : index
    %c0_14 = arith.constant 0 : index
    %4 = vector.load %arg2[%c0_10, %c0_11, %c0_12, %c0_13, %c2, %c0_14] : memref<1x1x6x10x10x128xf32, #tpu.memory_space<vmem>>, vector<1x1x4x8x8x128xf32>
    %5 = vector.shape_cast %4 : vector<1x1x4x8x8x128xf32> to vector<4x8x8x128xf32>
    %c0_15 = arith.constant 0 : index
    %c0_16 = arith.constant 0 : index
    %c0_17 = arith.constant 0 : index
    %c1_18 = arith.constant 1 : index
    %c0_19 = arith.constant 0 : index
    %c0_20 = arith.constant 0 : index
    %6 = vector.load %arg2[%c0_15, %c0_16, %c0_17, %c1_18, %c0_19, %c0_20] : memref<1x1x6x10x10x128xf32, #tpu.memory_space<vmem>>, vector<1x1x4x8x8x128xf32>
    %7 = vector.shape_cast %6 : vector<1x1x4x8x8x128xf32> to vector<4x8x8x128xf32>
    %c0_21 = arith.constant 0 : index
    %c0_22 = arith.constant 0 : index
    %c0_23 = arith.constant 0 : index
    %c1_24 = arith.constant 1 : index
    %c1_25 = arith.constant 1 : index
    %c0_26 = arith.constant 0 : index
    %8 = vector.load %arg2[%c0_21, %c0_22, %c0_23, %c1_24, %c1_25, %c0_26] : memref<1x1x6x10x10x128xf32, #tpu.memory_space<vmem>>, vector<1x1x4x8x8x128xf32>
    %9 = vector.shape_cast %8 : vector<1x1x4x8x8x128xf32> to vector<4x8x8x128xf32>
    %c0_27 = arith.constant 0 : index
    %c0_28 = arith.constant 0 : index
    %c0_29 = arith.constant 0 : index
    %c1_30 = arith.constant 1 : index
    %c2_31 = arith.constant 2 : index
    %c0_32 = arith.constant 0 : index
    %10 = vector.load %arg2[%c0_27, %c0_28, %c0_29, %c1_30, %c2_31, %c0_32] : memref<1x1x6x10x10x128xf32, #tpu.memory_space<vmem>>, vector<1x1x4x8x8x128xf32>
    %11 = vector.shape_cast %10 : vector<1x1x4x8x8x128xf32> to vector<4x8x8x128xf32>
    %c0_33 = arith.constant 0 : index
    %c0_34 = arith.constant 0 : index
    %c0_35 = arith.constant 0 : index
    %c2_36 = arith.constant 2 : index
    %c0_37 = arith.constant 0 : index
    %c0_38 = arith.constant 0 : index
    %12 = vector.load %arg2[%c0_33, %c0_34, %c0_35, %c2_36, %c0_37, %c0_38] : memref<1x1x6x10x10x128xf32, #tpu.memory_space<vmem>>, vector<1x1x4x8x8x128xf32>
    %13 = vector.shape_cast %12 : vector<1x1x4x8x8x128xf32> to vector<4x8x8x128xf32>
    %c0_39 = arith.constant 0 : index
    %c0_40 = arith.constant 0 : index
    %c0_41 = arith.constant 0 : index
    %c2_42 = arith.constant 2 : index
    %c1_43 = arith.constant 1 : index
    %c0_44 = arith.constant 0 : index
    %14 = vector.load %arg2[%c0_39, %c0_40, %c0_41, %c2_42, %c1_43, %c0_44] : memref<1x1x6x10x10x128xf32, #tpu.memory_space<vmem>>, vector<1x1x4x8x8x128xf32>
    %15 = vector.shape_cast %14 : vector<1x1x4x8x8x128xf32> to vector<4x8x8x128xf32>
    %c0_45 = arith.constant 0 : index
    %c0_46 = arith.constant 0 : index
    %c0_47 = arith.constant 0 : index
    %c2_48 = arith.constant 2 : index
    %c2_49 = arith.constant 2 : index
    %c0_50 = arith.constant 0 : index
    %16 = vector.load %arg2[%c0_45, %c0_46, %c0_47, %c2_48, %c2_49, %c0_50] : memref<1x1x6x10x10x128xf32, #tpu.memory_space<vmem>>, vector<1x1x4x8x8x128xf32>
    %17 = vector.shape_cast %16 : vector<1x1x4x8x8x128xf32> to vector<4x8x8x128xf32>
    %c0_51 = arith.constant 0 : index
    %c0_52 = arith.constant 0 : index
    %c1_53 = arith.constant 1 : index
    %c0_54 = arith.constant 0 : index
    %c0_55 = arith.constant 0 : index
    %c0_56 = arith.constant 0 : index
    %18 = vector.load %arg2[%c0_51, %c0_52, %c1_53, %c0_54, %c0_55, %c0_56] : memref<1x1x6x10x10x128xf32, #tpu.memory_space<vmem>>, vector<1x1x4x8x8x128xf32>
    %19 = vector.shape_cast %18 : vector<1x1x4x8x8x128xf32> to vector<4x8x8x128xf32>
    %c0_57 = arith.constant 0 : index
    %c0_58 = arith.constant 0 : index
    %c1_59 = arith.constant 1 : index
    %c0_60 = arith.constant 0 : index
    %c1_61 = arith.constant 1 : index
    %c0_62 = arith.constant 0 : index
    %20 = vector.load %arg2[%c0_57, %c0_58, %c1_59, %c0_60, %c1_61, %c0_62] : memref<1x1x6x10x10x128xf32, #tpu.memory_space<vmem>>, vector<1x1x4x8x8x128xf32>
    %21 = vector.shape_cast %20 : vector<1x1x4x8x8x128xf32> to vector<4x8x8x128xf32>
    %c0_63 = arith.constant 0 : index
    %c0_64 = arith.constant 0 : index
    %c1_65 = arith.constant 1 : index
    %c0_66 = arith.constant 0 : index
    %c2_67 = arith.constant 2 : index
    %c0_68 = arith.constant 0 : index
    %22 = vector.load %arg2[%c0_63, %c0_64, %c1_65, %c0_66, %c2_67, %c0_68] : memref<1x1x6x10x10x128xf32, #tpu.memory_space<vmem>>, vector<1x1x4x8x8x128xf32>
    %23 = vector.shape_cast %22 : vector<1x1x4x8x8x128xf32> to vector<4x8x8x128xf32>
    %c0_69 = arith.constant 0 : index
    %c0_70 = arith.constant 0 : index
    %c1_71 = arith.constant 1 : index
    %c1_72 = arith.constant 1 : index
    %c0_73 = arith.constant 0 : index
    %c0_74 = arith.constant 0 : index
    %24 = vector.load %arg2[%c0_69, %c0_70, %c1_71, %c1_72, %c0_73, %c0_74] : memref<1x1x6x10x10x128xf32, #tpu.memory_space<vmem>>, vector<1x1x4x8x8x128xf32>
    %25 = vector.shape_cast %24 : vector<1x1x4x8x8x128xf32> to vector<4x8x8x128xf32>
    %c0_75 = arith.constant 0 : index
    %c0_76 = arith.constant 0 : index
    %c1_77 = arith.constant 1 : index
    %c1_78 = arith.constant 1 : index
    %c1_79 = arith.constant 1 : index
    %c0_80 = arith.constant 0 : index
    %26 = vector.load %arg2[%c0_75, %c0_76, %c1_77, %c1_78, %c1_79, %c0_80] : memref<1x1x6x10x10x128xf32, #tpu.memory_space<vmem>>, vector<1x1x4x8x8x128xf32>
    %27 = vector.shape_cast %26 : vector<1x1x4x8x8x128xf32> to vector<4x8x8x128xf32>
    %c0_81 = arith.constant 0 : index
    %c0_82 = arith.constant 0 : index
    %c1_83 = arith.constant 1 : index
    %c1_84 = arith.constant 1 : index
    %c2_85 = arith.constant 2 : index
    %c0_86 = arith.constant 0 : index
    %28 = vector.load %arg2[%c0_81, %c0_82, %c1_83, %c1_84, %c2_85, %c0_86] : memref<1x1x6x10x10x128xf32, #tpu.memory_space<vmem>>, vector<1x1x4x8x8x128xf32>
    %29 = vector.shape_cast %28 : vector<1x1x4x8x8x128xf32> to vector<4x8x8x128xf32>
    %c0_87 = arith.constant 0 : index
    %c0_88 = arith.constant 0 : index
    %c1_89 = arith.constant 1 : index
    %c2_90 = arith.constant 2 : index
    %c0_91 = arith.constant 0 : index
    %c0_92 = arith.constant 0 : index
    %30 = vector.load %arg2[%c0_87, %c0_88, %c1_89, %c2_90, %c0_91, %c0_92] : memref<1x1x6x10x10x128xf32, #tpu.memory_space<vmem>>, vector<1x1x4x8x8x128xf32>
    %31 = vector.shape_cast %30 : vector<1x1x4x8x8x128xf32> to vector<4x8x8x128xf32>
    %c0_93 = arith.constant 0 : index
    %c0_94 = arith.constant 0 : index
    %c1_95 = arith.constant 1 : index
    %c2_96 = arith.constant 2 : index
    %c1_97 = arith.constant 1 : index
    %c0_98 = arith.constant 0 : index
    %32 = vector.load %arg2[%c0_93, %c0_94, %c1_95, %c2_96, %c1_97, %c0_98] : memref<1x1x6x10x10x128xf32, #tpu.memory_space<vmem>>, vector<1x1x4x8x8x128xf32>
    %33 = vector.shape_cast %32 : vector<1x1x4x8x8x128xf32> to vector<4x8x8x128xf32>
    %c0_99 = arith.constant 0 : index
    %c0_100 = arith.constant 0 : index
    %c1_101 = arith.constant 1 : index
    %c2_102 = arith.constant 2 : index
    %c2_103 = arith.constant 2 : index
    %c0_104 = arith.constant 0 : index
    %34 = vector.load %arg2[%c0_99, %c0_100, %c1_101, %c2_102, %c2_103, %c0_104] : memref<1x1x6x10x10x128xf32, #tpu.memory_space<vmem>>, vector<1x1x4x8x8x128xf32>
    %35 = vector.shape_cast %34 : vector<1x1x4x8x8x128xf32> to vector<4x8x8x128xf32>
    %c0_105 = arith.constant 0 : index
    %c0_106 = arith.constant 0 : index
    %c2_107 = arith.constant 2 : index
    %c0_108 = arith.constant 0 : index
    %c0_109 = arith.constant 0 : index
    %c0_110 = arith.constant 0 : index
    %36 = vector.load %arg2[%c0_105, %c0_106, %c2_107, %c0_108, %c0_109, %c0_110] : memref<1x1x6x10x10x128xf32, #tpu.memory_space<vmem>>, vector<1x1x4x8x8x128xf32>
    %37 = vector.shape_cast %36 : vector<1x1x4x8x8x128xf32> to vector<4x8x8x128xf32>
    %c0_111 = arith.constant 0 : index
    %c0_112 = arith.constant 0 : index
    %c2_113 = arith.constant 2 : index
    %c0_114 = arith.constant 0 : index
    %c1_115 = arith.constant 1 : index
    %c0_116 = arith.constant 0 : index
    %38 = vector.load %arg2[%c0_111, %c0_112, %c2_113, %c0_114, %c1_115, %c0_116] : memref<1x1x6x10x10x128xf32, #tpu.memory_space<vmem>>, vector<1x1x4x8x8x128xf32>
    %39 = vector.shape_cast %38 : vector<1x1x4x8x8x128xf32> to vector<4x8x8x128xf32>
    %c0_117 = arith.constant 0 : index
    %c0_118 = arith.constant 0 : index
    %c2_119 = arith.constant 2 : index
    %c0_120 = arith.constant 0 : index
    %c2_121 = arith.constant 2 : index
    %c0_122 = arith.constant 0 : index
    %40 = vector.load %arg2[%c0_117, %c0_118, %c2_119, %c0_120, %c2_121, %c0_122] : memref<1x1x6x10x10x128xf32, #tpu.memory_space<vmem>>, vector<1x1x4x8x8x128xf32>
    %41 = vector.shape_cast %40 : vector<1x1x4x8x8x128xf32> to vector<4x8x8x128xf32>
    %c0_123 = arith.constant 0 : index
    %c0_124 = arith.constant 0 : index
    %c2_125 = arith.constant 2 : index
    %c1_126 = arith.constant 1 : index
    %c0_127 = arith.constant 0 : index
    %c0_128 = arith.constant 0 : index
    %42 = vector.load %arg2[%c0_123, %c0_124, %c2_125, %c1_126, %c0_127, %c0_128] : memref<1x1x6x10x10x128xf32, #tpu.memory_space<vmem>>, vector<1x1x4x8x8x128xf32>
    %43 = vector.shape_cast %42 : vector<1x1x4x8x8x128xf32> to vector<4x8x8x128xf32>
    %c0_129 = arith.constant 0 : index
    %c0_130 = arith.constant 0 : index
    %c2_131 = arith.constant 2 : index
    %c1_132 = arith.constant 1 : index
    %c1_133 = arith.constant 1 : index
    %c0_134 = arith.constant 0 : index
    %44 = vector.load %arg2[%c0_129, %c0_130, %c2_131, %c1_132, %c1_133, %c0_134] : memref<1x1x6x10x10x128xf32, #tpu.memory_space<vmem>>, vector<1x1x4x8x8x128xf32>
    %45 = vector.shape_cast %44 : vector<1x1x4x8x8x128xf32> to vector<4x8x8x128xf32>
    %c0_135 = arith.constant 0 : index
    %c0_136 = arith.constant 0 : index
    %c2_137 = arith.constant 2 : index
    %c1_138 = arith.constant 1 : index
    %c2_139 = arith.constant 2 : index
    %c0_140 = arith.constant 0 : index
    %46 = vector.load %arg2[%c0_135, %c0_136, %c2_137, %c1_138, %c2_139, %c0_140] : memref<1x1x6x10x10x128xf32, #tpu.memory_space<vmem>>, vector<1x1x4x8x8x128xf32>
    %47 = vector.shape_cast %46 : vector<1x1x4x8x8x128xf32> to vector<4x8x8x128xf32>
    %c0_141 = arith.constant 0 : index
    %c0_142 = arith.constant 0 : index
    %c2_143 = arith.constant 2 : index
    %c2_144 = arith.constant 2 : index
    %c0_145 = arith.constant 0 : index
    %c0_146 = arith.constant 0 : index
    %48 = vector.load %arg2[%c0_141, %c0_142, %c2_143, %c2_144, %c0_145, %c0_146] : memref<1x1x6x10x10x128xf32, #tpu.memory_space<vmem>>, vector<1x1x4x8x8x128xf32>
    %49 = vector.shape_cast %48 : vector<1x1x4x8x8x128xf32> to vector<4x8x8x128xf32>
    %c0_147 = arith.constant 0 : index
    %c0_148 = arith.constant 0 : index
    %c2_149 = arith.constant 2 : index
    %c2_150 = arith.constant 2 : index
    %c1_151 = arith.constant 1 : index
    %c0_152 = arith.constant 0 : index
    %50 = vector.load %arg2[%c0_147, %c0_148, %c2_149, %c2_150, %c1_151, %c0_152] : memref<1x1x6x10x10x128xf32, #tpu.memory_space<vmem>>, vector<1x1x4x8x8x128xf32>
    %51 = vector.shape_cast %50 : vector<1x1x4x8x8x128xf32> to vector<4x8x8x128xf32>
    %c0_153 = arith.constant 0 : index
    %c0_154 = arith.constant 0 : index
    %c2_155 = arith.constant 2 : index
    %c2_156 = arith.constant 2 : index
    %c2_157 = arith.constant 2 : index
    %c0_158 = arith.constant 0 : index
    %52 = vector.load %arg2[%c0_153, %c0_154, %c2_155, %c2_156, %c2_157, %c0_158] : memref<1x1x6x10x10x128xf32, #tpu.memory_space<vmem>>, vector<1x1x4x8x8x128xf32>
    %53 = vector.shape_cast %52 : vector<1x1x4x8x8x128xf32> to vector<4x8x8x128xf32>
    %54 = tpu.concatenate %1, %3, %5, %7, %9, %11, %13, %15, %17, %19, %21, %23, %25, %27, %29, %31 in 3 : vector<4x8x8x128xf32>, vector<4x8x8x128xf32>, vector<4x8x8x128xf32>, vector<4x8x8x128xf32>, vector<4x8x8x128xf32>, vector<4x8x8x128xf32>, vector<4x8x8x128xf32>, vector<4x8x8x128xf32>, vector<4x8x8x128xf32>, vector<4x8x8x128xf32>, vector<4x8x8x128xf32>, vector<4x8x8x128xf32>, vector<4x8x8x128xf32>, vector<4x8x8x128xf32>, vector<4x8x8x128xf32>, vector<4x8x8x128xf32> -> vector<4x8x8x2048xf32>
    %55 = tpu.concatenate %33, %35, %37, %39, %41, %43, %45, %47, %49, %51, %53 in 3 : vector<4x8x8x128xf32>, vector<4x8x8x128xf32>, vector<4x8x8x128xf32>, vector<4x8x8x128xf32>, vector<4x8x8x128xf32>, vector<4x8x8x128xf32>, vector<4x8x8x128xf32>, vector<4x8x8x128xf32>, vector<4x8x8x128xf32>, vector<4x8x8x128xf32>, vector<4x8x8x128xf32> -> vector<4x8x8x1408xf32>
    %56 = tpu.concatenate %54, %55 in 3 : vector<4x8x8x2048xf32>, vector<4x8x8x1408xf32> -> vector<4x8x8x3456xf32>
    %57 = vector.shape_cast %56 : vector<4x8x8x3456xf32> to vector<256x3456xf32>
    %c0_159 = arith.constant 0 : index
    %c0_160 = arith.constant 0 : index
    %58 = vector.load %arg3[%c0_159, %c0_160] : memref<3456x128xf32, #tpu.memory_space<vmem>>, vector<3456x128xf32>
    %cst = arith.constant dense<0.000000e+00> : vector<256x128xf32>
    %59 = tpu.matmul %57, %58, %cst {dimension_numbers = #tpu.dot_dimension_numbers<[1], [0], [0], [1], [0, 0, 1, 1], [], []>} : vector<256x3456xf32>, vector<3456x128xf32>, vector<256x128xf32> -> vector<256x128xf32>
    %c0_161 = arith.constant 0 : index
    %c0_162 = arith.constant 0 : index
    %60 = vector.load %arg4[%c0_161, %c0_162] : memref<256x128xf32, #tpu.memory_space<vmem>>, vector<256x128xf32>
    tpu.vector_store %arg4[%c0_161, %c0_162], %59 {strides = array<i32>} : memref<256x128xf32, #tpu.memory_space<vmem>>, vector<256x128xf32>,
    %cst_163 = arith.constant dense<0.000000e+00> : vector<128xf32>
    %61 = vector.multi_reduction <add>, %59, %cst_163 [0] : vector<256x128xf32> to vector<128xf32>
    %62 = vector.shape_cast %61 : vector<128xf32> to vector<1x128xf32>
    %cst_164 = arith.constant 3.906250e-03 : f32
    %63 = vector.broadcast %cst_164 : f32 to vector<1x128xf32>
    %64 = arith.mulf %62, %63 : vector<1x128xf32>
    %65 = vector.broadcast %64 : vector<1x128xf32> to vector<256x128xf32>
    %66 = arith.subf %59, %65 : vector<256x128xf32>
    %c0_165 = arith.constant 0 : index
    %c0_166 = arith.constant 0 : index
    %c0_167 = arith.constant 0 : index
    %67 = vector.load %arg5[%c0_165, %c0_166, %c0_167] : memref<1x2x128xf32, #tpu.memory_space<vmem>>, vector<1x1x128xf32>
    %68 = vector.shape_cast %67 : vector<1x1x128xf32> to vector<1x128xf32>
    %69 = vector.shape_cast %62 : vector<1x128xf32> to vector<1x1x128xf32>
    tpu.vector_store %arg5[%c0_165, %c0_166, %c0_167], %69 {strides = array<i32>} : memref<1x2x128xf32, #tpu.memory_space<vmem>>, vector<1x1x128xf32>,
    %70 = arith.mulf %66, %66 : vector<256x128xf32>
    %cst_168 = arith.constant dense<0.000000e+00> : vector<128xf32>
    %71 = vector.multi_reduction <add>, %70, %cst_168 [0] : vector<256x128xf32> to vector<128xf32>
    %72 = vector.shape_cast %71 : vector<128xf32> to vector<1x128xf32>
    %c0_169 = arith.constant 0 : index
    %c1_170 = arith.constant 1 : index
    %c0_171 = arith.constant 0 : index
    %73 = vector.load %arg5[%c0_169, %c1_170, %c0_171] : memref<1x2x128xf32, #tpu.memory_space<vmem>>, vector<1x1x128xf32>
    %74 = vector.shape_cast %73 : vector<1x1x128xf32> to vector<1x128xf32>
    %75 = vector.shape_cast %72 : vector<1x128xf32> to vector<1x1x128xf32>
    tpu.vector_store %arg5[%c0_169, %c1_170, %c0_171], %75 {strides = array<i32>} : memref<1x2x128xf32, #tpu.memory_space<vmem>>, vector<1x1x128xf32>,
    return
  }
  func.func @transform_0(%arg0: i32, %arg1: i32) -> (i32, i32, i32, i32, i32, i32) {
    %c0_i32 = arith.constant 0 : i32
    %c0_i32_0 = arith.constant 0 : i32
    %c0_i32_1 = arith.constant 0 : i32
    %c0_i32_2 = arith.constant 0 : i32
    %c0_i32_3 = arith.constant 0 : i32
    return %arg0, %arg1, %c0_i32, %c0_i32_0, %c0_i32_1, %c0_i32_2 : i32, i32, i32, i32, i32, i32
  }
  func.func @transform_1(%arg0: i32, %arg1: i32) -> (i32, i32) {
    %c0_i32 = arith.constant 0 : i32
    %c0_i32_0 = arith.constant 0 : i32
    %c0_i32_1 = arith.constant 0 : i32
    return %c0_i32, %c0_i32_0 : i32, i32
  }
  func.func @transform_2(%arg0: i32, %arg1: i32) -> (i32, i32) {
    %c2_i32 = arith.constant 2 : i32
    %0 = arith.muli %arg0, %c2_i32 : i32
    %1 = arith.addi %0, %arg1 : i32
    %c0_i32 = arith.constant 0 : i32
    %c0_i32_0 = arith.constant 0 : i32
    return %1, %c0_i32 : i32, i32
  }
  func.func @transform_3(%arg0: i32, %arg1: i32) -> (i32, i32, i32) {
    %c2_i32 = arith.constant 2 : i32
    %0 = arith.muli %arg0, %c2_i32 : i32
    %1 = arith.addi %0, %arg1 : i32
    %c0_i32 = arith.constant 0 : i32
    %c0_i32_0 = arith.constant 0 : i32
    %c0_i32_1 = arith.constant 0 : i32
    return %1, %c0_i32, %c0_i32_0 : i32, i32, i32
  }
}

module attributes {stable_mosaic.version = 11 : i64} {
  func.func @_bn_apply_kernel(%arg0: i32, %arg1: i32, %arg2: memref<256x128xf32, #tpu.memory_space<vmem>>, %arg3: memref<1x128xf32, #tpu.memory_space<vmem>>, %arg4: memref<1x128xf32, #tpu.memory_space<vmem>>, %arg5: memref<1x8x256xf32, #tpu.memory_space<vmem>>) attributes {dimension_semantics = [#tpu.dimension_semantics<parallel>, #tpu.dimension_semantics<parallel>], iteration_bounds = array<i64: 2, 2>, scalar_prefetch = 0 : i64, scratch_operands = 0 : i64, tpu.core_type = #tpu.core_type<tc>, window_params = [{transform_indices = @transform_0, window_bounds = array<i64: 256, 128>}, {pipeline_mode = #tpu.pipeline_mode<synchronous>, transform_indices = @transform_1, window_bounds = array<i64: 1, 128>}, {pipeline_mode = #tpu.pipeline_mode<synchronous>, transform_indices = @transform_2, window_bounds = array<i64: 1, 128>}, {transform_indices = @transform_3, window_bounds = array<i64: 1, 8, 256>}]} {
    %c0 = arith.constant 0 : index
    %c0_0 = arith.constant 0 : index
    %0 = vector.load %arg2[%c0, %c0_0] : memref<256x128xf32, #tpu.memory_space<vmem>>, vector<256x128xf32>
    %c0_1 = arith.constant 0 : index
    %c0_2 = arith.constant 0 : index
    %1 = vector.load %arg3[%c0_1, %c0_2] : memref<1x128xf32, #tpu.memory_space<vmem>>, vector<1x128xf32>
    %2 = vector.broadcast %1 : vector<1x128xf32> to vector<256x128xf32>
    %3 = arith.mulf %0, %2 : vector<256x128xf32>
    %c0_3 = arith.constant 0 : index
    %c0_4 = arith.constant 0 : index
    %4 = vector.load %arg4[%c0_3, %c0_4] : memref<1x128xf32, #tpu.memory_space<vmem>>, vector<1x128xf32>
    %5 = vector.broadcast %4 : vector<1x128xf32> to vector<256x128xf32>
    %6 = arith.addf %3, %5 : vector<256x128xf32>
    %7 = tpu.transpose %6, [1, 0] : vector<256x128xf32> -> vector<128x256xf32>
    %8 = vector.extract_strided_slice %7 {offsets = [0, 0], sizes = [8, 256], strides = [1, 1]} : vector<128x256xf32> to vector<8x256xf32>
    %c0_5 = arith.constant 0 : index
    %c0_6 = arith.constant 0 : index
    %c0_7 = arith.constant 0 : index
    %9 = vector.load %arg5[%c0_5, %c0_6, %c0_7] : memref<1x8x256xf32, #tpu.memory_space<vmem>>, vector<1x8x256xf32>
    %10 = vector.shape_cast %9 : vector<1x8x256xf32> to vector<8x256xf32>
    %11 = vector.shape_cast %8 : vector<8x256xf32> to vector<1x8x256xf32>
    tpu.vector_store %arg5[%c0_5, %c0_6, %c0_7], %11 {strides = array<i32>} : memref<1x8x256xf32, #tpu.memory_space<vmem>>, vector<1x8x256xf32>,
    return
  }
  func.func @transform_0(%arg0: i32, %arg1: i32) -> (i32, i32) {
    %c2_i32 = arith.constant 2 : i32
    %0 = arith.muli %arg0, %c2_i32 : i32
    %1 = arith.addi %0, %arg1 : i32
    %c0_i32 = arith.constant 0 : i32
    %c0_i32_0 = arith.constant 0 : i32
    return %1, %c0_i32 : i32, i32
  }
  func.func @transform_1(%arg0: i32, %arg1: i32) -> (i32, i32) {
    %c0_i32 = arith.constant 0 : i32
    %c0_i32_0 = arith.constant 0 : i32
    %c0_i32_1 = arith.constant 0 : i32
    return %c0_i32, %c0_i32_0 : i32, i32
  }
  func.func @transform_2(%arg0: i32, %arg1: i32) -> (i32, i32) {
    %c0_i32 = arith.constant 0 : i32
    %c0_i32_0 = arith.constant 0 : i32
    %c0_i32_1 = arith.constant 0 : i32
    return %c0_i32, %c0_i32_0 : i32, i32
  }
  func.func @transform_3(%arg0: i32, %arg1: i32) -> (i32, i32, i32) {
    %c0_i32 = arith.constant 0 : i32
    %c0_i32_0 = arith.constant 0 : i32
    return %arg0, %c0_i32, %arg1 : i32, i32, i32
  }
}

</mosaic_0001>

<llo_original>
// kernel: separable_conv_block_3d.3
$region0: #{separable_conv_block_3d.3}
  #allocation0 [shape = 'u32[]', space=smem, size = 0x4, offset = 0x4, fixed_abs, tag = 'smem constant byte address 0x4 - core index']
  #allocation1 [shape = 'u32[144,128]{1,0:T(1,128)}', space=vmem, size = 0x12000, scoped, tag = 'internal scratch']
  %s0 = inlined_call_operand.vmem [shape: f32[1024,128], index: 0, kind: input, shape index: {}]
  %s1 = inlined_call_operand.vmem [shape: f32[1,128], index: 1, kind: input, shape index: {}]
  %s2 = inlined_call_operand.vmem [shape: f32[1,128], index: 2, kind: input, shape index: {}]
  %s3 = inlined_call_operand.vmem [shape: f32[2,8,512], index: 3, kind: output, shape index: {}]
  %s4 = sld [smem:[#allocation0]]
  $region45: #{separable_conv_block_3d.3} parent=0
    _
  %s6 = ssub.s32 1, %s4
  %s7 = scalar_select 0, %s6, %s4
  loop: start=0, step=1, limit=6
  $region2: #{separable_conv_block_3d.3} parent=0 // loop_pre_header
    _
  $region3: #{separable_conv_block_3d.3} parent=0 // loop_header
    %s9 = sphi 0, %s13
    %p10 = scmp.ge.s32.totalorder %s9, 6
    %s16 = sphi 0, %s28
    %s17 = sphi 0, %s24
    %s18 = sphi 0, %s16
    %s19 = sphi 0, %s17
    %s20 = sphi 0, %s18
    %s21 = sphi 0, %s19
    %s35 = sphi 0, %s37
    %s38 = sphi 0, %s35
    %s39 = sphi 0, %s38
    %s55 = sphi 0, %s39
    %s59 = sphi 0, %s59
    %s61 = sphi 0, %s59
    %s62 = sphi 0, %s61
    %s76 = sphi 0, %s62
    %s80 = sphi 0, %s80
    %s82 = sphi 0, %s80
    %s83 = sphi 0, %s82
    %s97 = sphi 0, %s83
    %s105 = sphi 0, %s107
    %s108 = sphi 0, %s105
    %s109 = sphi 0, %s108
    %s125 = sphi 0, %s109
  $region4: #{separable_conv_block_3d.3} parent=0 // loop_header_branch
    %12 = sbr.rel (%p10) target = $region8
  $region5: #{separable_conv_block_3d.3} parent=0 // loop_body
    %s14 = ssub.s32 %s9, 1
    %s15 = ssub.s32 %s9, 2
    %s22 = sadd.s32 1, %s17
    %p23 = scmp.ge.s32.totalorder %s22, 2
    %s24 = scalar_select %p23, 0, %s22
    %s25 = sadd.s32 1, %s16
    %s26 = scalar_select %p23, %s25, %s16
    %p27 = scmp.ge.s32.totalorder %s26, 2
    %s28 = scalar_select %p27, 0, %s26
    %s29 = smul.u32 %s16, 2
    %s30 = sadd.s32 %s29, %s17
    %s31 = smul.u32 %s28, 2
    %s32 = sadd.s32 %s31, %s24
    %s33 = ssub.s32 %s30, %s32
    %p34 = scmp.eq.s32.totalorder %s33, 0
    %s36 = sadd.s32 %s35, 1
    %s37 = scalar_select %p34, %s35, %s36
    %p40 = pneg %p34
    %p41 = scmp.eq.s32.totalorder %s9, 3
    %p42 = por %p40, %p41
    %p43 = scmp.ne.s32.totalorder %s35, %s38
    %p44 = scmp.eq.s32.totalorder %s9, 0
    %p45 = por %p43, %p44
    %p46 = scmp.ne.s32.totalorder %s35, %s38
    %p47 = scmp.eq.s32.totalorder %s14, 3
    %p48 = por %p46, %p47
    %p49 = scmp.ne.s32.totalorder %s38, %s39
    %p50 = scmp.eq.s32.totalorder %s14, 0
    %p51 = por %p49, %p50
    %p52 = scmp.ne.s32.totalorder %s38, %s39
    %p53 = scmp.eq.s32.totalorder %s15, 3
    %p54 = por %p52, %p53
    %p56 = scmp.ne.s32.totalorder %s39, %s55
    %p57 = scmp.eq.s32.totalorder %s15, 0
    %p58 = por %p56, %p57
    %s60 = sadd.s32 %s59, 1
    %p63 = scmp.eq.s32.totalorder %s9, 3
    %p64 = scmp.ne.s32.totalorder %s59, %s61
    %p65 = scmp.eq.s32.totalorder %s9, 0
    %p66 = por %p64, %p65
    %p67 = scmp.ne.s32.totalorder %s59, %s61
    %p68 = scmp.eq.s32.totalorder %s14, 3
    %p69 = por %p67, %p68
    %p70 = scmp.ne.s32.totalorder %s61, %s62
    %p71 = scmp.eq.s32.totalorder %s14, 0
    %p72 = por %p70, %p71
    %p73 = scmp.ne.s32.totalorder %s61, %s62
    %p74 = scmp.eq.s32.totalorder %s15, 3
    %p75 = por %p73, %p74
    %p77 = scmp.ne.s32.totalorder %s62, %s76
    %p78 = scmp.eq.s32.totalorder %s15, 0
    %p79 = por %p77, %p78
    %s81 = sadd.s32 %s80, 1
    %p84 = scmp.eq.s32.totalorder %s9, 3
    %p85 = scmp.ne.s32.totalorder %s80, %s82
    %p86 = scmp.eq.s32.totalorder %s9, 0
    %p87 = por %p85, %p86
    %p88 = scmp.ne.s32.totalorder %s80, %s82
    %p89 = scmp.eq.s32.totalorder %s14, 3
    %p90 = por %p88, %p89
    %p91 = scmp.ne.s32.totalorder %s82, %s83
    %p92 = scmp.eq.s32.totalorder %s14, 0
    %p93 = por %p91, %p92
    %p94 = scmp.ne.s32.totalorder %s82, %s83
    %p95 = scmp.eq.s32.totalorder %s15, 3
    %p96 = por %p94, %p95
    %p98 = scmp.ne.s32.totalorder %s83, %s97
    %p99 = scmp.eq.s32.totalorder %s15, 0
    %p100 = por %p98, %p99
    %s101 = ssub.s32 %s16, %s28
    %s102 = ssub.s32 %s17, %s24
    %s103 = sor.u32 %s101, %s102
    %p104 = scmp.eq.s32.totalorder %s103, 0
    %s106 = sadd.s32 %s105, 1
    %s107 = scalar_select %p104, %s105, %s106
    %p110 = pneg %p104
    %p111 = scmp.eq.s32.totalorder %s9, 3
    %p112 = por %p110, %p111
    %p113 = scmp.ne.s32.totalorder %s105, %s108
    %p114 = scmp.eq.s32.totalorder %s9, 0
    %p115 = por %p113, %p114
    %p116 = scmp.ne.s32.totalorder %s105, %s108
    %p117 = scmp.eq.s32.totalorder %s14, 3
    %p118 = por %p116, %p117
    %p119 = scmp.ne.s32.totalorder %s108, %s109
    %p120 = scmp.eq.s32.totalorder %s14, 0
    %p121 = por %p119, %p120
    %p122 = scmp.ne.s32.totalorder %s108, %s109
    %p123 = scmp.eq.s32.totalorder %s15, 3
    %p124 = por %p122, %p123
    %p126 = scmp.ne.s32.totalorder %s109, %s125
    %p127 = scmp.eq.s32.totalorder %s15, 0
    %p128 = por %p126, %p127
    %p129 = scmp.le.s32.totalorder 1, %s9
    %p130 = scmp.lt.s32.totalorder %s9, 5
    %p131 = pnand %p129, %p130
    %p132 = pneg %p131
    // Predicated region
    $region9: #{separable_conv_block_3d.3} parent=5 // pred_check
      _
    $region10: #{separable_conv_block_3d.3} parent=5 // pred_check_branch
      %134 = sbr.rel (%p131) target = $region12
    $region11: #{separable_conv_block_3d.3} parent=5 // pred_region
      %s135 = ssub.s32 %s9, 1
      // Predicated region
      $region13: #{separable_conv_block_3d.3} parent=11 // pred_check
        %p136 = pneg %p72
      $region14: #{separable_conv_block_3d.3} parent=11 // pred_check_branch
        %138 = sbr.rel (%p136) target = $region16
      $region15: #{separable_conv_block_3d.3} parent=11 // pred_region
        _
      $region16: #{separable_conv_block_3d.3} parent=11 // pred_fallthru
        _
      // Predicated region
      $region17: #{separable_conv_block_3d.3} parent=11 // pred_check
        %p139 = pneg %p93
      $region18: #{separable_conv_block_3d.3} parent=11 // pred_check_branch
        %141 = sbr.rel (%p139) target = $region20
      $region19: #{separable_conv_block_3d.3} parent=11 // pred_region
        _
      $region20: #{separable_conv_block_3d.3} parent=11 // pred_fallthru
        _
    $region12: #{separable_conv_block_3d.3} parent=5 // pred_fallthru
      _
    %p142 = scmp.lt.s32.totalorder %s9, 4
    // Predicated region
    $region21: #{separable_conv_block_3d.3} parent=5 // pred_check
      %p143 = pneg %p142
    $region22: #{separable_conv_block_3d.3} parent=5 // pred_check_branch
      %145 = sbr.rel (%p143) target = $region24
    $region23: #{separable_conv_block_3d.3} parent=5 // pred_region
      // Predicated region
      $region25: #{separable_conv_block_3d.3} parent=23 // pred_check
        %p146 = pneg %p45
      $region26: #{separable_conv_block_3d.3} parent=23 // pred_check_branch
        %148 = sbr.rel (%p146) target = $region28
      $region27: #{separable_conv_block_3d.3} parent=23 // pred_region
        %s149 = smul.u32 %s16, 2
        %s150 = sadd.s32 %s149, %s17
        %s151 = smul.u32 32, %s150
        %p152 = scmp.lt.s32.totalorder %s151, 127
        %s153 = scalar_select %p152, %s151, 127
        %s154 = smul.addr %s153, 8
        %s155 = scalar_lea.vmem %s0, %s154
        %s156 = smul.u32 %s16, 2
        %s157 = sadd.s32 %s156, %s17
        %s158 = smul.u32 32, %s157
      $region28: #{separable_conv_block_3d.3} parent=23 // pred_fallthru
        _
    $region24: #{separable_conv_block_3d.3} parent=5 // pred_fallthru
      _
    %p159 = scmp.le.s32.totalorder 1, %s9
    %p160 = scmp.lt.s32.totalorder %s9, 5
    %p161 = pnand %p159, %p160
    %p162 = pneg %p161
    // Predicated region
    $region29: #{separable_conv_block_3d.3} parent=5 // pred_check
      _
    $region30: #{separable_conv_block_3d.3} parent=5 // pred_check_branch
      %164 = sbr.rel (%p161) target = $region32
    $region31: #{separable_conv_block_3d.3} parent=5 // pred_region
      %s165 = ssub.s32 %s9, 1
      %s166 = smul.u32 %s18, 2
      %s167 = sadd.s32 %s166, %s19
      %s168 = smul.u32 32, %s167
      %p169 = scmp.lt.s32.totalorder %s168, 127
      %s170 = scalar_select %p169, %s168, 127
      %s171 = smul.addr %s170, 8
      %s172 = scalar_lea.vmem %s0, %s171
      %p173 = pneg %p51
      %p174 = pneg %p48
      %p175 = pneg %p72
      %p176 = pneg %p69
      %p177 = pneg %p93
      %p178 = pneg %p90
      %p179 = pneg %p121
      %p180 = pneg %p118
      %s181 = smul.u32 2, %s19
      %p182 = scmp.lt.s32.totalorder %s18, 1
      %s183 = scalar_select %p182, %s18, 1
      %p184 = scmp.lt.s32.totalorder %s181, 3
      %s185 = scalar_select %p184, %s181, 3
      %s186 = smul.addr %s183, 4
      %s187 = sadd.s32 %s185, %s186
      %s188 = smul.addr %s187, 8
      %s189 = scalar_lea.vmem %s3, %s188
      %s190 = smul.u32 %s18, 2
      %s191 = sadd.s32 %s190, %s19
      %s192 = smul.u32 32, %s191
      %p193 = scmp.lt.s32.totalorder %s192, 127
      %s194 = scalar_select %p193, %s192, 127
      %s195 = smul.addr %s194, 8
      %s196 = scalar_lea.vmem %s0, %s195
      %s197 = smul.u32 %s18, 2
      %s198 = sadd.s32 %s197, %s19
      %s199 = smul.u32 32, %s198
      %s200 = smul.u32 2, %s19
      %p201 = scmp.lt.s32.totalorder %s18, 1
      %s202 = scalar_select %p201, %s18, 1
      %p203 = scmp.lt.s32.totalorder %s200, 3
      %s204 = scalar_select %p203, %s200, 3
      %s205 = smul.addr %s202, 4
      %s206 = sadd.s32 %s204, %s205
      %s207 = smul.addr %s206, 8
      %s208 = scalar_lea.vmem %s3, %s207
      %s209 = smul.u32 2, %s19
      %v210 = vld [vmem:[%s196] sm:$0xff]
      %v211 = vld [vmem:[%s196 + $0x8] sm:$0xff]
      %v212 = vld [vmem:[%s196 + $0x10] sm:$0xff]
      %v213 = vld [vmem:[%s196 + $0x18] sm:$0xff]
      %v214 = vld [vmem:[%s196 + $0x20] sm:$0xff]
      %v215 = vld [vmem:[%s196 + $0x28] sm:$0xff]
      %v216 = vld [vmem:[%s196 + $0x30] sm:$0xff]
      %v217 = vld [vmem:[%s196 + $0x38] sm:$0xff]
      %v218 = vld [vmem:[%s196 + $0x40] sm:$0xff]
      %v219 = vld [vmem:[%s196 + $0x48] sm:$0xff]
      %v220 = vld [vmem:[%s196 + $0x50] sm:$0xff]
      %v221 = vld [vmem:[%s196 + $0x58] sm:$0xff]
      %v222 = vld [vmem:[%s196 + $0x60] sm:$0xff]
      %v223 = vld [vmem:[%s196 + $0x68] sm:$0xff]
      %v224 = vld [vmem:[%s196 + $0x70] sm:$0xff]
      %v225 = vld [vmem:[%s196 + $0x78] sm:$0xff]
      %v226 = vld [vmem:[%s196 + $0x80] sm:$0xff]
      %v227 = vld [vmem:[%s196 + $0x88] sm:$0xff]
      %v228 = vld [vmem:[%s196 + $0x90] sm:$0xff]
      %v229 = vld [vmem:[%s196 + $0x98] sm:$0xff]
      %v230 = vld [vmem:[%s196 + $0xa0] sm:$0xff]
      %v231 = vld [vmem:[%s196 + $0xa8] sm:$0xff]
      %v232 = vld [vmem:[%s196 + $0xb0] sm:$0xff]
      %v233 = vld [vmem:[%s196 + $0xb8] sm:$0xff]
      %v234 = vld [vmem:[%s196 + $0xc0] sm:$0xff]
      %v235 = vld [vmem:[%s196 + $0xc8] sm:$0xff]
      %v236 = vld [vmem:[%s196 + $0xd0] sm:$0xff]
      %v237 = vld [vmem:[%s196 + $0xd8] sm:$0xff]
      %v238 = vld [vmem:[%s196 + $0xe0] sm:$0xff]
      %v239 = vld [vmem:[%s196 + $0xe8] sm:$0xff]
      %v240 = vld [vmem:[%s196 + $0xf0] sm:$0xff]
      %v241 = vld [vmem:[%s196 + $0xf8] sm:$0xff]
      %v242 = vld [vmem:[%s1] sm:$0x1]
      %v244 = vlaneseq
      %v245 = vshrl.u32 %v244, 7
      %v246 = vsub.s32 0, %v245
      %v247 = vrot.slane %v242, %v246
      %v249 = vmul.f32 %v210, %v247
      %v250 = vmul.f32 %v211, %v247
      %v251 = vmul.f32 %v212, %v247
      %v252 = vmul.f32 %v213, %v247
      %v253 = vmul.f32 %v214, %v247
      %v254 = vmul.f32 %v215, %v247
      %v255 = vmul.f32 %v216, %v247
      %v256 = vmul.f32 %v217, %v247
      %v257 = vmul.f32 %v218, %v247
      %v258 = vmul.f32 %v219, %v247
      %v259 = vmul.f32 %v220, %v247
      %v260 = vmul.f32 %v221, %v247
      %v261 = vmul.f32 %v222, %v247
      %v262 = vmul.f32 %v223, %v247
      %v263 = vmul.f32 %v224, %v247
      %v264 = vmul.f32 %v225, %v247
      %v265 = vmul.f32 %v226, %v247
      %v266 = vmul.f32 %v227, %v247
      %v267 = vmul.f32 %v228, %v247
      %v268 = vmul.f32 %v229, %v247
      %v269 = vmul.f32 %v230, %v247
      %v270 = vmul.f32 %v231, %v247
      %v271 = vmul.f32 %v232, %v247
      %v272 = vmul.f32 %v233, %v247
      %v273 = vmul.f32 %v234, %v247
      %v274 = vmul.f32 %v235, %v247
      %v275 = vmul.f32 %v236, %v247
      %v276 = vmul.f32 %v237, %v247
      %v277 = vmul.f32 %v238, %v247
      %v278 = vmul.f32 %v239, %v247
      %v279 = vmul.f32 %v240, %v247
      %v280 = vmul.f32 %v241, %v247
      %v281 = vld [vmem:[%s2] sm:$0x1]
      %v283 = vlaneseq
      %v284 = vshrl.u32 %v283, 7
      %v285 = vsub.s32 0, %v284
      %v286 = vrot.slane %v281, %v285
      %v288 = vadd.f32 %v249, %v286
      %v289 = vadd.f32 %v250, %v286
      %v290 = vadd.f32 %v251, %v286
      %v291 = vadd.f32 %v252, %v286
      %v292 = vadd.f32 %v253, %v286
      %v293 = vadd.f32 %v254, %v286
      %v294 = vadd.f32 %v255, %v286
      %v295 = vadd.f32 %v256, %v286
      %v296 = vadd.f32 %v257, %v286
      %v297 = vadd.f32 %v258, %v286
      %v298 = vadd.f32 %v259, %v286
      %v299 = vadd.f32 %v260, %v286
      %v300 = vadd.f32 %v261, %v286
      %v301 = vadd.f32 %v262, %v286
      %v302 = vadd.f32 %v263, %v286
      %v303 = vadd.f32 %v264, %v286
      %v304 = vadd.f32 %v265, %v286
      %v305 = vadd.f32 %v266, %v286
      %v306 = vadd.f32 %v267, %v286
      %v307 = vadd.f32 %v268, %v286
      %v308 = vadd.f32 %v269, %v286
      %v309 = vadd.f32 %v270, %v286
      %v310 = vadd.f32 %v271, %v286
      %v311 = vadd.f32 %v272, %v286
      %v312 = vadd.f32 %v273, %v286
      %v313 = vadd.f32 %v274, %v286
      %v314 = vadd.f32 %v275, %v286
      %v315 = vadd.f32 %v276, %v286
      %v316 = vadd.f32 %v277, %v286
      %v317 = vadd.f32 %v278, %v286
      %v318 = vadd.f32 %v279, %v286
      %v319 = vadd.f32 %v280, %v286
      %320 = vxpose.xlu0.b32.start [1/16] %v288, 128
      %321 = vxpose.xlu0.b32.cont [2/16] %v289, 128
      %322 = vxpose.xlu0.b32.cont [3/16] %v290, 128
      %323 = vxpose.xlu0.b32.cont [4/16] %v291, 128
      %324 = vxpose.xlu0.b32.cont [5/16] %v292, 128
      %325 = vxpose.xlu0.b32.cont [6/16] %v293, 128
      %326 = vxpose.xlu0.b32.cont [7/16] %v294, 128
      %327 = vxpose.xlu0.b32.cont [8/16] %v295, 128
      %328 = vxpose.xlu0.b32.cont [9/16] %v296, 128
      %329 = vxpose.xlu0.b32.cont [10/16] %v297, 128
      %330 = vxpose.xlu0.b32.cont [11/16] %v298, 128
      %331 = vxpose.xlu0.b32.cont [12/16] %v299, 128
      %332 = vxpose.xlu0.b32.cont [13/16] %v300, 128
      %333 = vxpose.xlu0.b32.cont [14/16] %v301, 128
      %334 = vxpose.xlu0.b32.cont [15/16] %v302, 128
      %335 = vxpose.xlu0.b32.end [16/16] %v303, 128
      %v336 = vpop.trf.xlu0
      %v337 = vpop.trf.xlu0
      %v338 = vpop.trf.xlu0
      %v339 = vpop.trf.xlu0
      %v340 = vpop.trf.xlu0
      %v341 = vpop.trf.xlu0
      %v342 = vpop.trf.xlu0
      %v343 = vpop.trf.xlu0
      %v344 = vpop.trf.xlu0
      %v345 = vpop.trf.xlu0
      %v346 = vpop.trf.xlu0
      %v347 = vpop.trf.xlu0
      %v348 = vpop.trf.xlu0
      %v349 = vpop.trf.xlu0
      %v350 = vpop.trf.xlu0
      %v351 = vpop.trf.xlu0
      %352 = vxpose.xlu0.b32.start [1/16] %v304, 128
      %353 = vxpose.xlu0.b32.cont [2/16] %v305, 128
      %354 = vxpose.xlu0.b32.cont [3/16] %v306, 128
      %355 = vxpose.xlu0.b32.cont [4/16] %v307, 128
      %356 = vxpose.xlu0.b32.cont [5/16] %v308, 128
      %357 = vxpose.xlu0.b32.cont [6/16] %v309, 128
      %358 = vxpose.xlu0.b32.cont [7/16] %v310, 128
      %359 = vxpose.xlu0.b32.cont [8/16] %v311, 128
      %360 = vxpose.xlu0.b32.cont [9/16] %v312, 128
      %361 = vxpose.xlu0.b32.cont [10/16] %v313, 128
      %362 = vxpose.xlu0.b32.cont [11/16] %v314, 128
      %363 = vxpose.xlu0.b32.cont [12/16] %v315, 128
      %364 = vxpose.xlu0.b32.cont [13/16] %v316, 128
      %365 = vxpose.xlu0.b32.cont [14/16] %v317, 128
      %366 = vxpose.xlu0.b32.cont [15/16] %v318, 128
      %367 = vxpose.xlu0.b32.end [16/16] %v319, 128
      %v368 = vpop.trf.xlu0
      %v369 = vpop.trf.xlu0
      %v370 = vpop.trf.xlu0
      %v371 = vpop.trf.xlu0
      %v372 = vpop.trf.xlu0
      %v373 = vpop.trf.xlu0
      %v374 = vpop.trf.xlu0
      %v375 = vpop.trf.xlu0
      %v376 = vpop.trf.xlu0
      %v377 = vpop.trf.xlu0
      %v378 = vpop.trf.xlu0
      %v379 = vpop.trf.xlu0
      %v380 = vpop.trf.xlu0
      %v381 = vpop.trf.xlu0
      %v382 = vpop.trf.xlu0
      %v383 = vpop.trf.xlu0
      %384 = vst [vmem:[%s208] sm:$0xff] %v336
      %385 = vst [vmem:[%s208 + $0x8] sm:$0xff] %v368
      %s386 = smul.u32 2, %s19
      %p387 = scmp.lt.s32.totalorder %s18, 1
      %s388 = scalar_select %p387, %s18, 1
      %p389 = scmp.lt.s32.totalorder %s386, 3
      %s390 = scalar_select %p389, %s386, 3
      %s391 = smul.addr %s388, 4
      %s392 = sadd.s32 %s390, %s391
      %s393 = smul.addr %s392, 8
      %s394 = scalar_lea.vmem %s3, %s393
      // Predicated region
      $region33: #{separable_conv_block_3d.3} parent=31 // pred_check
        %p395 = pneg %p118
      $region34: #{separable_conv_block_3d.3} parent=31 // pred_check_branch
        %397 = sbr.rel (%p395) target = $region36
      $region35: #{separable_conv_block_3d.3} parent=31 // pred_region
        %s398 = smul.u32 2, %s19
      $region36: #{separable_conv_block_3d.3} parent=31 // pred_fallthru
        _
    $region32: #{separable_conv_block_3d.3} parent=5 // pred_fallthru
      _
    %p399 = scmp.le.s32.totalorder 2, %s9
    // Predicated region
    $region37: #{separable_conv_block_3d.3} parent=5 // pred_check
      %p400 = pneg %p399
    $region38: #{separable_conv_block_3d.3} parent=5 // pred_check_branch
      %402 = sbr.rel (%p400) target = $region40
    $region39: #{separable_conv_block_3d.3} parent=5 // pred_region
      %s403 = ssub.s32 %s9, 2
      // Predicated region
      $region41: #{separable_conv_block_3d.3} parent=39 // pred_check
        %p404 = pneg %p124
      $region42: #{separable_conv_block_3d.3} parent=39 // pred_check_branch
        %406 = sbr.rel (%p404) target = $region44
      $region43: #{separable_conv_block_3d.3} parent=39 // pred_region
        %s407 = smul.u32 2, %s21
        %p408 = scmp.lt.s32.totalorder %s20, 1
        %s409 = scalar_select %p408, %s20, 1
        %p410 = scmp.lt.s32.totalorder %s407, 3
        %s411 = scalar_select %p410, %s407, 3
        %s412 = smul.addr %s409, 4
        %s413 = sadd.s32 %s411, %s412
        %s414 = smul.addr %s413, 8
        %s415 = scalar_lea.vmem %s3, %s414
      $region44: #{separable_conv_block_3d.3} parent=39 // pred_fallthru
        _
    $region40: #{separable_conv_block_3d.3} parent=5 // pred_fallthru
      _
  $region6: #{separable_conv_block_3d.3} parent=0 // loop_footer
    %s13 = sadd.s32 1, %s9
  $region7: #{separable_conv_block_3d.3} parent=0 // loop_footer_branch
    %8 = sbr.rel target = $region3
  $region8: #{separable_conv_block_3d.3} parent=0 // loop_exit
    _

// kernel: separable_conv_block_3d.2
$region0: #{separable_conv_block_3d.2}
  #allocation0 [shape = 'u32[]', space=smem, size = 0x4, offset = 0x4, fixed_abs, tag = 'smem constant byte address 0x4 - core index']
  #allocation1 [shape = 'u32[144,128]{1,0:T(1,128)}', space=vmem, size = 0x12000, scoped, tag = 'internal scratch']
  %s0 = inlined_call_operand.vmem [shape: f32[2,2,6,10,10,128], index: 0, kind: input, shape index: {}]
  %s1 = inlined_call_operand.vmem [shape: f32[3456,128], index: 1, kind: input, shape index: {}]
  %s2 = inlined_call_operand.vmem [shape: f32[1024,128], index: 2, kind: output, shape index: {0}]
  %s3 = inlined_call_operand.vmem [shape: f32[4,2,128], index: 3, kind: output, shape index: {1}]
  %4 = xla_tuple %s2, %s3
  %s5 = sld [smem:[#allocation0]]
  $region49: #{separable_conv_block_3d.2} parent=0
    _
  %s7 = ssub.s32 1, %s5
  %s8 = scalar_select 0, %s7, %s5
  loop: start=0, step=1, limit=6
  $region2: #{separable_conv_block_3d.2} parent=0 // loop_pre_header
    _
  $region3: #{separable_conv_block_3d.2} parent=0 // loop_header
    %s10 = sphi 0, %s14
    %p11 = scmp.ge.s32.totalorder %s10, 6
    %s17 = sphi 0, %s29
    %s18 = sphi 0, %s25
    %s19 = sphi 0, %s17
    %s20 = sphi 0, %s18
    %s21 = sphi 0, %s19
    %s22 = sphi 0, %s20
    %s34 = sphi 0, %s36
    %s37 = sphi 0, %s34
    %s38 = sphi 0, %s37
    %s54 = sphi 0, %s38
    %s58 = sphi 0, %s58
    %s60 = sphi 0, %s58
    %s61 = sphi 0, %s60
    %s75 = sphi 0, %s61
    %s85 = sphi 0, %s87
    %s88 = sphi 0, %s85
    %s89 = sphi 0, %s88
    %s105 = sphi 0, %s89
    %s115 = sphi 0, %s117
    %s118 = sphi 0, %s115
    %s119 = sphi 0, %s118
    %s135 = sphi 0, %s119
  $region4: #{separable_conv_block_3d.2} parent=0 // loop_header_branch
    %13 = sbr.rel (%p11) target = $region8
  $region5: #{separable_conv_block_3d.2} parent=0 // loop_body
    %s15 = ssub.s32 %s10, 1
    %s16 = ssub.s32 %s10, 2
    %s23 = sadd.s32 1, %s18
    %p24 = scmp.ge.s32.totalorder %s23, 2
    %s25 = scalar_select %p24, 0, %s23
    %s26 = sadd.s32 1, %s17
    %s27 = scalar_select %p24, %s26, %s17
    %p28 = scmp.ge.s32.totalorder %s27, 2
    %s29 = scalar_select %p28, 0, %s27
    %s30 = ssub.s32 %s17, %s29
    %s31 = ssub.s32 %s18, %s25
    %s32 = sor.u32 %s30, %s31
    %p33 = scmp.eq.s32.totalorder %s32, 0
    %s35 = sadd.s32 %s34, 1
    %s36 = scalar_select %p33, %s34, %s35
    %p39 = pneg %p33
    %p40 = scmp.eq.s32.totalorder %s10, 3
    %p41 = por %p39, %p40
    %p42 = scmp.ne.s32.totalorder %s34, %s37
    %p43 = scmp.eq.s32.totalorder %s10, 0
    %p44 = por %p42, %p43
    %p45 = scmp.ne.s32.totalorder %s34, %s37
    %p46 = scmp.eq.s32.totalorder %s15, 3
    %p47 = por %p45, %p46
    %p48 = scmp.ne.s32.totalorder %s37, %s38
    %p49 = scmp.eq.s32.totalorder %s15, 0
    %p50 = por %p48, %p49
    %p51 = scmp.ne.s32.totalorder %s37, %s38
    %p52 = scmp.eq.s32.totalorder %s16, 3
    %p53 = por %p51, %p52
    %p55 = scmp.ne.s32.totalorder %s38, %s54
    %p56 = scmp.eq.s32.totalorder %s16, 0
    %p57 = por %p55, %p56
    %s59 = sadd.s32 %s58, 1
    %p62 = scmp.eq.s32.totalorder %s10, 3
    %p63 = scmp.ne.s32.totalorder %s58, %s60
    %p64 = scmp.eq.s32.totalorder %s10, 0
    %p65 = por %p63, %p64
    %p66 = scmp.ne.s32.totalorder %s58, %s60
    %p67 = scmp.eq.s32.totalorder %s15, 3
    %p68 = por %p66, %p67
    %p69 = scmp.ne.s32.totalorder %s60, %s61
    %p70 = scmp.eq.s32.totalorder %s15, 0
    %p71 = por %p69, %p70
    %p72 = scmp.ne.s32.totalorder %s60, %s61
    %p73 = scmp.eq.s32.totalorder %s16, 3
    %p74 = por %p72, %p73
    %p76 = scmp.ne.s32.totalorder %s61, %s75
    %p77 = scmp.eq.s32.totalorder %s16, 0
    %p78 = por %p76, %p77
    %s79 = smul.u32 %s17, 2
    %s80 = sadd.s32 %s79, %s18
    %s81 = smul.u32 %s29, 2
    %s82 = sadd.s32 %s81, %s25
    %s83 = ssub.s32 %s80, %s82
    %p84 = scmp.eq.s32.totalorder %s83, 0
    %s86 = sadd.s32 %s85, 1
    %s87 = scalar_select %p84, %s85, %s86
    %p90 = pneg %p84
    %p91 = scmp.eq.s32.totalorder %s10, 3
    %p92 = por %p90, %p91
    %p93 = scmp.ne.s32.totalorder %s85, %s88
    %p94 = scmp.eq.s32.totalorder %s10, 0
    %p95 = por %p93, %p94
    %p96 = scmp.ne.s32.totalorder %s85, %s88
    %p97 = scmp.eq.s32.totalorder %s15, 3
    %p98 = por %p96, %p97
    %p99 = scmp.ne.s32.totalorder %s88, %s89
    %p100 = scmp.eq.s32.totalorder %s15, 0
    %p101 = por %p99, %p100
    %p102 = scmp.ne.s32.totalorder %s88, %s89
    %p103 = scmp.eq.s32.totalorder %s16, 3
    %p104 = por %p102, %p103
    %p106 = scmp.ne.s32.totalorder %s89, %s105
    %p107 = scmp.eq.s32.totalorder %s16, 0
    %p108 = por %p106, %p107
    %s109 = smul.u32 %s17, 2
    %s110 = sadd.s32 %s109, %s18
    %s111 = smul.u32 %s29, 2
    %s112 = sadd.s32 %s111, %s25
    %s113 = ssub.s32 %s110, %s112
    %p114 = scmp.eq.s32.totalorder %s113, 0
    %s116 = sadd.s32 %s115, 1
    %s117 = scalar_select %p114, %s115, %s116
    %p120 = pneg %p114
    %p121 = scmp.eq.s32.totalorder %s10, 3
    %p122 = por %p120, %p121
    %p123 = scmp.ne.s32.totalorder %s115, %s118
    %p124 = scmp.eq.s32.totalorder %s10, 0
    %p125 = por %p123, %p124
    %p126 = scmp.ne.s32.totalorder %s115, %s118
    %p127 = scmp.eq.s32.totalorder %s15, 3
    %p128 = por %p126, %p127
    %p129 = scmp.ne.s32.totalorder %s118, %s119
    %p130 = scmp.eq.s32.totalorder %s15, 0
    %p131 = por %p129, %p130
    %p132 = scmp.ne.s32.totalorder %s118, %s119
    %p133 = scmp.eq.s32.totalorder %s16, 3
    %p134 = por %p132, %p133
    %p136 = scmp.ne.s32.totalorder %s119, %s135
    %p137 = scmp.eq.s32.totalorder %s16, 0
    %p138 = por %p136, %p137
    %p139 = scmp.le.s32.totalorder 1, %s10
    %p140 = scmp.lt.s32.totalorder %s10, 5
    %p141 = pnand %p139, %p140
    %p142 = pneg %p141
    // Predicated region
    $region9: #{separable_conv_block_3d.2} parent=5 // pred_check
      _
    $region10: #{separable_conv_block_3d.2} parent=5 // pred_check_branch
      %144 = sbr.rel (%p141) target = $region12
    $region11: #{separable_conv_block_3d.2} parent=5 // pred_region
      %s145 = ssub.s32 %s10, 1
      // Predicated region
      $region13: #{separable_conv_block_3d.2} parent=11 // pred_check
        %p146 = pneg %p71
      $region14: #{separable_conv_block_3d.2} parent=11 // pred_check_branch
        %148 = sbr.rel (%p146) target = $region16
      $region15: #{separable_conv_block_3d.2} parent=11 // pred_region
        _
      $region16: #{separable_conv_block_3d.2} parent=11 // pred_fallthru
        _
    $region12: #{separable_conv_block_3d.2} parent=5 // pred_fallthru
      _
    %p149 = scmp.lt.s32.totalorder %s10, 4
    // Predicated region
    $region17: #{separable_conv_block_3d.2} parent=5 // pred_check
      %p150 = pneg %p149
    $region18: #{separable_conv_block_3d.2} parent=5 // pred_check_branch
      %152 = sbr.rel (%p150) target = $region20
    $region19: #{separable_conv_block_3d.2} parent=5 // pred_region
      // Predicated region
      $region21: #{separable_conv_block_3d.2} parent=19 // pred_check
        %p153 = pneg %p44
      $region22: #{separable_conv_block_3d.2} parent=19 // pred_check_branch
        %155 = sbr.rel (%p153) target = $region24
      $region23: #{separable_conv_block_3d.2} parent=19 // pred_region
        %p156 = scmp.lt.s32.totalorder %s17, 1
        %s157 = scalar_select %p156, %s17, 1
        %p158 = scmp.lt.s32.totalorder %s18, 1
        %s159 = scalar_select %p158, %s18, 1
        %s160 = smul.addr %s159, 120
        %s161 = smul.addr %s157, 240
        %s162 = sadd.s32 %s160, %s161
        %s163 = smul.addr %s162, 8
        %s164 = scalar_lea.vmem %s0, %s163
      $region24: #{separable_conv_block_3d.2} parent=19 // pred_fallthru
        _
    $region20: #{separable_conv_block_3d.2} parent=5 // pred_fallthru
      _
    %p165 = scmp.le.s32.totalorder 1, %s10
    %p166 = scmp.lt.s32.totalorder %s10, 5
    %p167 = pnand %p165, %p166
    %p168 = pneg %p167
    // Predicated region
    $region25: #{separable_conv_block_3d.2} parent=5 // pred_check
      _
    $region26: #{separable_conv_block_3d.2} parent=5 // pred_check_branch
      %170 = sbr.rel (%p167) target = $region28
    $region27: #{separable_conv_block_3d.2} parent=5 // pred_region
      %s171 = ssub.s32 %s10, 1
      %p172 = scmp.lt.s32.totalorder %s19, 1
      %s173 = scalar_select %p172, %s19, 1
      %p174 = scmp.lt.s32.totalorder %s20, 1
      %s175 = scalar_select %p174, %s20, 1
      %s176 = smul.addr %s175, 120
      %s177 = smul.addr %s173, 240
      %s178 = sadd.s32 %s176, %s177
      %s179 = smul.addr %s178, 8
      %s180 = scalar_lea.vmem %s0, %s179
      %p181 = pneg %p50
      %p182 = pneg %p47
      %p183 = pneg %p71
      %p184 = pneg %p68
      %p185 = pneg %p101
      %p186 = pneg %p98
      %s187 = smul.u32 %s19, 2
      %s188 = sadd.s32 %s187, %s20
      %s189 = smul.u32 32, %s188
      %p190 = scmp.lt.s32.totalorder %s189, 127
      %s191 = scalar_select %p190, %s189, 127
      %s192 = smul.addr %s191, 8
      %s193 = scalar_lea.vmem %s2, %s192
      %p194 = pneg %p131
      %p195 = pneg %p128
      %s196 = smul.u32 %s19, 2
      %s197 = sadd.s32 %s196, %s20
      %p198 = scmp.lt.s32.totalorder %s197, 3
      %s199 = scalar_select %p198, %s197, 3
      %s200 = smul.addr %s199, 2
      %s201 = scalar_lea.vmem %s3, %s200
      %p202 = scmp.lt.s32.totalorder %s19, 1
      %s203 = scalar_select %p202, %s19, 1
      %p204 = scmp.lt.s32.totalorder %s20, 1
      %s205 = scalar_select %p204, %s20, 1
      %s206 = smul.addr %s205, 120
      %s207 = smul.addr %s203, 240
      %s208 = sadd.s32 %s206, %s207
      %s209 = smul.addr %s208, 8
      %s210 = scalar_lea.vmem %s0, %s209
      %s211 = smul.u32 %s19, 2
      %s212 = sadd.s32 %s211, %s20
      %s213 = smul.u32 32, %s212
      %p214 = scmp.lt.s32.totalorder %s213, 127
      %s215 = scalar_select %p214, %s213, 127
      %s216 = smul.addr %s215, 8
      %s217 = scalar_lea.vmem %s2, %s216
      %s218 = smul.u32 %s19, 2
      %s219 = sadd.s32 %s218, %s20
      %s220 = smul.u32 32, %s219
      %s221 = smul.u32 %s19, 2
      %s222 = sadd.s32 %s221, %s20
      %p223 = scmp.lt.s32.totalorder %s222, 3
      %s224 = scalar_select %p223, %s222, 3
      %s225 = smul.addr %s224, 2
      %s226 = scalar_lea.vmem %s3, %s225
      %s227 = smul.u32 %s19, 2
      %s228 = sadd.s32 %s227, %s20
      %v229 = vld [vmem:[%s210] sm:$0xff]
      %v230 = vld [vmem:[%s210 + $0x10] sm:$0xff]
      %v231 = vld [vmem:[%s210 + $0x20] sm:$0xff]
      %v232 = vld [vmem:[%s210 + $0x30] sm:$0xff]
      %v233 = vld [vmem:[%s210 + $0x40] sm:$0xff]
      %v234 = vld [vmem:[%s210 + $0x50] sm:$0xff]
      %v235 = vld [vmem:[%s210 + $0x60] sm:$0xff]
      %v236 = vld [vmem:[%s210 + $0x70] sm:$0xff]
      %v237 = vld [vmem:[%s210 + $0xa0] sm:$0xff]
      %v238 = vld [vmem:[%s210 + $0xb0] sm:$0xff]
      %v239 = vld [vmem:[%s210 + $0xc0] sm:$0xff]
      %v240 = vld [vmem:[%s210 + $0xd0] sm:$0xff]
      %v241 = vld [vmem:[%s210 + $0xe0] sm:$0xff]
      %v242 = vld [vmem:[%s210 + $0xf0] sm:$0xff]
      %v243 = vld [vmem:[%s210 + $0x100] sm:$0xff]
      %v244 = vld [vmem:[%s210 + $0x110] sm:$0xff]
      %v245 = vld [vmem:[%s210 + $0x140] sm:$0xff]
      %v246 = vld [vmem:[%s210 + $0x150] sm:$0xff]
      %v247 = vld [vmem:[%s210 + $0x160] sm:$0xff]
      %v248 = vld [vmem:[%s210 + $0x170] sm:$0xff]
      %v249 = vld [vmem:[%s210 + $0x180] sm:$0xff]
      %v250 = vld [vmem:[%s210 + $0x190] sm:$0xff]
      %v251 = vld [vmem:[%s210 + $0x1a0] sm:$0xff]
      %v252 = vld [vmem:[%s210 + $0x1b0] sm:$0xff]
      %v253 = vld [vmem:[%s210 + $0x1e0] sm:$0xff]
      %v254 = vld [vmem:[%s210 + $0x1f0] sm:$0xff]
      %v255 = vld [vmem:[%s210 + $0x200] sm:$0xff]
      %v256 = vld [vmem:[%s210 + $0x210] sm:$0xff]
      %v257 = vld [vmem:[%s210 + $0x220] sm:$0xff]
      %v258 = vld [vmem:[%s210 + $0x230] sm:$0xff]
      %v259 = vld [vmem:[%s210 + $0x240] sm:$0xff]
      %v260 = vld [vmem:[%s210 + $0x250] sm:$0xff]
      %v261 = vld [vmem:[%s210 + $0x1] sm:$0xff]
      %v262 = vld [vmem:[%s210 + $0x11] sm:$0xff]
      %v263 = vld [vmem:[%s210 + $0x21] sm:$0xff]
      %v264 = vld [vmem:[%s210 + $0x31] sm:$0xff]
      %v265 = vld [vmem:[%s210 + $0x41] sm:$0xff]
      %v266 = vld [vmem:[%s210 + $0x51] sm:$0xff]
      %v267 = vld [vmem:[%s210 + $0x61] sm:$0xff]
      %v268 = vld [vmem:[%s210 + $0x71] sm:$0xff]
      %v269 = vld [vmem:[%s210 + $0xa1] sm:$0xff]
      %v270 = vld [vmem:[%s210 + $0xb1] sm:$0xff]
      %v271 = vld [vmem:[%s210 + $0xc1] sm:$0xff]
      %v272 = vld [vmem:[%s210 + $0xd1] sm:$0xff]
      %v273 = vld [vmem:[%s210 + $0xe1] sm:$0xff]
      %v274 = vld [vmem:[%s210 + $0xf1] sm:$0xff]
      %v275 = vld [vmem:[%s210 + $0x101] sm:$0xff]
      %v276 = vld [vmem:[%s210 + $0x111] sm:$0xff]
      %v277 = vld [vmem:[%s210 + $0x141] sm:$0xff]
      %v278 = vld [vmem:[%s210 + $0x151] sm:$0xff]
      %v279 = vld [vmem:[%s210 + $0x161] sm:$0xff]
      %v280 = vld [vmem:[%s210 + $0x171] sm:$0xff]
      %v281 = vld [vmem:[%s210 + $0x181] sm:$0xff]
      %v282 = vld [vmem:[%s210 + $0x191] sm:$0xff]
      %v283 = vld [vmem:[%s210 + $0x1a1] sm:$0xff]
      %v284 = vld [vmem:[%s210 + $0x1b1] sm:$0xff]
      %v285 = vld [vmem:[%s210 + $0x1e1] sm:$0xff]
      %v286 = vld [vmem:[%s210 + $0x1f1] sm:$0xff]
      %v287 = vld [vmem:[%s210 + $0x201] sm:$0xff]
      %v288 = vld [vmem:[%s210 + $0x211] sm:$0xff]
      %v289 = vld [vmem:[%s210 + $0x221] sm:$0xff]
      %v290 = vld [vmem:[%s210 + $0x231] sm:$0xff]
      %v291 = vld [vmem:[%s210 + $0x241] sm:$0xff]
      %v292 = vld [vmem:[%s210 + $0x251] sm:$0xff]
      %v293 = vld [vmem:[%s210 + $0x2] sm:$0xff]
      %v294 = vld [vmem:[%s210 + $0x12] sm:$0xff]
      %v295 = vld [vmem:[%s210 + $0x22] sm:$0xff]
      %v296 = vld [vmem:[%s210 + $0x32] sm:$0xff]
      %v297 = vld [vmem:[%s210 + $0x42] sm:$0xff]
      %v298 = vld [vmem:[%s210 + $0x52] sm:$0xff]
      %v299 = vld [vmem:[%s210 + $0x62] sm:$0xff]
      %v300 = vld [vmem:[%s210 + $0x72] sm:$0xff]
      %v301 = vld [vmem:[%s210 + $0xa2] sm:$0xff]
      %v302 = vld [vmem:[%s210 + $0xb2] sm:$0xff]
      %v303 = vld [vmem:[%s210 + $0xc2] sm:$0xff]
      %v304 = vld [vmem:[%s210 + $0xd2] sm:$0xff]
      %v305 = vld [vmem:[%s210 + $0xe2] sm:$0xff]
      %v306 = vld [vmem:[%s210 + $0xf2] sm:$0xff]
      %v307 = vld [vmem:[%s210 + $0x102] sm:$0xff]
      %v308 = vld [vmem:[%s210 + $0x112] sm:$0xff]
      %v309 = vld [vmem:[%s210 + $0x142] sm:$0xff]
      %v310 = vld [vmem:[%s210 + $0x152] sm:$0xff]
      %v311 = vld [vmem:[%s210 + $0x162] sm:$0xff]
      %v312 = vld [vmem:[%s210 + $0x172] sm:$0xff]
      %v313 = vld [vmem:[%s210 + $0x182] sm:$0xff]
      %v314 = vld [vmem:[%s210 + $0x192] sm:$0xff]
      %v315 = vld [vmem:[%s210 + $0x1a2] sm:$0xff]
      %v316 = vld [vmem:[%s210 + $0x1b2] sm:$0xff]
      %v317 = vld [vmem:[%s210 + $0x1e2] sm:$0xff]
      %v318 = vld [vmem:[%s210 + $0x1f2] sm:$0xff]
      %v319 = vld [vmem:[%s210 + $0x202] sm:$0xff]
      %v320 = vld [vmem:[%s210 + $0x212] sm:$0xff]
      %v321 = vld [vmem:[%s210 + $0x222] sm:$0xff]
      %v322 = vld [vmem:[%s210 + $0x232] sm:$0xff]
      %v323 = vld [vmem:[%s210 + $0x242] sm:$0xff]
      %v324 = vld [vmem:[%s210 + $0x252] sm:$0xff]
      %s325 = scalar_lea.vmem %s210, 16
      %v326 = vld [vmem:[%s325] sm:$0xff]
      %v327 = vld [vmem:[%s325 + $0x10] sm:$0xff]
      %v328 = vld [vmem:[%s325 + $0x20] sm:$0xff]
      %v329 = vld [vmem:[%s325 + $0x30] sm:$0xff]
      %v330 = vld [vmem:[%s325 + $0x40] sm:$0xff]
      %v331 = vld [vmem:[%s325 + $0x50] sm:$0xff]
      %v332 = vld [vmem:[%s325 + $0x60] sm:$0xff]
      %v333 = vld [vmem:[%s325 + $0x70] sm:$0xff]
      %v334 = vld [vmem:[%s325 + $0xa0] sm:$0xff]
      %v335 = vld [vmem:[%s325 + $0xb0] sm:$0xff]
      %v336 = vld [vmem:[%s325 + $0xc0] sm:$0xff]
      %v337 = vld [vmem:[%s325 + $0xd0] sm:$0xff]
      %v338 = vld [vmem:[%s325 + $0xe0] sm:$0xff]
      %v339 = vld [vmem:[%s325 + $0xf0] sm:$0xff]
      %v340 = vld [vmem:[%s325 + $0x100] sm:$0xff]
      %v341 = vld [vmem:[%s325 + $0x110] sm:$0xff]
      %v342 = vld [vmem:[%s325 + $0x140] sm:$0xff]
      %v343 = vld [vmem:[%s325 + $0x150] sm:$0xff]
      %v344 = vld [vmem:[%s325 + $0x160] sm:$0xff]
      %v345 = vld [vmem:[%s325 + $0x170] sm:$0xff]
      %v346 = vld [vmem:[%s325 + $0x180] sm:$0xff]
      %v347 = vld [vmem:[%s325 + $0x190] sm:$0xff]
      %v348 = vld [vmem:[%s325 + $0x1a0] sm:$0xff]
      %v349 = vld [vmem:[%s325 + $0x1b0] sm:$0xff]
      %v350 = vld [vmem:[%s325 + $0x1e0] sm:$0xff]
      %v351 = vld [vmem:[%s325 + $0x1f0] sm:$0xff]
      %v352 = vld [vmem:[%s325 + $0x200] sm:$0xff]
      %v353 = vld [vmem:[%s325 + $0x210] sm:$0xff]
      %v354 = vld [vmem:[%s325 + $0x220] sm:$0xff]
      %v355 = vld [vmem:[%s325 + $0x230] sm:$0xff]
      %v356 = vld [vmem:[%s325 + $0x240] sm:$0xff]
      %v357 = vld [vmem:[%s325 + $0x250] sm:$0xff]
      %v358 = vld [vmem:[%s325 + $0x1] sm:$0xff]
      %v359 = vld [vmem:[%s325 + $0x11] sm:$0xff]
      %v360 = vld [vmem:[%s325 + $0x21] sm:$0xff]
      %v361 = vld [vmem:[%s325 + $0x31] sm:$0xff]
      %v362 = vld [vmem:[%s325 + $0x41] sm:$0xff]
      %v363 = vld [vmem:[%s325 + $0x51] sm:$0xff]
      %v364 = vld [vmem:[%s325 + $0x61] sm:$0xff]
      %v365 = vld [vmem:[%s325 + $0x71] sm:$0xff]
      %v366 = vld [vmem:[%s325 + $0xa1] sm:$0xff]
      %v367 = vld [vmem:[%s325 + $0xb1] sm:$0xff]
      %v368 = vld [vmem:[%s325 + $0xc1] sm:$0xff]
      %v369 = vld [vmem:[%s325 + $0xd1] sm:$0xff]
      %v370 = vld [vmem:[%s325 + $0xe1] sm:$0xff]
      %v371 = vld [vmem:[%s325 + $0xf1] sm:$0xff]
      %v372 = vld [vmem:[%s325 + $0x101] sm:$0xff]
      %v373 = vld [vmem:[%s325 + $0x111] sm:$0xff]
      %v374 = vld [vmem:[%s325 + $0x141] sm:$0xff]
      %v375 = vld [vmem:[%s325 + $0x151] sm:$0xff]
      %v376 = vld [vmem:[%s325 + $0x161] sm:$0xff]
      %v377 = vld [vmem:[%s325 + $0x171] sm:$0xff]
      %v378 = vld [vmem:[%s325 + $0x181] sm:$0xff]
      %v379 = vld [vmem:[%s325 + $0x191] sm:$0xff]
      %v380 = vld [vmem:[%s325 + $0x1a1] sm:$0xff]
      %v381 = vld [vmem:[%s325 + $0x1b1] sm:$0xff]
      %v382 = vld [vmem:[%s325 + $0x1e1] sm:$0xff]
      %v383 = vld [vmem:[%s325 + $0x1f1] sm:$0xff]
      %v384 = vld [vmem:[%s325 + $0x201] sm:$0xff]
      %v385 = vld [vmem:[%s325 + $0x211] sm:$0xff]
      %v386 = vld [vmem:[%s325 + $0x221] sm:$0xff]
      %v387 = vld [vmem:[%s325 + $0x231] sm:$0xff]
      %v388 = vld [vmem:[%s325 + $0x241] sm:$0xff]
      %v389 = vld [vmem:[%s325 + $0x251] sm:$0xff]
      %v390 = vld [vmem:[%s325 + $0x2] sm:$0xff]
      %v391 = vld [vmem:[%s325 + $0x12] sm:$0xff]
      %v392 = vld [vmem:[%s325 + $0x22] sm:$0xff]
      %v393 = vld [vmem:[%s325 + $0x32] sm:$0xff]
      %v394 = vld [vmem:[%s325 + $0x42] sm:$0xff]
      %v395 = vld [vmem:[%s325 + $0x52] sm:$0xff]
      %v396 = vld [vmem:[%s325 + $0x62] sm:$0xff]
      %v397 = vld [vmem:[%s325 + $0x72] sm:$0xff]
      %v398 = vld [vmem:[%s325 + $0xa2] sm:$0xff]
      %v399 = vld [vmem:[%s325 + $0xb2] sm:$0xff]
      %v400 = vld [vmem:[%s325 + $0xc2] sm:$0xff]
      %v401 = vld [vmem:[%s325 + $0xd2] sm:$0xff]
      %v402 = vld [vmem:[%s325 + $0xe2] sm:$0xff]
      %v403 = vld [vmem:[%s325 + $0xf2] sm:$0xff]
      %v404 = vld [vmem:[%s325 + $0x102] sm:$0xff]
      %v405 = vld [vmem:[%s325 + $0x112] sm:$0xff]
      %v406 = vld [vmem:[%s325 + $0x142] sm:$0xff]
      %v407 = vld [vmem:[%s325 + $0x152] sm:$0xff]
      %v408 = vld [vmem:[%s325 + $0x162] sm:$0xff]
      %v409 = vld [vmem:[%s325 + $0x172] sm:$0xff]
      %v410 = vld [vmem:[%s325 + $0x182] sm:$0xff]
      %v411 = vld [vmem:[%s325 + $0x192] sm:$0xff]
      %v412 = vld [vmem:[%s325 + $0x1a2] sm:$0xff]
      %v413 = vld [vmem:[%s325 + $0x1b2] sm:$0xff]
      %v414 = vld [vmem:[%s325 + $0x1e2] sm:$0xff]
      %v415 = vld [vmem:[%s325 + $0x1f2] sm:$0xff]
      %v416 = vld [vmem:[%s325 + $0x202] sm:$0xff]
      %v417 = vld [vmem:[%s325 + $0x212] sm:$0xff]
      %v418 = vld [vmem:[%s325 + $0x222] sm:$0xff]
      %v419 = vld [vmem:[%s325 + $0x232] sm:$0xff]
      %v420 = vld [vmem:[%s325 + $0x242] sm:$0xff]
      %v421 = vld [vmem:[%s325 + $0x252] sm:$0xff]
      %s422 = scalar_lea.vmem %s210, 32
      %v423 = vld [vmem:[%s422] sm:$0xff]
      %v424 = vld [vmem:[%s422 + $0x10] sm:$0xff]
      %v425 = vld [vmem:[%s422 + $0x20] sm:$0xff]
      %v426 = vld [vmem:[%s422 + $0x30] sm:$0xff]
      %v427 = vld [vmem:[%s422 + $0x40] sm:$0xff]
      %v428 = vld [vmem:[%s422 + $0x50] sm:$0xff]
      %v429 = vld [vmem:[%s422 + $0x60] sm:$0xff]
      %v430 = vld [vmem:[%s422 + $0x70] sm:$0xff]
      %v431 = vld [vmem:[%s422 + $0xa0] sm:$0xff]
      %v432 = vld [vmem:[%s422 + $0xb0] sm:$0xff]
      %v433 = vld [vmem:[%s422 + $0xc0] sm:$0xff]
      %v434 = vld [vmem:[%s422 + $0xd0] sm:$0xff]
      %v435 = vld [vmem:[%s422 + $0xe0] sm:$0xff]
      %v436 = vld [vmem:[%s422 + $0xf0] sm:$0xff]
      %v437 = vld [vmem:[%s422 + $0x100] sm:$0xff]
      %v438 = vld [vmem:[%s422 + $0x110] sm:$0xff]
      %v439 = vld [vmem:[%s422 + $0x140] sm:$0xff]
      %v440 = vld [vmem:[%s422 + $0x150] sm:$0xff]
      %v441 = vld [vmem:[%s422 + $0x160] sm:$0xff]
      %v442 = vld [vmem:[%s422 + $0x170] sm:$0xff]
      %v443 = vld [vmem:[%s422 + $0x180] sm:$0xff]
      %v444 = vld [vmem:[%s422 + $0x190] sm:$0xff]
      %v445 = vld [vmem:[%s422 + $0x1a0] sm:$0xff]
      %v446 = vld [vmem:[%s422 + $0x1b0] sm:$0xff]
      %v447 = vld [vmem:[%s422 + $0x1e0] sm:$0xff]
      %v448 = vld [vmem:[%s422 + $0x1f0] sm:$0xff]
      %v449 = vld [vmem:[%s422 + $0x200] sm:$0xff]
      %v450 = vld [vmem:[%s422 + $0x210] sm:$0xff]
      %v451 = vld [vmem:[%s422 + $0x220] sm:$0xff]
      %v452 = vld [vmem:[%s422 + $0x230] sm:$0xff]
      %v453 = vld [vmem:[%s422 + $0x240] sm:$0xff]
      %v454 = vld [vmem:[%s422 + $0x250] sm:$0xff]
      %v455 = vld [vmem:[%s422 + $0x1] sm:$0xff]
      %v456 = vld [vmem:[%s422 + $0x11] sm:$0xff]
      %v457 = vld [vmem:[%s422 + $0x21] sm:$0xff]
      %v458 = vld [vmem:[%s422 + $0x31] sm:$0xff]
      %v459 = vld [vmem:[%s422 + $0x41] sm:$0xff]
      %v460 = vld [vmem:[%s422 + $0x51] sm:$0xff]
      %v461 = vld [vmem:[%s422 + $0x61] sm:$0xff]
      %v462 = vld [vmem:[%s422 + $0x71] sm:$0xff]
      %v463 = vld [vmem:[%s422 + $0xa1] sm:$0xff]
      %v464 = vld [vmem:[%s422 + $0xb1] sm:$0xff]
      %v465 = vld [vmem:[%s422 + $0xc1] sm:$0xff]
      %v466 = vld [vmem:[%s422 + $0xd1] sm:$0xff]
      %v467 = vld [vmem:[%s422 + $0xe1] sm:$0xff]
      %v468 = vld [vmem:[%s422 + $0xf1] sm:$0xff]
      %v469 = vld [vmem:[%s422 + $0x101] sm:$0xff]
      %v470 = vld [vmem:[%s422 + $0x111] sm:$0xff]
      %v471 = vld [vmem:[%s422 + $0x141] sm:$0xff]
      %v472 = vld [vmem:[%s422 + $0x151] sm:$0xff]
      %v473 = vld [vmem:[%s422 + $0x161] sm:$0xff]
      %v474 = vld [vmem:[%s422 + $0x171] sm:$0xff]
      %v475 = vld [vmem:[%s422 + $0x181] sm:$0xff]
      %v476 = vld [vmem:[%s422 + $0x191] sm:$0xff]
      %v477 = vld [vmem:[%s422 + $0x1a1] sm:$0xff]
      %v478 = vld [vmem:[%s422 + $0x1b1] sm:$0xff]
      %v479 = vld [vmem:[%s422 + $0x1e1] sm:$0xff]
      %v480 = vld [vmem:[%s422 + $0x1f1] sm:$0xff]
      %v481 = vld [vmem:[%s422 + $0x201] sm:$0xff]
      %v482 = vld [vmem:[%s422 + $0x211] sm:$0xff]
      %v483 = vld [vmem:[%s422 + $0x221] sm:$0xff]
      %v484 = vld [vmem:[%s422 + $0x231] sm:$0xff]
      %v485 = vld [vmem:[%s422 + $0x241] sm:$0xff]
      %v486 = vld [vmem:[%s422 + $0x251] sm:$0xff]
      %v487 = vld [vmem:[%s422 + $0x2] sm:$0xff]
      %v488 = vld [vmem:[%s422 + $0x12] sm:$0xff]
      %v489 = vld [vmem:[%s422 + $0x22] sm:$0xff]
      %v490 = vld [vmem:[%s422 + $0x32] sm:$0xff]
      %v491 = vld [vmem:[%s422 + $0x42] sm:$0xff]
      %v492 = vld [vmem:[%s422 + $0x52] sm:$0xff]
      %v493 = vld [vmem:[%s422 + $0x62] sm:$0xff]
      %v494 = vld [vmem:[%s422 + $0x72] sm:$0xff]
      %v495 = vld [vmem:[%s422 + $0xa2] sm:$0xff]
      %v496 = vld [vmem:[%s422 + $0xb2] sm:$0xff]
      %v497 = vld [vmem:[%s422 + $0xc2] sm:$0xff]
      %v498 = vld [vmem:[%s422 + $0xd2] sm:$0xff]
      %v499 = vld [vmem:[%s422 + $0xe2] sm:$0xff]
      %v500 = vld [vmem:[%s422 + $0xf2] sm:$0xff]
      %v501 = vld [vmem:[%s422 + $0x102] sm:$0xff]
      %v502 = vld [vmem:[%s422 + $0x112] sm:$0xff]
      %v503 = vld [vmem:[%s422 + $0x142] sm:$0xff]
      %v504 = vld [vmem:[%s422 + $0x152] sm:$0xff]
      %v505 = vld [vmem:[%s422 + $0x162] sm:$0xff]
      %v506 = vld [vmem:[%s422 + $0x172] sm:$0xff]
      %v507 = vld [vmem:[%s422 + $0x182] sm:$0xff]
      %v508 = vld [vmem:[%s422 + $0x192] sm:$0xff]
      %v509 = vld [vmem:[%s422 + $0x1a2] sm:$0xff]
      %v510 = vld [vmem:[%s422 + $0x1b2] sm:$0xff]
      %v511 = vld [vmem:[%s422 + $0x1e2] sm:$0xff]
      %v512 = vld [vmem:[%s422 + $0x1f2] sm:$0xff]
      %v513 = vld [vmem:[%s422 + $0x202] sm:$0xff]
      %v514 = vld [vmem:[%s422 + $0x212] sm:$0xff]
      %v515 = vld [vmem:[%s422 + $0x222] sm:$0xff]
      %v516 = vld [vmem:[%s422 + $0x232] sm:$0xff]
      %v517 = vld [vmem:[%s422 + $0x242] sm:$0xff]
      %v518 = vld [vmem:[%s422 + $0x252] sm:$0xff]
      %s519 = scalar_lea.vmem %s210, 160
      %v520 = vld [vmem:[%s519] sm:$0xff]
      %v521 = vld [vmem:[%s519 + $0x10] sm:$0xff]
      %v522 = vld [vmem:[%s519 + $0x20] sm:$0xff]
      %v523 = vld [vmem:[%s519 + $0x30] sm:$0xff]
      %v524 = vld [vmem:[%s519 + $0x40] sm:$0xff]
      %v525 = vld [vmem:[%s519 + $0x50] sm:$0xff]
      %v526 = vld [vmem:[%s519 + $0x60] sm:$0xff]
      %v527 = vld [vmem:[%s519 + $0x70] sm:$0xff]
      %v528 = vld [vmem:[%s519 + $0xa0] sm:$0xff]
      %v529 = vld [vmem:[%s519 + $0xb0] sm:$0xff]
      %v530 = vld [vmem:[%s519 + $0xc0] sm:$0xff]
      %v531 = vld [vmem:[%s519 + $0xd0] sm:$0xff]
      %v532 = vld [vmem:[%s519 + $0xe0] sm:$0xff]
      %v533 = vld [vmem:[%s519 + $0xf0] sm:$0xff]
      %v534 = vld [vmem:[%s519 + $0x100] sm:$0xff]
      %v535 = vld [vmem:[%s519 + $0x110] sm:$0xff]
      %v536 = vld [vmem:[%s519 + $0x140] sm:$0xff]
      %v537 = vld [vmem:[%s519 + $0x150] sm:$0xff]
      %v538 = vld [vmem:[%s519 + $0x160] sm:$0xff]
      %v539 = vld [vmem:[%s519 + $0x170] sm:$0xff]
      %v540 = vld [vmem:[%s519 + $0x180] sm:$0xff]
      %v541 = vld [vmem:[%s519 + $0x190] sm:$0xff]
      %v542 = vld [vmem:[%s519 + $0x1a0] sm:$0xff]
      %v543 = vld [vmem:[%s519 + $0x1b0] sm:$0xff]
      %v544 = vld [vmem:[%s519 + $0x1e0] sm:$0xff]
      %v545 = vld [vmem:[%s519 + $0x1f0] sm:$0xff]
      %v546 = vld [vmem:[%s519 + $0x200] sm:$0xff]
      %v547 = vld [vmem:[%s519 + $0x210] sm:$0xff]
      %v548 = vld [vmem:[%s519 + $0x220] sm:$0xff]
      %v549 = vld [vmem:[%s519 + $0x230] sm:$0xff]
      %v550 = vld [vmem:[%s519 + $0x240] sm:$0xff]
      %v551 = vld [vmem:[%s519 + $0x250] sm:$0xff]
      %v552 = vld [vmem:[%s519 + $0x1] sm:$0xff]
      %v553 = vld [vmem:[%s519 + $0x11] sm:$0xff]
      %v554 = vld [vmem:[%s519 + $0x21] sm:$0xff]
      %v555 = vld [vmem:[%s519 + $0x31] sm:$0xff]
      %v556 = vld [vmem:[%s519 + $0x41] sm:$0xff]
      %v557 = vld [vmem:[%s519 + $0x51] sm:$0xff]
      %v558 = vld [vmem:[%s519 + $0x61] sm:$0xff]
      %v559 = vld [vmem:[%s519 + $0x71] sm:$0xff]
      %v560 = vld [vmem:[%s519 + $0xa1] sm:$0xff]
      %v561 = vld [vmem:[%s519 + $0xb1] sm:$0xff]
      %v562 = vld [vmem:[%s519 + $0xc1] sm:$0xff]
      %v563 = vld [vmem:[%s519 + $0xd1] sm:$0xff]
      %v564 = vld [vmem:[%s519 + $0xe1] sm:$0xff]
      %v565 = vld [vmem:[%s519 + $0xf1] sm:$0xff]
      %v566 = vld [vmem:[%s519 + $0x101] sm:$0xff]
      %v567 = vld [vmem:[%s519 + $0x111] sm:$0xff]
      %v568 = vld [vmem:[%s519 + $0x141] sm:$0xff]
      %v569 = vld [vmem:[%s519 + $0x151] sm:$0xff]
      %v570 = vld [vmem:[%s519 + $0x161] sm:$0xff]
      %v571 = vld [vmem:[%s519 + $0x171] sm:$0xff]
      %v572 = vld [vmem:[%s519 + $0x181] sm:$0xff]
      %v573 = vld [vmem:[%s519 + $0x191] sm:$0xff]
      %v574 = vld [vmem:[%s519 + $0x1a1] sm:$0xff]
      %v575 = vld [vmem:[%s519 + $0x1b1] sm:$0xff]
      %v576 = vld [vmem:[%s519 + $0x1e1] sm:$0xff]
      %v577 = vld [vmem:[%s519 + $0x1f1] sm:$0xff]
      %v578 = vld [vmem:[%s519 + $0x201] sm:$0xff]
      %v579 = vld [vmem:[%s519 + $0x211] sm:$0xff]
      %v580 = vld [vmem:[%s519 + $0x221] sm:$0xff]
      %v581 = vld [vmem:[%s519 + $0x231] sm:$0xff]
      %v582 = vld [vmem:[%s519 + $0x241] sm:$0xff]
      %v583 = vld [vmem:[%s519 + $0x251] sm:$0xff]
      %v584 = vld [vmem:[%s519 + $0x2] sm:$0xff]
      %v585 = vld [vmem:[%s519 + $0x12] sm:$0xff]
      %v586 = vld [vmem:[%s519 + $0x22] sm:$0xff]
      %v587 = vld [vmem:[%s519 + $0x32] sm:$0xff]
      %v588 = vld [vmem:[%s519 + $0x42] sm:$0xff]
      %v589 = vld [vmem:[%s519 + $0x52] sm:$0xff]
      %v590 = vld [vmem:[%s519 + $0x62] sm:$0xff]
      %v591 = vld [vmem:[%s519 + $0x72] sm:$0xff]
      %v592 = vld [vmem:[%s519 + $0xa2] sm:$0xff]
      %v593 = vld [vmem:[%s519 + $0xb2] sm:$0xff]
      %v594 = vld [vmem:[%s519 + $0xc2] sm:$0xff]
      %v595 = vld [vmem:[%s519 + $0xd2] sm:$0xff]
      %v596 = vld [vmem:[%s519 + $0xe2] sm:$0xff]
      %v597 = vld [vmem:[%s519 + $0xf2] sm:$0xff]
      %v598 = vld [vmem:[%s519 + $0x102] sm:$0xff]
      %v599 = vld [vmem:[%s519 + $0x112] sm:$0xff]
      %v600 = vld [vmem:[%s519 + $0x142] sm:$0xff]
      %v601 = vld [vmem:[%s519 + $0x152] sm:$0xff]
      %v602 = vld [vmem:[%s519 + $0x162] sm:$0xff]
      %v603 = vld [vmem:[%s519 + $0x172] sm:$0xff]
      %v604 = vld [vmem:[%s519 + $0x182] sm:$0xff]
      %v605 = vld [vmem:[%s519 + $0x192] sm:$0xff]
      %v606 = vld [vmem:[%s519 + $0x1a2] sm:$0xff]
      %v607 = vld [vmem:[%s519 + $0x1b2] sm:$0xff]
      %v608 = vld [vmem:[%s519 + $0x1e2] sm:$0xff]
      %v609 = vld [vmem:[%s519 + $0x1f2] sm:$0xff]
      %v610 = vld [vmem:[%s519 + $0x202] sm:$0xff]
      %v611 = vld [vmem:[%s519 + $0x212] sm:$0xff]
      %v612 = vld [vmem:[%s519 + $0x222] sm:$0xff]
      %v613 = vld [vmem:[%s519 + $0x232] sm:$0xff]
      %v614 = vld [vmem:[%s519 + $0x242] sm:$0xff]
      %v615 = vld [vmem:[%s519 + $0x252] sm:$0xff]
      %s616 = scalar_lea.vmem %s210, 176
      %v617 = vld [vmem:[%s616] sm:$0xff]
      %v618 = vld [vmem:[%s616 + $0x10] sm:$0xff]
      %v619 = vld [vmem:[%s616 + $0x20] sm:$0xff]
      %v620 = vld [vmem:[%s616 + $0x30] sm:$0xff]
      %v621 = vld [vmem:[%s616 + $0x40] sm:$0xff]
      %v622 = vld [vmem:[%s616 + $0x50] sm:$0xff]
      %v623 = vld [vmem:[%s616 + $0x60] sm:$0xff]
      %v624 = vld [vmem:[%s616 + $0x70] sm:$0xff]
      %v625 = vld [vmem:[%s616 + $0xa0] sm:$0xff]
      %v626 = vld [vmem:[%s616 + $0xb0] sm:$0xff]
      %v627 = vld [vmem:[%s616 + $0xc0] sm:$0xff]
      %v628 = vld [vmem:[%s616 + $0xd0] sm:$0xff]
      %v629 = vld [vmem:[%s616 + $0xe0] sm:$0xff]
      %v630 = vld [vmem:[%s616 + $0xf0] sm:$0xff]
      %v631 = vld [vmem:[%s616 + $0x100] sm:$0xff]
      %v632 = vld [vmem:[%s616 + $0x110] sm:$0xff]
      %v633 = vld [vmem:[%s616 + $0x140] sm:$0xff]
      %v634 = vld [vmem:[%s616 + $0x150] sm:$0xff]
      %v635 = vld [vmem:[%s616 + $0x160] sm:$0xff]
      %v636 = vld [vmem:[%s616 + $0x170] sm:$0xff]
      %v637 = vld [vmem:[%s616 + $0x180] sm:$0xff]
      %v638 = vld [vmem:[%s616 + $0x190] sm:$0xff]
      %v639 = vld [vmem:[%s616 + $0x1a0] sm:$0xff]
      %v640 = vld [vmem:[%s616 + $0x1b0] sm:$0xff]
      %v641 = vld [vmem:[%s616 + $0x1e0] sm:$0xff]
      %v642 = vld [vmem:[%s616 + $0x1f0] sm:$0xff]
      %v643 = vld [vmem:[%s616 + $0x200] sm:$0xff]
      %v644 = vld [vmem:[%s616 + $0x210] sm:$0xff]
      %v645 = vld [vmem:[%s616 + $0x220] sm:$0xff]
      %v646 = vld [vmem:[%s616 + $0x230] sm:$0xff]
      %v647 = vld [vmem:[%s616 + $0x240] sm:$0xff]
      %v648 = vld [vmem:[%s616 + $0x250] sm:$0xff]
      %v649 = vld [vmem:[%s616 + $0x1] sm:$0xff]
      %v650 = vld [vmem:[%s616 + $0x11] sm:$0xff]
      %v651 = vld [vmem:[%s616 + $0x21] sm:$0xff]
      %v652 = vld [vmem:[%s616 + $0x31] sm:$0xff]
      %v653 = vld [vmem:[%s616 + $0x41] sm:$0xff]
      %v654 = vld [vmem:[%s616 + $0x51] sm:$0xff]
      %v655 = vld [vmem:[%s616 + $0x61] sm:$0xff]
      %v656 = vld [vmem:[%s616 + $0x71] sm:$0xff]
      %v657 = vld [vmem:[%s616 + $0xa1] sm:$0xff]
      %v658 = vld [vmem:[%s616 + $0xb1] sm:$0xff]
      %v659 = vld [vmem:[%s616 + $0xc1] sm:$0xff]
      %v660 = vld [vmem:[%s616 + $0xd1] sm:$0xff]
      %v661 = vld [vmem:[%s616 + $0xe1] sm:$0xff]
      %v662 = vld [vmem:[%s616 + $0xf1] sm:$0xff]
      %v663 = vld [vmem:[%s616 + $0x101] sm:$0xff]
      %v664 = vld [vmem:[%s616 + $0x111] sm:$0xff]
      %v665 = vld [vmem:[%s616 + $0x141] sm:$0xff]
      %v666 = vld [vmem:[%s616 + $0x151] sm:$0xff]
      %v667 = vld [vmem:[%s616 + $0x161] sm:$0xff]
      %v668 = vld [vmem:[%s616 + $0x171] sm:$0xff]
      %v669 = vld [vmem:[%s616 + $0x181] sm:$0xff]
      %v670 = vld [vmem:[%s616 + $0x191] sm:$0xff]
      %v671 = vld [vmem:[%s616 + $0x1a1] sm:$0xff]
      %v672 = vld [vmem:[%s616 + $0x1b1] sm:$0xff]
      %v673 = vld [vmem:[%s616 + $0x1e1] sm:$0xff]
      %v674 = vld [vmem:[%s616 + $0x1f1] sm:$0xff]
      %v675 = vld [vmem:[%s616 + $0x201] sm:$0xff]
      %v676 = vld [vmem:[%s616 + $0x211] sm:$0xff]
      %v677 = vld [vmem:[%s616 + $0x221] sm:$0xff]
      %v678 = vld [vmem:[%s616 + $0x231] sm:$0xff]
      %v679 = vld [vmem:[%s616 + $0x241] sm:$0xff]
      %v680 = vld [vmem:[%s616 + $0x251] sm:$0xff]
      %v681 = vld [vmem:[%s616 + $0x2] sm:$0xff]
      %v682 = vld [vmem:[%s616 + $0x12] sm:$0xff]
      %v683 = vld [vmem:[%s616 + $0x22] sm:$0xff]
      %v684 = vld [vmem:[%s616 + $0x32] sm:$0xff]
      %v685 = vld [vmem:[%s616 + $0x42] sm:$0xff]
      %v686 = vld [vmem:[%s616 + $0x52] sm:$0xff]
      %v687 = vld [vmem:[%s616 + $0x62] sm:$0xff]
      %v688 = vld [vmem:[%s616 + $0x72] sm:$0xff]
      %v689 = vld [vmem:[%s616 + $0xa2] sm:$0xff]
      %v690 = vld [vmem:[%s616 + $0xb2] sm:$0xff]
      %v691 = vld [vmem:[%s616 + $0xc2] sm:$0xff]
      %v692 = vld [vmem:[%s616 + $0xd2] sm:$0xff]
      %v693 = vld [vmem:[%s616 + $0xe2] sm:$0xff]
      %v694 = vld [vmem:[%s616 + $0xf2] sm:$0xff]
      %v695 = vld [vmem:[%s616 + $0x102] sm:$0xff]
      %v696 = vld [vmem:[%s616 + $0x112] sm:$0xff]
      %v697 = vld [vmem:[%s616 + $0x142] sm:$0xff]
      %v698 = vld [vmem:[%s616 + $0x152] sm:$0xff]
      %v699 = vld [vmem:[%s616 + $0x162] sm:$0xff]
      %v700 = vld [vmem:[%s616 + $0x172] sm:$0xff]
      %v701 = vld [vmem:[%s616 + $0x182] sm:$0xff]
      %v702 = vld [vmem:[%s616 + $0x192] sm:$0xff]
      %v703 = vld [vmem:[%s616 + $0x1a2] sm:$0xff]
      %v704 = vld [vmem:[%s616 + $0x1b2] sm:$0xff]
      %v705 = vld [vmem:[%s616 + $0x1e2] sm:$0xff]
      %v706 = vld [vmem:[%s616 + $0x1f2] sm:$0xff]
      %v707 = vld [vmem:[%s616 + $0x202] sm:$0xff]
      %v708 = vld [vmem:[%s616 + $0x212] sm:$0xff]
      %v709 = vld [vmem:[%s616 + $0x222] sm:$0xff]
      %v710 = vld [vmem:[%s616 + $0x232] sm:$0xff]
      %v711 = vld [vmem:[%s616 + $0x242] sm:$0xff]
      %v712 = vld [vmem:[%s616 + $0x252] sm:$0xff]
      %s713 = scalar_lea.vmem %s210, 192
      %v714 = vld [vmem:[%s713] sm:$0xff]
      %v715 = vld [vmem:[%s713 + $0x10] sm:$0xff]
      %v716 = vld [vmem:[%s713 + $0x20] sm:$0xff]
      %v717 = vld [vmem:[%s713 + $0x30] sm:$0xff]
      %v718 = vld [vmem:[%s713 + $0x40] sm:$0xff]
      %v719 = vld [vmem:[%s713 + $0x50] sm:$0xff]
      %v720 = vld [vmem:[%s713 + $0x60] sm:$0xff]
      %v721 = vld [vmem:[%s713 + $0x70] sm:$0xff]
      %v722 = vld [vmem:[%s713 + $0xa0] sm:$0xff]
      %v723 = vld [vmem:[%s713 + $0xb0] sm:$0xff]
      %v724 = vld [vmem:[%s713 + $0xc0] sm:$0xff]
      %v725 = vld [vmem:[%s713 + $0xd0] sm:$0xff]
      %v726 = vld [vmem:[%s713 + $0xe0] sm:$0xff]
      %v727 = vld [vmem:[%s713 + $0xf0] sm:$0xff]
      %v728 = vld [vmem:[%s713 + $0x100] sm:$0xff]
      %v729 = vld [vmem:[%s713 + $0x110] sm:$0xff]
      %v730 = vld [vmem:[%s713 + $0x140] sm:$0xff]
      %v731 = vld [vmem:[%s713 + $0x150] sm:$0xff]
      %v732 = vld [vmem:[%s713 + $0x160] sm:$0xff]
      %v733 = vld [vmem:[%s713 + $0x170] sm:$0xff]
      %v734 = vld [vmem:[%s713 + $0x180] sm:$0xff]
      %v735 = vld [vmem:[%s713 + $0x190] sm:$0xff]
      %v736 = vld [vmem:[%s713 + $0x1a0] sm:$0xff]
      %v737 = vld [vmem:[%s713 + $0x1b0] sm:$0xff]
      %v738 = vld [vmem:[%s713 + $0x1e0] sm:$0xff]
      %v739 = vld [vmem:[%s713 + $0x1f0] sm:$0xff]
      %v740 = vld [vmem:[%s713 + $0x200] sm:$0xff]
      %v741 = vld [vmem:[%s713 + $0x210] sm:$0xff]
      %v742 = vld [vmem:[%s713 + $0x220] sm:$0xff]
      %v743 = vld [vmem:[%s713 + $0x230] sm:$0xff]
      %v744 = vld [vmem:[%s713 + $0x240] sm:$0xff]
      %v745 = vld [vmem:[%s713 + $0x250] sm:$0xff]
      %v746 = vld [vmem:[%s713 + $0x1] sm:$0xff]
      %v747 = vld [vmem:[%s713 + $0x11] sm:$0xff]
      %v748 = vld [vmem:[%s713 + $0x21] sm:$0xff]
      %v749 = vld [vmem:[%s713 + $0x31] sm:$0xff]
      %v750 = vld [vmem:[%s713 + $0x41] sm:$0xff]
      %v751 = vld [vmem:[%s713 + $0x51] sm:$0xff]
      %v752 = vld [vmem:[%s713 + $0x61] sm:$0xff]
      %v753 = vld [vmem:[%s713 + $0x71] sm:$0xff]
      %v754 = vld [vmem:[%s713 + $0xa1] sm:$0xff]
      %v755 = vld [vmem:[%s713 + $0xb1] sm:$0xff]
      %v756 = vld [vmem:[%s713 + $0xc1] sm:$0xff]
      %v757 = vld [vmem:[%s713 + $0xd1] sm:$0xff]
      %v758 = vld [vmem:[%s713 + $0xe1] sm:$0xff]
      %v759 = vld [vmem:[%s713 + $0xf1] sm:$0xff]
      %v760 = vld [vmem:[%s713 + $0x101] sm:$0xff]
      %v761 = vld [vmem:[%s713 + $0x111] sm:$0xff]
      %v762 = vld [vmem:[%s713 + $0x141] sm:$0xff]
      %v763 = vld [vmem:[%s713 + $0x151] sm:$0xff]
      %v764 = vld [vmem:[%s713 + $0x161] sm:$0xff]
      %v765 = vld [vmem:[%s713 + $0x171] sm:$0xff]
      %v766 = vld [vmem:[%s713 + $0x181] sm:$0xff]
      %v767 = vld [vmem:[%s713 + $0x191] sm:$0xff]
      %v768 = vld [vmem:[%s713 + $0x1a1] sm:$0xff]
      %v769 = vld [vmem:[%s713 + $0x1b1] sm:$0xff]
      %v770 = vld [vmem:[%s713 + $0x1e1] sm:$0xff]
      %v771 = vld [vmem:[%s713 + $0x1f1] sm:$0xff]
      %v772 = vld [vmem:[%s713 + $0x201] sm:$0xff]
      %v773 = vld [vmem:[%s713 + $0x211] sm:$0xff]
      %v774 = vld [vmem:[%s713 + $0x221] sm:$0xff]
      %v775 = vld [vmem:[%s713 + $0x231] sm:$0xff]
      %v776 = vld [vmem:[%s713 + $0x241] sm:$0xff]
      %v777 = vld [vmem:[%s713 + $0x251] sm:$0xff]
      %v778 = vld [vmem:[%s713 + $0x2] sm:$0xff]
      %v779 = vld [vmem:[%s713 + $0x12] sm:$0xff]
      %v780 = vld [vmem:[%s713 + $0x22] sm:$0xff]
      %v781 = vld [vmem:[%s713 + $0x32] sm:$0xff]
      %v782 = vld [vmem:[%s713 + $0x42] sm:$0xff]
      %v783 = vld [vmem:[%s713 + $0x52] sm:$0xff]
      %v784 = vld [vmem:[%s713 + $0x62] sm:$0xff]
      %v785 = vld [vmem:[%s713 + $0x72] sm:$0xff]
      %v786 = vld [vmem:[%s713 + $0xa2] sm:$0xff]
      %v787 = vld [vmem:[%s713 + $0xb2] sm:$0xff]
      %v788 = vld [vmem:[%s713 + $0xc2] sm:$0xff]
      %v789 = vld [vmem:[%s713 + $0xd2] sm:$0xff]
      %v790 = vld [vmem:[%s713 + $0xe2] sm:$0xff]
      %v791 = vld [vmem:[%s713 + $0xf2] sm:$0xff]
      %v792 = vld [vmem:[%s713 + $0x102] sm:$0xff]
      %v793 = vld [vmem:[%s713 + $0x112] sm:$0xff]
      %v794 = vld [vmem:[%s713 + $0x142] sm:$0xff]
      %v795 = vld [vmem:[%s713 + $0x152] sm:$0xff]
      %v796 = vld [vmem:[%s713 + $0x162] sm:$0xff]
      %v797 = vld [vmem:[%s713 + $0x172] sm:$0xff]
      %v798 = vld [vmem:[%s713 + $0x182] sm:$0xff]
      %v799 = vld [vmem:[%s713 + $0x192] sm:$0xff]
      %v800 = vld [vmem:[%s713 + $0x1a2] sm:$0xff]
      %v801 = vld [vmem:[%s713 + $0x1b2] sm:$0xff]
      %v802 = vld [vmem:[%s713 + $0x1e2] sm:$0xff]
      %v803 = vld [vmem:[%s713 + $0x1f2] sm:$0xff]
      %v804 = vld [vmem:[%s713 + $0x202] sm:$0xff]
      %v805 = vld [vmem:[%s713 + $0x212] sm:$0xff]
      %v806 = vld [vmem:[%s713 + $0x222] sm:$0xff]
      %v807 = vld [vmem:[%s713 + $0x232] sm:$0xff]
      %v808 = vld [vmem:[%s713 + $0x242] sm:$0xff]
      %v809 = vld [vmem:[%s713 + $0x252] sm:$0xff]
      %s810 = scalar_lea.vmem %s210, 320
      %v811 = vld [vmem:[%s810] sm:$0xff]
      %v812 = vld [vmem:[%s810 + $0x10] sm:$0xff]
      %v813 = vld [vmem:[%s810 + $0x20] sm:$0xff]
      %v814 = vld [vmem:[%s810 + $0x30] sm:$0xff]
      %v815 = vld [vmem:[%s810 + $0x40] sm:$0xff]
      %v816 = vld [vmem:[%s810 + $0x50] sm:$0xff]
      %v817 = vld [vmem:[%s810 + $0x60] sm:$0xff]
      %v818 = vld [vmem:[%s810 + $0x70] sm:$0xff]
      %v819 = vld [vmem:[%s810 + $0xa0] sm:$0xff]
      %v820 = vld [vmem:[%s810 + $0xb0] sm:$0xff]
      %v821 = vld [vmem:[%s810 + $0xc0] sm:$0xff]
      %v822 = vld [vmem:[%s810 + $0xd0] sm:$0xff]
      %v823 = vld [vmem:[%s810 + $0xe0] sm:$0xff]
      %v824 = vld [vmem:[%s810 + $0xf0] sm:$0xff]
      %v825 = vld [vmem:[%s810 + $0x100] sm:$0xff]
      %v826 = vld [vmem:[%s810 + $0x110] sm:$0xff]
      %v827 = vld [vmem:[%s810 + $0x140] sm:$0xff]
      %v828 = vld [vmem:[%s810 + $0x150] sm:$0xff]
      %v829 = vld [vmem:[%s810 + $0x160] sm:$0xff]
      %v830 = vld [vmem:[%s810 + $0x170] sm:$0xff]
      %v831 = vld [vmem:[%s810 + $0x180] sm:$0xff]
      %v832 = vld [vmem:[%s810 + $0x190] sm:$0xff]
      %v833 = vld [vmem:[%s810 + $0x1a0] sm:$0xff]
      %v834 = vld [vmem:[%s810 + $0x1b0] sm:$0xff]
      %v835 = vld [vmem:[%s810 + $0x1e0] sm:$0xff]
      %v836 = vld [vmem:[%s810 + $0x1f0] sm:$0xff]
      %v837 = vld [vmem:[%s810 + $0x200] sm:$0xff]
      %v838 = vld [vmem:[%s810 + $0x210] sm:$0xff]
      %v839 = vld [vmem:[%s810 + $0x220] sm:$0xff]
      %v840 = vld [vmem:[%s810 + $0x230] sm:$0xff]
      %v841 = vld [vmem:[%s810 + $0x240] sm:$0xff]
      %v842 = vld [vmem:[%s810 + $0x250] sm:$0xff]
      %v843 = vld [vmem:[%s810 + $0x1] sm:$0xff]
      %v844 = vld [vmem:[%s810 + $0x11] sm:$0xff]
      %v845 = vld [vmem:[%s810 + $0x21] sm:$0xff]
      %v846 = vld [vmem:[%s810 + $0x31] sm:$0xff]
      %v847 = vld [vmem:[%s810 + $0x41] sm:$0xff]
      %v848 = vld [vmem:[%s810 + $0x51] sm:$0xff]
      %v849 = vld [vmem:[%s810 + $0x61] sm:$0xff]
      %v850 = vld [vmem:[%s810 + $0x71] sm:$0xff]
      %v851 = vld [vmem:[%s810 + $0xa1] sm:$0xff]
      %v852 = vld [vmem:[%s810 + $0xb1] sm:$0xff]
      %v853 = vld [vmem:[%s810 + $0xc1] sm:$0xff]
      %v854 = vld [vmem:[%s810 + $0xd1] sm:$0xff]
      %v855 = vld [vmem:[%s810 + $0xe1] sm:$0xff]
      %v856 = vld [vmem:[%s810 + $0xf1] sm:$0xff]
      %v857 = vld [vmem:[%s810 + $0x101] sm:$0xff]
      %v858 = vld [vmem:[%s810 + $0x111] sm:$0xff]
      %v859 = vld [vmem:[%s810 + $0x141] sm:$0xff]
      %v860 = vld [vmem:[%s810 + $0x151] sm:$0xff]
      %v861 = vld [vmem:[%s810 + $0x161] sm:$0xff]
      %v862 = vld [vmem:[%s810 + $0x171] sm:$0xff]
      %v863 = vld [vmem:[%s810 + $0x181] sm:$0xff]
      %v864 = vld [vmem:[%s810 + $0x191] sm:$0xff]
      %v865 = vld [vmem:[%s810 + $0x1a1] sm:$0xff]
      %v866 = vld [vmem:[%s810 + $0x1b1] sm:$0xff]
      %v867 = vld [vmem:[%s810 + $0x1e1] sm:$0xff]
      %v868 = vld [vmem:[%s810 + $0x1f1] sm:$0xff]
      %v869 = vld [vmem:[%s810 + $0x201] sm:$0xff]
      %v870 = vld [vmem:[%s810 + $0x211] sm:$0xff]
      %v871 = vld [vmem:[%s810 + $0x221] sm:$0xff]
      %v872 = vld [vmem:[%s810 + $0x231] sm:$0xff]
      %v873 = vld [vmem:[%s810 + $0x241] sm:$0xff]
      %v874 = vld [vmem:[%s810 + $0x251] sm:$0xff]
      %v875 = vld [vmem:[%s810 + $0x2] sm:$0xff]
      %v876 = vld [vmem:[%s810 + $0x12] sm:$0xff]
      %v877 = vld [vmem:[%s810 + $0x22] sm:$0xff]
      %v878 = vld [vmem:[%s810 + $0x32] sm:$0xff]
      %v879 = vld [vmem:[%s810 + $0x42] sm:$0xff]
      %v880 = vld [vmem:[%s810 + $0x52] sm:$0xff]
      %v881 = vld [vmem:[%s810 + $0x62] sm:$0xff]
      %v882 = vld [vmem:[%s810 + $0x72] sm:$0xff]
      %v883 = vld [vmem:[%s810 + $0xa2] sm:$0xff]
      %v884 = vld [vmem:[%s810 + $0xb2] sm:$0xff]
      %v885 = vld [vmem:[%s810 + $0xc2] sm:$0xff]
      %v886 = vld [vmem:[%s810 + $0xd2] sm:$0xff]
      %v887 = vld [vmem:[%s810 + $0xe2] sm:$0xff]
      %v888 = vld [vmem:[%s810 + $0xf2] sm:$0xff]
      %v889 = vld [vmem:[%s810 + $0x102] sm:$0xff]
      %v890 = vld [vmem:[%s810 + $0x112] sm:$0xff]
      %v891 = vld [vmem:[%s810 + $0x142] sm:$0xff]
      %v892 = vld [vmem:[%s810 + $0x152] sm:$0xff]
      %v893 = vld [vmem:[%s810 + $0x162] sm:$0xff]
      %v894 = vld [vmem:[%s810 + $0x172] sm:$0xff]
      %v895 = vld [vmem:[%s810 + $0x182] sm:$0xff]
      %v896 = vld [vmem:[%s810 + $0x192] sm:$0xff]
      %v897 = vld [vmem:[%s810 + $0x1a2] sm:$0xff]
      %v898 = vld [vmem:[%s810 + $0x1b2] sm:$0xff]
      %v899 = vld [vmem:[%s810 + $0x1e2] sm:$0xff]
      %v900 = vld [vmem:[%s810 + $0x1f2] sm:$0xff]
      %v901 = vld [vmem:[%s810 + $0x202] sm:$0xff]
      %v902 = vld [vmem:[%s810 + $0x212] sm:$0xff]
      %v903 = vld [vmem:[%s810 + $0x222] sm:$0xff]
      %v904 = vld [vmem:[%s810 + $0x232] sm:$0xff]
      %v905 = vld [vmem:[%s810 + $0x242] sm:$0xff]
      %v906 = vld [vmem:[%s810 + $0x252] sm:$0xff]
      %s907 = scalar_lea.vmem %s210, 336
      %v908 = vld [vmem:[%s907] sm:$0xff]
      %v909 = vld [vmem:[%s907 + $0x10] sm:$0xff]
      %v910 = vld [vmem:[%s907 + $0x20] sm:$0xff]
      %v911 = vld [vmem:[%s907 + $0x30] sm:$0xff]
      %v912 = vld [vmem:[%s907 + $0x40] sm:$0xff]
      %v913 = vld [vmem:[%s907 + $0x50] sm:$0xff]
      %v914 = vld [vmem:[%s907 + $0x60] sm:$0xff]
      %v915 = vld [vmem:[%s907 + $0x70] sm:$0xff]
      %v916 = vld [vmem:[%s907 + $0xa0] sm:$0xff]
      %v917 = vld [vmem:[%s907 + $0xb0] sm:$0xff]
      %v918 = vld [vmem:[%s907 + $0xc0] sm:$0xff]
      %v919 = vld [vmem:[%s907 + $0xd0] sm:$0xff]
      %v920 = vld [vmem:[%s907 + $0xe0] sm:$0xff]
      %v921 = vld [vmem:[%s907 + $0xf0] sm:$0xff]
      %v922 = vld [vmem:[%s907 + $0x100] sm:$0xff]
      %v923 = vld [vmem:[%s907 + $0x110] sm:$0xff]
      %v924 = vld [vmem:[%s907 + $0x140] sm:$0xff]
      %v925 = vld [vmem:[%s907 + $0x150] sm:$0xff]
      %v926 = vld [vmem:[%s907 + $0x160] sm:$0xff]
      %v927 = vld [vmem:[%s907 + $0x170] sm:$0xff]
      %v928 = vld [vmem:[%s907 + $0x180] sm:$0xff]
      %v929 = vld [vmem:[%s907 + $0x190] sm:$0xff]
      %v930 = vld [vmem:[%s907 + $0x1a0] sm:$0xff]
      %v931 = vld [vmem:[%s907 + $0x1b0] sm:$0xff]
      %v932 = vld [vmem:[%s907 + $0x1e0] sm:$0xff]
      %v933 = vld [vmem:[%s907 + $0x1f0] sm:$0xff]
      %v934 = vld [vmem:[%s907 + $0x200] sm:$0xff]
      %v935 = vld [vmem:[%s907 + $0x210] sm:$0xff]
      %v936 = vld [vmem:[%s907 + $0x220] sm:$0xff]
      %v937 = vld [vmem:[%s907 + $0x230] sm:$0xff]
      %v938 = vld [vmem:[%s907 + $0x240] sm:$0xff]
      %v939 = vld [vmem:[%s907 + $0x250] sm:$0xff]
      %v940 = vld [vmem:[%s907 + $0x1] sm:$0xff]
      %v941 = vld [vmem:[%s907 + $0x11] sm:$0xff]
      %v942 = vld [vmem:[%s907 + $0x21] sm:$0xff]
      %v943 = vld [vmem:[%s907 + $0x31] sm:$0xff]
      %v944 = vld [vmem:[%s907 + $0x41] sm:$0xff]
      %v945 = vld [vmem:[%s907 + $0x51] sm:$0xff]
      %v946 = vld [vmem:[%s907 + $0x61] sm:$0xff]
      %v947 = vld [vmem:[%s907 + $0x71] sm:$0xff]
      %v948 = vld [vmem:[%s907 + $0xa1] sm:$0xff]
      %v949 = vld [vmem:[%s907 + $0xb1] sm:$0xff]
      %v950 = vld [vmem:[%s907 + $0xc1] sm:$0xff]
      %v951 = vld [vmem:[%s907 + $0xd1] sm:$0xff]
      %v952 = vld [vmem:[%s907 + $0xe1] sm:$0xff]
      %v953 = vld [vmem:[%s907 + $0xf1] sm:$0xff]
      %v954 = vld [vmem:[%s907 + $0x101] sm:$0xff]
      %v955 = vld [vmem:[%s907 + $0x111] sm:$0xff]
      %v956 = vld [vmem:[%s907 + $0x141] sm:$0xff]
      %v957 = vld [vmem:[%s907 + $0x151] sm:$0xff]
      %v958 = vld [vmem:[%s907 + $0x161] sm:$0xff]
      %v959 = vld [vmem:[%s907 + $0x171] sm:$0xff]
      %v960 = vld [vmem:[%s907 + $0x181] sm:$0xff]
      %v961 = vld [vmem:[%s907 + $0x191] sm:$0xff]
      %v962 = vld [vmem:[%s907 + $0x1a1] sm:$0xff]
      %v963 = vld [vmem:[%s907 + $0x1b1] sm:$0xff]
      %v964 = vld [vmem:[%s907 + $0x1e1] sm:$0xff]
      %v965 = vld [vmem:[%s907 + $0x1f1] sm:$0xff]
      %v966 = vld [vmem:[%s907 + $0x201] sm:$0xff]
      %v967 = vld [vmem:[%s907 + $0x211] sm:$0xff]
      %v968 = vld [vmem:[%s907 + $0x221] sm:$0xff]
      %v969 = vld [vmem:[%s907 + $0x231] sm:$0xff]
      %v970 = vld [vmem:[%s907 + $0x241] sm:$0xff]
      %v971 = vld [vmem:[%s907 + $0x251] sm:$0xff]
      %v972 = vld [vmem:[%s907 + $0x2] sm:$0xff]
      %v973 = vld [vmem:[%s907 + $0x12] sm:$0xff]
      %v974 = vld [vmem:[%s907 + $0x22] sm:$0xff]
      %v975 = vld [vmem:[%s907 + $0x32] sm:$0xff]
      %v976 = vld [vmem:[%s907 + $0x42] sm:$0xff]
      %v977 = vld [vmem:[%s907 + $0x52] sm:$0xff]
      %v978 = vld [vmem:[%s907 + $0x62] sm:$0xff]
      %v979 = vld [vmem:[%s907 + $0x72] sm:$0xff]
      %v980 = vld [vmem:[%s907 + $0xa2] sm:$0xff]
      %v981 = vld [vmem:[%s907 + $0xb2] sm:$0xff]
      %v982 = vld [vmem:[%s907 + $0xc2] sm:$0xff]
      %v983 = vld [vmem:[%s907 + $0xd2] sm:$0xff]
      %v984 = vld [vmem:[%s907 + $0xe2] sm:$0xff]
      %v985 = vld [vmem:[%s907 + $0xf2] sm:$0xff]
      %v986 = vld [vmem:[%s907 + $0x102] sm:$0xff]
      %v987 = vld [vmem:[%s907 + $0x112] sm:$0xff]
      %v988 = vld [vmem:[%s907 + $0x142] sm:$0xff]
      %v989 = vld [vmem:[%s907 + $0x152] sm:$0xff]
      %v990 = vld [vmem:[%s907 + $0x162] sm:$0xff]
      %v991 = vld [vmem:[%s907 + $0x172] sm:$0xff]
      %v992 = vld [vmem:[%s907 + $0x182] sm:$0xff]
      %v993 = vld [vmem:[%s907 + $0x192] sm:$0xff]
      %v994 = vld [vmem:[%s907 + $0x1a2] sm:$0xff]
      %v995 = vld [vmem:[%s907 + $0x1b2] sm:$0xff]
      %v996 = vld [vmem:[%s907 + $0x1e2] sm:$0xff]
      %v997 = vld [vmem:[%s907 + $0x1f2] sm:$0xff]
      %v998 = vld [vmem:[%s907 + $0x202] sm:$0xff]
      %v999 = vld [vmem:[%s907 + $0x212] sm:$0xff]
      %v1000 = vld [vmem:[%s907 + $0x222] sm:$0xff]
      %v1001 = vld [vmem:[%s907 + $0x232] sm:$0xff]
      %v1002 = vld [vmem:[%s907 + $0x242] sm:$0xff]
      %v1003 = vld [vmem:[%s907 + $0x252] sm:$0xff]
      %s1004 = scalar_lea.vmem %s210, 352
      %v1005 = vld [vmem:[%s1004] sm:$0xff]
      %v1006 = vld [vmem:[%s1004 + $0x10] sm:$0xff]
      %v1007 = vld [vmem:[%s1004 + $0x20] sm:$0xff]
      %v1008 = vld [vmem:[%s1004 + $0x30] sm:$0xff]
      %v1009 = vld [vmem:[%s1004 + $0x40] sm:$0xff]
      %v1010 = vld [vmem:[%s1004 + $0x50] sm:$0xff]
      %v1011 = vld [vmem:[%s1004 + $0x60] sm:$0xff]
      %v1012 = vld [vmem:[%s1004 + $0x70] sm:$0xff]
      %v1013 = vld [vmem:[%s1004 + $0xa0] sm:$0xff]
      %v1014 = vld [vmem:[%s1004 + $0xb0] sm:$0xff]
      %v1015 = vld [vmem:[%s1004 + $0xc0] sm:$0xff]
      %v1016 = vld [vmem:[%s1004 + $0xd0] sm:$0xff]
      %v1017 = vld [vmem:[%s1004 + $0xe0] sm:$0xff]
      %v1018 = vld [vmem:[%s1004 + $0xf0] sm:$0xff]
      %v1019 = vld [vmem:[%s1004 + $0x100] sm:$0xff]
      %v1020 = vld [vmem:[%s1004 + $0x110] sm:$0xff]
      %v1021 = vld [vmem:[%s1004 + $0x140] sm:$0xff]
      %v1022 = vld [vmem:[%s1004 + $0x150] sm:$0xff]
      %v1023 = vld [vmem:[%s1004 + $0x160] sm:$0xff]
      %v1024 = vld [vmem:[%s1004 + $0x170] sm:$0xff]
      %v1025 = vld [vmem:[%s1004 + $0x180] sm:$0xff]
      %v1026 = vld [vmem:[%s1004 + $0x190] sm:$0xff]
      %v1027 = vld [vmem:[%s1004 + $0x1a0] sm:$0xff]
      %v1028 = vld [vmem:[%s1004 + $0x1b0] sm:$0xff]
      %v1029 = vld [vmem:[%s1004 + $0x1e0] sm:$0xff]
      %v1030 = vld [vmem:[%s1004 + $0x1f0] sm:$0xff]
      %v1031 = vld [vmem:[%s1004 + $0x200] sm:$0xff]
      %v1032 = vld [vmem:[%s1004 + $0x210] sm:$0xff]
      %v1033 = vld [vmem:[%s1004 + $0x220] sm:$0xff]
      %v1034 = vld [vmem:[%s1004 + $0x230] sm:$0xff]
      %v1035 = vld [vmem:[%s1004 + $0x240] sm:$0xff]
      %v1036 = vld [vmem:[%s1004 + $0x250] sm:$0xff]
      %v1037 = vld [vmem:[%s1004 + $0x1] sm:$0xff]
      %v1038 = vld [vmem:[%s1004 + $0x11] sm:$0xff]
      %v1039 = vld [vmem:[%s1004 + $0x21] sm:$0xff]
      %v1040 = vld [vmem:[%s1004 + $0x31] sm:$0xff]
      %v1041 = vld [vmem:[%s1004 + $0x41] sm:$0xff]
      %v1042 = vld [vmem:[%s1004 + $0x51] sm:$0xff]
      %v1043 = vld [vmem:[%s1004 + $0x61] sm:$0xff]
      %v1044 = vld [vmem:[%s1004 + $0x71] sm:$0xff]
      %v1045 = vld [vmem:[%s1004 + $0xa1] sm:$0xff]
      %v1046 = vld [vmem:[%s1004 + $0xb1] sm:$0xff]
      %v1047 = vld [vmem:[%s1004 + $0xc1] sm:$0xff]
      %v1048 = vld [vmem:[%s1004 + $0xd1] sm:$0xff]
      %v1049 = vld [vmem:[%s1004 + $0xe1] sm:$0xff]
      %v1050 = vld [vmem:[%s1004 + $0xf1] sm:$0xff]
      %v1051 = vld [vmem:[%s1004 + $0x101] sm:$0xff]
      %v1052 = vld [vmem:[%s1004 + $0x111] sm:$0xff]
      %v1053 = vld [vmem:[%s1004 + $0x141] sm:$0xff]
      %v1054 = vld [vmem:[%s1004 + $0x151] sm:$0xff]
      %v1055 = vld [vmem:[%s1004 + $0x161] sm:$0xff]
      %v1056 = vld [vmem:[%s1004 + $0x171] sm:$0xff]
      %v1057 = vld [vmem:[%s1004 + $0x181] sm:$0xff]
      %v1058 = vld [vmem:[%s1004 + $0x191] sm:$0xff]
      %v1059 = vld [vmem:[%s1004 + $0x1a1] sm:$0xff]
      %v1060 = vld [vmem:[%s1004 + $0x1b1] sm:$0xff]
      %v1061 = vld [vmem:[%s1004 + $0x1e1] sm:$0xff]
      %v1062 = vld [vmem:[%s1004 + $0x1f1] sm:$0xff]
      %v1063 = vld [vmem:[%s1004 + $0x201] sm:$0xff]
      %v1064 = vld [vmem:[%s1004 + $0x211] sm:$0xff]
      %v1065 = vld [vmem:[%s1004 + $0x221] sm:$0xff]
      %v1066 = vld [vmem:[%s1004 + $0x231] sm:$0xff]
      %v1067 = vld [vmem:[%s1004 + $0x241] sm:$0xff]
      %v1068 = vld [vmem:[%s1004 + $0x251] sm:$0xff]
      %v1069 = vld [vmem:[%s1004 + $0x2] sm:$0xff]
      %v1070 = vld [vmem:[%s1004 + $0x12] sm:$0xff]
      %v1071 = vld [vmem:[%s1004 + $0x22] sm:$0xff]
      %v1072 = vld [vmem:[%s1004 + $0x32] sm:$0xff]
      %v1073 = vld [vmem:[%s1004 + $0x42] sm:$0xff]
      %v1074 = vld [vmem:[%s1004 + $0x52] sm:$0xff]
      %v1075 = vld [vmem:[%s1004 + $0x62] sm:$0xff]
      %v1076 = vld [vmem:[%s1004 + $0x72] sm:$0xff]
      %v1077 = vld [vmem:[%s1004 + $0xa2] sm:$0xff]
      %v1078 = vld [vmem:[%s1004 + $0xb2] sm:$0xff]
      %v1079 = vld [vmem:[%s1004 + $0xc2] sm:$0xff]
      %v1080 = vld [vmem:[%s1004 + $0xd2] sm:$0xff]
      %v1081 = vld [vmem:[%s1004 + $0xe2] sm:$0xff]
      %v1082 = vld [vmem:[%s1004 + $0xf2] sm:$0xff]
      %v1083 = vld [vmem:[%s1004 + $0x102] sm:$0xff]
      %v1084 = vld [vmem:[%s1004 + $0x112] sm:$0xff]
      %v1085 = vld [vmem:[%s1004 + $0x142] sm:$0xff]
      %v1086 = vld [vmem:[%s1004 + $0x152] sm:$0xff]
      %v1087 = vld [vmem:[%s1004 + $0x162] sm:$0xff]
      %v1088 = vld [vmem:[%s1004 + $0x172] sm:$0xff]
      %v1089 = vld [vmem:[%s1004 + $0x182] sm:$0xff]
      %v1090 = vld [vmem:[%s1004 + $0x192] sm:$0xff]
      %v1091 = vld [vmem:[%s1004 + $0x1a2] sm:$0xff]
      %v1092 = vld [vmem:[%s1004 + $0x1b2] sm:$0xff]
      %v1093 = vld [vmem:[%s1004 + $0x1e2] sm:$0xff]
      %v1094 = vld [vmem:[%s1004 + $0x1f2] sm:$0xff]
      %v1095 = vld [vmem:[%s1004 + $0x202] sm:$0xff]
      %v1096 = vld [vmem:[%s1004 + $0x212] sm:$0xff]
      %v1097 = vld [vmem:[%s1004 + $0x222] sm:$0xff]
      %v1098 = vld [vmem:[%s1004 + $0x232] sm:$0xff]
      %v1099 = vld [vmem:[%s1004 + $0x242] sm:$0xff]
      %v1100 = vld [vmem:[%s1004 + $0x252] sm:$0xff]
      %v1101 = vld [vmem:[%s1] sm:$0xff]
      %v1102 = vld [vmem:[%s1 + $0x8] sm:$0xff]
      %v1103 = vld [vmem:[%s1 + $0x10] sm:$0xff]
      %v1104 = vld [vmem:[%s1 + $0x18] sm:$0xff]
      %v1105 = vld [vmem:[%s1 + $0x20] sm:$0xff]
      %v1106 = vld [vmem:[%s1 + $0x28] sm:$0xff]
      %v1107 = vld [vmem:[%s1 + $0x30] sm:$0xff]
      %v1108 = vld [vmem:[%s1 + $0x38] sm:$0xff]
      %v1109 = vld [vmem:[%s1 + $0x40] sm:$0xff]
      %v1110 = vld [vmem:[%s1 + $0x48] sm:$0xff]
      %v1111 = vld [vmem:[%s1 + $0x50] sm:$0xff]
      %v1112 = vld [vmem:[%s1 + $0x58] sm:$0xff]
      %v1113 = vld [vmem:[%s1 + $0x60] sm:$0xff]
      %v1114 = vld [vmem:[%s1 + $0x68] sm:$0xff]
      %v1115 = vld [vmem:[%s1 + $0x70] sm:$0xff]
      %v1116 = vld [vmem:[%s1 + $0x78] sm:$0xff]
      %v1117 = vld [vmem:[%s1 + $0x80] sm:$0xff]
      %v1118 = vld [vmem:[%s1 + $0x88] sm:$0xff]
      %v1119 = vld [vmem:[%s1 + $0x90] sm:$0xff]
      %v1120 = vld [vmem:[%s1 + $0x98] sm:$0xff]
      %v1121 = vld [vmem:[%s1 + $0xa0] sm:$0xff]
      %v1122 = vld [vmem:[%s1 + $0xa8] sm:$0xff]
      %v1123 = vld [vmem:[%s1 + $0xb0] sm:$0xff]
      %v1124 = vld [vmem:[%s1 + $0xb8] sm:$0xff]
      %v1125 = vld [vmem:[%s1 + $0xc0] sm:$0xff]
      %v1126 = vld [vmem:[%s1 + $0xc8] sm:$0xff]
      %v1127 = vld [vmem:[%s1 + $0xd0] sm:$0xff]
      %v1128 = vld [vmem:[%s1 + $0xd8] sm:$0xff]
      %v1129 = vld [vmem:[%s1 + $0xe0] sm:$0xff]
      %v1130 = vld [vmem:[%s1 + $0xe8] sm:$0xff]
      %v1131 = vld [vmem:[%s1 + $0xf0] sm:$0xff]
      %v1132 = vld [vmem:[%s1 + $0xf8] sm:$0xff]
      %v1133 = vld [vmem:[%s1 + $0x100] sm:$0xff]
      %v1134 = vld [vmem:[%s1 + $0x108] sm:$0xff]
      %v1135 = vld [vmem:[%s1 + $0x110] sm:$0xff]
      %v1136 = vld [vmem:[%s1 + $0x118] sm:$0xff]
      %v1137 = vld [vmem:[%s1 + $0x120] sm:$0xff]
      %v1138 = vld [vmem:[%s1 + $0x128] sm:$0xff]
      %v1139 = vld [vmem:[%s1 + $0x130] sm:$0xff]
      %v1140 = vld [vmem:[%s1 + $0x138] sm:$0xff]
      %v1141 = vld [vmem:[%s1 + $0x140] sm:$0xff]
      %v1142 = vld [vmem:[%s1 + $0x148] sm:$0xff]
      %v1143 = vld [vmem:[%s1 + $0x150] sm:$0xff]
      %v1144 = vld [vmem:[%s1 + $0x158] sm:$0xff]
      %v1145 = vld [vmem:[%s1 + $0x160] sm:$0xff]
      %v1146 = vld [vmem:[%s1 + $0x168] sm:$0xff]
      %v1147 = vld [vmem:[%s1 + $0x170] sm:$0xff]
      %v1148 = vld [vmem:[%s1 + $0x178] sm:$0xff]
      %v1149 = vld [vmem:[%s1 + $0x180] sm:$0xff]
      %v1150 = vld [vmem:[%s1 + $0x188] sm:$0xff]
      %v1151 = vld [vmem:[%s1 + $0x190] sm:$0xff]
      %v1152 = vld [vmem:[%s1 + $0x198] sm:$0xff]
      %v1153 = vld [vmem:[%s1 + $0x1a0] sm:$0xff]
      %v1154 = vld [vmem:[%s1 + $0x1a8] sm:$0xff]
      %v1155 = vld [vmem:[%s1 + $0x1b0] sm:$0xff]
      %v1156 = vld [vmem:[%s1 + $0x1b8] sm:$0xff]
      %v1157 = vld [vmem:[%s1 + $0x1c0] sm:$0xff]
      %v1158 = vld [vmem:[%s1 + $0x1c8] sm:$0xff]
      %v1159 = vld [vmem:[%s1 + $0x1d0] sm:$0xff]
      %v1160 = vld [vmem:[%s1 + $0x1d8] sm:$0xff]
      %v1161 = vld [vmem:[%s1 + $0x1e0] sm:$0xff]
      %v1162 = vld [vmem:[%s1 + $0x1e8] sm:$0xff]
      %v1163 = vld [vmem:[%s1 + $0x1f0] sm:$0xff]
      %v1164 = vld [vmem:[%s1 + $0x1f8] sm:$0xff]
      %v1165 = vld [vmem:[%s1 + $0x200] sm:$0xff]
      %v1166 = vld [vmem:[%s1 + $0x208] sm:$0xff]
      %v1167 = vld [vmem:[%s1 + $0x210] sm:$0xff]
      %v1168 = vld [vmem:[%s1 + $0x218] sm:$0xff]
      %v1169 = vld [vmem:[%s1 + $0x220] sm:$0xff]
      %v1170 = vld [vmem:[%s1 + $0x228] sm:$0xff]
      %v1171 = vld [vmem:[%s1 + $0x230] sm:$0xff]
      %v1172 = vld [vmem:[%s1 + $0x238] sm:$0xff]
      %v1173 = vld [vmem:[%s1 + $0x240] sm:$0xff]
      %v1174 = vld [vmem:[%s1 + $0x248] sm:$0xff]
      %v1175 = vld [vmem:[%s1 + $0x250] sm:$0xff]
      %v1176 = vld [vmem:[%s1 + $0x258] sm:$0xff]
      %v1177 = vld [vmem:[%s1 + $0x260] sm:$0xff]
      %v1178 = vld [vmem:[%s1 + $0x268] sm:$0xff]
      %v1179 = vld [vmem:[%s1 + $0x270] sm:$0xff]
      %v1180 = vld [vmem:[%s1 + $0x278] sm:$0xff]
      %v1181 = vld [vmem:[%s1 + $0x280] sm:$0xff]
      %v1182 = vld [vmem:[%s1 + $0x288] sm:$0xff]
      %v1183 = vld [vmem:[%s1 + $0x290] sm:$0xff]
      %v1184 = vld [vmem:[%s1 + $0x298] sm:$0xff]
      %v1185 = vld [vmem:[%s1 + $0x2a0] sm:$0xff]
      %v1186 = vld [vmem:[%s1 + $0x2a8] sm:$0xff]
      %v1187 = vld [vmem:[%s1 + $0x2b0] sm:$0xff]
      %v1188 = vld [vmem:[%s1 + $0x2b8] sm:$0xff]
      %v1189 = vld [vmem:[%s1 + $0x2c0] sm:$0xff]
      %v1190 = vld [vmem:[%s1 + $0x2c8] sm:$0xff]
      %v1191 = vld [vmem:[%s1 + $0x2d0] sm:$0xff]
      %v1192 = vld [vmem:[%s1 + $0x2d8] sm:$0xff]
      %v1193 = vld [vmem:[%s1 + $0x2e0] sm:$0xff]
      %v1194 = vld [vmem:[%s1 + $0x2e8] sm:$0xff]
      %v1195 = vld [vmem:[%s1 + $0x2f0] sm:$0xff]
      %v1196 = vld [vmem:[%s1 + $0x2f8] sm:$0xff]
      %v1197 = vld [vmem:[%s1 + $0x300] sm:$0xff]
      %v1198 = vld [vmem:[%s1 + $0x308] sm:$0xff]
      %v1199 = vld [vmem:[%s1 + $0x310] sm:$0xff]
      %v1200 = vld [vmem:[%s1 + $0x318] sm:$0xff]
      %v1201 = vld [vmem:[%s1 + $0x320] sm:$0xff]
      %v1202 = vld [vmem:[%s1 + $0x328] sm:$0xff]
      %v1203 = vld [vmem:[%s1 + $0x330] sm:$0xff]
      %v1204 = vld [vmem:[%s1 + $0x338] sm:$0xff]
      %v1205 = vld [vmem:[%s1 + $0x340] sm:$0xff]
      %v1206 = vld [vmem:[%s1 + $0x348] sm:$0xff]
      %v1207 = vld [vmem:[%s1 + $0x350] sm:$0xff]
      %v1208 = vld [vmem:[%s1 + $0x358] sm:$0xff]
      %v1209 = vld [vmem:[%s1 + $0x360] sm:$0xff]
      %v1210 = vld [vmem:[%s1 + $0x368] sm:$0xff]
      %v1211 = vld [vmem:[%s1 + $0x370] sm:$0xff]
      %v1212 = vld [vmem:[%s1 + $0x378] sm:$0xff]
      %v1213 = vld [vmem:[%s1 + $0x380] sm:$0xff]
      %v1214 = vld [vmem:[%s1 + $0x388] sm:$0xff]
      %v1215 = vld [vmem:[%s1 + $0x390] sm:$0xff]
      %v1216 = vld [vmem:[%s1 + $0x398] sm:$0xff]
      %v1217 = vld [vmem:[%s1 + $0x3a0] sm:$0xff]
      %v1218 = vld [vmem:[%s1 + $0x3a8] sm:$0xff]
      %v1219 = vld [vmem:[%s1 + $0x3b0] sm:$0xff]
      %v1220 = vld [vmem:[%s1 + $0x3b8] sm:$0xff]
      %v1221 = vld [vmem:[%s1 + $0x3c0] sm:$0xff]
      %v1222 = vld [vmem:[%s1 + $0x3c8] sm:$0xff]
      %v1223 = vld [vmem:[%s1 + $0x3d0] sm:$0xff]
      %v1224 = vld [vmem:[%s1 + $0x3d8] sm:$0xff]
      %v1225 = vld [vmem:[%s1 + $0x3e0] sm:$0xff]
      %v1226 = vld [vmem:[%s1 + $0x3e8] sm:$0xff]
      %v1227 = vld [vmem:[%s1 + $0x3f0] sm:$0xff]
      %v1228 = vld [vmem:[%s1 + $0x3f8] sm:$0xff]
      %v1229 = vld [vmem:[%s1 + $0x400] sm:$0xff]
      %v1230 = vld [vmem:[%s1 + $0x408] sm:$0xff]
      %v1231 = vld [vmem:[%s1 + $0x410] sm:$0xff]
      %v1232 = vld [vmem:[%s1 + $0x418] sm:$0xff]
      %v1233 = vld [vmem:[%s1 + $0x420] sm:$0xff]
      %v1234 = vld [vmem:[%s1 + $0x428] sm:$0xff]
      %v1235 = vld [vmem:[%s1 + $0x430] sm:$0xff]
      %v1236 = vld [vmem:[%s1 + $0x438] sm:$0xff]
      %v1237 = vld [vmem:[%s1 + $0x440] sm:$0xff]
      %v1238 = vld [vmem:[%s1 + $0x448] sm:$0xff]
      %v1239 = vld [vmem:[%s1 + $0x450] sm:$0xff]
      %v1240 = vld [vmem:[%s1 + $0x458] sm:$0xff]
      %v1241 = vld [vmem:[%s1 + $0x460] sm:$0xff]
      %v1242 = vld [vmem:[%s1 + $0x468] sm:$0xff]
      %v1243 = vld [vmem:[%s1 + $0x470] sm:$0xff]
      %v1244 = vld [vmem:[%s1 + $0x478] sm:$0xff]
      %v1245 = vld [vmem:[%s1 + $0x480] sm:$0xff]
      %v1246 = vld [vmem:[%s1 + $0x488] sm:$0xff]
      %v1247 = vld [vmem:[%s1 + $0x490] sm:$0xff]
      %v1248 = vld [vmem:[%s1 + $0x498] sm:$0xff]
      %v1249 = vld [vmem:[%s1 + $0x4a0] sm:$0xff]
      %v1250 = vld [vmem:[%s1 + $0x4a8] sm:$0xff]
      %v1251 = vld [vmem:[%s1 + $0x4b0] sm:$0xff]
      %v1252 = vld [vmem:[%s1 + $0x4b8] sm:$0xff]
      %v1253 = vld [vmem:[%s1 + $0x4c0] sm:$0xff]
      %v1254 = vld [vmem:[%s1 + $0x4c8] sm:$0xff]
      %v1255 = vld [vmem:[%s1 + $0x4d0] sm:$0xff]
      %v1256 = vld [vmem:[%s1 + $0x4d8] sm:$0xff]
      %v1257 = vld [vmem:[%s1 + $0x4e0] sm:$0xff]
      %v1258 = vld [vmem:[%s1 + $0x4e8] sm:$0xff]
      %v1259 = vld [vmem:[%s1 + $0x4f0] sm:$0xff]
      %v1260 = vld [vmem:[%s1 + $0x4f8] sm:$0xff]
      %v1261 = vld [vmem:[%s1 + $0x500] sm:$0xff]
      %v1262 = vld [vmem:[%s1 + $0x508] sm:$0xff]
      %v1263 = vld [vmem:[%s1 + $0x510] sm:$0xff]
      %v1264 = vld [vmem:[%s1 + $0x518] sm:$0xff]
      %v1265 = vld [vmem:[%s1 + $0x520] sm:$0xff]
      %v1266 = vld [vmem:[%s1 + $0x528] sm:$0xff]
      %v1267 = vld [vmem:[%s1 + $0x530] sm:$0xff]
      %v1268 = vld [vmem:[%s1 + $0x538] sm:$0xff]
      %v1269 = vld [vmem:[%s1 + $0x540] sm:$0xff]
      %v1270 = vld [vmem:[%s1 + $0x548] sm:$0xff]
      %v1271 = vld [vmem:[%s1 + $0x550] sm:$0xff]
      %v1272 = vld [vmem:[%s1 + $0x558] sm:$0xff]
      %v1273 = vld [vmem:[%s1 + $0x560] sm:$0xff]
      %v1274 = vld [vmem:[%s1 + $0x568] sm:$0xff]
      %v1275 = vld [vmem:[%s1 + $0x570] sm:$0xff]
      %v1276 = vld [vmem:[%s1 + $0x578] sm:$0xff]
      %v1277 = vld [vmem:[%s1 + $0x580] sm:$0xff]
      %v1278 = vld [vmem:[%s1 + $0x588] sm:$0xff]
      %v1279 = vld [vmem:[%s1 + $0x590] sm:$0xff]
      %v1280 = vld [vmem:[%s1 + $0x598] sm:$0xff]
      %v1281 = vld [vmem:[%s1 + $0x5a0] sm:$0xff]
      %v1282 = vld [vmem:[%s1 + $0x5a8] sm:$0xff]
      %v1283 = vld [vmem:[%s1 + $0x5b0] sm:$0xff]
      %v1284 = vld [vmem:[%s1 + $0x5b8] sm:$0xff]
      %v1285 = vld [vmem:[%s1 + $0x5c0] sm:$0xff]
      %v1286 = vld [vmem:[%s1 + $0x5c8] sm:$0xff]
      %v1287 = vld [vmem:[%s1 + $0x5d0] sm:$0xff]
      %v1288 = vld [vmem:[%s1 + $0x5d8] sm:$0xff]
      %v1289 = vld [vmem:[%s1 + $0x5e0] sm:$0xff]
      %v1290 = vld [vmem:[%s1 + $0x5e8] sm:$0xff]
      %v1291 = vld [vmem:[%s1 + $0x5f0] sm:$0xff]
      %v1292 = vld [vmem:[%s1 + $0x5f8] sm:$0xff]
      %v1293 = vld [vmem:[%s1 + $0x600] sm:$0xff]
      %v1294 = vld [vmem:[%s1 + $0x608] sm:$0xff]
      %v1295 = vld [vmem:[%s1 + $0x610] sm:$0xff]
      %v1296 = vld [vmem:[%s1 + $0x618] sm:$0xff]
      %v1297 = vld [vmem:[%s1 + $0x620] sm:$0xff]
      %v1298 = vld [vmem:[%s1 + $0x628] sm:$0xff]
      %v1299 = vld [vmem:[%s1 + $0x630] sm:$0xff]
      %v1300 = vld [vmem:[%s1 + $0x638] sm:$0xff]
      %v1301 = vld [vmem:[%s1 + $0x640] sm:$0xff]
      %v1302 = vld [vmem:[%s1 + $0x648] sm:$0xff]
      %v1303 = vld [vmem:[%s1 + $0x650] sm:$0xff]
      %v1304 = vld [vmem:[%s1 + $0x658] sm:$0xff]
      %v1305 = vld [vmem:[%s1 + $0x660] sm:$0xff]
      %v1306 = vld [vmem:[%s1 + $0x668] sm:$0xff]
      %v1307 = vld [vmem:[%s1 + $0x670] sm:$0xff]
      %v1308 = vld [vmem:[%s1 + $0x678] sm:$0xff]
      %v1309 = vld [vmem:[%s1 + $0x680] sm:$0xff]
      %v1310 = vld [vmem:[%s1 + $0x688] sm:$0xff]
      %v1311 = vld [vmem:[%s1 + $0x690] sm:$0xff]
      %v1312 = vld [vmem:[%s1 + $0x698] sm:$0xff]
      %v1313 = vld [vmem:[%s1 + $0x6a0] sm:$0xff]
      %v1314 = vld [vmem:[%s1 + $0x6a8] sm:$0xff]
      %v1315 = vld [vmem:[%s1 + $0x6b0] sm:$0xff]
      %v1316 = vld [vmem:[%s1 + $0x6b8] sm:$0xff]
      %v1317 = vld [vmem:[%s1 + $0x6c0] sm:$0xff]
      %v1318 = vld [vmem:[%s1 + $0x6c8] sm:$0xff]
      %v1319 = vld [vmem:[%s1 + $0x6d0] sm:$0xff]
      %v1320 = vld [vmem:[%s1 + $0x6d8] sm:$0xff]
      %v1321 = vld [vmem:[%s1 + $0x6e0] sm:$0xff]
      %v1322 = vld [vmem:[%s1 + $0x6e8] sm:$0xff]
      %v1323 = vld [vmem:[%s1 + $0x6f0] sm:$0xff]
      %v1324 = vld [vmem:[%s1 + $0x6f8] sm:$0xff]
      %v1325 = vld [vmem:[%s1 + $0x700] sm:$0xff]
      %v1326 = vld [vmem:[%s1 + $0x708] sm:$0xff]
      %v1327 = vld [vmem:[%s1 + $0x710] sm:$0xff]
      %v1328 = vld [vmem:[%s1 + $0x718] sm:$0xff]
      %v1329 = vld [vmem:[%s1 + $0x720] sm:$0xff]
      %v1330 = vld [vmem:[%s1 + $0x728] sm:$0xff]
      %v1331 = vld [vmem:[%s1 + $0x730] sm:$0xff]
      %v1332 = vld [vmem:[%s1 + $0x738] sm:$0xff]
      %v1333 = vld [vmem:[%s1 + $0x740] sm:$0xff]
      %v1334 = vld [vmem:[%s1 + $0x748] sm:$0xff]
      %v1335 = vld [vmem:[%s1 + $0x750] sm:$0xff]
      %v1336 = vld [vmem:[%s1 + $0x758] sm:$0xff]
      %v1337 = vld [vmem:[%s1 + $0x760] sm:$0xff]
      %v1338 = vld [vmem:[%s1 + $0x768] sm:$0xff]
      %v1339 = vld [vmem:[%s1 + $0x770] sm:$0xff]
      %v1340 = vld [vmem:[%s1 + $0x778] sm:$0xff]
      %v1341 = vld [vmem:[%s1 + $0x780] sm:$0xff]
      %v1342 = vld [vmem:[%s1 + $0x788] sm:$0xff]
      %v1343 = vld [vmem:[%s1 + $0x790] sm:$0xff]
      %v1344 = vld [vmem:[%s1 + $0x798] sm:$0xff]
      %v1345 = vld [vmem:[%s1 + $0x7a0] sm:$0xff]
      %v1346 = vld [vmem:[%s1 + $0x7a8] sm:$0xff]
      %v1347 = vld [vmem:[%s1 + $0x7b0] sm:$0xff]
      %v1348 = vld [vmem:[%s1 + $0x7b8] sm:$0xff]
      %v1349 = vld [vmem:[%s1 + $0x7c0] sm:$0xff]
      %v1350 = vld [vmem:[%s1 + $0x7c8] sm:$0xff]
      %v1351 = vld [vmem:[%s1 + $0x7d0] sm:$0xff]
      %v1352 = vld [vmem:[%s1 + $0x7d8] sm:$0xff]
      %v1353 = vld [vmem:[%s1 + $0x7e0] sm:$0xff]
      %v1354 = vld [vmem:[%s1 + $0x7e8] sm:$0xff]
      %v1355 = vld [vmem:[%s1 + $0x7f0] sm:$0xff]
      %v1356 = vld [vmem:[%s1 + $0x7f8] sm:$0xff]
      %v1357 = vld [vmem:[%s1 + $0x800] sm:$0xff]
      %v1358 = vld [vmem:[%s1 + $0x808] sm:$0xff]
      %v1359 = vld [vmem:[%s1 + $0x810] sm:$0xff]
      %v1360 = vld [vmem:[%s1 + $0x818] sm:$0xff]
      %v1361 = vld [vmem:[%s1 + $0x820] sm:$0xff]
      %v1362 = vld [vmem:[%s1 + $0x828] sm:$0xff]
      %v1363 = vld [vmem:[%s1 + $0x830] sm:$0xff]
      %v1364 = vld [vmem:[%s1 + $0x838] sm:$0xff]
      %v1365 = vld [vmem:[%s1 + $0x840] sm:$0xff]
      %v1366 = vld [vmem:[%s1 + $0x848] sm:$0xff]
      %v1367 = vld [vmem:[%s1 + $0x850] sm:$0xff]
      %v1368 = vld [vmem:[%s1 + $0x858] sm:$0xff]
      %v1369 = vld [vmem:[%s1 + $0x860] sm:$0xff]
      %v1370 = vld [vmem:[%s1 + $0x868] sm:$0xff]
      %v1371 = vld [vmem:[%s1 + $0x870] sm:$0xff]
      %v1372 = vld [vmem:[%s1 + $0x878] sm:$0xff]
      %v1373 = vld [vmem:[%s1 + $0x880] sm:$0xff]
      %v1374 = vld [vmem:[%s1 + $0x888] sm:$0xff]
      %v1375 = vld [vmem:[%s1 + $0x890] sm:$0xff]
      %v1376 = vld [vmem:[%s1 + $0x898] sm:$0xff]
      %v1377 = vld [vmem:[%s1 + $0x8a0] sm:$0xff]
      %v1378 = vld [vmem:[%s1 + $0x8a8] sm:$0xff]
      %v1379 = vld [vmem:[%s1 + $0x8b0] sm:$0xff]
      %v1380 = vld [vmem:[%s1 + $0x8b8] sm:$0xff]
      %v1381 = vld [vmem:[%s1 + $0x8c0] sm:$0xff]
      %v1382 = vld [vmem:[%s1 + $0x8c8] sm:$0xff]
      %v1383 = vld [vmem:[%s1 + $0x8d0] sm:$0xff]
      %v1384 = vld [vmem:[%s1 + $0x8d8] sm:$0xff]
      %v1385 = vld [vmem:[%s1 + $0x8e0] sm:$0xff]
      %v1386 = vld [vmem:[%s1 + $0x8e8] sm:$0xff]
      %v1387 = vld [vmem:[%s1 + $0x8f0] sm:$0xff]
      %v1388 = vld [vmem:[%s1 + $0x8f8] sm:$0xff]
      %v1389 = vld [vmem:[%s1 + $0x900] sm:$0xff]
      %v1390 = vld [vmem:[%s1 + $0x908] sm:$0xff]
      %v1391 = vld [vmem:[%s1 + $0x910] sm:$0xff]
      %v1392 = vld [vmem:[%s1 + $0x918] sm:$0xff]
      %v1393 = vld [vmem:[%s1 + $0x920] sm:$0xff]
      %v1394 = vld [vmem:[%s1 + $0x928] sm:$0xff]
      %v1395 = vld [vmem:[%s1 + $0x930] sm:$0xff]
      %v1396 = vld [vmem:[%s1 + $0x938] sm:$0xff]
      %v1397 = vld [vmem:[%s1 + $0x940] sm:$0xff]
      %v1398 = vld [vmem:[%s1 + $0x948] sm:$0xff]
      %v1399 = vld [vmem:[%s1 + $0x950] sm:$0xff]
      %v1400 = vld [vmem:[%s1 + $0x958] sm:$0xff]
      %v1401 = vld [vmem:[%s1 + $0x960] sm:$0xff]
      %v1402 = vld [vmem:[%s1 + $0x968] sm:$0xff]
      %v1403 = vld [vmem:[%s1 + $0x970] sm:$0xff]
      %v1404 = vld [vmem:[%s1 + $0x978] sm:$0xff]
      %v1405 = vld [vmem:[%s1 + $0x980] sm:$0xff]
      %v1406 = vld [vmem:[%s1 + $0x988] sm:$0xff]
      %v1407 = vld [vmem:[%s1 + $0x990] sm:$0xff]
      %v1408 = vld [vmem:[%s1 + $0x998] sm:$0xff]
      %v1409 = vld [vmem:[%s1 + $0x9a0] sm:$0xff]
      %v1410 = vld [vmem:[%s1 + $0x9a8] sm:$0xff]
      %v1411 = vld [vmem:[%s1 + $0x9b0] sm:$0xff]
      %v1412 = vld [vmem:[%s1 + $0x9b8] sm:$0xff]
      %v1413 = vld [vmem:[%s1 + $0x9c0] sm:$0xff]
      %v1414 = vld [vmem:[%s1 + $0x9c8] sm:$0xff]
      %v1415 = vld [vmem:[%s1 + $0x9d0] sm:$0xff]
      %v1416 = vld [vmem:[%s1 + $0x9d8] sm:$0xff]
      %v1417 = vld [vmem:[%s1 + $0x9e0] sm:$0xff]
      %v1418 = vld [vmem:[%s1 + $0x9e8] sm:$0xff]
      %v1419 = vld [vmem:[%s1 + $0x9f0] sm:$0xff]
      %v1420 = vld [vmem:[%s1 + $0x9f8] sm:$0xff]
      %v1421 = vld [vmem:[%s1 + $0xa00] sm:$0xff]
      %v1422 = vld [vmem:[%s1 + $0xa08] sm:$0xff]
      %v1423 = vld [vmem:[%s1 + $0xa10] sm:$0xff]
      %v1424 = vld [vmem:[%s1 + $0xa18] sm:$0xff]
      %v1425 = vld [vmem:[%s1 + $0xa20] sm:$0xff]
      %v1426 = vld [vmem:[%s1 + $0xa28] sm:$0xff]
      %v1427 = vld [vmem:[%s1 + $0xa30] sm:$0xff]
      %v1428 = vld [vmem:[%s1 + $0xa38] sm:$0xff]
      %v1429 = vld [vmem:[%s1 + $0xa40] sm:$0xff]
      %v1430 = vld [vmem:[%s1 + $0xa48] sm:$0xff]
      %v1431 = vld [vmem:[%s1 + $0xa50] sm:$0xff]
      %v1432 = vld [vmem:[%s1 + $0xa58] sm:$0xff]
      %v1433 = vld [vmem:[%s1 + $0xa60] sm:$0xff]
      %v1434 = vld [vmem:[%s1 + $0xa68] sm:$0xff]
      %v1435 = vld [vmem:[%s1 + $0xa70] sm:$0xff]
      %v1436 = vld [vmem:[%s1 + $0xa78] sm:$0xff]
      %v1437 = vld [vmem:[%s1 + $0xa80] sm:$0xff]
      %v1438 = vld [vmem:[%s1 + $0xa88] sm:$0xff]
      %v1439 = vld [vmem:[%s1 + $0xa90] sm:$0xff]
      %v1440 = vld [vmem:[%s1 + $0xa98] sm:$0xff]
      %v1441 = vld [vmem:[%s1 + $0xaa0] sm:$0xff]
      %v1442 = vld [vmem:[%s1 + $0xaa8] sm:$0xff]
      %v1443 = vld [vmem:[%s1 + $0xab0] sm:$0xff]
      %v1444 = vld [vmem:[%s1 + $0xab8] sm:$0xff]
      %v1445 = vld [vmem:[%s1 + $0xac0] sm:$0xff]
      %v1446 = vld [vmem:[%s1 + $0xac8] sm:$0xff]
      %v1447 = vld [vmem:[%s1 + $0xad0] sm:$0xff]
      %v1448 = vld [vmem:[%s1 + $0xad8] sm:$0xff]
      %v1449 = vld [vmem:[%s1 + $0xae0] sm:$0xff]
      %v1450 = vld [vmem:[%s1 + $0xae8] sm:$0xff]
      %v1451 = vld [vmem:[%s1 + $0xaf0] sm:$0xff]
      %v1452 = vld [vmem:[%s1 + $0xaf8] sm:$0xff]
      %v1453 = vld [vmem:[%s1 + $0xb00] sm:$0xff]
      %v1454 = vld [vmem:[%s1 + $0xb08] sm:$0xff]
      %v1455 = vld [vmem:[%s1 + $0xb10] sm:$0xff]
      %v1456 = vld [vmem:[%s1 + $0xb18] sm:$0xff]
      %v1457 = vld [vmem:[%s1 + $0xb20] sm:$0xff]
      %v1458 = vld [vmem:[%s1 + $0xb28] sm:$0xff]
      %v1459 = vld [vmem:[%s1 + $0xb30] sm:$0xff]
      %v1460 = vld [vmem:[%s1 + $0xb38] sm:$0xff]
      %v1461 = vld [vmem:[%s1 + $0xb40] sm:$0xff]
      %v1462 = vld [vmem:[%s1 + $0xb48] sm:$0xff]
      %v1463 = vld [vmem:[%s1 + $0xb50] sm:$0xff]
      %v1464 = vld [vmem:[%s1 + $0xb58] sm:$0xff]
      %v1465 = vld [vmem:[%s1 + $0xb60] sm:$0xff]
      %v1466 = vld [vmem:[%s1 + $0xb68] sm:$0xff]
      %v1467 = vld [vmem:[%s1 + $0xb70] sm:$0xff]
      %v1468 = vld [vmem:[%s1 + $0xb78] sm:$0xff]
      %v1469 = vld [vmem:[%s1 + $0xb80] sm:$0xff]
      %v1470 = vld [vmem:[%s1 + $0xb88] sm:$0xff]
      %v1471 = vld [vmem:[%s1 + $0xb90] sm:$0xff]
      %v1472 = vld [vmem:[%s1 + $0xb98] sm:$0xff]
      %v1473 = vld [vmem:[%s1 + $0xba0] sm:$0xff]
      %v1474 = vld [vmem:[%s1 + $0xba8] sm:$0xff]
      %v1475 = vld [vmem:[%s1 + $0xbb0] sm:$0xff]
      %v1476 = vld [vmem:[%s1 + $0xbb8] sm:$0xff]
      %v1477 = vld [vmem:[%s1 + $0xbc0] sm:$0xff]
      %v1478 = vld [vmem:[%s1 + $0xbc8] sm:$0xff]
      %v1479 = vld [vmem:[%s1 + $0xbd0] sm:$0xff]
      %v1480 = vld [vmem:[%s1 + $0xbd8] sm:$0xff]
      %v1481 = vld [vmem:[%s1 + $0xbe0] sm:$0xff]
      %v1482 = vld [vmem:[%s1 + $0xbe8] sm:$0xff]
      %v1483 = vld [vmem:[%s1 + $0xbf0] sm:$0xff]
      %v1484 = vld [vmem:[%s1 + $0xbf8] sm:$0xff]
      %v1485 = vld [vmem:[%s1 + $0xc00] sm:$0xff]
      %v1486 = vld [vmem:[%s1 + $0xc08] sm:$0xff]
      %v1487 = vld [vmem:[%s1 + $0xc10] sm:$0xff]
      %v1488 = vld [vmem:[%s1 + $0xc18] sm:$0xff]
      %v1489 = vld [vmem:[%s1 + $0xc20] sm:$0xff]
      %v1490 = vld [vmem:[%s1 + $0xc28] sm:$0xff]
      %v1491 = vld [vmem:[%s1 + $0xc30] sm:$0xff]
      %v1492 = vld [vmem:[%s1 + $0xc38] sm:$0xff]
      %v1493 = vld [vmem:[%s1 + $0xc40] sm:$0xff]
      %v1494 = vld [vmem:[%s1 + $0xc48] sm:$0xff]
      %v1495 = vld [vmem:[%s1 + $0xc50] sm:$0xff]
      %v1496 = vld [vmem:[%s1 + $0xc58] sm:$0xff]
      %v1497 = vld [vmem:[%s1 + $0xc60] sm:$0xff]
      %v1498 = vld [vmem:[%s1 + $0xc68] sm:$0xff]
      %v1499 = vld [vmem:[%s1 + $0xc70] sm:$0xff]
      %v1500 = vld [vmem:[%s1 + $0xc78] sm:$0xff]
      %v1501 = vld [vmem:[%s1 + $0xc80] sm:$0xff]
      %v1502 = vld [vmem:[%s1 + $0xc88] sm:$0xff]
      %v1503 = vld [vmem:[%s1 + $0xc90] sm:$0xff]
      %v1504 = vld [vmem:[%s1 + $0xc98] sm:$0xff]
      %v1505 = vld [vmem:[%s1 + $0xca0] sm:$0xff]
      %v1506 = vld [vmem:[%s1 + $0xca8] sm:$0xff]
      %v1507 = vld [vmem:[%s1 + $0xcb0] sm:$0xff]
      %v1508 = vld [vmem:[%s1 + $0xcb8] sm:$0xff]
      %v1509 = vld [vmem:[%s1 + $0xcc0] sm:$0xff]
      %v1510 = vld [vmem:[%s1 + $0xcc8] sm:$0xff]
      %v1511 = vld [vmem:[%s1 + $0xcd0] sm:$0xff]
      %v1512 = vld [vmem:[%s1 + $0xcd8] sm:$0xff]
      %v1513 = vld [vmem:[%s1 + $0xce0] sm:$0xff]
      %v1514 = vld [vmem:[%s1 + $0xce8] sm:$0xff]
      %v1515 = vld [vmem:[%s1 + $0xcf0] sm:$0xff]
      %v1516 = vld [vmem:[%s1 + $0xcf8] sm:$0xff]
      %v1517 = vld [vmem:[%s1 + $0xd00] sm:$0xff]
      %v1518 = vld [vmem:[%s1 + $0xd08] sm:$0xff]
      %v1519 = vld [vmem:[%s1 + $0xd10] sm:$0xff]
      %v1520 = vld [vmem:[%s1 + $0xd18] sm:$0xff]
      %v1521 = vld [vmem:[%s1 + $0xd20] sm:$0xff]
      %v1522 = vld [vmem:[%s1 + $0xd28] sm:$0xff]
      %v1523 = vld [vmem:[%s1 + $0xd30] sm:$0xff]
      %v1524 = vld [vmem:[%s1 + $0xd38] sm:$0xff]
      %v1525 = vld [vmem:[%s1 + $0xd40] sm:$0xff]
      %v1526 = vld [vmem:[%s1 + $0xd48] sm:$0xff]
      %v1527 = vld [vmem:[%s1 + $0xd50] sm:$0xff]
      %v1528 = vld [vmem:[%s1 + $0xd58] sm:$0xff]
      %v1529 = vld [vmem:[%s1 + $0xd60] sm:$0xff]
      %v1530 = vld [vmem:[%s1 + $0xd68] sm:$0xff]
      %v1531 = vld [vmem:[%s1 + $0xd70] sm:$0xff]
      %v1532 = vld [vmem:[%s1 + $0xd78] sm:$0xff]
      %1533 = vmatprep.subr.mxu0 0.0
      %1534 = vmatpush1.msra.mxu0 %v1101
      %1535 = vmatprep.subr.mxu0 0.0
      %1536 = vmatpush1.msra.mxu0 %v1102
      %1537 = vmatprep.subr.mxu0 0.0
      %1538 = vmatpush1.msra.mxu0 %v1103
      %1539 = vmatprep.subr.mxu0 0.0
      %1540 = vmatpush1.msra.mxu0 %v1104
      %1541 = vmatprep.subr.mxu0 0.0
      %1542 = vmatpush1.msra.mxu0 %v1105
      %1543 = vmatprep.subr.mxu0 0.0
      %1544 = vmatpush1.msra.mxu0 %v1106
      %1545 = vmatprep.subr.mxu0 0.0
      %1546 = vmatpush1.msra.mxu0 %v1107
      %1547 = vmatprep.subr.mxu0 0.0
      %1548 = vmatpush1.msra.mxu0 %v1108
      %1549 = vmatprep.subr.mxu0 0.0
      %1550 = vmatpush1.msra.mxu0 %v1109
      %1551 = vmatprep.subr.mxu0 0.0
      %1552 = vmatpush1.msra.mxu0 %v1110
      %1553 = vmatprep.subr.mxu0 0.0
      %1554 = vmatpush1.msra.mxu0 %v1111
      %1555 = vmatprep.subr.mxu0 0.0
      %1556 = vmatpush1.msra.mxu0 %v1112
      %1557 = vmatprep.subr.mxu0 0.0
      %1558 = vmatpush1.msra.mxu0 %v1113
      %1559 = vmatprep.subr.mxu0 0.0
      %1560 = vmatpush1.msra.mxu0 %v1114
      %1561 = vmatprep.subr.mxu0 0.0
      %1562 = vmatpush1.msra.mxu0 %v1115
      %1563 = vmatprep.subr.mxu0 0.0
      %1564 = vmatpush1.msra.mxu0 %v1116
      %1565 = vmatprep.subr.mxu0 0.0
      %1566 = vmatpush1.msra.mxu0 %v1117
      %1567 = vmatprep.subr.mxu0 0.0
      %1568 = vmatpush1.msra.mxu0 %v1118
      %1569 = vmatprep.subr.mxu0 0.0
      %1570 = vmatpush1.msra.mxu0 %v1119
      %1571 = vmatprep.subr.mxu0 0.0
      %1572 = vmatpush1.msra.mxu0 %v1120
      %1573 = vmatprep.subr.mxu0 0.0
      %1574 = vmatpush1.msra.mxu0 %v1121
      %1575 = vmatprep.subr.mxu0 0.0
      %1576 = vmatpush1.msra.mxu0 %v1122
      %1577 = vmatprep.subr.mxu0 0.0
      %1578 = vmatpush1.msra.mxu0 %v1123
      %1579 = vmatprep.subr.mxu0 0.0
      %1580 = vmatpush1.msra.mxu0 %v1124
      %1581 = vmatprep.subr.mxu0 0.0
      %1582 = vmatpush1.msra.mxu0 %v1125
      %1583 = vmatprep.subr.mxu0 0.0
      %1584 = vmatpush1.msra.mxu0 %v1126
      %1585 = vmatprep.subr.mxu0 0.0
      %1586 = vmatpush1.msra.mxu0 %v1127
      %1587 = vmatprep.subr.mxu0 0.0
      %1588 = vmatpush1.msra.mxu0 %v1128
      %1589 = vmatprep.subr.mxu0 0.0
      %1590 = vmatpush1.msra.mxu0 %v1129
      %1591 = vmatprep.subr.mxu0 0.0
      %1592 = vmatpush1.msra.mxu0 %v1130
      %1593 = vmatprep.subr.mxu0 0.0
      %1594 = vmatpush1.msra.mxu0 %v1131
      %1595 = vmatprep.subr.mxu0 0.0
      %1596 = vmatpush1.msra.mxu0 %v1132
      %1597 = vmatprep.mubr.f32.mxu0 %v261
      %1598 = vmatmul.mubr.f32.gmra.mrb[0].mxu0 %v229
      %v1599 = vpop.f32.mrb[0].mxu0
      %v1600 = vadd.f32 0.0, %v1599
      %v1601 = vpop.f32.mrb[0].mxu0
      %1602 = vmatprep.mubr.f32.mxu0 %v262
      %1603 = vmatmul.mubr.f32.gmra.mrb[0].mxu0 %v230
      %v1604 = vpop.f32.mrb[0].mxu0
      %v1605 = vadd.f32 0.0, %v1604
      %v1606 = vpop.f32.mrb[0].mxu0
      %1607 = vmatprep.mubr.f32.mxu0 %v263
      %1608 = vmatmul.mubr.f32.gmra.mrb[0].mxu0 %v231
      %v1609 = vpop.f32.mrb[0].mxu0
      %v1610 = vadd.f32 0.0, %v1609
      %v1611 = vpop.f32.mrb[0].mxu0
      %1612 = vmatprep.mubr.f32.mxu0 %v264
      %1613 = vmatmul.mubr.f32.gmra.mrb[0].mxu0 %v232
      %v1614 = vpop.f32.mrb[0].mxu0
      %v1615 = vadd.f32 0.0, %v1614
      %v1616 = vpop.f32.mrb[0].mxu0
      %1617 = vmatprep.mubr.f32.mxu0 %v265
      %1618 = vmatmul.mubr.f32.gmra.mrb[0].mxu0 %v233
      %v1619 = vpop.f32.mrb[0].mxu0
      %v1620 = vadd.f32 0.0, %v1619
      %v1621 = vpop.f32.mrb[0].mxu0
      %1622 = vmatprep.mubr.f32.mxu0 %v266
      %1623 = vmatmul.mubr.f32.gmra.mrb[0].mxu0 %v234
      %v1624 = vpop.f32.mrb[0].mxu0
      %v1625 = vadd.f32 0.0, %v1624
      %v1626 = vpop.f32.mrb[0].mxu0
      %1627 = vmatprep.mubr.f32.mxu0 %v267
      %1628 = vmatmul.mubr.f32.gmra.mrb[0].mxu0 %v235
      %v1629 = vpop.f32.mrb[0].mxu0
      %v1630 = vadd.f32 0.0, %v1629
      %v1631 = vpop.f32.mrb[0].mxu0
      %1632 = vmatprep.mubr.f32.mxu0 %v268
      %1633 = vmatmul.mubr.f32.gmra.mrb[0].mxu0 %v236
      %v1634 = vpop.f32.mrb[0].mxu0
      %v1635 = vadd.f32 0.0, %v1634
      %v1636 = vpop.f32.mrb[0].mxu0
      %1637 = vmatprep.mubr.f32.mxu0 %v269
      %1638 = vmatmul.mubr.f32.gmra.mrb[0].mxu0 %v237
      %v1639 = vpop.f32.mrb[0].mxu0
      %v1640 = vadd.f32 0.0, %v1639
      %v1641 = vpop.f32.mrb[0].mxu0
      %1642 = vmatprep.mubr.f32.mxu0 %v270
      %1643 = vmatmul.mubr.f32.gmra.mrb[0].mxu0 %v238
      %v1644 = vpop.f32.mrb[0].mxu0
      %v1645 = vadd.f32 0.0, %v1644
      %v1646 = vpop.f32.mrb[0].mxu0
      %1647 = vmatprep.mubr.f32.mxu0 %v271
      %1648 = vmatmul.mubr.f32.gmra.mrb[0].mxu0 %v239
      %v1649 = vpop.f32.mrb[0].mxu0
      %v1650 = vadd.f32 0.0, %v1649
      %v1651 = vpop.f32.mrb[0].mxu0
      %1652 = vmatprep.mubr.f32.mxu0 %v272
      %1653 = vmatmul.mubr.f32.gmra.mrb[0].mxu0 %v240
      %v1654 = vpop.f32.mrb[0].mxu0
      %v1655 = vadd.f32 0.0, %v1654
      %v1656 = vpop.f32.mrb[0].mxu0
      %1657 = vmatprep.mubr.f32.mxu0 %v273
      %1658 = vmatmul.mubr.f32.gmra.mrb[0].mxu0 %v241
      %v1659 = vpop.f32.mrb[0].mxu0
      %v1660 = vadd.f32 0.0, %v1659
      %v1661 = vpop.f32.mrb[0].mxu0
      %1662 = vmatprep.mubr.f32.mxu0 %v274
      %1663 = vmatmul.mubr.f32.gmra.mrb[0].mxu0 %v242
      %v1664 = vpop.f32.mrb[0].mxu0
      %v1665 = vadd.f32 0.0, %v1664
      %v1666 = vpop.f32.mrb[0].mxu0
      %1667 = vmatprep.mubr.f32.mxu0 %v275
      %1668 = vmatmul.mubr.f32.gmra.mrb[0].mxu0 %v243
      %v1669 = vpop.f32.mrb[0].mxu0
      %v1670 = vadd.f32 0.0, %v1669
      %v1671 = vpop.f32.mrb[0].mxu0
      %1672 = vmatprep.mubr.f32.mxu0 %v276
      %1673 = vmatmul.mubr.f32.gmra.mrb[0].mxu0 %v244
      %v1674 = vpop.f32.mrb[0].mxu0
      %v1675 = vadd.f32 0.0, %v1674
      %v1676 = vpop.f32.mrb[0].mxu0
      %1677 = vmatprep.mubr.f32.mxu0 %v277
      %1678 = vmatmul.mubr.f32.gmra.mrb[0].mxu0 %v245
      %v1679 = vpop.f32.mrb[0].mxu0
      %v1680 = vadd.f32 0.0, %v1679
      %v1681 = vpop.f32.mrb[0].mxu0
      %1682 = vmatprep.mubr.f32.mxu0 %v278
      %1683 = vmatmul.mubr.f32.gmra.mrb[0].mxu0 %v246
      %v1684 = vpop.f32.mrb[0].mxu0
      %v1685 = vadd.f32 0.0, %v1684
      %v1686 = vpop.f32.mrb[0].mxu0
      %1687 = vmatprep.mubr.f32.mxu0 %v279
      %1688 = vmatmul.mubr.f32.gmra.mrb[0].mxu0 %v247
      %v1689 = vpop.f32.mrb[0].mxu0
      %v1690 = vadd.f32 0.0, %v1689
      %v1691 = vpop.f32.mrb[0].mxu0
      %1692 = vmatprep.mubr.f32.mxu0 %v280
      %1693 = vmatmul.mubr.f32.gmra.mrb[0].mxu0 %v248
      %v1694 = vpop.f32.mrb[0].mxu0
      %v1695 = vadd.f32 0.0, %v1694
      %v1696 = vpop.f32.mrb[0].mxu0
      %1697 = vmatprep.mubr.f32.mxu0 %v281
      %1698 = vmatmul.mubr.f32.gmra.mrb[0].mxu0 %v249
      %v1699 = vpop.f32.mrb[0].mxu0
      %v1700 = vadd.f32 0.0, %v1699
      %v1701 = vpop.f32.mrb[0].mxu0
      %1702 = vmatprep.mubr.f32.mxu0 %v282
      %1703 = vmatmul.mubr.f32.gmra.mrb[0].mxu0 %v250
      %v1704 = vpop.f32.mrb[0].mxu0
      %v1705 = vadd.f32 0.0, %v1704
      %v1706 = vpop.f32.mrb[0].mxu0
      %1707 = vmatprep.mubr.f32.mxu0 %v283
      %1708 = vmatmul.mubr.f32.gmra.mrb[0].mxu0 %v251
      %v1709 = vpop.f32.mrb[0].mxu0
      %v1710 = vadd.f32 0.0, %v1709
      %v1711 = vpop.f32.mrb[0].mxu0
      %1712 = vmatprep.mubr.f32.mxu0 %v284
      %1713 = vmatmul.mubr.f32.gmra.mrb[0].mxu0 %v252
      %v1714 = vpop.f32.mrb[0].mxu0
      %v1715 = vadd.f32 0.0, %v1714
      %v1716 = vpop.f32.mrb[0].mxu0
      %1717 = vmatprep.mubr.f32.mxu0 %v285
      %1718 = vmatmul.mubr.f32.gmra.mrb[0].mxu0 %v253
      %v1719 = vpop.f32.mrb[0].mxu0
      %v1720 = vadd.f32 0.0, %v1719
      %v1721 = vpop.f32.mrb[0].mxu0
      %1722 = vmatprep.mubr.f32.mxu0 %v286
      %1723 = vmatmul.mubr.f32.gmra.mrb[0].mxu0 %v254
      %v1724 = vpop.f32.mrb[0].mxu0
      %v1725 = vadd.f32 0.0, %v1724
      %v1726 = vpop.f32.mrb[0].mxu0
      %1727 = vmatprep.mubr.f32.mxu0 %v287
      %1728 = vmatmul.mubr.f32.gmra.mrb[0].mxu0 %v255
      %v1729 = vpop.f32.mrb[0].mxu0
      %v1730 = vadd.f32 0.0, %v1729
      %v1731 = vpop.f32.mrb[0].mxu0
      %1732 = vmatprep.mubr.f32.mxu0 %v288
      %1733 = vmatmul.mubr.f32.gmra.mrb[0].mxu0 %v256
      %v1734 = vpop.f32.mrb[0].mxu0
      %v1735 = vadd.f32 0.0, %v1734
      %v1736 = vpop.f32.mrb[0].mxu0
      %1737 = vmatprep.mubr.f32.mxu0 %v289
      %1738 = vmatmul.mubr.f32.gmra.mrb[0].mxu0 %v257
      %v1739 = vpop.f32.mrb[0].mxu0
      %v1740 = vadd.f32 0.0, %v1739
      %v1741 = vpop.f32.mrb[0].mxu0
      %1742 = vmatprep.mubr.f32.mxu0 %v290
      %1743 = vmatmul.mubr.f32.gmra.mrb[0].mxu0 %v258
      %v1744 = vpop.f32.mrb[0].mxu0
      %v1745 = vadd.f32 0.0, %v1744
      %v1746 = vpop.f32.mrb[0].mxu0
      %1747 = vmatprep.mubr.f32.mxu0 %v291
      %1748 = vmatmul.mubr.f32.gmra.mrb[0].mxu0 %v259
      %v1749 = vpop.f32.mrb[0].mxu0
      %v1750 = vadd.f32 0.0, %v1749
      %v1751 = vpop.f32.mrb[0].mxu0
      %1752 = vmatprep.mubr.f32.mxu0 %v292
      %1753 = vmatmul.mubr.f32.gmra.mrb[0].mxu0 %v260
      %v1754 = vpop.f32.mrb[0].mxu0
      %v1755 = vadd.f32 0.0, %v1754
      %v1756 = vpop.f32.mrb[0].mxu0
      %1757 = vdwg.mxu0
      %1758 = vmatprep.subr.mxu0 0.0
      %1759 = vmatpush1.msra.mxu0 %v1133
      %1760 = vmatprep.subr.mxu0 0.0
      %1761 = vmatpush1.msra.mxu0 %v1134
      %1762 = vmatprep.subr.mxu0 0.0
      %1763 = vmatpush1.msra.mxu0 %v1135
      %1764 = vmatprep.subr.mxu0 0.0
      %1765 = vmatpush1.msra.mxu0 %v1136
      %1766 = vmatprep.subr.mxu0 0.0
      %1767 = vmatpush1.msra.mxu0 %v1137
      %1768 = vmatprep.subr.mxu0 0.0
      %1769 = vmatpush1.msra.mxu0 %v1138
      %1770 = vmatprep.subr.mxu0 0.0
      %1771 = vmatpush1.msra.mxu0 %v1139
      %1772 = vmatprep.subr.mxu0 0.0
      %1773 = vmatpush1.msra.mxu0 %v1140
      %1774 = vmatprep.subr.mxu0 0.0
      %1775 = vmatpush1.msra.mxu0 %v1141
      %1776 = vmatprep.subr.mxu0 0.0
      %1777 = vmatpush1.msra.mxu0 %v1142
      %1778 = vmatprep.subr.mxu0 0.0
      %1779 = vmatpush1.msra.mxu0 %v1143
      %1780 = vmatprep.subr.mxu0 0.0
      %1781 = vmatpush1.msra.mxu0 %v1144
      %1782 = vmatprep.subr.mxu0 0.0
      %1783 = vmatpush1.msra.mxu0 %v1145
      %1784 = vmatprep.subr.mxu0 0.0
      %1785 = vmatpush1.msra.mxu0 %v1146
      %1786 = vmatprep.subr.mxu0 0.0
      %1787 = vmatpush1.msra.mxu0 %v1147
      %1788 = vmatprep.subr.mxu0 0.0
      %1789 = vmatpush1.msra.mxu0 %v1148
      %1790 = vmatprep.subr.mxu0 0.0
      %1791 = vmatpush1.msra.mxu0 %v1149
      %1792 = vmatprep.subr.mxu0 0.0
      %1793 = vmatpush1.msra.mxu0 %v1150
      %1794 = vmatprep.subr.mxu0 0.0
      %1795 = vmatpush1.msra.mxu0 %v1151
      %1796 = vmatprep.subr.mxu0 0.0
      %1797 = vmatpush1.msra.mxu0 %v1152
      %1798 = vmatprep.subr.mxu0 0.0
      %1799 = vmatpush1.msra.mxu0 %v1153
      %1800 = vmatprep.subr.mxu0 0.0
      %1801 = vmatpush1.msra.mxu0 %v1154
      %1802 = vmatprep.subr.mxu0 0.0
      %1803 = vmatpush1.msra.mxu0 %v1155
      %1804 = vmatprep.subr.mxu0 0.0
      %1805 = vmatpush1.msra.mxu0 %v1156
      %1806 = vmatprep.subr.mxu0 0.0
      %1807 = vmatpush1.msra.mxu0 %v1157
      %1808 = vmatprep.subr.mxu0 0.0
      %1809 = vmatpush1.msra.mxu0 %v1158
      %1810 = vmatprep.subr.mxu0 0.0
      %1811 = vmatpush1.msra.mxu0 %v1159
      %1812 = vmatprep.subr.mxu0 0.0
      %1813 = vmatpush1.msra.mxu0 %v1160
      %1814 = vmatprep.subr.mxu0 0.0
      %1815 = vmatpush1.msra.mxu0 %v1161
      %1816 = vmatprep.subr.mxu0 0.0
      %1817 = vmatpush1.msra.mxu0 %v1162
      %1818 = vmatprep.subr.mxu0 0.0
      %1819 = vmatpush1.msra.mxu0 %v1163
      %1820 = vmatprep.subr.mxu0 0.0
      %1821 = vmatpush1.msra.mxu0 %v1164
      %1822 = vmatprep.mubr.f32.mxu0 %v326
      %1823 = vmatmul.mubr.f32.gmra.mrb[0].mxu0 %v293
      %v1824 = vpop.f32.mrb[0].mxu0
      %v1825 = vadd.f32 %v1600, %v1824
      %v1826 = vpop.f32.mrb[0].mxu0
      %1827 = vmatprep.mubr.f32.mxu0 %v327
      %1828 = vmatmul.mubr.f32.gmra.mrb[0].mxu0 %v294
      %v1829 = vpop.f32.mrb[0].mxu0
      %v1830 = vadd.f32 %v1605, %v1829
      %v1831 = vpop.f32.mrb[0].mxu0
      %1832 = vmatprep.mubr.f32.mxu0 %v328
      %1833 = vmatmul.mubr.f32.gmra.mrb[0].mxu0 %v295
      %v1834 = vpop.f32.mrb[0].mxu0
      %v1835 = vadd.f32 %v1610, %v1834
      %v1836 = vpop.f32.mrb[0].mxu0
      %1837 = vmatprep.mubr.f32.mxu0 %v329
      %1838 = vmatmul.mubr.f32.gmra.mrb[0].mxu0 %v296
      %v1839 = vpop.f32.mrb[0].mxu0
      %v1840 = vadd.f32 %v1615, %v1839
      %v1841 = vpop.f32.mrb[0].mxu0
      %1842 = vmatprep.mubr.f32.mxu0 %v330
      %1843 = vmatmul.mubr.f32.gmra.mrb[0].mxu0 %v297
      %v1844 = vpop.f32.mrb[0].mxu0
      %v1845 = vadd.f32 %v1620, %v1844
      %v1846 = vpop.f32.mrb[0].mxu0
      %1847 = vmatprep.mubr.f32.mxu0 %v331
      %1848 = vmatmul.mubr.f32.gmra.mrb[0].mxu0 %v298
      %v1849 = vpop.f32.mrb[0].mxu0
      %v1850 = vadd.f32 %v1625, %v1849
      %v1851 = vpop.f32.mrb[0].mxu0
      %1852 = vmatprep.mubr.f32.mxu0 %v332
      %1853 = vmatmul.mubr.f32.gmra.mrb[0].mxu0 %v299
      %v1854 = vpop.f32.mrb[0].mxu0
      %v1855 = vadd.f32 %v1630, %v1854
      %v1856 = vpop.f32.mrb[0].mxu0
      %1857 = vmatprep.mubr.f32.mxu0 %v333
      %1858 = vmatmul.mubr.f32.gmra.mrb[0].mxu0 %v300
      %v1859 = vpop.f32.mrb[0].mxu0
      %v1860 = vadd.f32 %v1635, %v1859
      %v1861 = vpop.f32.mrb[0].mxu0
      %1862 = vmatprep.mubr.f32.mxu0 %v334
      %1863 = vmatmul.mubr.f32.gmra.mrb[0].mxu0 %v301
      %v1864 = vpop.f32.mrb[0].mxu0
      %v1865 = vadd.f32 %v1640, %v1864
      %v1866 = vpop.f32.mrb[0].mxu0
      %1867 = vmatprep.mubr.f32.mxu0 %v335
      %1868 = vmatmul.mubr.f32.gmra.mrb[0].mxu0 %v302
      %v1869 = vpop.f32.mrb[0].mxu0
      %v1870 = vadd.f32 %v1645, %v1869
      %v1871 = vpop.f32.mrb[0].mxu0
      %1872 = vmatprep.mubr.f32.mxu0 %v336
      %1873 = vmatmul.mubr.f32.gmra.mrb[0].mxu0 %v303
      %v1874 = vpop.f32.mrb[0].mxu0
      %v1875 = vadd.f32 %v1650, %v1874
      %v1876 = vpop.f32.mrb[0].mxu0
      %1877 = vmatprep.mubr.f32.mxu0 %v337
      %1878 = vmatmul.mubr.f32.gmra.mrb[0].mxu0 %v304
      %v1879 = vpop.f32.mrb[0].mxu0
      %v1880 = vadd.f32 %v1655, %v1879
      %v1881 = vpop.f32.mrb[0].mxu0
      %1882 = vmatprep.mubr.f32.mxu0 %v338
      %1883 = vmatmul.mubr.f32.gmra.mrb[0].mxu0 %v305
      %v1884 = vpop.f32.mrb[0].mxu0
      %v1885 = vadd.f32 %v1660, %v1884
      %v1886 = vpop.f32.mrb[0].mxu0
      %1887 = vmatprep.mubr.f32.mxu0 %v339
      %1888 = vmatmul.mubr.f32.gmra.mrb[0].mxu0 %v306
      %v1889 = vpop.f32.mrb[0].mxu0
      %v1890 = vadd.f32 %v1665, %v1889
      %v1891 = vpop.f32.mrb[0].mxu0
      %1892 = vmatprep.mubr.f32.mxu0 %v340
      %1893 = vmatmul.mubr.f32.gmra.mrb[0].mxu0 %v307
      %v1894 = vpop.f32.mrb[0].mxu0
      %v1895 = vadd.f32 %v1670, %v1894
      %v1896 = vpop.f32.mrb[0].mxu0
      %1897 = vmatprep.mubr.f32.mxu0 %v341
      %1898 = vmatmul.mubr.f32.gmra.mrb[0].mxu0 %v308
      %v1899 = vpop.f32.mrb[0].mxu0
      %v1900 = vadd.f32 %v1675, %v1899
      %v1901 = vpop.f32.mrb[0].mxu0
      %1902 = vmatprep.mubr.f32.mxu0 %v342
      %1903 = vmatmul.mubr.f32.gmra.mrb[0].mxu0 %v309
      %v1904 = vpop.f32.mrb[0].mxu0
      %v1905 = vadd.f32 %v1680, %v1904
      %v1906 = vpop.f32.mrb[0].mxu0
      %1907 = vmatprep.mubr.f32.mxu0 %v343
      %1908 = vmatmul.mubr.f32.gmra.mrb[0].mxu0 %v310
      %v1909 = vpop.f32.mrb[0].mxu0
      %v1910 = vadd.f32 %v1685, %v1909
      %v1911 = vpop.f32.mrb[0].mxu0
      %1912 = vmatprep.mubr.f32.mxu0 %v344
      %1913 = vmatmul.mubr.f32.gmra.mrb[0].mxu0 %v311
      %v1914 = vpop.f32.mrb[0].mxu0
      %v1915 = vadd.f32 %v1690, %v1914
      %v1916 = vpop.f32.mrb[0].mxu0
      %1917 = vmatprep.mubr.f32.mxu0 %v345
      %1918 = vmatmul.mubr.f32.gmra.mrb[0].mxu0 %v312
      %v1919 = vpop.f32.mrb[0].mxu0
      %v1920 = vadd.f32 %v1695, %v1919
      %v1921 = vpop.f32.mrb[0].mxu0
      %1922 = vmatprep.mubr.f32.mxu0 %v346
      %1923 = vmatmul.mubr.f32.gmra.mrb[0].mxu0 %v313
      %v1924 = vpop.f32.mrb[0].mxu0
      %v1925 = vadd.f32 %v1700, %v1924
      %v1926 = vpop.f32.mrb[0].mxu0
      %1927 = vmatprep.mubr.f32.mxu0 %v347
      %1928 = vmatmul.mubr.f32.gmra.mrb[0].mxu0 %v314
      %v1929 = vpop.f32.mrb[0].mxu0
      %v1930 = vadd.f32 %v1705, %v1929
      %v1931 = vpop.f32.mrb[0].mxu0
      %1932 = vmatprep.mubr.f32.mxu0 %v348
      %1933 = vmatmul.mubr.f32.gmra.mrb[0].mxu0 %v315
      %v1934 = vpop.f32.mrb[0].mxu0
      %v1935 = vadd.f32 %v1710, %v1934
      %v1936 = vpop.f32.mrb[0].mxu0
      %1937 = vmatprep.mubr.f32.mxu0 %v349
      %1938 = vmatmul.mubr.f32.gmra.mrb[0].mxu0 %v316
      %v1939 = vpop.f32.mrb[0].mxu0
      %v1940 = vadd.f32 %v1715, %v1939
      %v1941 = vpop.f32.mrb[0].mxu0
      %1942 = vmatprep.mubr.f32.mxu0 %v350
      %1943 = vmatmul.mubr.f32.gmra.mrb[0].mxu0 %v317
      %v1944 = vpop.f32.mrb[0].mxu0
      %v1945 = vadd.f32 %v1720, %v1944
      %v1946 = vpop.f32.mrb[0].mxu0
      %1947 = vmatprep.mubr.f32.mxu0 %v351
      %1948 = vmatmul.mubr.f32.gmra.mrb[0].mxu0 %v318
      %v1949 = vpop.f32.mrb[0].mxu0
      %v1950 = vadd.f32 %v1725, %v1949
      %v1951 = vpop.f32.mrb[0].mxu0
      %1952 = vmatprep.mubr.f32.mxu0 %v352
      %1953 = vmatmul.mubr.f32.gmra.mrb[0].mxu0 %v319
      %v1954 = vpop.f32.mrb[0].mxu0
      %v1955 = vadd.f32 %v1730, %v1954
      %v1956 = vpop.f32.mrb[0].mxu0
      %1957 = vmatprep.mubr.f32.mxu0 %v353
      %1958 = vmatmul.mubr.f32.gmra.mrb[0].mxu0 %v320
      %v1959 = vpop.f32.mrb[0].mxu0
      %v1960 = vadd.f32 %v1735, %v1959
      %v1961 = vpop.f32.mrb[0].mxu0
      %1962 = vmatprep.mubr.f32.mxu0 %v354
      %1963 = vmatmul.mubr.f32.gmra.mrb[0].mxu0 %v321
      %v1964 = vpop.f32.mrb[0].mxu0
      %v1965 = vadd.f32 %v1740, %v1964
      %v1966 = vpop.f32.mrb[0].mxu0
      %1967 = vmatprep.mubr.f32.mxu0 %v355
      %1968 = vmatmul.mubr.f32.gmra.mrb[0].mxu0 %v322
      %v1969 = vpop.f32.mrb[0].mxu0
      %v1970 = vadd.f32 %v1745, %v1969
      %v1971 = vpop.f32.mrb[0].mxu0
      %1972 = vmatprep.mubr.f32.mxu0 %v356
      %1973 = vmatmul.mubr.f32.gmra.mrb[0].mxu0 %v323
      %v1974 = vpop.f32.mrb[0].mxu0
      %v1975 = vadd.f32 %v1750, %v1974
      %v1976 = vpop.f32.mrb[0].mxu0
      %1977 = vmatprep.mubr.f32.mxu0 %v357
      %1978 = vmatmul.mubr.f32.gmra.mrb[0].mxu0 %v324
      %v1979 = vpop.f32.mrb[0].mxu0
      %v1980 = vadd.f32 %v1755, %v1979
      %v1981 = vpop.f32.mrb[0].mxu0
      %1982 = vdwg.mxu0
      %1983 = vmatprep.subr.mxu0 0.0
      %1984 = vmatpush1.msra.mxu0 %v1165
      %1985 = vmatprep.subr.mxu0 0.0
      %1986 = vmatpush1.msra.mxu0 %v1166
      %1987 = vmatprep.subr.mxu0 0.0
      %1988 = vmatpush1.msra.mxu0 %v1167
      %1989 = vmatprep.subr.mxu0 0.0
      %1990 = vmatpush1.msra.mxu0 %v1168
      %1991 = vmatprep.subr.mxu0 0.0
      %1992 = vmatpush1.msra.mxu0 %v1169
      %1993 = vmatprep.subr.mxu0 0.0
      %1994 = vmatpush1.msra.mxu0 %v1170
      %1995 = vmatprep.subr.mxu0 0.0
      %1996 = vmatpush1.msra.mxu0 %v1171
      %1997 = vmatprep.subr.mxu0 0.0
      %1998 = vmatpush1.msra.mxu0 %v1172
      %1999 = vmatprep.subr.mxu0 0.0
      %2000 = vmatpush1.msra.mxu0 %v1173
      %2001 = vmatprep.subr.mxu0 0.0
      %2002 = vmatpush1.msra.mxu0 %v1174
      %2003 = vmatprep.subr.mxu0 0.0
      %2004 = vmatpush1.msra.mxu0 %v1175
      %2005 = vmatprep.subr.mxu0 0.0
      %2006 = vmatpush1.msra.mxu0 %v1176
      %2007 = vmatprep.subr.mxu0 0.0
      %2008 = vmatpush1.msra.mxu0 %v1177
      %2009 = vmatprep.subr.mxu0 0.0
      %2010 = vmatpush1.msra.mxu0 %v1178
      %2011 = vmatprep.subr.mxu0 0.0
      %2012 = vmatpush1.msra.mxu0 %v1179
      %2013 = vmatprep.subr.mxu0 0.0
      %2014 = vmatpush1.msra.mxu0 %v1180
      %2015 = vmatprep.subr.mxu0 0.0
      %2016 = vmatpush1.msra.mxu0 %v1181
      %2017 = vmatprep.subr.mxu0 0.0
      %2018 = vmatpush1.msra.mxu0 %v1182
      %2019 = vmatprep.subr.mxu0 0.0
      %2020 = vmatpush1.msra.mxu0 %v1183
      %2021 = vmatprep.subr.mxu0 0.0
      %2022 = vmatpush1.msra.mxu0 %v1184
      %2023 = vmatprep.subr.mxu0 0.0
      %2024 = vmatpush1.msra.mxu0 %v1185
      %2025 = vmatprep.subr.mxu0 0.0
      %2026 = vmatpush1.msra.mxu0 %v1186
      %2027 = vmatprep.subr.mxu0 0.0
      %2028 = vmatpush1.msra.mxu0 %v1187
      %2029 = vmatprep.subr.mxu0 0.0
      %2030 = vmatpush1.msra.mxu0 %v1188
      %2031 = vmatprep.subr.mxu0 0.0
      %2032 = vmatpush1.msra.mxu0 %v1189
      %2033 = vmatprep.subr.mxu0 0.0
      %2034 = vmatpush1.msra.mxu0 %v1190
      %2035 = vmatprep.subr.mxu0 0.0
      %2036 = vmatpush1.msra.mxu0 %v1191
      %2037 = vmatprep.subr.mxu0 0.0
      %2038 = vmatpush1.msra.mxu0 %v1192
      %2039 = vmatprep.subr.mxu0 0.0
      %2040 = vmatpush1.msra.mxu0 %v1193
      %2041 = vmatprep.subr.mxu0 0.0
      %2042 = vmatpush1.msra.mxu0 %v1194
      %2043 = vmatprep.subr.mxu0 0.0
      %2044 = vmatpush1.msra.mxu0 %v1195
      %2045 = vmatprep.subr.mxu0 0.0
      %2046 = vmatpush1.msra.mxu0 %v1196
      %2047 = vmatprep.mubr.f32.mxu0 %v390
      %2048 = vmatmul.mubr.f32.gmra.mrb[0].mxu0 %v358
      %v2049 = vpop.f32.mrb[0].mxu0
      %v2050 = vadd.f32 %v1825, %v2049
      %v2051 = vpop.f32.mrb[0].mxu0
      %2052 = vmatprep.mubr.f32.mxu0 %v391
      %2053 = vmatmul.mubr.f32.gmra.mrb[0].mxu0 %v359
      %v2054 = vpop.f32.mrb[0].mxu0
      %v2055 = vadd.f32 %v1830, %v2054
      %v2056 = vpop.f32.mrb[0].mxu0
      %2057 = vmatprep.mubr.f32.mxu0 %v392
      %2058 = vmatmul.mubr.f32.gmra.mrb[0].mxu0 %v360
      %v2059 = vpop.f32.mrb[0].mxu0
      %v2060 = vadd.f32 %v1835, %v2059
      %v2061 = vpop.f32.mrb[0].mxu0
      %2062 = vmatprep.mubr.f32.mxu0 %v393
      %2063 = vmatmul.mubr.f32.gmra.mrb[0].mxu0 %v361
      %v2064 = vpop.f32.mrb[0].mxu0
      %v2065 = vadd.f32 %v1840, %v2064
      %v2066 = vpop.f32.mrb[0].mxu0
      %2067 = vmatprep.mubr.f32.mxu0 %v394
      %2068 = vmatmul.mubr.f32.gmra.mrb[0].mxu0 %v362
      %v2069 = vpop.f32.mrb[0].mxu0
      %v2070 = vadd.f32 %v1845, %v2069
      %v2071 = vpop.f32.mrb[0].mxu0
      %2072 = vmatprep.mubr.f32.mxu0 %v395
      %2073 = vmatmul.mubr.f32.gmra.mrb[0].mxu0 %v363
      %v2074 = vpop.f32.mrb[0].mxu0
      %v2075 = vadd.f32 %v1850, %v2074
      %v2076 = vpop.f32.mrb[0].mxu0
      %2077 = vmatprep.mubr.f32.mxu0 %v396
      %2078 = vmatmul.mubr.f32.gmra.mrb[0].mxu0 %v364
      %v2079 = vpop.f32.mrb[0].mxu0
      %v2080 = vadd.f32 %v1855, %v2079
      %v2081 = vpop.f32.mrb[0].mxu0
      %2082 = vmatprep.mubr.f32.mxu0 %v397
      %2083 = vmatmul.mubr.f32.gmra.mrb[0].mxu0 %v365
      %v2084 = vpop.f32.mrb[0].mxu0
      %v2085 = vadd.f32 %v1860, %v2084
      %v2086 = vpop.f32.mrb[0].mxu0
      %2087 = vmatprep.mubr.f32.mxu0 %v398
      %2088 = vmatmul.mubr.f32.gmra.mrb[0].mxu0 %v366
      %v2089 = vpop.f32.mrb[0].mxu0
      %v2090 = vadd.f32 %v1865, %v2089
      %v2091 = vpop.f32.mrb[0].mxu0
      %2092 = vmatprep.mubr.f32.mxu0 %v399
      %2093 = vmatmul.mubr.f32.gmra.mrb[0].mxu0 %v367
      %v2094 = vpop.f32.mrb[0].mxu0
      %v2095 = vadd.f32 %v1870, %v2094
      %v2096 = vpop.f32.mrb[0].mxu0
      %2097 = vmatprep.mubr.f32.mxu0 %v400
      %2098 = vmatmul.mubr.f32.gmra.mrb[0].mxu0 %v368
      %v2099 = vpop.f32.mrb[0].mxu0
      %v2100 = vadd.f32 %v1875, %v2099
      %v2101 = vpop.f32.mrb[0].mxu0
      %2102 = vmatprep.mubr.f32.mxu0 %v401
      %2103 = vmatmul.mubr.f32.gmra.mrb[0].mxu0 %v369
      %v2104 = vpop.f32.mrb[0].mxu0
      %v2105 = vadd.f32 %v1880, %v2104
      %v2106 = vpop.f32.mrb[0].mxu0
      %2107 = vmatprep.mubr.f32.mxu0 %v402
      %2108 = vmatmul.mubr.f32.gmra.mrb[0].mxu0 %v370
      %v2109 = vpop.f32.mrb[0].mxu0
      %v2110 = vadd.f32 %v1885, %v2109
      %v2111 = vpop.f32.mrb[0].mxu0
      %2112 = vmatprep.mubr.f32.mxu0 %v403
      %2113 = vmatmul.mubr.f32.gmra.mrb[0].mxu0 %v371
      %v2114 = vpop.f32.mrb[0].mxu0
      %v2115 = vadd.f32 %v1890, %v2114
      %v2116 = vpop.f32.mrb[0].mxu0
      %2117 = vmatprep.mubr.f32.mxu0 %v404
      %2118 = vmatmul.mubr.f32.gmra.mrb[0].mxu0 %v372
      %v2119 = vpop.f32.mrb[0].mxu0
      %v2120 = vadd.f32 %v1895, %v2119
      %v2121 = vpop.f32.mrb[0].mxu0
      %2122 = vmatprep.mubr.f32.mxu0 %v405
      %2123 = vmatmul.mubr.f32.gmra.mrb[0].mxu0 %v373
      %v2124 = vpop.f32.mrb[0].mxu0
      %v2125 = vadd.f32 %v1900, %v2124
      %v2126 = vpop.f32.mrb[0].mxu0
      %2127 = vmatprep.mubr.f32.mxu0 %v406
      %2128 = vmatmul.mubr.f32.gmra.mrb[0].mxu0 %v374
      %v2129 = vpop.f32.mrb[0].mxu0
      %v2130 = vadd.f32 %v1905, %v2129
      %v2131 = vpop.f32.mrb[0].mxu0
      %2132 = vmatprep.mubr.f32.mxu0 %v407
      %2133 = vmatmul.mubr.f32.gmra.mrb[0].mxu0 %v375
      %v2134 = vpop.f32.mrb[0].mxu0
      %v2135 = vadd.f32 %v1910, %v2134
      %v2136 = vpop.f32.mrb[0].mxu0
      %2137 = vmatprep.mubr.f32.mxu0 %v408
      %2138 = vmatmul.mubr.f32.gmra.mrb[0].mxu0 %v376
      %v2139 = vpop.f32.mrb[0].mxu0
      %v2140 = vadd.f32 %v1915, %v2139
      %v2141 = vpop.f32.mrb[0].mxu0
      %2142 = vmatprep.mubr.f32.mxu0 %v409
      %2143 = vmatmul.mubr.f32.gmra.mrb[0].mxu0 %v377
      %v2144 = vpop.f32.mrb[0].mxu0
      %v2145 = vadd.f32 %v1920, %v2144
      %v2146 = vpop.f32.mrb[0].mxu0
      %2147 = vmatprep.mubr.f32.mxu0 %v410
      %2148 = vmatmul.mubr.f32.gmra.mrb[0].mxu0 %v378
      %v2149 = vpop.f32.mrb[0].mxu0
      %v2150 = vadd.f32 %v1925, %v2149
      %v2151 = vpop.f32.mrb[0].mxu0
      %2152 = vmatprep.mubr.f32.mxu0 %v411
      %2153 = vmatmul.mubr.f32.gmra.mrb[0].mxu0 %v379
      %v2154 = vpop.f32.mrb[0].mxu0
      %v2155 = vadd.f32 %v1930, %v2154
      %v2156 = vpop.f32.mrb[0].mxu0
      %2157 = vmatprep.mubr.f32.mxu0 %v412
      %2158 = vmatmul.mubr.f32.gmra.mrb[0].mxu0 %v380
      %v2159 = vpop.f32.mrb[0].mxu0
      %v2160 = vadd.f32 %v1935, %v2159
      %v2161 = vpop.f32.mrb[0].mxu0
      %2162 = vmatprep.mubr.f32.mxu0 %v413
      %2163 = vmatmul.mubr.f32.gmra.mrb[0].mxu0 %v381
      %v2164 = vpop.f32.mrb[0].mxu0
      %v2165 = vadd.f32 %v1940, %v2164
      %v2166 = vpop.f32.mrb[0].mxu0
      %2167 = vmatprep.mubr.f32.mxu0 %v414
      %2168 = vmatmul.mubr.f32.gmra.mrb[0].mxu0 %v382
      %v2169 = vpop.f32.mrb[0].mxu0
      %v2170 = vadd.f32 %v1945, %v2169
      %v2171 = vpop.f32.mrb[0].mxu0
      %2172 = vmatprep.mubr.f32.mxu0 %v415
      %2173 = vmatmul.mubr.f32.gmra.mrb[0].mxu0 %v383
      %v2174 = vpop.f32.mrb[0].mxu0
      %v2175 = vadd.f32 %v1950, %v2174
      %v2176 = vpop.f32.mrb[0].mxu0
      %2177 = vmatprep.mubr.f32.mxu0 %v416
      %2178 = vmatmul.mubr.f32.gmra.mrb[0].mxu0 %v384
      %v2179 = vpop.f32.mrb[0].mxu0
      %v2180 = vadd.f32 %v1955, %v2179
      %v2181 = vpop.f32.mrb[0].mxu0
      %2182 = vmatprep.mubr.f32.mxu0 %v417
      %2183 = vmatmul.mubr.f32.gmra.mrb[0].mxu0 %v385
      %v2184 = vpop.f32.mrb[0].mxu0
      %v2185 = vadd.f32 %v1960, %v2184
      %v2186 = vpop.f32.mrb[0].mxu0
      %2187 = vmatprep.mubr.f32.mxu0 %v418
      %2188 = vmatmul.mubr.f32.gmra.mrb[0].mxu0 %v386
      %v2189 = vpop.f32.mrb[0].mxu0
      %v2190 = vadd.f32 %v1965, %v2189
      %v2191 = vpop.f32.mrb[0].mxu0
      %2192 = vmatprep.mubr.f32.mxu0 %v419
      %2193 = vmatmul.mubr.f32.gmra.mrb[0].mxu0 %v387
      %v2194 = vpop.f32.mrb[0].mxu0
      %v2195 = vadd.f32 %v1970, %v2194
      %v2196 = vpop.f32.mrb[0].mxu0
      %2197 = vmatprep.mubr.f32.mxu0 %v420
      %2198 = vmatmul.mubr.f32.gmra.mrb[0].mxu0 %v388
      %v2199 = vpop.f32.mrb[0].mxu0
      %v2200 = vadd.f32 %v1975, %v2199
      %v2201 = vpop.f32.mrb[0].mxu0
      %2202 = vmatprep.mubr.f32.mxu0 %v421
      %2203 = vmatmul.mubr.f32.gmra.mrb[0].mxu0 %v389
      %v2204 = vpop.f32.mrb[0].mxu0
      %v2205 = vadd.f32 %v1980, %v2204
      %v2206 = vpop.f32.mrb[0].mxu0
      %2207 = vdwg.mxu0
      %2208 = vmatprep.subr.mxu0 0.0
      %2209 = vmatpush1.msra.mxu0 %v1197
      %2210 = vmatprep.subr.mxu0 0.0
      %2211 = vmatpush1.msra.mxu0 %v1198
      %2212 = vmatprep.subr.mxu0 0.0
      %2213 = vmatpush1.msra.mxu0 %v1199
      %2214 = vmatprep.subr.mxu0 0.0
      %2215 = vmatpush1.msra.mxu0 %v1200
      %2216 = vmatprep.subr.mxu0 0.0
      %2217 = vmatpush1.msra.mxu0 %v1201
      %2218 = vmatprep.subr.mxu0 0.0
      %2219 = vmatpush1.msra.mxu0 %v1202
      %2220 = vmatprep.subr.mxu0 0.0
      %2221 = vmatpush1.msra.mxu0 %v1203
      %2222 = vmatprep.subr.mxu0 0.0
      %2223 = vmatpush1.msra.mxu0 %v1204
      %2224 = vmatprep.subr.mxu0 0.0
      %2225 = vmatpush1.msra.mxu0 %v1205
      %2226 = vmatprep.subr.mxu0 0.0
      %2227 = vmatpush1.msra.mxu0 %v1206
      %2228 = vmatprep.subr.mxu0 0.0
      %2229 = vmatpush1.msra.mxu0 %v1207
      %2230 = vmatprep.subr.mxu0 0.0
      %2231 = vmatpush1.msra.mxu0 %v1208
      %2232 = vmatprep.subr.mxu0 0.0
      %2233 = vmatpush1.msra.mxu0 %v1209
      %2234 = vmatprep.subr.mxu0 0.0
      %2235 = vmatpush1.msra.mxu0 %v1210
      %2236 = vmatprep.subr.mxu0 0.0
      %2237 = vmatpush1.msra.mxu0 %v1211
      %2238 = vmatprep.subr.mxu0 0.0
      %2239 = vmatpush1.msra.mxu0 %v1212
      %2240 = vmatprep.subr.mxu0 0.0
      %2241 = vmatpush1.msra.mxu0 %v1213
      %2242 = vmatprep.subr.mxu0 0.0
      %2243 = vmatpush1.msra.mxu0 %v1214
      %2244 = vmatprep.subr.mxu0 0.0
      %2245 = vmatpush1.msra.mxu0 %v1215
      %2246 = vmatprep.subr.mxu0 0.0
      %2247 = vmatpush1.msra.mxu0 %v1216
      %2248 = vmatprep.subr.mxu0 0.0
      %2249 = vmatpush1.msra.mxu0 %v1217
      %2250 = vmatprep.subr.mxu0 0.0
      %2251 = vmatpush1.msra.mxu0 %v1218
      %2252 = vmatprep.subr.mxu0 0.0
      %2253 = vmatpush1.msra.mxu0 %v1219
      %2254 = vmatprep.subr.mxu0 0.0
      %2255 = vmatpush1.msra.mxu0 %v1220
      %2256 = vmatprep.subr.mxu0 0.0
      %2257 = vmatpush1.msra.mxu0 %v1221
      %2258 = vmatprep.subr.mxu0 0.0
      %2259 = vmatpush1.msra.mxu0 %v1222
      %2260 = vmatprep.subr.mxu0 0.0
      %2261 = vmatpush1.msra.mxu0 %v1223
      %2262 = vmatprep.subr.mxu0 0.0
      %2263 = vmatpush1.msra.mxu0 %v1224
      %2264 = vmatprep.subr.mxu0 0.0
      %2265 = vmatpush1.msra.mxu0 %v1225
      %2266 = vmatprep.subr.mxu0 0.0
      %2267 = vmatpush1.msra.mxu0 %v1226
      %2268 = vmatprep.subr.mxu0 0.0
      %2269 = vmatpush1.msra.mxu0 %v1227
      %2270 = vmatprep.subr.mxu0 0.0
      %2271 = vmatpush1.msra.mxu0 %v1228
      %2272 = vmatprep.mubr.f32.mxu0 %v455
      %2273 = vmatmul.mubr.f32.gmra.mrb[0].mxu0 %v423
      %v2274 = vpop.f32.mrb[0].mxu0
      %v2275 = vadd.f32 %v2050, %v2274
      %v2276 = vpop.f32.mrb[0].mxu0
      %2277 = vmatprep.mubr.f32.mxu0 %v456
      %2278 = vmatmul.mubr.f32.gmra.mrb[0].mxu0 %v424
      %v2279 = vpop.f32.mrb[0].mxu0
      %v2280 = vadd.f32 %v2055, %v2279
      %v2281 = vpop.f32.mrb[0].mxu0
      %2282 = vmatprep.mubr.f32.mxu0 %v457
      %2283 = vmatmul.mubr.f32.gmra.mrb[0].mxu0 %v425
      %v2284 = vpop.f32.mrb[0].mxu0
      %v2285 = vadd.f32 %v2060, %v2284
      %v2286 = vpop.f32.mrb[0].mxu0
      %2287 = vmatprep.mubr.f32.mxu0 %v458
      %2288 = vmatmul.mubr.f32.gmra.mrb[0].mxu0 %v426
      %v2289 = vpop.f32.mrb[0].mxu0
      %v2290 = vadd.f32 %v2065, %v2289
      %v2291 = vpop.f32.mrb[0].mxu0
      %2292 = vmatprep.mubr.f32.mxu0 %v459
      %2293 = vmatmul.mubr.f32.gmra.mrb[0].mxu0 %v427
      %v2294 = vpop.f32.mrb[0].mxu0
      %v2295 = vadd.f32 %v2070, %v2294
      %v2296 = vpop.f32.mrb[0].mxu0
      %2297 = vmatprep.mubr.f32.mxu0 %v460
      %2298 = vmatmul.mubr.f32.gmra.mrb[0].mxu0 %v428
      %v2299 = vpop.f32.mrb[0].mxu0
      %v2300 = vadd.f32 %v2075, %v2299
      %v2301 = vpop.f32.mrb[0].mxu0
      %2302 = vmatprep.mubr.f32.mxu0 %v461
      %2303 = vmatmul.mubr.f32.gmra.mrb[0].mxu0 %v429
      %v2304 = vpop.f32.mrb[0].mxu0
      %v2305 = vadd.f32 %v2080, %v2304
      %v2306 = vpop.f32.mrb[0].mxu0
      %2307 = vmatprep.mubr.f32.mxu0 %v462
      %2308 = vmatmul.mubr.f32.gmra.mrb[0].mxu0 %v430
      %v2309 = vpop.f32.mrb[0].mxu0
      %v2310 = vadd.f32 %v2085, %v2309
      %v2311 = vpop.f32.mrb[0].mxu0
      %2312 = vmatprep.mubr.f32.mxu0 %v463
      %2313 = vmatmul.mubr.f32.gmra.mrb[0].mxu0 %v431
      %v2314 = vpop.f32.mrb[0].mxu0
      %v2315 = vadd.f32 %v2090, %v2314
      %v2316 = vpop.f32.mrb[0].mxu0
      %2317 = vmatprep.mubr.f32.mxu0 %v464
      %2318 = vmatmul.mubr.f32.gmra.mrb[0].mxu0 %v432
      %v2319 = vpop.f32.mrb[0].mxu0
      %v2320 = vadd.f32 %v2095, %v2319
      %v2321 = vpop.f32.mrb[0].mxu0
      %2322 = vmatprep.mubr.f32.mxu0 %v465
      %2323 = vmatmul.mubr.f32.gmra.mrb[0].mxu0 %v433
      %v2324 = vpop.f32.mrb[0].mxu0
      %v2325 = vadd.f32 %v2100, %v2324
      %v2326 = vpop.f32.mrb[0].mxu0
      %2327 = vmatprep.mubr.f32.mxu0 %v466
      %2328 = vmatmul.mubr.f32.gmra.mrb[0].mxu0 %v434
      %v2329 = vpop.f32.mrb[0].mxu0
      %v2330 = vadd.f32 %v2105, %v2329
      %v2331 = vpop.f32.mrb[0].mxu0
      %2332 = vmatprep.mubr.f32.mxu0 %v467
      %2333 = vmatmul.mubr.f32.gmra.mrb[0].mxu0 %v435
      %v2334 = vpop.f32.mrb[0].mxu0
      %v2335 = vadd.f32 %v2110, %v2334
      %v2336 = vpop.f32.mrb[0].mxu0
      %2337 = vmatprep.mubr.f32.mxu0 %v468
      %2338 = vmatmul.mubr.f32.gmra.mrb[0].mxu0 %v436
      %v2339 = vpop.f32.mrb[0].mxu0
      %v2340 = vadd.f32 %v2115, %v2339
      %v2341 = vpop.f32.mrb[0].mxu0
      %2342 = vmatprep.mubr.f32.mxu0 %v469
      %2343 = vmatmul.mubr.f32.gmra.mrb[0].mxu0 %v437
      %v2344 = vpop.f32.mrb[0].mxu0
      %v2345 = vadd.f32 %v2120, %v2344
      %v2346 = vpop.f32.mrb[0].mxu0
      %2347 = vmatprep.mubr.f32.mxu0 %v470
      %2348 = vmatmul.mubr.f32.gmra.mrb[0].mxu0 %v438
      %v2349 = vpop.f32.mrb[0].mxu0
      %v2350 = vadd.f32 %v2125, %v2349
      %v2351 = vpop.f32.mrb[0].mxu0
      %2352 = vmatprep.mubr.f32.mxu0 %v471
      %2353 = vmatmul.mubr.f32.gmra.mrb[0].mxu0 %v439
      %v2354 = vpop.f32.mrb[0].mxu0
      %v2355 = vadd.f32 %v2130, %v2354
      %v2356 = vpop.f32.mrb[0].mxu0
      %2357 = vmatprep.mubr.f32.mxu0 %v472
      %2358 = vmatmul.mubr.f32.gmra.mrb[0].mxu0 %v440
      %v2359 = vpop.f32.mrb[0].mxu0
      %v2360 = vadd.f32 %v2135, %v2359
      %v2361 = vpop.f32.mrb[0].mxu0
      %2362 = vmatprep.mubr.f32.mxu0 %v473
      %2363 = vmatmul.mubr.f32.gmra.mrb[0].mxu0 %v441
      %v2364 = vpop.f32.mrb[0].mxu0
      %v2365 = vadd.f32 %v2140, %v2364
      %v2366 = vpop.f32.mrb[0].mxu0
      %2367 = vmatprep.mubr.f32.mxu0 %v474
      %2368 = vmatmul.mubr.f32.gmra.mrb[0].mxu0 %v442
      %v2369 = vpop.f32.mrb[0].mxu0
      %v2370 = vadd.f32 %v2145, %v2369
      %v2371 = vpop.f32.mrb[0].mxu0
      %2372 = vmatprep.mubr.f32.mxu0 %v475
      %2373 = vmatmul.mubr.f32.gmra.mrb[0].mxu0 %v443
      %v2374 = vpop.f32.mrb[0].mxu0
      %v2375 = vadd.f32 %v2150, %v2374
      %v2376 = vpop.f32.mrb[0].mxu0
      %2377 = vmatprep.mubr.f32.mxu0 %v476
      %2378 = vmatmul.mubr.f32.gmra.mrb[0].mxu0 %v444
      %v2379 = vpop.f32.mrb[0].mxu0
      %v2380 = vadd.f32 %v2155, %v2379
      %v2381 = vpop.f32.mrb[0].mxu0
      %2382 = vmatprep.mubr.f32.mxu0 %v477
      %2383 = vmatmul.mubr.f32.gmra.mrb[0].mxu0 %v445
      %v2384 = vpop.f32.mrb[0].mxu0
      %v2385 = vadd.f32 %v2160, %v2384
      %v2386 = vpop.f32.mrb[0].mxu0
      %2387 = vmatprep.mubr.f32.mxu0 %v478
      %2388 = vmatmul.mubr.f32.gmra.mrb[0].mxu0 %v446
      %v2389 = vpop.f32.mrb[0].mxu0
      %v2390 = vadd.f32 %v2165, %v2389
      %v2391 = vpop.f32.mrb[0].mxu0
      %2392 = vmatprep.mubr.f32.mxu0 %v479
      %2393 = vmatmul.mubr.f32.gmra.mrb[0].mxu0 %v447
      %v2394 = vpop.f32.mrb[0].mxu0
      %v2395 = vadd.f32 %v2170, %v2394
      %v2396 = vpop.f32.mrb[0].mxu0
      %2397 = vmatprep.mubr.f32.mxu0 %v480
      %2398 = vmatmul.mubr.f32.gmra.mrb[0].mxu0 %v448
      %v2399 = vpop.f32.mrb[0].mxu0
      %v2400 = vadd.f32 %v2175, %v2399
      %v2401 = vpop.f32.mrb[0].mxu0
      %2402 = vmatprep.mubr.f32.mxu0 %v481
      %2403 = vmatmul.mubr.f32.gmra.mrb[0].mxu0 %v449
      %v2404 = vpop.f32.mrb[0].mxu0
      %v2405 = vadd.f32 %v2180, %v2404
      %v2406 = vpop.f32.mrb[0].mxu0
      %2407 = vmatprep.mubr.f32.mxu0 %v482
      %2408 = vmatmul.mubr.f32.gmra.mrb[0].mxu0 %v450
      %v2409 = vpop.f32.mrb[0].mxu0
      %v2410 = vadd.f32 %v2185, %v2409
      %v2411 = vpop.f32.mrb[0].mxu0
      %2412 = vmatprep.mubr.f32.mxu0 %v483
      %2413 = vmatmul.mubr.f32.gmra.mrb[0].mxu0 %v451
      %v2414 = vpop.f32.mrb[0].mxu0
      %v2415 = vadd.f32 %v2190, %v2414
      %v2416 = vpop.f32.mrb[0].mxu0
      %2417 = vmatprep.mubr.f32.mxu0 %v484
      %2418 = vmatmul.mubr.f32.gmra.mrb[0].mxu0 %v452
      %v2419 = vpop.f32.mrb[0].mxu0
      %v2420 = vadd.f32 %v2195, %v2419
      %v2421 = vpop.f32.mrb[0].mxu0
      %2422 = vmatprep.mubr.f32.mxu0 %v485
      %2423 = vmatmul.mubr.f32.gmra.mrb[0].mxu0 %v453
      %v2424 = vpop.f32.mrb[0].mxu0
      %v2425 = vadd.f32 %v2200, %v2424
      %v2426 = vpop.f32.mrb[0].mxu0
      %2427 = vmatprep.mubr.f32.mxu0 %v486
      %2428 = vmatmul.mubr.f32.gmra.mrb[0].mxu0 %v454
      %v2429 = vpop.f32.mrb[0].mxu0
      %v2430 = vadd.f32 %v2205, %v2429
      %v2431 = vpop.f32.mrb[0].mxu0
      %2432 = vdwg.mxu0
      %2433 = vmatprep.subr.mxu0 0.0
      %2434 = vmatpush1.msra.mxu0 %v1229
      %2435 = vmatprep.subr.mxu0 0.0
      %2436 = vmatpush1.msra.mxu0 %v1230
      %2437 = vmatprep.subr.mxu0 0.0
      %2438 = vmatpush1.msra.mxu0 %v1231
      %2439 = vmatprep.subr.mxu0 0.0
      %2440 = vmatpush1.msra.mxu0 %v1232
      %2441 = vmatprep.subr.mxu0 0.0
      %2442 = vmatpush1.msra.mxu0 %v1233
      %2443 = vmatprep.subr.mxu0 0.0
      %2444 = vmatpush1.msra.mxu0 %v1234
      %2445 = vmatprep.subr.mxu0 0.0
      %2446 = vmatpush1.msra.mxu0 %v1235
      %2447 = vmatprep.subr.mxu0 0.0
      %2448 = vmatpush1.msra.mxu0 %v1236
      %2449 = vmatprep.subr.mxu0 0.0
      %2450 = vmatpush1.msra.mxu0 %v1237
      %2451 = vmatprep.subr.mxu0 0.0
      %2452 = vmatpush1.msra.mxu0 %v1238
      %2453 = vmatprep.subr.mxu0 0.0
      %2454 = vmatpush1.msra.mxu0 %v1239
      %2455 = vmatprep.subr.mxu0 0.0
      %2456 = vmatpush1.msra.mxu0 %v1240
      %2457 = vmatprep.subr.mxu0 0.0
      %2458 = vmatpush1.msra.mxu0 %v1241
      %2459 = vmatprep.subr.mxu0 0.0
      %2460 = vmatpush1.msra.mxu0 %v1242
      %2461 = vmatprep.subr.mxu0 0.0
      %2462 = vmatpush1.msra.mxu0 %v1243
      %2463 = vmatprep.subr.mxu0 0.0
      %2464 = vmatpush1.msra.mxu0 %v1244
      %2465 = vmatprep.subr.mxu0 0.0
      %2466 = vmatpush1.msra.mxu0 %v1245
      %2467 = vmatprep.subr.mxu0 0.0
      %2468 = vmatpush1.msra.mxu0 %v1246
      %2469 = vmatprep.subr.mxu0 0.0
      %2470 = vmatpush1.msra.mxu0 %v1247
      %2471 = vmatprep.subr.mxu0 0.0
      %2472 = vmatpush1.msra.mxu0 %v1248
      %2473 = vmatprep.subr.mxu0 0.0
      %2474 = vmatpush1.msra.mxu0 %v1249
      %2475 = vmatprep.subr.mxu0 0.0
      %2476 = vmatpush1.msra.mxu0 %v1250
      %2477 = vmatprep.subr.mxu0 0.0
      %2478 = vmatpush1.msra.mxu0 %v1251
      %2479 = vmatprep.subr.mxu0 0.0
      %2480 = vmatpush1.msra.mxu0 %v1252
      %2481 = vmatprep.subr.mxu0 0.0
      %2482 = vmatpush1.msra.mxu0 %v1253
      %2483 = vmatprep.subr.mxu0 0.0
      %2484 = vmatpush1.msra.mxu0 %v1254
      %2485 = vmatprep.subr.mxu0 0.0
      %2486 = vmatpush1.msra.mxu0 %v1255
      %2487 = vmatprep.subr.mxu0 0.0
      %2488 = vmatpush1.msra.mxu0 %v1256
      %2489 = vmatprep.subr.mxu0 0.0
      %2490 = vmatpush1.msra.mxu0 %v1257
      %2491 = vmatprep.subr.mxu0 0.0
      %2492 = vmatpush1.msra.mxu0 %v1258
      %2493 = vmatprep.subr.mxu0 0.0
      %2494 = vmatpush1.msra.mxu0 %v1259
      %2495 = vmatprep.subr.mxu0 0.0
      %2496 = vmatpush1.msra.mxu0 %v1260
      %2497 = vmatprep.mubr.f32.mxu0 %v520
      %2498 = vmatmul.mubr.f32.gmra.mrb[0].mxu0 %v487
      %v2499 = vpop.f32.mrb[0].mxu0
      %v2500 = vadd.f32 %v2275, %v2499
      %v2501 = vpop.f32.mrb[0].mxu0
      %2502 = vmatprep.mubr.f32.mxu0 %v521
      %2503 = vmatmul.mubr.f32.gmra.mrb[0].mxu0 %v488
      %v2504 = vpop.f32.mrb[0].mxu0
      %v2505 = vadd.f32 %v2280, %v2504
      %v2506 = vpop.f32.mrb[0].mxu0
      %2507 = vmatprep.mubr.f32.mxu0 %v522
      %2508 = vmatmul.mubr.f32.gmra.mrb[0].mxu0 %v489
      %v2509 = vpop.f32.mrb[0].mxu0
      %v2510 = vadd.f32 %v2285, %v2509
      %v2511 = vpop.f32.mrb[0].mxu0
      %2512 = vmatprep.mubr.f32.mxu0 %v523
      %2513 = vmatmul.mubr.f32.gmra.mrb[0].mxu0 %v490
      %v2514 = vpop.f32.mrb[0].mxu0
      %v2515 = vadd.f32 %v2290, %v2514
      %v2516 = vpop.f32.mrb[0].mxu0
      %2517 = vmatprep.mubr.f32.mxu0 %v524
      %2518 = vmatmul.mubr.f32.gmra.mrb[0].mxu0 %v491
      %v2519 = vpop.f32.mrb[0].mxu0
      %v2520 = vadd.f32 %v2295, %v2519
      %v2521 = vpop.f32.mrb[0].mxu0
      %2522 = vmatprep.mubr.f32.mxu0 %v525
      %2523 = vmatmul.mubr.f32.gmra.mrb[0].mxu0 %v492
      %v2524 = vpop.f32.mrb[0].mxu0
      %v2525 = vadd.f32 %v2300, %v2524
      %v2526 = vpop.f32.mrb[0].mxu0
      %2527 = vmatprep.mubr.f32.mxu0 %v526
      %2528 = vmatmul.mubr.f32.gmra.mrb[0].mxu0 %v493
      %v2529 = vpop.f32.mrb[0].mxu0
      %v2530 = vadd.f32 %v2305, %v2529
      %v2531 = vpop.f32.mrb[0].mxu0
      %2532 = vmatprep.mubr.f32.mxu0 %v527
      %2533 = vmatmul.mubr.f32.gmra.mrb[0].mxu0 %v494
      %v2534 = vpop.f32.mrb[0].mxu0
      %v2535 = vadd.f32 %v2310, %v2534
      %v2536 = vpop.f32.mrb[0].mxu0
      %2537 = vmatprep.mubr.f32.mxu0 %v528
      %2538 = vmatmul.mubr.f32.gmra.mrb[0].mxu0 %v495
      %v2539 = vpop.f32.mrb[0].mxu0
      %v2540 = vadd.f32 %v2315, %v2539
      %v2541 = vpop.f32.mrb[0].mxu0
      %2542 = vmatprep.mubr.f32.mxu0 %v529
      %2543 = vmatmul.mubr.f32.gmra.mrb[0].mxu0 %v496
      %v2544 = vpop.f32.mrb[0].mxu0
      %v2545 = vadd.f32 %v2320, %v2544
      %v2546 = vpop.f32.mrb[0].mxu0
      %2547 = vmatprep.mubr.f32.mxu0 %v530
      %2548 = vmatmul.mubr.f32.gmra.mrb[0].mxu0 %v497
      %v2549 = vpop.f32.mrb[0].mxu0
      %v2550 = vadd.f32 %v2325, %v2549
      %v2551 = vpop.f32.mrb[0].mxu0
      %2552 = vmatprep.mubr.f32.mxu0 %v531
      %2553 = vmatmul.mubr.f32.gmra.mrb[0].mxu0 %v498
      %v2554 = vpop.f32.mrb[0].mxu0
      %v2555 = vadd.f32 %v2330, %v2554
      %v2556 = vpop.f32.mrb[0].mxu0
      %2557 = vmatprep.mubr.f32.mxu0 %v532
      %2558 = vmatmul.mubr.f32.gmra.mrb[0].mxu0 %v499
      %v2559 = vpop.f32.mrb[0].mxu0
      %v2560 = vadd.f32 %v2335, %v2559
      %v2561 = vpop.f32.mrb[0].mxu0
      %2562 = vmatprep.mubr.f32.mxu0 %v533
      %2563 = vmatmul.mubr.f32.gmra.mrb[0].mxu0 %v500
      %v2564 = vpop.f32.mrb[0].mxu0
      %v2565 = vadd.f32 %v2340, %v2564
      %v2566 = vpop.f32.mrb[0].mxu0
      %2567 = vmatprep.mubr.f32.mxu0 %v534
      %2568 = vmatmul.mubr.f32.gmra.mrb[0].mxu0 %v501
      %v2569 = vpop.f32.mrb[0].mxu0
      %v2570 = vadd.f32 %v2345, %v2569
      %v2571 = vpop.f32.mrb[0].mxu0
      %2572 = vmatprep.mubr.f32.mxu0 %v535
      %2573 = vmatmul.mubr.f32.gmra.mrb[0].mxu0 %v502
      %v2574 = vpop.f32.mrb[0].mxu0
      %v2575 = vadd.f32 %v2350, %v2574
      %v2576 = vpop.f32.mrb[0].mxu0
      %2577 = vmatprep.mubr.f32.mxu0 %v536
      %2578 = vmatmul.mubr.f32.gmra.mrb[0].mxu0 %v503
      %v2579 = vpop.f32.mrb[0].mxu0
      %v2580 = vadd.f32 %v2355, %v2579
      %v2581 = vpop.f32.mrb[0].mxu0
      %2582 = vmatprep.mubr.f32.mxu0 %v537
      %2583 = vmatmul.mubr.f32.gmra.mrb[0].mxu0 %v504
      %v2584 = vpop.f32.mrb[0].mxu0
      %v2585 = vadd.f32 %v2360, %v2584
      %v2586 = vpop.f32.mrb[0].mxu0
      %2587 = vmatprep.mubr.f32.mxu0 %v538
      %2588 = vmatmul.mubr.f32.gmra.mrb[0].mxu0 %v505
      %v2589 = vpop.f32.mrb[0].mxu0
      %v2590 = vadd.f32 %v2365, %v2589
      %v2591 = vpop.f32.mrb[0].mxu0
      %2592 = vmatprep.mubr.f32.mxu0 %v539
      %2593 = vmatmul.mubr.f32.gmra.mrb[0].mxu0 %v506
      %v2594 = vpop.f32.mrb[0].mxu0
      %v2595 = vadd.f32 %v2370, %v2594
      %v2596 = vpop.f32.mrb[0].mxu0
      %2597 = vmatprep.mubr.f32.mxu0 %v540
      %2598 = vmatmul.mubr.f32.gmra.mrb[0].mxu0 %v507
      %v2599 = vpop.f32.mrb[0].mxu0
      %v2600 = vadd.f32 %v2375, %v2599
      %v2601 = vpop.f32.mrb[0].mxu0
      %2602 = vmatprep.mubr.f32.mxu0 %v541
      %2603 = vmatmul.mubr.f32.gmra.mrb[0].mxu0 %v508
      %v2604 = vpop.f32.mrb[0].mxu0
      %v2605 = vadd.f32 %v2380, %v2604
      %v2606 = vpop.f32.mrb[0].mxu0
      %2607 = vmatprep.mubr.f32.mxu0 %v542
      %2608 = vmatmul.mubr.f32.gmra.mrb[0].mxu0 %v509
      %v2609 = vpop.f32.mrb[0].mxu0
      %v2610 = vadd.f32 %v2385, %v2609
      %v2611 = vpop.f32.mrb[0].mxu0
      %2612 = vmatprep.mubr.f32.mxu0 %v543
      %2613 = vmatmul.mubr.f32.gmra.mrb[0].mxu0 %v510
      %v2614 = vpop.f32.mrb[0].mxu0
      %v2615 = vadd.f32 %v2390, %v2614
      %v2616 = vpop.f32.mrb[0].mxu0
      %2617 = vmatprep.mubr.f32.mxu0 %v544
      %2618 = vmatmul.mubr.f32.gmra.mrb[0].mxu0 %v511
      %v2619 = vpop.f32.mrb[0].mxu0
      %v2620 = vadd.f32 %v2395, %v2619
      %v2621 = vpop.f32.mrb[0].mxu0
      %2622 = vmatprep.mubr.f32.mxu0 %v545
      %2623 = vmatmul.mubr.f32.gmra.mrb[0].mxu0 %v512
      %v2624 = vpop.f32.mrb[0].mxu0
      %v2625 = vadd.f32 %v2400, %v2624
      %v2626 = vpop.f32.mrb[0].mxu0
      %2627 = vmatprep.mubr.f32.mxu0 %v546
      %2628 = vmatmul.mubr.f32.gmra.mrb[0].mxu0 %v513
      %v2629 = vpop.f32.mrb[0].mxu0
      %v2630 = vadd.f32 %v2405, %v2629
      %v2631 = vpop.f32.mrb[0].mxu0
      %2632 = vmatprep.mubr.f32.mxu0 %v547
      %2633 = vmatmul.mubr.f32.gmra.mrb[0].mxu0 %v514
      %v2634 = vpop.f32.mrb[0].mxu0
      %v2635 = vadd.f32 %v2410, %v2634
      %v2636 = vpop.f32.mrb[0].mxu0
      %2637 = vmatprep.mubr.f32.mxu0 %v548
      %2638 = vmatmul.mubr.f32.gmra.mrb[0].mxu0 %v515
      %v2639 = vpop.f32.mrb[0].mxu0
      %v2640 = vadd.f32 %v2415, %v2639
      %v2641 = vpop.f32.mrb[0].mxu0
      %2642 = vmatprep.mubr.f32.mxu0 %v549
      %2643 = vmatmul.mubr.f32.gmra.mrb[0].mxu0 %v516
      %v2644 = vpop.f32.mrb[0].mxu0
      %v2645 = vadd.f32 %v2420, %v2644
      %v2646 = vpop.f32.mrb[0].mxu0
      %2647 = vmatprep.mubr.f32.mxu0 %v550
      %2648 = vmatmul.mubr.f32.gmra.mrb[0].mxu0 %v517
      %v2649 = vpop.f32.mrb[0].mxu0
      %v2650 = vadd.f32 %v2425, %v2649
      %v2651 = vpop.f32.mrb[0].mxu0
      %2652 = vmatprep.mubr.f32.mxu0 %v551
      %2653 = vmatmul.mubr.f32.gmra.mrb[0].mxu0 %v518
      %v2654 = vpop.f32.mrb[0].mxu0
      %v2655 = vadd.f32 %v2430, %v2654
      %v2656 = vpop.f32.mrb[0].mxu0
      %2657 = vdwg.mxu0
      %2658 = vmatprep.subr.mxu0 0.0
      %2659 = vmatpush1.msra.mxu0 %v1261
      %2660 = vmatprep.subr.mxu0 0.0
      %2661 = vmatpush1.msra.mxu0 %v1262
      %2662 = vmatprep.subr.mxu0 0.0
      %2663 = vmatpush1.msra.mxu0 %v1263
      %2664 = vmatprep.subr.mxu0 0.0
      %2665 = vmatpush1.msra.mxu0 %v1264
      %2666 = vmatprep.subr.mxu0 0.0
      %2667 = vmatpush1.msra.mxu0 %v1265
      %2668 = vmatprep.subr.mxu0 0.0
      %2669 = vmatpush1.msra.mxu0 %v1266
      %2670 = vmatprep.subr.mxu0 0.0
      %2671 = vmatpush1.msra.mxu0 %v1267
      %2672 = vmatprep.subr.mxu0 0.0
      %2673 = vmatpush1.msra.mxu0 %v1268
      %2674 = vmatprep.subr.mxu0 0.0
      %2675 = vmatpush1.msra.mxu0 %v1269
      %2676 = vmatprep.subr.mxu0 0.0
      %2677 = vmatpush1.msra.mxu0 %v1270
      %2678 = vmatprep.subr.mxu0 0.0
      %2679 = vmatpush1.msra.mxu0 %v1271
      %2680 = vmatprep.subr.mxu0 0.0
      %2681 = vmatpush1.msra.mxu0 %v1272
      %2682 = vmatprep.subr.mxu0 0.0
      %2683 = vmatpush1.msra.mxu0 %v1273
      %2684 = vmatprep.subr.mxu0 0.0
      %2685 = vmatpush1.msra.mxu0 %v1274
      %2686 = vmatprep.subr.mxu0 0.0
      %2687 = vmatpush1.msra.mxu0 %v1275
      %2688 = vmatprep.subr.mxu0 0.0
      %2689 = vmatpush1.msra.mxu0 %v1276
      %2690 = vmatprep.subr.mxu0 0.0
      %2691 = vmatpush1.msra.mxu0 %v1277
      %2692 = vmatprep.subr.mxu0 0.0
      %2693 = vmatpush1.msra.mxu0 %v1278
      %2694 = vmatprep.subr.mxu0 0.0
      %2695 = vmatpush1.msra.mxu0 %v1279
      %2696 = vmatprep.subr.mxu0 0.0
      %2697 = vmatpush1.msra.mxu0 %v1280
      %2698 = vmatprep.subr.mxu0 0.0
      %2699 = vmatpush1.msra.mxu0 %v1281
      %2700 = vmatprep.subr.mxu0 0.0
      %2701 = vmatpush1.msra.mxu0 %v1282
      %2702 = vmatprep.subr.mxu0 0.0
      %2703 = vmatpush1.msra.mxu0 %v1283
      %2704 = vmatprep.subr.mxu0 0.0
      %2705 = vmatpush1.msra.mxu0 %v1284
      %2706 = vmatprep.subr.mxu0 0.0
      %2707 = vmatpush1.msra.mxu0 %v1285
      %2708 = vmatprep.subr.mxu0 0.0
      %2709 = vmatpush1.msra.mxu0 %v1286
      %2710 = vmatprep.subr.mxu0 0.0
      %2711 = vmatpush1.msra.mxu0 %v1287
      %2712 = vmatprep.subr.mxu0 0.0
      %2713 = vmatpush1.msra.mxu0 %v1288
      %2714 = vmatprep.subr.mxu0 0.0
      %2715 = vmatpush1.msra.mxu0 %v1289
      %2716 = vmatprep.subr.mxu0 0.0
      %2717 = vmatpush1.msra.mxu0 %v1290
      %2718 = vmatprep.subr.mxu0 0.0
      %2719 = vmatpush1.msra.mxu0 %v1291
      %2720 = vmatprep.subr.mxu0 0.0
      %2721 = vmatpush1.msra.mxu0 %v1292
      %2722 = vmatprep.mubr.f32.mxu0 %v584
      %2723 = vmatmul.mubr.f32.gmra.mrb[0].mxu0 %v552
      %v2724 = vpop.f32.mrb[0].mxu0
      %v2725 = vadd.f32 %v2500, %v2724
      %v2726 = vpop.f32.mrb[0].mxu0
      %2727 = vmatprep.mubr.f32.mxu0 %v585
      %2728 = vmatmul.mubr.f32.gmra.mrb[0].mxu0 %v553
      %v2729 = vpop.f32.mrb[0].mxu0
      %v2730 = vadd.f32 %v2505, %v2729
      %v2731 = vpop.f32.mrb[0].mxu0
      %2732 = vmatprep.mubr.f32.mxu0 %v586
      %2733 = vmatmul.mubr.f32.gmra.mrb[0].mxu0 %v554
      %v2734 = vpop.f32.mrb[0].mxu0
      %v2735 = vadd.f32 %v2510, %v2734
      %v2736 = vpop.f32.mrb[0].mxu0
      %2737 = vmatprep.mubr.f32.mxu0 %v587
      %2738 = vmatmul.mubr.f32.gmra.mrb[0].mxu0 %v555
      %v2739 = vpop.f32.mrb[0].mxu0
      %v2740 = vadd.f32 %v2515, %v2739
      %v2741 = vpop.f32.mrb[0].mxu0
      %2742 = vmatprep.mubr.f32.mxu0 %v588
      %2743 = vmatmul.mubr.f32.gmra.mrb[0].mxu0 %v556
      %v2744 = vpop.f32.mrb[0].mxu0
      %v2745 = vadd.f32 %v2520, %v2744
      %v2746 = vpop.f32.mrb[0].mxu0
      %2747 = vmatprep.mubr.f32.mxu0 %v589
      %2748 = vmatmul.mubr.f32.gmra.mrb[0].mxu0 %v557
      %v2749 = vpop.f32.mrb[0].mxu0
      %v2750 = vadd.f32 %v2525, %v2749
      %v2751 = vpop.f32.mrb[0].mxu0
      %2752 = vmatprep.mubr.f32.mxu0 %v590
      %2753 = vmatmul.mubr.f32.gmra.mrb[0].mxu0 %v558
      %v2754 = vpop.f32.mrb[0].mxu0
      %v2755 = vadd.f32 %v2530, %v2754
      %v2756 = vpop.f32.mrb[0].mxu0
      %2757 = vmatprep.mubr.f32.mxu0 %v591
      %2758 = vmatmul.mubr.f32.gmra.mrb[0].mxu0 %v559
      %v2759 = vpop.f32.mrb[0].mxu0
      %v2760 = vadd.f32 %v2535, %v2759
      %v2761 = vpop.f32.mrb[0].mxu0
      %2762 = vmatprep.mubr.f32.mxu0 %v592
      %2763 = vmatmul.mubr.f32.gmra.mrb[0].mxu0 %v560
      %v2764 = vpop.f32.mrb[0].mxu0
      %v2765 = vadd.f32 %v2540, %v2764
      %v2766 = vpop.f32.mrb[0].mxu0
      %2767 = vmatprep.mubr.f32.mxu0 %v593
      %2768 = vmatmul.mubr.f32.gmra.mrb[0].mxu0 %v561
      %v2769 = vpop.f32.mrb[0].mxu0
      %v2770 = vadd.f32 %v2545, %v2769
      %v2771 = vpop.f32.mrb[0].mxu0
      %2772 = vmatprep.mubr.f32.mxu0 %v594
      %2773 = vmatmul.mubr.f32.gmra.mrb[0].mxu0 %v562
      %v2774 = vpop.f32.mrb[0].mxu0
      %v2775 = vadd.f32 %v2550, %v2774
      %v2776 = vpop.f32.mrb[0].mxu0
      %2777 = vmatprep.mubr.f32.mxu0 %v595
      %2778 = vmatmul.mubr.f32.gmra.mrb[0].mxu0 %v563
      %v2779 = vpop.f32.mrb[0].mxu0
      %v2780 = vadd.f32 %v2555, %v2779
      %v2781 = vpop.f32.mrb[0].mxu0
      %2782 = vmatprep.mubr.f32.mxu0 %v596
      %2783 = vmatmul.mubr.f32.gmra.mrb[0].mxu0 %v564
      %v2784 = vpop.f32.mrb[0].mxu0
      %v2785 = vadd.f32 %v2560, %v2784
      %v2786 = vpop.f32.mrb[0].mxu0
      %2787 = vmatprep.mubr.f32.mxu0 %v597
      %2788 = vmatmul.mubr.f32.gmra.mrb[0].mxu0 %v565
      %v2789 = vpop.f32.mrb[0].mxu0
      %v2790 = vadd.f32 %v2565, %v2789
      %v2791 = vpop.f32.mrb[0].mxu0
      %2792 = vmatprep.mubr.f32.mxu0 %v598
      %2793 = vmatmul.mubr.f32.gmra.mrb[0].mxu0 %v566
      %v2794 = vpop.f32.mrb[0].mxu0
      %v2795 = vadd.f32 %v2570, %v2794
      %v2796 = vpop.f32.mrb[0].mxu0
      %2797 = vmatprep.mubr.f32.mxu0 %v599
      %2798 = vmatmul.mubr.f32.gmra.mrb[0].mxu0 %v567
      %v2799 = vpop.f32.mrb[0].mxu0
      %v2800 = vadd.f32 %v2575, %v2799
      %v2801 = vpop.f32.mrb[0].mxu0
      %2802 = vmatprep.mubr.f32.mxu0 %v600
      %2803 = vmatmul.mubr.f32.gmra.mrb[0].mxu0 %v568
      %v2804 = vpop.f32.mrb[0].mxu0
      %v2805 = vadd.f32 %v2580, %v2804
      %v2806 = vpop.f32.mrb[0].mxu0
      %2807 = vmatprep.mubr.f32.mxu0 %v601
      %2808 = vmatmul.mubr.f32.gmra.mrb[0].mxu0 %v569
      %v2809 = vpop.f32.mrb[0].mxu0
      %v2810 = vadd.f32 %v2585, %v2809
      %v2811 = vpop.f32.mrb[0].mxu0
      %2812 = vmatprep.mubr.f32.mxu0 %v602
      %2813 = vmatmul.mubr.f32.gmra.mrb[0].mxu0 %v570
      %v2814 = vpop.f32.mrb[0].mxu0
      %v2815 = vadd.f32 %v2590, %v2814
      %v2816 = vpop.f32.mrb[0].mxu0
      %2817 = vmatprep.mubr.f32.mxu0 %v603
      %2818 = vmatmul.mubr.f32.gmra.mrb[0].mxu0 %v571
      %v2819 = vpop.f32.mrb[0].mxu0
      %v2820 = vadd.f32 %v2595, %v2819
      %v2821 = vpop.f32.mrb[0].mxu0
      %2822 = vmatprep.mubr.f32.mxu0 %v604
      %2823 = vmatmul.mubr.f32.gmra.mrb[0].mxu0 %v572
      %v2824 = vpop.f32.mrb[0].mxu0
      %v2825 = vadd.f32 %v2600, %v2824
      %v2826 = vpop.f32.mrb[0].mxu0
      %2827 = vmatprep.mubr.f32.mxu0 %v605
      %2828 = vmatmul.mubr.f32.gmra.mrb[0].mxu0 %v573
      %v2829 = vpop.f32.mrb[0].mxu0
      %v2830 = vadd.f32 %v2605, %v2829
      %v2831 = vpop.f32.mrb[0].mxu0
      %2832 = vmatprep.mubr.f32.mxu0 %v606
      %2833 = vmatmul.mubr.f32.gmra.mrb[0].mxu0 %v574
      %v2834 = vpop.f32.mrb[0].mxu0
      %v2835 = vadd.f32 %v2610, %v2834
      %v2836 = vpop.f32.mrb[0].mxu0
      %2837 = vmatprep.mubr.f32.mxu0 %v607
      %2838 = vmatmul.mubr.f32.gmra.mrb[0].mxu0 %v575
      %v2839 = vpop.f32.mrb[0].mxu0
      %v2840 = vadd.f32 %v2615, %v2839
      %v2841 = vpop.f32.mrb[0].mxu0
      %2842 = vmatprep.mubr.f32.mxu0 %v608
      %2843 = vmatmul.mubr.f32.gmra.mrb[0].mxu0 %v576
      %v2844 = vpop.f32.mrb[0].mxu0
      %v2845 = vadd.f32 %v2620, %v2844
      %v2846 = vpop.f32.mrb[0].mxu0
      %2847 = vmatprep.mubr.f32.mxu0 %v609
      %2848 = vmatmul.mubr.f32.gmra.mrb[0].mxu0 %v577
      %v2849 = vpop.f32.mrb[0].mxu0
      %v2850 = vadd.f32 %v2625, %v2849
      %v2851 = vpop.f32.mrb[0].mxu0
      %2852 = vmatprep.mubr.f32.mxu0 %v610
      %2853 = vmatmul.mubr.f32.gmra.mrb[0].mxu0 %v578
      %v2854 = vpop.f32.mrb[0].mxu0
      %v2855 = vadd.f32 %v2630, %v2854
      %v2856 = vpop.f32.mrb[0].mxu0
      %2857 = vmatprep.mubr.f32.mxu0 %v611
      %2858 = vmatmul.mubr.f32.gmra.mrb[0].mxu0 %v579
      %v2859 = vpop.f32.mrb[0].mxu0
      %v2860 = vadd.f32 %v2635, %v2859
      %v2861 = vpop.f32.mrb[0].mxu0
      %2862 = vmatprep.mubr.f32.mxu0 %v612
      %2863 = vmatmul.mubr.f32.gmra.mrb[0].mxu0 %v580
      %v2864 = vpop.f32.mrb[0].mxu0
      %v2865 = vadd.f32 %v2640, %v2864
      %v2866 = vpop.f32.mrb[0].mxu0
      %2867 = vmatprep.mubr.f32.mxu0 %v613
      %2868 = vmatmul.mubr.f32.gmra.mrb[0].mxu0 %v581
      %v2869 = vpop.f32.mrb[0].mxu0
      %v2870 = vadd.f32 %v2645, %v2869
      %v2871 = vpop.f32.mrb[0].mxu0
      %2872 = vmatprep.mubr.f32.mxu0 %v614
      %2873 = vmatmul.mubr.f32.gmra.mrb[0].mxu0 %v582
      %v2874 = vpop.f32.mrb[0].mxu0
      %v2875 = vadd.f32 %v2650, %v2874
      %v2876 = vpop.f32.mrb[0].mxu0
      %2877 = vmatprep.mubr.f32.mxu0 %v615
      %2878 = vmatmul.mubr.f32.gmra.mrb[0].mxu0 %v583
      %v2879 = vpop.f32.mrb[0].mxu0
      %v2880 = vadd.f32 %v2655, %v2879
      %v2881 = vpop.f32.mrb[0].mxu0
      %2882 = vdwg.mxu0
      %2883 = vmatprep.subr.mxu0 0.0
      %2884 = vmatpush1.msra.mxu0 %v1293
      %2885 = vmatprep.subr.mxu0 0.0
      %2886 = vmatpush1.msra.mxu0 %v1294
      %2887 = vmatprep.subr.mxu0 0.0
      %2888 = vmatpush1.msra.mxu0 %v1295
      %2889 = vmatprep.subr.mxu0 0.0
      %2890 = vmatpush1.msra.mxu0 %v1296
      %2891 = vmatprep.subr.mxu0 0.0
      %2892 = vmatpush1.msra.mxu0 %v1297
      %2893 = vmatprep.subr.mxu0 0.0
      %2894 = vmatpush1.msra.mxu0 %v1298
      %2895 = vmatprep.subr.mxu0 0.0
      %2896 = vmatpush1.msra.mxu0 %v1299
      %2897 = vmatprep.subr.mxu0 0.0
      %2898 = vmatpush1.msra.mxu0 %v1300
      %2899 = vmatprep.subr.mxu0 0.0
      %2900 = vmatpush1.msra.mxu0 %v1301
      %2901 = vmatprep.subr.mxu0 0.0
      %2902 = vmatpush1.msra.mxu0 %v1302
      %2903 = vmatprep.subr.mxu0 0.0
      %2904 = vmatpush1.msra.mxu0 %v1303
      %2905 = vmatprep.subr.mxu0 0.0
      %2906 = vmatpush1.msra.mxu0 %v1304
      %2907 = vmatprep.subr.mxu0 0.0
      %2908 = vmatpush1.msra.mxu0 %v1305
      %2909 = vmatprep.subr.mxu0 0.0
      %2910 = vmatpush1.msra.mxu0 %v1306
      %2911 = vmatprep.subr.mxu0 0.0
      %2912 = vmatpush1.msra.mxu0 %v1307
      %2913 = vmatprep.subr.mxu0 0.0
      %2914 = vmatpush1.msra.mxu0 %v1308
      %2915 = vmatprep.subr.mxu0 0.0
      %2916 = vmatpush1.msra.mxu0 %v1309
      %2917 = vmatprep.subr.mxu0 0.0
      %2918 = vmatpush1.msra.mxu0 %v1310
      %2919 = vmatprep.subr.mxu0 0.0
      %2920 = vmatpush1.msra.mxu0 %v1311
      %2921 = vmatprep.subr.mxu0 0.0
      %2922 = vmatpush1.msra.mxu0 %v1312
      %2923 = vmatprep.subr.mxu0 0.0
      %2924 = vmatpush1.msra.mxu0 %v1313
      %2925 = vmatprep.subr.mxu0 0.0
      %2926 = vmatpush1.msra.mxu0 %v1314
      %2927 = vmatprep.subr.mxu0 0.0
      %2928 = vmatpush1.msra.mxu0 %v1315
      %2929 = vmatprep.subr.mxu0 0.0
      %2930 = vmatpush1.msra.mxu0 %v1316
      %2931 = vmatprep.subr.mxu0 0.0
      %2932 = vmatpush1.msra.mxu0 %v1317
      %2933 = vmatprep.subr.mxu0 0.0
      %2934 = vmatpush1.msra.mxu0 %v1318
      %2935 = vmatprep.subr.mxu0 0.0
      %2936 = vmatpush1.msra.mxu0 %v1319
      %2937 = vmatprep.subr.mxu0 0.0
      %2938 = vmatpush1.msra.mxu0 %v1320
      %2939 = vmatprep.subr.mxu0 0.0
      %2940 = vmatpush1.msra.mxu0 %v1321
      %2941 = vmatprep.subr.mxu0 0.0
      %2942 = vmatpush1.msra.mxu0 %v1322
      %2943 = vmatprep.subr.mxu0 0.0
      %2944 = vmatpush1.msra.mxu0 %v1323
      %2945 = vmatprep.subr.mxu0 0.0
      %2946 = vmatpush1.msra.mxu0 %v1324
      %2947 = vmatprep.mubr.f32.mxu0 %v649
      %2948 = vmatmul.mubr.f32.gmra.mrb[0].mxu0 %v617
      %v2949 = vpop.f32.mrb[0].mxu0
      %v2950 = vadd.f32 %v2725, %v2949
      %v2951 = vpop.f32.mrb[0].mxu0
      %2952 = vmatprep.mubr.f32.mxu0 %v650
      %2953 = vmatmul.mubr.f32.gmra.mrb[0].mxu0 %v618
      %v2954 = vpop.f32.mrb[0].mxu0
      %v2955 = vadd.f32 %v2730, %v2954
      %v2956 = vpop.f32.mrb[0].mxu0
      %2957 = vmatprep.mubr.f32.mxu0 %v651
      %2958 = vmatmul.mubr.f32.gmra.mrb[0].mxu0 %v619
      %v2959 = vpop.f32.mrb[0].mxu0
      %v2960 = vadd.f32 %v2735, %v2959
      %v2961 = vpop.f32.mrb[0].mxu0
      %2962 = vmatprep.mubr.f32.mxu0 %v652
      %2963 = vmatmul.mubr.f32.gmra.mrb[0].mxu0 %v620
      %v2964 = vpop.f32.mrb[0].mxu0
      %v2965 = vadd.f32 %v2740, %v2964
      %v2966 = vpop.f32.mrb[0].mxu0
      %2967 = vmatprep.mubr.f32.mxu0 %v653
      %2968 = vmatmul.mubr.f32.gmra.mrb[0].mxu0 %v621
      %v2969 = vpop.f32.mrb[0].mxu0
      %v2970 = vadd.f32 %v2745, %v2969
      %v2971 = vpop.f32.mrb[0].mxu0
      %2972 = vmatprep.mubr.f32.mxu0 %v654
      %2973 = vmatmul.mubr.f32.gmra.mrb[0].mxu0 %v622
      %v2974 = vpop.f32.mrb[0].mxu0
      %v2975 = vadd.f32 %v2750, %v2974
      %v2976 = vpop.f32.mrb[0].mxu0
      %2977 = vmatprep.mubr.f32.mxu0 %v655
      %2978 = vmatmul.mubr.f32.gmra.mrb[0].mxu0 %v623
      %v2979 = vpop.f32.mrb[0].mxu0
      %v2980 = vadd.f32 %v2755, %v2979
      %v2981 = vpop.f32.mrb[0].mxu0
      %2982 = vmatprep.mubr.f32.mxu0 %v656
      %2983 = vmatmul.mubr.f32.gmra.mrb[0].mxu0 %v624
      %v2984 = vpop.f32.mrb[0].mxu0
      %v2985 = vadd.f32 %v2760, %v2984
      %v2986 = vpop.f32.mrb[0].mxu0
      %2987 = vmatprep.mubr.f32.mxu0 %v657
      %2988 = vmatmul.mubr.f32.gmra.mrb[0].mxu0 %v625
      %v2989 = vpop.f32.mrb[0].mxu0
      %v2990 = vadd.f32 %v2765, %v2989
      %v2991 = vpop.f32.mrb[0].mxu0
      %2992 = vmatprep.mubr.f32.mxu0 %v658
      %2993 = vmatmul.mubr.f32.gmra.mrb[0].mxu0 %v626
      %v2994 = vpop.f32.mrb[0].mxu0
      %v2995 = vadd.f32 %v2770, %v2994
      %v2996 = vpop.f32.mrb[0].mxu0
      %2997 = vmatprep.mubr.f32.mxu0 %v659
      %2998 = vmatmul.mubr.f32.gmra.mrb[0].mxu0 %v627
      %v2999 = vpop.f32.mrb[0].mxu0
      %v3000 = vadd.f32 %v2775, %v2999
      %v3001 = vpop.f32.mrb[0].mxu0
      %3002 = vmatprep.mubr.f32.mxu0 %v660
      %3003 = vmatmul.mubr.f32.gmra.mrb[0].mxu0 %v628
      %v3004 = vpop.f32.mrb[0].mxu0
      %v3005 = vadd.f32 %v2780, %v3004
      %v3006 = vpop.f32.mrb[0].mxu0
      %3007 = vmatprep.mubr.f32.mxu0 %v661
      %3008 = vmatmul.mubr.f32.gmra.mrb[0].mxu0 %v629
      %v3009 = vpop.f32.mrb[0].mxu0
      %v3010 = vadd.f32 %v2785, %v3009
      %v3011 = vpop.f32.mrb[0].mxu0
      %3012 = vmatprep.mubr.f32.mxu0 %v662
      %3013 = vmatmul.mubr.f32.gmra.mrb[0].mxu0 %v630
      %v3014 = vpop.f32.mrb[0].mxu0
      %v3015 = vadd.f32 %v2790, %v3014
      %v3016 = vpop.f32.mrb[0].mxu0
      %3017 = vmatprep.mubr.f32.mxu0 %v663
      %3018 = vmatmul.mubr.f32.gmra.mrb[0].mxu0 %v631
      %v3019 = vpop.f32.mrb[0].mxu0
      %v3020 = vadd.f32 %v2795, %v3019
      %v3021 = vpop.f32.mrb[0].mxu0
      %3022 = vmatprep.mubr.f32.mxu0 %v664
      %3023 = vmatmul.mubr.f32.gmra.mrb[0].mxu0 %v632
      %v3024 = vpop.f32.mrb[0].mxu0
      %v3025 = vadd.f32 %v2800, %v3024
      %v3026 = vpop.f32.mrb[0].mxu0
      %3027 = vmatprep.mubr.f32.mxu0 %v665
      %3028 = vmatmul.mubr.f32.gmra.mrb[0].mxu0 %v633
      %v3029 = vpop.f32.mrb[0].mxu0
      %v3030 = vadd.f32 %v2805, %v3029
      %v3031 = vpop.f32.mrb[0].mxu0
      %3032 = vmatprep.mubr.f32.mxu0 %v666
      %3033 = vmatmul.mubr.f32.gmra.mrb[0].mxu0 %v634
      %v3034 = vpop.f32.mrb[0].mxu0
      %v3035 = vadd.f32 %v2810, %v3034
      %v3036 = vpop.f32.mrb[0].mxu0
      %3037 = vmatprep.mubr.f32.mxu0 %v667
      %3038 = vmatmul.mubr.f32.gmra.mrb[0].mxu0 %v635
      %v3039 = vpop.f32.mrb[0].mxu0
      %v3040 = vadd.f32 %v2815, %v3039
      %v3041 = vpop.f32.mrb[0].mxu0
      %3042 = vmatprep.mubr.f32.mxu0 %v668
      %3043 = vmatmul.mubr.f32.gmra.mrb[0].mxu0 %v636
      %v3044 = vpop.f32.mrb[0].mxu0
      %v3045 = vadd.f32 %v2820, %v3044
      %v3046 = vpop.f32.mrb[0].mxu0
      %3047 = vmatprep.mubr.f32.mxu0 %v669
      %3048 = vmatmul.mubr.f32.gmra.mrb[0].mxu0 %v637
      %v3049 = vpop.f32.mrb[0].mxu0
      %v3050 = vadd.f32 %v2825, %v3049
      %v3051 = vpop.f32.mrb[0].mxu0
      %3052 = vmatprep.mubr.f32.mxu0 %v670
      %3053 = vmatmul.mubr.f32.gmra.mrb[0].mxu0 %v638
      %v3054 = vpop.f32.mrb[0].mxu0
      %v3055 = vadd.f32 %v2830, %v3054
      %v3056 = vpop.f32.mrb[0].mxu0
      %3057 = vmatprep.mubr.f32.mxu0 %v671
      %3058 = vmatmul.mubr.f32.gmra.mrb[0].mxu0 %v639
      %v3059 = vpop.f32.mrb[0].mxu0
      %v3060 = vadd.f32 %v2835, %v3059
      %v3061 = vpop.f32.mrb[0].mxu0
      %3062 = vmatprep.mubr.f32.mxu0 %v672
      %3063 = vmatmul.mubr.f32.gmra.mrb[0].mxu0 %v640
      %v3064 = vpop.f32.mrb[0].mxu0
      %v3065 = vadd.f32 %v2840, %v3064
      %v3066 = vpop.f32.mrb[0].mxu0
      %3067 = vmatprep.mubr.f32.mxu0 %v673
      %3068 = vmatmul.mubr.f32.gmra.mrb[0].mxu0 %v641
      %v3069 = vpop.f32.mrb[0].mxu0
      %v3070 = vadd.f32 %v2845, %v3069
      %v3071 = vpop.f32.mrb[0].mxu0
      %3072 = vmatprep.mubr.f32.mxu0 %v674
      %3073 = vmatmul.mubr.f32.gmra.mrb[0].mxu0 %v642
      %v3074 = vpop.f32.mrb[0].mxu0
      %v3075 = vadd.f32 %v2850, %v3074
      %v3076 = vpop.f32.mrb[0].mxu0
      %3077 = vmatprep.mubr.f32.mxu0 %v675
      %3078 = vmatmul.mubr.f32.gmra.mrb[0].mxu0 %v643
      %v3079 = vpop.f32.mrb[0].mxu0
      %v3080 = vadd.f32 %v2855, %v3079
      %v3081 = vpop.f32.mrb[0].mxu0
      %3082 = vmatprep.mubr.f32.mxu0 %v676
      %3083 = vmatmul.mubr.f32.gmra.mrb[0].mxu0 %v644
      %v3084 = vpop.f32.mrb[0].mxu0
      %v3085 = vadd.f32 %v2860, %v3084
      %v3086 = vpop.f32.mrb[0].mxu0
      %3087 = vmatprep.mubr.f32.mxu0 %v677
      %3088 = vmatmul.mubr.f32.gmra.mrb[0].mxu0 %v645
      %v3089 = vpop.f32.mrb[0].mxu0
      %v3090 = vadd.f32 %v2865, %v3089
      %v3091 = vpop.f32.mrb[0].mxu0
      %3092 = vmatprep.mubr.f32.mxu0 %v678
      %3093 = vmatmul.mubr.f32.gmra.mrb[0].mxu0 %v646
      %v3094 = vpop.f32.mrb[0].mxu0
      %v3095 = vadd.f32 %v2870, %v3094
      %v3096 = vpop.f32.mrb[0].mxu0
      %3097 = vmatprep.mubr.f32.mxu0 %v679
      %3098 = vmatmul.mubr.f32.gmra.mrb[0].mxu0 %v647
      %v3099 = vpop.f32.mrb[0].mxu0
      %v3100 = vadd.f32 %v2875, %v3099
      %v3101 = vpop.f32.mrb[0].mxu0
      %3102 = vmatprep.mubr.f32.mxu0 %v680
      %3103 = vmatmul.mubr.f32.gmra.mrb[0].mxu0 %v648
      %v3104 = vpop.f32.mrb[0].mxu0
      %v3105 = vadd.f32 %v2880, %v3104
      %v3106 = vpop.f32.mrb[0].mxu0
      %3107 = vdwg.mxu0
      %3108 = vmatprep.subr.mxu0 0.0
      %3109 = vmatpush1.msra.mxu0 %v1325
      %3110 = vmatprep.subr.mxu0 0.0
      %3111 = vmatpush1.msra.mxu0 %v1326
      %3112 = vmatprep.subr.mxu0 0.0
      %3113 = vmatpush1.msra.mxu0 %v1327
      %3114 = vmatprep.subr.mxu0 0.0
      %3115 = vmatpush1.msra.mxu0 %v1328
      %3116 = vmatprep.subr.mxu0 0.0
      %3117 = vmatpush1.msra.mxu0 %v1329
      %3118 = vmatprep.subr.mxu0 0.0
      %3119 = vmatpush1.msra.mxu0 %v1330
      %3120 = vmatprep.subr.mxu0 0.0
      %3121 = vmatpush1.msra.mxu0 %v1331
      %3122 = vmatprep.subr.mxu0 0.0
      %3123 = vmatpush1.msra.mxu0 %v1332
      %3124 = vmatprep.subr.mxu0 0.0
      %3125 = vmatpush1.msra.mxu0 %v1333
      %3126 = vmatprep.subr.mxu0 0.0
      %3127 = vmatpush1.msra.mxu0 %v1334
      %3128 = vmatprep.subr.mxu0 0.0
      %3129 = vmatpush1.msra.mxu0 %v1335
      %3130 = vmatprep.subr.mxu0 0.0
      %3131 = vmatpush1.msra.mxu0 %v1336
      %3132 = vmatprep.subr.mxu0 0.0
      %3133 = vmatpush1.msra.mxu0 %v1337
      %3134 = vmatprep.subr.mxu0 0.0
      %3135 = vmatpush1.msra.mxu0 %v1338
      %3136 = vmatprep.subr.mxu0 0.0
      %3137 = vmatpush1.msra.mxu0 %v1339
      %3138 = vmatprep.subr.mxu0 0.0
      %3139 = vmatpush1.msra.mxu0 %v1340
      %3140 = vmatprep.subr.mxu0 0.0
      %3141 = vmatpush1.msra.mxu0 %v1341
      %3142 = vmatprep.subr.mxu0 0.0
      %3143 = vmatpush1.msra.mxu0 %v1342
      %3144 = vmatprep.subr.mxu0 0.0
      %3145 = vmatpush1.msra.mxu0 %v1343
      %3146 = vmatprep.subr.mxu0 0.0
      %3147 = vmatpush1.msra.mxu0 %v1344
      %3148 = vmatprep.subr.mxu0 0.0
      %3149 = vmatpush1.msra.mxu0 %v1345
      %3150 = vmatprep.subr.mxu0 0.0
      %3151 = vmatpush1.msra.mxu0 %v1346
      %3152 = vmatprep.subr.mxu0 0.0
      %3153 = vmatpush1.msra.mxu0 %v1347
      %3154 = vmatprep.subr.mxu0 0.0
      %3155 = vmatpush1.msra.mxu0 %v1348
      %3156 = vmatprep.subr.mxu0 0.0
      %3157 = vmatpush1.msra.mxu0 %v1349
      %3158 = vmatprep.subr.mxu0 0.0
      %3159 = vmatpush1.msra.mxu0 %v1350
      %3160 = vmatprep.subr.mxu0 0.0
      %3161 = vmatpush1.msra.mxu0 %v1351
      %3162 = vmatprep.subr.mxu0 0.0
      %3163 = vmatpush1.msra.mxu0 %v1352
      %3164 = vmatprep.subr.mxu0 0.0
      %3165 = vmatpush1.msra.mxu0 %v1353
      %3166 = vmatprep.subr.mxu0 0.0
      %3167 = vmatpush1.msra.mxu0 %v1354
      %3168 = vmatprep.subr.mxu0 0.0
      %3169 = vmatpush1.msra.mxu0 %v1355
      %3170 = vmatprep.subr.mxu0 0.0
      %3171 = vmatpush1.msra.mxu0 %v1356
      %3172 = vmatprep.mubr.f32.mxu0 %v714
      %3173 = vmatmul.mubr.f32.gmra.mrb[0].mxu0 %v681
      %v3174 = vpop.f32.mrb[0].mxu0
      %v3175 = vadd.f32 %v2950, %v3174
      %v3176 = vpop.f32.mrb[0].mxu0
      %3177 = vmatprep.mubr.f32.mxu0 %v715
      %3178 = vmatmul.mubr.f32.gmra.mrb[0].mxu0 %v682
      %v3179 = vpop.f32.mrb[0].mxu0
      %v3180 = vadd.f32 %v2955, %v3179
      %v3181 = vpop.f32.mrb[0].mxu0
      %3182 = vmatprep.mubr.f32.mxu0 %v716
      %3183 = vmatmul.mubr.f32.gmra.mrb[0].mxu0 %v683
      %v3184 = vpop.f32.mrb[0].mxu0
      %v3185 = vadd.f32 %v2960, %v3184
      %v3186 = vpop.f32.mrb[0].mxu0
      %3187 = vmatprep.mubr.f32.mxu0 %v717
      %3188 = vmatmul.mubr.f32.gmra.mrb[0].mxu0 %v684
      %v3189 = vpop.f32.mrb[0].mxu0
      %v3190 = vadd.f32 %v2965, %v3189
      %v3191 = vpop.f32.mrb[0].mxu0
      %3192 = vmatprep.mubr.f32.mxu0 %v718
      %3193 = vmatmul.mubr.f32.gmra.mrb[0].mxu0 %v685
      %v3194 = vpop.f32.mrb[0].mxu0
      %v3195 = vadd.f32 %v2970, %v3194
      %v3196 = vpop.f32.mrb[0].mxu0
      %3197 = vmatprep.mubr.f32.mxu0 %v719
      %3198 = vmatmul.mubr.f32.gmra.mrb[0].mxu0 %v686
      %v3199 = vpop.f32.mrb[0].mxu0
      %v3200 = vadd.f32 %v2975, %v3199
      %v3201 = vpop.f32.mrb[0].mxu0
      %3202 = vmatprep.mubr.f32.mxu0 %v720
      %3203 = vmatmul.mubr.f32.gmra.mrb[0].mxu0 %v687
      %v3204 = vpop.f32.mrb[0].mxu0
      %v3205 = vadd.f32 %v2980, %v3204
      %v3206 = vpop.f32.mrb[0].mxu0
      %3207 = vmatprep.mubr.f32.mxu0 %v721
      %3208 = vmatmul.mubr.f32.gmra.mrb[0].mxu0 %v688
      %v3209 = vpop.f32.mrb[0].mxu0
      %v3210 = vadd.f32 %v2985, %v3209
      %v3211 = vpop.f32.mrb[0].mxu0
      %3212 = vmatprep.mubr.f32.mxu0 %v722
      %3213 = vmatmul.mubr.f32.gmra.mrb[0].mxu0 %v689
      %v3214 = vpop.f32.mrb[0].mxu0
      %v3215 = vadd.f32 %v2990, %v3214
      %v3216 = vpop.f32.mrb[0].mxu0
      %3217 = vmatprep.mubr.f32.mxu0 %v723
      %3218 = vmatmul.mubr.f32.gmra.mrb[0].mxu0 %v690
      %v3219 = vpop.f32.mrb[0].mxu0
      %v3220 = vadd.f32 %v2995, %v3219
      %v3221 = vpop.f32.mrb[0].mxu0
      %3222 = vmatprep.mubr.f32.mxu0 %v724
      %3223 = vmatmul.mubr.f32.gmra.mrb[0].mxu0 %v691
      %v3224 = vpop.f32.mrb[0].mxu0
      %v3225 = vadd.f32 %v3000, %v3224
      %v3226 = vpop.f32.mrb[0].mxu0
      %3227 = vmatprep.mubr.f32.mxu0 %v725
      %3228 = vmatmul.mubr.f32.gmra.mrb[0].mxu0 %v692
      %v3229 = vpop.f32.mrb[0].mxu0
      %v3230 = vadd.f32 %v3005, %v3229
      %v3231 = vpop.f32.mrb[0].mxu0
      %3232 = vmatprep.mubr.f32.mxu0 %v726
      %3233 = vmatmul.mubr.f32.gmra.mrb[0].mxu0 %v693
      %v3234 = vpop.f32.mrb[0].mxu0
      %v3235 = vadd.f32 %v3010, %v3234
      %v3236 = vpop.f32.mrb[0].mxu0
      %3237 = vmatprep.mubr.f32.mxu0 %v727
      %3238 = vmatmul.mubr.f32.gmra.mrb[0].mxu0 %v694
      %v3239 = vpop.f32.mrb[0].mxu0
      %v3240 = vadd.f32 %v3015, %v3239
      %v3241 = vpop.f32.mrb[0].mxu0
      %3242 = vmatprep.mubr.f32.mxu0 %v728
      %3243 = vmatmul.mubr.f32.gmra.mrb[0].mxu0 %v695
      %v3244 = vpop.f32.mrb[0].mxu0
      %v3245 = vadd.f32 %v3020, %v3244
      %v3246 = vpop.f32.mrb[0].mxu0
      %3247 = vmatprep.mubr.f32.mxu0 %v729
      %3248 = vmatmul.mubr.f32.gmra.mrb[0].mxu0 %v696
      %v3249 = vpop.f32.mrb[0].mxu0
      %v3250 = vadd.f32 %v3025, %v3249
      %v3251 = vpop.f32.mrb[0].mxu0
      %3252 = vmatprep.mubr.f32.mxu0 %v730
      %3253 = vmatmul.mubr.f32.gmra.mrb[0].mxu0 %v697
      %v3254 = vpop.f32.mrb[0].mxu0
      %v3255 = vadd.f32 %v3030, %v3254
      %v3256 = vpop.f32.mrb[0].mxu0
      %3257 = vmatprep.mubr.f32.mxu0 %v731
      %3258 = vmatmul.mubr.f32.gmra.mrb[0].mxu0 %v698
      %v3259 = vpop.f32.mrb[0].mxu0
      %v3260 = vadd.f32 %v3035, %v3259
      %v3261 = vpop.f32.mrb[0].mxu0
      %3262 = vmatprep.mubr.f32.mxu0 %v732
      %3263 = vmatmul.mubr.f32.gmra.mrb[0].mxu0 %v699
      %v3264 = vpop.f32.mrb[0].mxu0
      %v3265 = vadd.f32 %v3040, %v3264
      %v3266 = vpop.f32.mrb[0].mxu0
      %3267 = vmatprep.mubr.f32.mxu0 %v733
      %3268 = vmatmul.mubr.f32.gmra.mrb[0].mxu0 %v700
      %v3269 = vpop.f32.mrb[0].mxu0
      %v3270 = vadd.f32 %v3045, %v3269
      %v3271 = vpop.f32.mrb[0].mxu0
      %3272 = vmatprep.mubr.f32.mxu0 %v734
      %3273 = vmatmul.mubr.f32.gmra.mrb[0].mxu0 %v701
      %v3274 = vpop.f32.mrb[0].mxu0
      %v3275 = vadd.f32 %v3050, %v3274
      %v3276 = vpop.f32.mrb[0].mxu0
      %3277 = vmatprep.mubr.f32.mxu0 %v735
      %3278 = vmatmul.mubr.f32.gmra.mrb[0].mxu0 %v702
      %v3279 = vpop.f32.mrb[0].mxu0
      %v3280 = vadd.f32 %v3055, %v3279
      %v3281 = vpop.f32.mrb[0].mxu0
      %3282 = vmatprep.mubr.f32.mxu0 %v736
      %3283 = vmatmul.mubr.f32.gmra.mrb[0].mxu0 %v703
      %v3284 = vpop.f32.mrb[0].mxu0
      %v3285 = vadd.f32 %v3060, %v3284
      %v3286 = vpop.f32.mrb[0].mxu0
      %3287 = vmatprep.mubr.f32.mxu0 %v737
      %3288 = vmatmul.mubr.f32.gmra.mrb[0].mxu0 %v704
      %v3289 = vpop.f32.mrb[0].mxu0
      %v3290 = vadd.f32 %v3065, %v3289
      %v3291 = vpop.f32.mrb[0].mxu0
      %3292 = vmatprep.mubr.f32.mxu0 %v738
      %3293 = vmatmul.mubr.f32.gmra.mrb[0].mxu0 %v705
      %v3294 = vpop.f32.mrb[0].mxu0
      %v3295 = vadd.f32 %v3070, %v3294
      %v3296 = vpop.f32.mrb[0].mxu0
      %3297 = vmatprep.mubr.f32.mxu0 %v739
      %3298 = vmatmul.mubr.f32.gmra.mrb[0].mxu0 %v706
      %v3299 = vpop.f32.mrb[0].mxu0
      %v3300 = vadd.f32 %v3075, %v3299
      %v3301 = vpop.f32.mrb[0].mxu0
      %3302 = vmatprep.mubr.f32.mxu0 %v740
      %3303 = vmatmul.mubr.f32.gmra.mrb[0].mxu0 %v707
      %v3304 = vpop.f32.mrb[0].mxu0
      %v3305 = vadd.f32 %v3080, %v3304
      %v3306 = vpop.f32.mrb[0].mxu0
      %3307 = vmatprep.mubr.f32.mxu0 %v741
      %3308 = vmatmul.mubr.f32.gmra.mrb[0].mxu0 %v708
      %v3309 = vpop.f32.mrb[0].mxu0
      %v3310 = vadd.f32 %v3085, %v3309
      %v3311 = vpop.f32.mrb[0].mxu0
      %3312 = vmatprep.mubr.f32.mxu0 %v742
      %3313 = vmatmul.mubr.f32.gmra.mrb[0].mxu0 %v709
      %v3314 = vpop.f32.mrb[0].mxu0
      %v3315 = vadd.f32 %v3090, %v3314
      %v3316 = vpop.f32.mrb[0].mxu0
      %3317 = vmatprep.mubr.f32.mxu0 %v743
      %3318 = vmatmul.mubr.f32.gmra.mrb[0].mxu0 %v710
      %v3319 = vpop.f32.mrb[0].mxu0
      %v3320 = vadd.f32 %v3095, %v3319
      %v3321 = vpop.f32.mrb[0].mxu0
      %3322 = vmatprep.mubr.f32.mxu0 %v744
      %3323 = vmatmul.mubr.f32.gmra.mrb[0].mxu0 %v711
      %v3324 = vpop.f32.mrb[0].mxu0
      %v3325 = vadd.f32 %v3100, %v3324
      %v3326 = vpop.f32.mrb[0].mxu0
      %3327 = vmatprep.mubr.f32.mxu0 %v745
      %3328 = vmatmul.mubr.f32.gmra.mrb[0].mxu0 %v712
      %v3329 = vpop.f32.mrb[0].mxu0
      %v3330 = vadd.f32 %v3105, %v3329
      %v3331 = vpop.f32.mrb[0].mxu0
      %3332 = vdwg.mxu0
      %3333 = vmatprep.subr.mxu0 0.0
      %3334 = vmatpush1.msra.mxu0 %v1357
      %3335 = vmatprep.subr.mxu0 0.0
      %3336 = vmatpush1.msra.mxu0 %v1358
      %3337 = vmatprep.subr.mxu0 0.0
      %3338 = vmatpush1.msra.mxu0 %v1359
      %3339 = vmatprep.subr.mxu0 0.0
      %3340 = vmatpush1.msra.mxu0 %v1360
      %3341 = vmatprep.subr.mxu0 0.0
      %3342 = vmatpush1.msra.mxu0 %v1361
      %3343 = vmatprep.subr.mxu0 0.0
      %3344 = vmatpush1.msra.mxu0 %v1362
      %3345 = vmatprep.subr.mxu0 0.0
      %3346 = vmatpush1.msra.mxu0 %v1363
      %3347 = vmatprep.subr.mxu0 0.0
      %3348 = vmatpush1.msra.mxu0 %v1364
      %3349 = vmatprep.subr.mxu0 0.0
      %3350 = vmatpush1.msra.mxu0 %v1365
      %3351 = vmatprep.subr.mxu0 0.0
      %3352 = vmatpush1.msra.mxu0 %v1366
      %3353 = vmatprep.subr.mxu0 0.0
      %3354 = vmatpush1.msra.mxu0 %v1367
      %3355 = vmatprep.subr.mxu0 0.0
      %3356 = vmatpush1.msra.mxu0 %v1368
      %3357 = vmatprep.subr.mxu0 0.0
      %3358 = vmatpush1.msra.mxu0 %v1369
      %3359 = vmatprep.subr.mxu0 0.0
      %3360 = vmatpush1.msra.mxu0 %v1370
      %3361 = vmatprep.subr.mxu0 0.0
      %3362 = vmatpush1.msra.mxu0 %v1371
      %3363 = vmatprep.subr.mxu0 0.0
      %3364 = vmatpush1.msra.mxu0 %v1372
      %3365 = vmatprep.subr.mxu0 0.0
      %3366 = vmatpush1.msra.mxu0 %v1373
      %3367 = vmatprep.subr.mxu0 0.0
      %3368 = vmatpush1.msra.mxu0 %v1374
      %3369 = vmatprep.subr.mxu0 0.0
      %3370 = vmatpush1.msra.mxu0 %v1375
      %3371 = vmatprep.subr.mxu0 0.0
      %3372 = vmatpush1.msra.mxu0 %v1376
      %3373 = vmatprep.subr.mxu0 0.0
      %3374 = vmatpush1.msra.mxu0 %v1377
      %3375 = vmatprep.subr.mxu0 0.0
      %3376 = vmatpush1.msra.mxu0 %v1378
      %3377 = vmatprep.subr.mxu0 0.0
      %3378 = vmatpush1.msra.mxu0 %v1379
      %3379 = vmatprep.subr.mxu0 0.0
      %3380 = vmatpush1.msra.mxu0 %v1380
      %3381 = vmatprep.subr.mxu0 0.0
      %3382 = vmatpush1.msra.mxu0 %v1381
      %3383 = vmatprep.subr.mxu0 0.0
      %3384 = vmatpush1.msra.mxu0 %v1382
      %3385 = vmatprep.subr.mxu0 0.0
      %3386 = vmatpush1.msra.mxu0 %v1383
      %3387 = vmatprep.subr.mxu0 0.0
      %3388 = vmatpush1.msra.mxu0 %v1384
      %3389 = vmatprep.subr.mxu0 0.0
      %3390 = vmatpush1.msra.mxu0 %v1385
      %3391 = vmatprep.subr.mxu0 0.0
      %3392 = vmatpush1.msra.mxu0 %v1386
      %3393 = vmatprep.subr.mxu0 0.0
      %3394 = vmatpush1.msra.mxu0 %v1387
      %3395 = vmatprep.subr.mxu0 0.0
      %3396 = vmatpush1.msra.mxu0 %v1388
      %3397 = vmatprep.mubr.f32.mxu0 %v778
      %3398 = vmatmul.mubr.f32.gmra.mrb[0].mxu0 %v746
      %v3399 = vpop.f32.mrb[0].mxu0
      %v3400 = vadd.f32 %v3175, %v3399
      %v3401 = vpop.f32.mrb[0].mxu0
      %3402 = vmatprep.mubr.f32.mxu0 %v779
      %3403 = vmatmul.mubr.f32.gmra.mrb[0].mxu0 %v747
      %v3404 = vpop.f32.mrb[0].mxu0
      %v3405 = vadd.f32 %v3180, %v3404
      %v3406 = vpop.f32.mrb[0].mxu0
      %3407 = vmatprep.mubr.f32.mxu0 %v780
      %3408 = vmatmul.mubr.f32.gmra.mrb[0].mxu0 %v748
      %v3409 = vpop.f32.mrb[0].mxu0
      %v3410 = vadd.f32 %v3185, %v3409
      %v3411 = vpop.f32.mrb[0].mxu0
      %3412 = vmatprep.mubr.f32.mxu0 %v781
      %3413 = vmatmul.mubr.f32.gmra.mrb[0].mxu0 %v749
      %v3414 = vpop.f32.mrb[0].mxu0
      %v3415 = vadd.f32 %v3190, %v3414
      %v3416 = vpop.f32.mrb[0].mxu0
      %3417 = vmatprep.mubr.f32.mxu0 %v782
      %3418 = vmatmul.mubr.f32.gmra.mrb[0].mxu0 %v750
      %v3419 = vpop.f32.mrb[0].mxu0
      %v3420 = vadd.f32 %v3195, %v3419
      %v3421 = vpop.f32.mrb[0].mxu0
      %3422 = vmatprep.mubr.f32.mxu0 %v783
      %3423 = vmatmul.mubr.f32.gmra.mrb[0].mxu0 %v751
      %v3424 = vpop.f32.mrb[0].mxu0
      %v3425 = vadd.f32 %v3200, %v3424
      %v3426 = vpop.f32.mrb[0].mxu0
      %3427 = vmatprep.mubr.f32.mxu0 %v784
      %3428 = vmatmul.mubr.f32.gmra.mrb[0].mxu0 %v752
      %v3429 = vpop.f32.mrb[0].mxu0
      %v3430 = vadd.f32 %v3205, %v3429
      %v3431 = vpop.f32.mrb[0].mxu0
      %3432 = vmatprep.mubr.f32.mxu0 %v785
      %3433 = vmatmul.mubr.f32.gmra.mrb[0].mxu0 %v753
      %v3434 = vpop.f32.mrb[0].mxu0
      %v3435 = vadd.f32 %v3210, %v3434
      %v3436 = vpop.f32.mrb[0].mxu0
      %3437 = vmatprep.mubr.f32.mxu0 %v786
      %3438 = vmatmul.mubr.f32.gmra.mrb[0].mxu0 %v754
      %v3439 = vpop.f32.mrb[0].mxu0
      %v3440 = vadd.f32 %v3215, %v3439
      %v3441 = vpop.f32.mrb[0].mxu0
      %3442 = vmatprep.mubr.f32.mxu0 %v787
      %3443 = vmatmul.mubr.f32.gmra.mrb[0].mxu0 %v755
      %v3444 = vpop.f32.mrb[0].mxu0
      %v3445 = vadd.f32 %v3220, %v3444
      %v3446 = vpop.f32.mrb[0].mxu0
      %3447 = vmatprep.mubr.f32.mxu0 %v788
      %3448 = vmatmul.mubr.f32.gmra.mrb[0].mxu0 %v756
      %v3449 = vpop.f32.mrb[0].mxu0
      %v3450 = vadd.f32 %v3225, %v3449
      %v3451 = vpop.f32.mrb[0].mxu0
      %3452 = vmatprep.mubr.f32.mxu0 %v789
      %3453 = vmatmul.mubr.f32.gmra.mrb[0].mxu0 %v757
      %v3454 = vpop.f32.mrb[0].mxu0
      %v3455 = vadd.f32 %v3230, %v3454
      %v3456 = vpop.f32.mrb[0].mxu0
      %3457 = vmatprep.mubr.f32.mxu0 %v790
      %3458 = vmatmul.mubr.f32.gmra.mrb[0].mxu0 %v758
      %v3459 = vpop.f32.mrb[0].mxu0
      %v3460 = vadd.f32 %v3235, %v3459
      %v3461 = vpop.f32.mrb[0].mxu0
      %3462 = vmatprep.mubr.f32.mxu0 %v791
      %3463 = vmatmul.mubr.f32.gmra.mrb[0].mxu0 %v759
      %v3464 = vpop.f32.mrb[0].mxu0
      %v3465 = vadd.f32 %v3240, %v3464
      %v3466 = vpop.f32.mrb[0].mxu0
      %3467 = vmatprep.mubr.f32.mxu0 %v792
      %3468 = vmatmul.mubr.f32.gmra.mrb[0].mxu0 %v760
      %v3469 = vpop.f32.mrb[0].mxu0
      %v3470 = vadd.f32 %v3245, %v3469
      %v3471 = vpop.f32.mrb[0].mxu0
      %3472 = vmatprep.mubr.f32.mxu0 %v793
      %3473 = vmatmul.mubr.f32.gmra.mrb[0].mxu0 %v761
      %v3474 = vpop.f32.mrb[0].mxu0
      %v3475 = vadd.f32 %v3250, %v3474
      %v3476 = vpop.f32.mrb[0].mxu0
      %3477 = vmatprep.mubr.f32.mxu0 %v794
      %3478 = vmatmul.mubr.f32.gmra.mrb[0].mxu0 %v762
      %v3479 = vpop.f32.mrb[0].mxu0
      %v3480 = vadd.f32 %v3255, %v3479
      %v3481 = vpop.f32.mrb[0].mxu0
      %3482 = vmatprep.mubr.f32.mxu0 %v795
      %3483 = vmatmul.mubr.f32.gmra.mrb[0].mxu0 %v763
      %v3484 = vpop.f32.mrb[0].mxu0
      %v3485 = vadd.f32 %v3260, %v3484
      %v3486 = vpop.f32.mrb[0].mxu0
      %3487 = vmatprep.mubr.f32.mxu0 %v796
      %3488 = vmatmul.mubr.f32.gmra.mrb[0].mxu0 %v764
      %v3489 = vpop.f32.mrb[0].mxu0
      %v3490 = vadd.f32 %v3265, %v3489
      %v3491 = vpop.f32.mrb[0].mxu0
      %3492 = vmatprep.mubr.f32.mxu0 %v797
      %3493 = vmatmul.mubr.f32.gmra.mrb[0].mxu0 %v765
      %v3494 = vpop.f32.mrb[0].mxu0
      %v3495 = vadd.f32 %v3270, %v3494
      %v3496 = vpop.f32.mrb[0].mxu0
      %3497 = vmatprep.mubr.f32.mxu0 %v798
      %3498 = vmatmul.mubr.f32.gmra.mrb[0].mxu0 %v766
      %v3499 = vpop.f32.mrb[0].mxu0
      %v3500 = vadd.f32 %v3275, %v3499
      %v3501 = vpop.f32.mrb[0].mxu0
      %3502 = vmatprep.mubr.f32.mxu0 %v799
      %3503 = vmatmul.mubr.f32.gmra.mrb[0].mxu0 %v767
      %v3504 = vpop.f32.mrb[0].mxu0
      %v3505 = vadd.f32 %v3280, %v3504
      %v3506 = vpop.f32.mrb[0].mxu0
      %3507 = vmatprep.mubr.f32.mxu0 %v800
      %3508 = vmatmul.mubr.f32.gmra.mrb[0].mxu0 %v768
      %v3509 = vpop.f32.mrb[0].mxu0
      %v3510 = vadd.f32 %v3285, %v3509
      %v3511 = vpop.f32.mrb[0].mxu0
      %3512 = vmatprep.mubr.f32.mxu0 %v801
      %3513 = vmatmul.mubr.f32.gmra.mrb[0].mxu0 %v769
      %v3514 = vpop.f32.mrb[0].mxu0
      %v3515 = vadd.f32 %v3290, %v3514
      %v3516 = vpop.f32.mrb[0].mxu0
      %3517 = vmatprep.mubr.f32.mxu0 %v802
      %3518 = vmatmul.mubr.f32.gmra.mrb[0].mxu0 %v770
      %v3519 = vpop.f32.mrb[0].mxu0
      %v3520 = vadd.f32 %v3295, %v3519
      %v3521 = vpop.f32.mrb[0].mxu0
      %3522 = vmatprep.mubr.f32.mxu0 %v803
      %3523 = vmatmul.mubr.f32.gmra.mrb[0].mxu0 %v771
      %v3524 = vpop.f32.mrb[0].mxu0
      %v3525 = vadd.f32 %v3300, %v3524
      %v3526 = vpop.f32.mrb[0].mxu0
      %3527 = vmatprep.mubr.f32.mxu0 %v804
      %3528 = vmatmul.mubr.f32.gmra.mrb[0].mxu0 %v772
      %v3529 = vpop.f32.mrb[0].mxu0
      %v3530 = vadd.f32 %v3305, %v3529
      %v3531 = vpop.f32.mrb[0].mxu0
      %3532 = vmatprep.mubr.f32.mxu0 %v805
      %3533 = vmatmul.mubr.f32.gmra.mrb[0].mxu0 %v773
      %v3534 = vpop.f32.mrb[0].mxu0
      %v3535 = vadd.f32 %v3310, %v3534
      %v3536 = vpop.f32.mrb[0].mxu0
      %3537 = vmatprep.mubr.f32.mxu0 %v806
      %3538 = vmatmul.mubr.f32.gmra.mrb[0].mxu0 %v774
      %v3539 = vpop.f32.mrb[0].mxu0
      %v3540 = vadd.f32 %v3315, %v3539
      %v3541 = vpop.f32.mrb[0].mxu0
      %3542 = vmatprep.mubr.f32.mxu0 %v807
      %3543 = vmatmul.mubr.f32.gmra.mrb[0].mxu0 %v775
      %v3544 = vpop.f32.mrb[0].mxu0
      %v3545 = vadd.f32 %v3320, %v3544
      %v3546 = vpop.f32.mrb[0].mxu0
      %3547 = vmatprep.mubr.f32.mxu0 %v808
      %3548 = vmatmul.mubr.f32.gmra.mrb[0].mxu0 %v776
      %v3549 = vpop.f32.mrb[0].mxu0
      %v3550 = vadd.f32 %v3325, %v3549
      %v3551 = vpop.f32.mrb[0].mxu0
      %3552 = vmatprep.mubr.f32.mxu0 %v809
      %3553 = vmatmul.mubr.f32.gmra.mrb[0].mxu0 %v777
      %v3554 = vpop.f32.mrb[0].mxu0
      %v3555 = vadd.f32 %v3330, %v3554
      %v3556 = vpop.f32.mrb[0].mxu0
      %3557 = vdwg.mxu0
      %3558 = vmatprep.subr.mxu0 0.0
      %3559 = vmatpush1.msra.mxu0 %v1389
      %3560 = vmatprep.subr.mxu0 0.0
      %3561 = vmatpush1.msra.mxu0 %v1390
      %3562 = vmatprep.subr.mxu0 0.0
      %3563 = vmatpush1.msra.mxu0 %v1391
      %3564 = vmatprep.subr.mxu0 0.0
      %3565 = vmatpush1.msra.mxu0 %v1392
      %3566 = vmatprep.subr.mxu0 0.0
      %3567 = vmatpush1.msra.mxu0 %v1393
      %3568 = vmatprep.subr.mxu0 0.0
      %3569 = vmatpush1.msra.mxu0 %v1394
      %3570 = vmatprep.subr.mxu0 0.0
      %3571 = vmatpush1.msra.mxu0 %v1395
      %3572 = vmatprep.subr.mxu0 0.0
      %3573 = vmatpush1.msra.mxu0 %v1396
      %3574 = vmatprep.subr.mxu0 0.0
      %3575 = vmatpush1.msra.mxu0 %v1397
      %3576 = vmatprep.subr.mxu0 0.0
      %3577 = vmatpush1.msra.mxu0 %v1398
      %3578 = vmatprep.subr.mxu0 0.0
      %3579 = vmatpush1.msra.mxu0 %v1399
      %3580 = vmatprep.subr.mxu0 0.0
      %3581 = vmatpush1.msra.mxu0 %v1400
      %3582 = vmatprep.subr.mxu0 0.0
      %3583 = vmatpush1.msra.mxu0 %v1401
      %3584 = vmatprep.subr.mxu0 0.0
      %3585 = vmatpush1.msra.mxu0 %v1402
      %3586 = vmatprep.subr.mxu0 0.0
      %3587 = vmatpush1.msra.mxu0 %v1403
      %3588 = vmatprep.subr.mxu0 0.0
      %3589 = vmatpush1.msra.mxu0 %v1404
      %3590 = vmatprep.subr.mxu0 0.0
      %3591 = vmatpush1.msra.mxu0 %v1405
      %3592 = vmatprep.subr.mxu0 0.0
      %3593 = vmatpush1.msra.mxu0 %v1406
      %3594 = vmatprep.subr.mxu0 0.0
      %3595 = vmatpush1.msra.mxu0 %v1407
      %3596 = vmatprep.subr.mxu0 0.0
      %3597 = vmatpush1.msra.mxu0 %v1408
      %3598 = vmatprep.subr.mxu0 0.0
      %3599 = vmatpush1.msra.mxu0 %v1409
      %3600 = vmatprep.subr.mxu0 0.0
      %3601 = vmatpush1.msra.mxu0 %v1410
      %3602 = vmatprep.subr.mxu0 0.0
      %3603 = vmatpush1.msra.mxu0 %v1411
      %3604 = vmatprep.subr.mxu0 0.0
      %3605 = vmatpush1.msra.mxu0 %v1412
      %3606 = vmatprep.subr.mxu0 0.0
      %3607 = vmatpush1.msra.mxu0 %v1413
      %3608 = vmatprep.subr.mxu0 0.0
      %3609 = vmatpush1.msra.mxu0 %v1414
      %3610 = vmatprep.subr.mxu0 0.0
      %3611 = vmatpush1.msra.mxu0 %v1415
      %3612 = vmatprep.subr.mxu0 0.0
      %3613 = vmatpush1.msra.mxu0 %v1416
      %3614 = vmatprep.subr.mxu0 0.0
      %3615 = vmatpush1.msra.mxu0 %v1417
      %3616 = vmatprep.subr.mxu0 0.0
      %3617 = vmatpush1.msra.mxu0 %v1418
      %3618 = vmatprep.subr.mxu0 0.0
      %3619 = vmatpush1.msra.mxu0 %v1419
      %3620 = vmatprep.subr.mxu0 0.0
      %3621 = vmatpush1.msra.mxu0 %v1420
      %3622 = vmatprep.mubr.f32.mxu0 %v843
      %3623 = vmatmul.mubr.f32.gmra.mrb[0].mxu0 %v811
      %v3624 = vpop.f32.mrb[0].mxu0
      %v3625 = vadd.f32 %v3400, %v3624
      %v3626 = vpop.f32.mrb[0].mxu0
      %3627 = vmatprep.mubr.f32.mxu0 %v844
      %3628 = vmatmul.mubr.f32.gmra.mrb[0].mxu0 %v812
      %v3629 = vpop.f32.mrb[0].mxu0
      %v3630 = vadd.f32 %v3405, %v3629
      %v3631 = vpop.f32.mrb[0].mxu0
      %3632 = vmatprep.mubr.f32.mxu0 %v845
      %3633 = vmatmul.mubr.f32.gmra.mrb[0].mxu0 %v813
      %v3634 = vpop.f32.mrb[0].mxu0
      %v3635 = vadd.f32 %v3410, %v3634
      %v3636 = vpop.f32.mrb[0].mxu0
      %3637 = vmatprep.mubr.f32.mxu0 %v846
      %3638 = vmatmul.mubr.f32.gmra.mrb[0].mxu0 %v814
      %v3639 = vpop.f32.mrb[0].mxu0
      %v3640 = vadd.f32 %v3415, %v3639
      %v3641 = vpop.f32.mrb[0].mxu0
      %3642 = vmatprep.mubr.f32.mxu0 %v847
      %3643 = vmatmul.mubr.f32.gmra.mrb[0].mxu0 %v815
      %v3644 = vpop.f32.mrb[0].mxu0
      %v3645 = vadd.f32 %v3420, %v3644
      %v3646 = vpop.f32.mrb[0].mxu0
      %3647 = vmatprep.mubr.f32.mxu0 %v848
      %3648 = vmatmul.mubr.f32.gmra.mrb[0].mxu0 %v816
      %v3649 = vpop.f32.mrb[0].mxu0
      %v3650 = vadd.f32 %v3425, %v3649
      %v3651 = vpop.f32.mrb[0].mxu0
      %3652 = vmatprep.mubr.f32.mxu0 %v849
      %3653 = vmatmul.mubr.f32.gmra.mrb[0].mxu0 %v817
      %v3654 = vpop.f32.mrb[0].mxu0
      %v3655 = vadd.f32 %v3430, %v3654
      %v3656 = vpop.f32.mrb[0].mxu0
      %3657 = vmatprep.mubr.f32.mxu0 %v850
      %3658 = vmatmul.mubr.f32.gmra.mrb[0].mxu0 %v818
      %v3659 = vpop.f32.mrb[0].mxu0
      %v3660 = vadd.f32 %v3435, %v3659
      %v3661 = vpop.f32.mrb[0].mxu0
      %3662 = vmatprep.mubr.f32.mxu0 %v851
      %3663 = vmatmul.mubr.f32.gmra.mrb[0].mxu0 %v819
      %v3664 = vpop.f32.mrb[0].mxu0
      %v3665 = vadd.f32 %v3440, %v3664
      %v3666 = vpop.f32.mrb[0].mxu0
      %3667 = vmatprep.mubr.f32.mxu0 %v852
      %3668 = vmatmul.mubr.f32.gmra.mrb[0].mxu0 %v820
      %v3669 = vpop.f32.mrb[0].mxu0
      %v3670 = vadd.f32 %v3445, %v3669
      %v3671 = vpop.f32.mrb[0].mxu0
      %3672 = vmatprep.mubr.f32.mxu0 %v853
      %3673 = vmatmul.mubr.f32.gmra.mrb[0].mxu0 %v821
      %v3674 = vpop.f32.mrb[0].mxu0
      %v3675 = vadd.f32 %v3450, %v3674
      %v3676 = vpop.f32.mrb[0].mxu0
      %3677 = vmatprep.mubr.f32.mxu0 %v854
      %3678 = vmatmul.mubr.f32.gmra.mrb[0].mxu0 %v822
      %v3679 = vpop.f32.mrb[0].mxu0
      %v3680 = vadd.f32 %v3455, %v3679
      %v3681 = vpop.f32.mrb[0].mxu0
      %3682 = vmatprep.mubr.f32.mxu0 %v855
      %3683 = vmatmul.mubr.f32.gmra.mrb[0].mxu0 %v823
      %v3684 = vpop.f32.mrb[0].mxu0
      %v3685 = vadd.f32 %v3460, %v3684
      %v3686 = vpop.f32.mrb[0].mxu0
      %3687 = vmatprep.mubr.f32.mxu0 %v856
      %3688 = vmatmul.mubr.f32.gmra.mrb[0].mxu0 %v824
      %v3689 = vpop.f32.mrb[0].mxu0
      %v3690 = vadd.f32 %v3465, %v3689
      %v3691 = vpop.f32.mrb[0].mxu0
      %3692 = vmatprep.mubr.f32.mxu0 %v857
      %3693 = vmatmul.mubr.f32.gmra.mrb[0].mxu0 %v825
      %v3694 = vpop.f32.mrb[0].mxu0
      %v3695 = vadd.f32 %v3470, %v3694
      %v3696 = vpop.f32.mrb[0].mxu0
      %3697 = vmatprep.mubr.f32.mxu0 %v858
      %3698 = vmatmul.mubr.f32.gmra.mrb[0].mxu0 %v826
      %v3699 = vpop.f32.mrb[0].mxu0
      %v3700 = vadd.f32 %v3475, %v3699
      %v3701 = vpop.f32.mrb[0].mxu0
      %3702 = vmatprep.mubr.f32.mxu0 %v859
      %3703 = vmatmul.mubr.f32.gmra.mrb[0].mxu0 %v827
      %v3704 = vpop.f32.mrb[0].mxu0
      %v3705 = vadd.f32 %v3480, %v3704
      %v3706 = vpop.f32.mrb[0].mxu0
      %3707 = vmatprep.mubr.f32.mxu0 %v860
      %3708 = vmatmul.mubr.f32.gmra.mrb[0].mxu0 %v828
      %v3709 = vpop.f32.mrb[0].mxu0
      %v3710 = vadd.f32 %v3485, %v3709
      %v3711 = vpop.f32.mrb[0].mxu0
      %3712 = vmatprep.mubr.f32.mxu0 %v861
      %3713 = vmatmul.mubr.f32.gmra.mrb[0].mxu0 %v829
      %v3714 = vpop.f32.mrb[0].mxu0
      %v3715 = vadd.f32 %v3490, %v3714
      %v3716 = vpop.f32.mrb[0].mxu0
      %3717 = vmatprep.mubr.f32.mxu0 %v862
      %3718 = vmatmul.mubr.f32.gmra.mrb[0].mxu0 %v830
      %v3719 = vpop.f32.mrb[0].mxu0
      %v3720 = vadd.f32 %v3495, %v3719
      %v3721 = vpop.f32.mrb[0].mxu0
      %3722 = vmatprep.mubr.f32.mxu0 %v863
      %3723 = vmatmul.mubr.f32.gmra.mrb[0].mxu0 %v831
      %v3724 = vpop.f32.mrb[0].mxu0
      %v3725 = vadd.f32 %v3500, %v3724
      %v3726 = vpop.f32.mrb[0].mxu0
      %3727 = vmatprep.mubr.f32.mxu0 %v864
      %3728 = vmatmul.mubr.f32.gmra.mrb[0].mxu0 %v832
      %v3729 = vpop.f32.mrb[0].mxu0
      %v3730 = vadd.f32 %v3505, %v3729
      %v3731 = vpop.f32.mrb[0].mxu0
      %3732 = vmatprep.mubr.f32.mxu0 %v865
      %3733 = vmatmul.mubr.f32.gmra.mrb[0].mxu0 %v833
      %v3734 = vpop.f32.mrb[0].mxu0
      %v3735 = vadd.f32 %v3510, %v3734
      %v3736 = vpop.f32.mrb[0].mxu0
      %3737 = vmatprep.mubr.f32.mxu0 %v866
      %3738 = vmatmul.mubr.f32.gmra.mrb[0].mxu0 %v834
      %v3739 = vpop.f32.mrb[0].mxu0
      %v3740 = vadd.f32 %v3515, %v3739
      %v3741 = vpop.f32.mrb[0].mxu0
      %3742 = vmatprep.mubr.f32.mxu0 %v867
      %3743 = vmatmul.mubr.f32.gmra.mrb[0].mxu0 %v835
      %v3744 = vpop.f32.mrb[0].mxu0
      %v3745 = vadd.f32 %v3520, %v3744
      %v3746 = vpop.f32.mrb[0].mxu0
      %3747 = vmatprep.mubr.f32.mxu0 %v868
      %3748 = vmatmul.mubr.f32.gmra.mrb[0].mxu0 %v836
      %v3749 = vpop.f32.mrb[0].mxu0
      %v3750 = vadd.f32 %v3525, %v3749
      %v3751 = vpop.f32.mrb[0].mxu0
      %3752 = vmatprep.mubr.f32.mxu0 %v869
      %3753 = vmatmul.mubr.f32.gmra.mrb[0].mxu0 %v837
      %v3754 = vpop.f32.mrb[0].mxu0
      %v3755 = vadd.f32 %v3530, %v3754
      %v3756 = vpop.f32.mrb[0].mxu0
      %3757 = vmatprep.mubr.f32.mxu0 %v870
      %3758 = vmatmul.mubr.f32.gmra.mrb[0].mxu0 %v838
      %v3759 = vpop.f32.mrb[0].mxu0
      %v3760 = vadd.f32 %v3535, %v3759
      %v3761 = vpop.f32.mrb[0].mxu0
      %3762 = vmatprep.mubr.f32.mxu0 %v871
      %3763 = vmatmul.mubr.f32.gmra.mrb[0].mxu0 %v839
      %v3764 = vpop.f32.mrb[0].mxu0
      %v3765 = vadd.f32 %v3540, %v3764
      %v3766 = vpop.f32.mrb[0].mxu0
      %3767 = vmatprep.mubr.f32.mxu0 %v872
      %3768 = vmatmul.mubr.f32.gmra.mrb[0].mxu0 %v840
      %v3769 = vpop.f32.mrb[0].mxu0
      %v3770 = vadd.f32 %v3545, %v3769
      %v3771 = vpop.f32.mrb[0].mxu0
      %3772 = vmatprep.mubr.f32.mxu0 %v873
      %3773 = vmatmul.mubr.f32.gmra.mrb[0].mxu0 %v841
      %v3774 = vpop.f32.mrb[0].mxu0
      %v3775 = vadd.f32 %v3550, %v3774
      %v3776 = vpop.f32.mrb[0].mxu0
      %3777 = vmatprep.mubr.f32.mxu0 %v874
      %3778 = vmatmul.mubr.f32.gmra.mrb[0].mxu0 %v842
      %v3779 = vpop.f32.mrb[0].mxu0
      %v3780 = vadd.f32 %v3555, %v3779
      %v3781 = vpop.f32.mrb[0].mxu0
      %3782 = vdwg.mxu0
      %3783 = vmatprep.subr.mxu0 0.0
      %3784 = vmatpush1.msra.mxu0 %v1421
      %3785 = vmatprep.subr.mxu0 0.0
      %3786 = vmatpush1.msra.mxu0 %v1422
      %3787 = vmatprep.subr.mxu0 0.0
      %3788 = vmatpush1.msra.mxu0 %v1423
      %3789 = vmatprep.subr.mxu0 0.0
      %3790 = vmatpush1.msra.mxu0 %v1424
      %3791 = vmatprep.subr.mxu0 0.0
      %3792 = vmatpush1.msra.mxu0 %v1425
      %3793 = vmatprep.subr.mxu0 0.0
      %3794 = vmatpush1.msra.mxu0 %v1426
      %3795 = vmatprep.subr.mxu0 0.0
      %3796 = vmatpush1.msra.mxu0 %v1427
      %3797 = vmatprep.subr.mxu0 0.0
      %3798 = vmatpush1.msra.mxu0 %v1428
      %3799 = vmatprep.subr.mxu0 0.0
      %3800 = vmatpush1.msra.mxu0 %v1429
      %3801 = vmatprep.subr.mxu0 0.0
      %3802 = vmatpush1.msra.mxu0 %v1430
      %3803 = vmatprep.subr.mxu0 0.0
      %3804 = vmatpush1.msra.mxu0 %v1431
      %3805 = vmatprep.subr.mxu0 0.0
      %3806 = vmatpush1.msra.mxu0 %v1432
      %3807 = vmatprep.subr.mxu0 0.0
      %3808 = vmatpush1.msra.mxu0 %v1433
      %3809 = vmatprep.subr.mxu0 0.0
      %3810 = vmatpush1.msra.mxu0 %v1434
      %3811 = vmatprep.subr.mxu0 0.0
      %3812 = vmatpush1.msra.mxu0 %v1435
      %3813 = vmatprep.subr.mxu0 0.0
      %3814 = vmatpush1.msra.mxu0 %v1436
      %3815 = vmatprep.subr.mxu0 0.0
      %3816 = vmatpush1.msra.mxu0 %v1437
      %3817 = vmatprep.subr.mxu0 0.0
      %3818 = vmatpush1.msra.mxu0 %v1438
      %3819 = vmatprep.subr.mxu0 0.0
      %3820 = vmatpush1.msra.mxu0 %v1439
      %3821 = vmatprep.subr.mxu0 0.0
      %3822 = vmatpush1.msra.mxu0 %v1440
      %3823 = vmatprep.subr.mxu0 0.0
      %3824 = vmatpush1.msra.mxu0 %v1441
      %3825 = vmatprep.subr.mxu0 0.0
      %3826 = vmatpush1.msra.mxu0 %v1442
      %3827 = vmatprep.subr.mxu0 0.0
      %3828 = vmatpush1.msra.mxu0 %v1443
      %3829 = vmatprep.subr.mxu0 0.0
      %3830 = vmatpush1.msra.mxu0 %v1444
      %3831 = vmatprep.subr.mxu0 0.0
      %3832 = vmatpush1.msra.mxu0 %v1445
      %3833 = vmatprep.subr.mxu0 0.0
      %3834 = vmatpush1.msra.mxu0 %v1446
      %3835 = vmatprep.subr.mxu0 0.0
      %3836 = vmatpush1.msra.mxu0 %v1447
      %3837 = vmatprep.subr.mxu0 0.0
      %3838 = vmatpush1.msra.mxu0 %v1448
      %3839 = vmatprep.subr.mxu0 0.0
      %3840 = vmatpush1.msra.mxu0 %v1449
      %3841 = vmatprep.subr.mxu0 0.0
      %3842 = vmatpush1.msra.mxu0 %v1450
      %3843 = vmatprep.subr.mxu0 0.0
      %3844 = vmatpush1.msra.mxu0 %v1451
      %3845 = vmatprep.subr.mxu0 0.0
      %3846 = vmatpush1.msra.mxu0 %v1452
      %3847 = vmatprep.mubr.f32.mxu0 %v908
      %3848 = vmatmul.mubr.f32.gmra.mrb[0].mxu0 %v875
      %v3849 = vpop.f32.mrb[0].mxu0
      %v3850 = vadd.f32 %v3625, %v3849
      %v3851 = vpop.f32.mrb[0].mxu0
      %3852 = vmatprep.mubr.f32.mxu0 %v909
      %3853 = vmatmul.mubr.f32.gmra.mrb[0].mxu0 %v876
      %v3854 = vpop.f32.mrb[0].mxu0
      %v3855 = vadd.f32 %v3630, %v3854
      %v3856 = vpop.f32.mrb[0].mxu0
      %3857 = vmatprep.mubr.f32.mxu0 %v910
      %3858 = vmatmul.mubr.f32.gmra.mrb[0].mxu0 %v877
      %v3859 = vpop.f32.mrb[0].mxu0
      %v3860 = vadd.f32 %v3635, %v3859
      %v3861 = vpop.f32.mrb[0].mxu0
      %3862 = vmatprep.mubr.f32.mxu0 %v911
      %3863 = vmatmul.mubr.f32.gmra.mrb[0].mxu0 %v878
      %v3864 = vpop.f32.mrb[0].mxu0
      %v3865 = vadd.f32 %v3640, %v3864
      %v3866 = vpop.f32.mrb[0].mxu0
      %3867 = vmatprep.mubr.f32.mxu0 %v912
      %3868 = vmatmul.mubr.f32.gmra.mrb[0].mxu0 %v879
      %v3869 = vpop.f32.mrb[0].mxu0
      %v3870 = vadd.f32 %v3645, %v3869
      %v3871 = vpop.f32.mrb[0].mxu0
      %3872 = vmatprep.mubr.f32.mxu0 %v913
      %3873 = vmatmul.mubr.f32.gmra.mrb[0].mxu0 %v880
      %v3874 = vpop.f32.mrb[0].mxu0
      %v3875 = vadd.f32 %v3650, %v3874
      %v3876 = vpop.f32.mrb[0].mxu0
      %3877 = vmatprep.mubr.f32.mxu0 %v914
      %3878 = vmatmul.mubr.f32.gmra.mrb[0].mxu0 %v881
      %v3879 = vpop.f32.mrb[0].mxu0
      %v3880 = vadd.f32 %v3655, %v3879
      %v3881 = vpop.f32.mrb[0].mxu0
      %3882 = vmatprep.mubr.f32.mxu0 %v915
      %3883 = vmatmul.mubr.f32.gmra.mrb[0].mxu0 %v882
      %v3884 = vpop.f32.mrb[0].mxu0
      %v3885 = vadd.f32 %v3660, %v3884
      %v3886 = vpop.f32.mrb[0].mxu0
      %3887 = vmatprep.mubr.f32.mxu0 %v916
      %3888 = vmatmul.mubr.f32.gmra.mrb[0].mxu0 %v883
      %v3889 = vpop.f32.mrb[0].mxu0
      %v3890 = vadd.f32 %v3665, %v3889
      %v3891 = vpop.f32.mrb[0].mxu0
      %3892 = vmatprep.mubr.f32.mxu0 %v917
      %3893 = vmatmul.mubr.f32.gmra.mrb[0].mxu0 %v884
      %v3894 = vpop.f32.mrb[0].mxu0
      %v3895 = vadd.f32 %v3670, %v3894
      %v3896 = vpop.f32.mrb[0].mxu0
      %3897 = vmatprep.mubr.f32.mxu0 %v918
      %3898 = vmatmul.mubr.f32.gmra.mrb[0].mxu0 %v885
      %v3899 = vpop.f32.mrb[0].mxu0
      %v3900 = vadd.f32 %v3675, %v3899
      %v3901 = vpop.f32.mrb[0].mxu0
      %3902 = vmatprep.mubr.f32.mxu0 %v919
      %3903 = vmatmul.mubr.f32.gmra.mrb[0].mxu0 %v886
      %v3904 = vpop.f32.mrb[0].mxu0
      %v3905 = vadd.f32 %v3680, %v3904
      %v3906 = vpop.f32.mrb[0].mxu0
      %3907 = vmatprep.mubr.f32.mxu0 %v920
      %3908 = vmatmul.mubr.f32.gmra.mrb[0].mxu0 %v887
      %v3909 = vpop.f32.mrb[0].mxu0
      %v3910 = vadd.f32 %v3685, %v3909
      %v3911 = vpop.f32.mrb[0].mxu0
      %3912 = vmatprep.mubr.f32.mxu0 %v921
      %3913 = vmatmul.mubr.f32.gmra.mrb[0].mxu0 %v888
      %v3914 = vpop.f32.mrb[0].mxu0
      %v3915 = vadd.f32 %v3690, %v3914
      %v3916 = vpop.f32.mrb[0].mxu0
      %3917 = vmatprep.mubr.f32.mxu0 %v922
      %3918 = vmatmul.mubr.f32.gmra.mrb[0].mxu0 %v889
      %v3919 = vpop.f32.mrb[0].mxu0
      %v3920 = vadd.f32 %v3695, %v3919
      %v3921 = vpop.f32.mrb[0].mxu0
      %3922 = vmatprep.mubr.f32.mxu0 %v923
      %3923 = vmatmul.mubr.f32.gmra.mrb[0].mxu0 %v890
      %v3924 = vpop.f32.mrb[0].mxu0
      %v3925 = vadd.f32 %v3700, %v3924
      %v3926 = vpop.f32.mrb[0].mxu0
      %3927 = vmatprep.mubr.f32.mxu0 %v924
      %3928 = vmatmul.mubr.f32.gmra.mrb[0].mxu0 %v891
      %v3929 = vpop.f32.mrb[0].mxu0
      %v3930 = vadd.f32 %v3705, %v3929
      %v3931 = vpop.f32.mrb[0].mxu0
      %3932 = vmatprep.mubr.f32.mxu0 %v925
      %3933 = vmatmul.mubr.f32.gmra.mrb[0].mxu0 %v892
      %v3934 = vpop.f32.mrb[0].mxu0
      %v3935 = vadd.f32 %v3710, %v3934
      %v3936 = vpop.f32.mrb[0].mxu0
      %3937 = vmatprep.mubr.f32.mxu0 %v926
      %3938 = vmatmul.mubr.f32.gmra.mrb[0].mxu0 %v893
      %v3939 = vpop.f32.mrb[0].mxu0
      %v3940 = vadd.f32 %v3715, %v3939
      %v3941 = vpop.f32.mrb[0].mxu0
      %3942 = vmatprep.mubr.f32.mxu0 %v927
      %3943 = vmatmul.mubr.f32.gmra.mrb[0].mxu0 %v894
      %v3944 = vpop.f32.mrb[0].mxu0
      %v3945 = vadd.f32 %v3720, %v3944
      %v3946 = vpop.f32.mrb[0].mxu0
      %3947 = vmatprep.mubr.f32.mxu0 %v928
      %3948 = vmatmul.mubr.f32.gmra.mrb[0].mxu0 %v895
      %v3949 = vpop.f32.mrb[0].mxu0
      %v3950 = vadd.f32 %v3725, %v3949
      %v3951 = vpop.f32.mrb[0].mxu0
      %3952 = vmatprep.mubr.f32.mxu0 %v929
      %3953 = vmatmul.mubr.f32.gmra.mrb[0].mxu0 %v896
      %v3954 = vpop.f32.mrb[0].mxu0
      %v3955 = vadd.f32 %v3730, %v3954
      %v3956 = vpop.f32.mrb[0].mxu0
      %3957 = vmatprep.mubr.f32.mxu0 %v930
      %3958 = vmatmul.mubr.f32.gmra.mrb[0].mxu0 %v897
      %v3959 = vpop.f32.mrb[0].mxu0
      %v3960 = vadd.f32 %v3735, %v3959
      %v3961 = vpop.f32.mrb[0].mxu0
      %3962 = vmatprep.mubr.f32.mxu0 %v931
      %3963 = vmatmul.mubr.f32.gmra.mrb[0].mxu0 %v898
      %v3964 = vpop.f32.mrb[0].mxu0
      %v3965 = vadd.f32 %v3740, %v3964
      %v3966 = vpop.f32.mrb[0].mxu0
      %3967 = vmatprep.mubr.f32.mxu0 %v932
      %3968 = vmatmul.mubr.f32.gmra.mrb[0].mxu0 %v899
      %v3969 = vpop.f32.mrb[0].mxu0
      %v3970 = vadd.f32 %v3745, %v3969
      %v3971 = vpop.f32.mrb[0].mxu0
      %3972 = vmatprep.mubr.f32.mxu0 %v933
      %3973 = vmatmul.mubr.f32.gmra.mrb[0].mxu0 %v900
      %v3974 = vpop.f32.mrb[0].mxu0
      %v3975 = vadd.f32 %v3750, %v3974
      %v3976 = vpop.f32.mrb[0].mxu0
      %3977 = vmatprep.mubr.f32.mxu0 %v934
      %3978 = vmatmul.mubr.f32.gmra.mrb[0].mxu0 %v901
      %v3979 = vpop.f32.mrb[0].mxu0
      %v3980 = vadd.f32 %v3755, %v3979
      %v3981 = vpop.f32.mrb[0].mxu0
      %3982 = vmatprep.mubr.f32.mxu0 %v935
      %3983 = vmatmul.mubr.f32.gmra.mrb[0].mxu0 %v902
      %v3984 = vpop.f32.mrb[0].mxu0
      %v3985 = vadd.f32 %v3760, %v3984
      %v3986 = vpop.f32.mrb[0].mxu0
      %3987 = vmatprep.mubr.f32.mxu0 %v936
      %3988 = vmatmul.mubr.f32.gmra.mrb[0].mxu0 %v903
      %v3989 = vpop.f32.mrb[0].mxu0
      %v3990 = vadd.f32 %v3765, %v3989
      %v3991 = vpop.f32.mrb[0].mxu0
      %3992 = vmatprep.mubr.f32.mxu0 %v937
      %3993 = vmatmul.mubr.f32.gmra.mrb[0].mxu0 %v904
      %v3994 = vpop.f32.mrb[0].mxu0
      %v3995 = vadd.f32 %v3770, %v3994
      %v3996 = vpop.f32.mrb[0].mxu0
      %3997 = vmatprep.mubr.f32.mxu0 %v938
      %3998 = vmatmul.mubr.f32.gmra.mrb[0].mxu0 %v905
      %v3999 = vpop.f32.mrb[0].mxu0
      %v4000 = vadd.f32 %v3775, %v3999
      %v4001 = vpop.f32.mrb[0].mxu0
      %4002 = vmatprep.mubr.f32.mxu0 %v939
      %4003 = vmatmul.mubr.f32.gmra.mrb[0].mxu0 %v906
      %v4004 = vpop.f32.mrb[0].mxu0
      %v4005 = vadd.f32 %v3780, %v4004
      %v4006 = vpop.f32.mrb[0].mxu0
      %4007 = vdwg.mxu0
      %4008 = vmatprep.subr.mxu0 0.0
      %4009 = vmatpush1.msra.mxu0 %v1453
      %4010 = vmatprep.subr.mxu0 0.0
      %4011 = vmatpush1.msra.mxu0 %v1454
      %4012 = vmatprep.subr.mxu0 0.0
      %4013 = vmatpush1.msra.mxu0 %v1455
      %4014 = vmatprep.subr.mxu0 0.0
      %4015 = vmatpush1.msra.mxu0 %v1456
      %4016 = vmatprep.subr.mxu0 0.0
      %4017 = vmatpush1.msra.mxu0 %v1457
      %4018 = vmatprep.subr.mxu0 0.0
      %4019 = vmatpush1.msra.mxu0 %v1458
      %4020 = vmatprep.subr.mxu0 0.0
      %4021 = vmatpush1.msra.mxu0 %v1459
      %4022 = vmatprep.subr.mxu0 0.0
      %4023 = vmatpush1.msra.mxu0 %v1460
      %4024 = vmatprep.subr.mxu0 0.0
      %4025 = vmatpush1.msra.mxu0 %v1461
      %4026 = vmatprep.subr.mxu0 0.0
      %4027 = vmatpush1.msra.mxu0 %v1462
      %4028 = vmatprep.subr.mxu0 0.0
      %4029 = vmatpush1.msra.mxu0 %v1463
      %4030 = vmatprep.subr.mxu0 0.0
      %4031 = vmatpush1.msra.mxu0 %v1464
      %4032 = vmatprep.subr.mxu0 0.0
      %4033 = vmatpush1.msra.mxu0 %v1465
      %4034 = vmatprep.subr.mxu0 0.0
      %4035 = vmatpush1.msra.mxu0 %v1466
      %4036 = vmatprep.subr.mxu0 0.0
      %4037 = vmatpush1.msra.mxu0 %v1467
      %4038 = vmatprep.subr.mxu0 0.0
      %4039 = vmatpush1.msra.mxu0 %v1468
      %4040 = vmatprep.subr.mxu0 0.0
      %4041 = vmatpush1.msra.mxu0 %v1469
      %4042 = vmatprep.subr.mxu0 0.0
      %4043 = vmatpush1.msra.mxu0 %v1470
      %4044 = vmatprep.subr.mxu0 0.0
      %4045 = vmatpush1.msra.mxu0 %v1471
      %4046 = vmatprep.subr.mxu0 0.0
      %4047 = vmatpush1.msra.mxu0 %v1472
      %4048 = vmatprep.subr.mxu0 0.0
      %4049 = vmatpush1.msra.mxu0 %v1473
      %4050 = vmatprep.subr.mxu0 0.0
      %4051 = vmatpush1.msra.mxu0 %v1474
      %4052 = vmatprep.subr.mxu0 0.0
      %4053 = vmatpush1.msra.mxu0 %v1475
      %4054 = vmatprep.subr.mxu0 0.0
      %4055 = vmatpush1.msra.mxu0 %v1476
      %4056 = vmatprep.subr.mxu0 0.0
      %4057 = vmatpush1.msra.mxu0 %v1477
      %4058 = vmatprep.subr.mxu0 0.0
      %4059 = vmatpush1.msra.mxu0 %v1478
      %4060 = vmatprep.subr.mxu0 0.0
      %4061 = vmatpush1.msra.mxu0 %v1479
      %4062 = vmatprep.subr.mxu0 0.0
      %4063 = vmatpush1.msra.mxu0 %v1480
      %4064 = vmatprep.subr.mxu0 0.0
      %4065 = vmatpush1.msra.mxu0 %v1481
      %4066 = vmatprep.subr.mxu0 0.0
      %4067 = vmatpush1.msra.mxu0 %v1482
      %4068 = vmatprep.subr.mxu0 0.0
      %4069 = vmatpush1.msra.mxu0 %v1483
      %4070 = vmatprep.subr.mxu0 0.0
      %4071 = vmatpush1.msra.mxu0 %v1484
      %4072 = vmatprep.mubr.f32.mxu0 %v972
      %4073 = vmatmul.mubr.f32.gmra.mrb[0].mxu0 %v940
      %v4074 = vpop.f32.mrb[0].mxu0
      %v4075 = vadd.f32 %v3850, %v4074
      %v4076 = vpop.f32.mrb[0].mxu0
      %4077 = vmatprep.mubr.f32.mxu0 %v973
      %4078 = vmatmul.mubr.f32.gmra.mrb[0].mxu0 %v941
      %v4079 = vpop.f32.mrb[0].mxu0
      %v4080 = vadd.f32 %v3855, %v4079
      %v4081 = vpop.f32.mrb[0].mxu0
      %4082 = vmatprep.mubr.f32.mxu0 %v974
      %4083 = vmatmul.mubr.f32.gmra.mrb[0].mxu0 %v942
      %v4084 = vpop.f32.mrb[0].mxu0
      %v4085 = vadd.f32 %v3860, %v4084
      %v4086 = vpop.f32.mrb[0].mxu0
      %4087 = vmatprep.mubr.f32.mxu0 %v975
      %4088 = vmatmul.mubr.f32.gmra.mrb[0].mxu0 %v943
      %v4089 = vpop.f32.mrb[0].mxu0
      %v4090 = vadd.f32 %v3865, %v4089
      %v4091 = vpop.f32.mrb[0].mxu0
      %4092 = vmatprep.mubr.f32.mxu0 %v976
      %4093 = vmatmul.mubr.f32.gmra.mrb[0].mxu0 %v944
      %v4094 = vpop.f32.mrb[0].mxu0
      %v4095 = vadd.f32 %v3870, %v4094
      %v4096 = vpop.f32.mrb[0].mxu0
      %4097 = vmatprep.mubr.f32.mxu0 %v977
      %4098 = vmatmul.mubr.f32.gmra.mrb[0].mxu0 %v945
      %v4099 = vpop.f32.mrb[0].mxu0
      %v4100 = vadd.f32 %v3875, %v4099
      %v4101 = vpop.f32.mrb[0].mxu0
      %4102 = vmatprep.mubr.f32.mxu0 %v978
      %4103 = vmatmul.mubr.f32.gmra.mrb[0].mxu0 %v946
      %v4104 = vpop.f32.mrb[0].mxu0
      %v4105 = vadd.f32 %v3880, %v4104
      %v4106 = vpop.f32.mrb[0].mxu0
      %4107 = vmatprep.mubr.f32.mxu0 %v979
      %4108 = vmatmul.mubr.f32.gmra.mrb[0].mxu0 %v947
      %v4109 = vpop.f32.mrb[0].mxu0
      %v4110 = vadd.f32 %v3885, %v4109
      %v4111 = vpop.f32.mrb[0].mxu0
      %4112 = vmatprep.mubr.f32.mxu0 %v980
      %4113 = vmatmul.mubr.f32.gmra.mrb[0].mxu0 %v948
      %v4114 = vpop.f32.mrb[0].mxu0
      %v4115 = vadd.f32 %v3890, %v4114
      %v4116 = vpop.f32.mrb[0].mxu0
      %4117 = vmatprep.mubr.f32.mxu0 %v981
      %4118 = vmatmul.mubr.f32.gmra.mrb[0].mxu0 %v949
      %v4119 = vpop.f32.mrb[0].mxu0
      %v4120 = vadd.f32 %v3895, %v4119
      %v4121 = vpop.f32.mrb[0].mxu0
      %4122 = vmatprep.mubr.f32.mxu0 %v982
      %4123 = vmatmul.mubr.f32.gmra.mrb[0].mxu0 %v950
      %v4124 = vpop.f32.mrb[0].mxu0
      %v4125 = vadd.f32 %v3900, %v4124
      %v4126 = vpop.f32.mrb[0].mxu0
      %4127 = vmatprep.mubr.f32.mxu0 %v983
      %4128 = vmatmul.mubr.f32.gmra.mrb[0].mxu0 %v951
      %v4129 = vpop.f32.mrb[0].mxu0
      %v4130 = vadd.f32 %v3905, %v4129
      %v4131 = vpop.f32.mrb[0].mxu0
      %4132 = vmatprep.mubr.f32.mxu0 %v984
      %4133 = vmatmul.mubr.f32.gmra.mrb[0].mxu0 %v952
      %v4134 = vpop.f32.mrb[0].mxu0
      %v4135 = vadd.f32 %v3910, %v4134
      %v4136 = vpop.f32.mrb[0].mxu0
      %4137 = vmatprep.mubr.f32.mxu0 %v985
      %4138 = vmatmul.mubr.f32.gmra.mrb[0].mxu0 %v953
      %v4139 = vpop.f32.mrb[0].mxu0
      %v4140 = vadd.f32 %v3915, %v4139
      %v4141 = vpop.f32.mrb[0].mxu0
      %4142 = vmatprep.mubr.f32.mxu0 %v986
      %4143 = vmatmul.mubr.f32.gmra.mrb[0].mxu0 %v954
      %v4144 = vpop.f32.mrb[0].mxu0
      %v4145 = vadd.f32 %v3920, %v4144
      %v4146 = vpop.f32.mrb[0].mxu0
      %4147 = vmatprep.mubr.f32.mxu0 %v987
      %4148 = vmatmul.mubr.f32.gmra.mrb[0].mxu0 %v955
      %v4149 = vpop.f32.mrb[0].mxu0
      %v4150 = vadd.f32 %v3925, %v4149
      %v4151 = vpop.f32.mrb[0].mxu0
      %4152 = vmatprep.mubr.f32.mxu0 %v988
      %4153 = vmatmul.mubr.f32.gmra.mrb[0].mxu0 %v956
      %v4154 = vpop.f32.mrb[0].mxu0
      %v4155 = vadd.f32 %v3930, %v4154
      %v4156 = vpop.f32.mrb[0].mxu0
      %4157 = vmatprep.mubr.f32.mxu0 %v989
      %4158 = vmatmul.mubr.f32.gmra.mrb[0].mxu0 %v957
      %v4159 = vpop.f32.mrb[0].mxu0
      %v4160 = vadd.f32 %v3935, %v4159
      %v4161 = vpop.f32.mrb[0].mxu0
      %4162 = vmatprep.mubr.f32.mxu0 %v990
      %4163 = vmatmul.mubr.f32.gmra.mrb[0].mxu0 %v958
      %v4164 = vpop.f32.mrb[0].mxu0
      %v4165 = vadd.f32 %v3940, %v4164
      %v4166 = vpop.f32.mrb[0].mxu0
      %4167 = vmatprep.mubr.f32.mxu0 %v991
      %4168 = vmatmul.mubr.f32.gmra.mrb[0].mxu0 %v959
      %v4169 = vpop.f32.mrb[0].mxu0
      %v4170 = vadd.f32 %v3945, %v4169
      %v4171 = vpop.f32.mrb[0].mxu0
      %4172 = vmatprep.mubr.f32.mxu0 %v992
      %4173 = vmatmul.mubr.f32.gmra.mrb[0].mxu0 %v960
      %v4174 = vpop.f32.mrb[0].mxu0
      %v4175 = vadd.f32 %v3950, %v4174
      %v4176 = vpop.f32.mrb[0].mxu0
      %4177 = vmatprep.mubr.f32.mxu0 %v993
      %4178 = vmatmul.mubr.f32.gmra.mrb[0].mxu0 %v961
      %v4179 = vpop.f32.mrb[0].mxu0
      %v4180 = vadd.f32 %v3955, %v4179
      %v4181 = vpop.f32.mrb[0].mxu0
      %4182 = vmatprep.mubr.f32.mxu0 %v994
      %4183 = vmatmul.mubr.f32.gmra.mrb[0].mxu0 %v962
      %v4184 = vpop.f32.mrb[0].mxu0
      %v4185 = vadd.f32 %v3960, %v4184
      %v4186 = vpop.f32.mrb[0].mxu0
      %4187 = vmatprep.mubr.f32.mxu0 %v995
      %4188 = vmatmul.mubr.f32.gmra.mrb[0].mxu0 %v963
      %v4189 = vpop.f32.mrb[0].mxu0
      %v4190 = vadd.f32 %v3965, %v4189
      %v4191 = vpop.f32.mrb[0].mxu0
      %4192 = vmatprep.mubr.f32.mxu0 %v996
      %4193 = vmatmul.mubr.f32.gmra.mrb[0].mxu0 %v964
      %v4194 = vpop.f32.mrb[0].mxu0
      %v4195 = vadd.f32 %v3970, %v4194
      %v4196 = vpop.f32.mrb[0].mxu0
      %4197 = vmatprep.mubr.f32.mxu0 %v997
      %4198 = vmatmul.mubr.f32.gmra.mrb[0].mxu0 %v965
      %v4199 = vpop.f32.mrb[0].mxu0
      %v4200 = vadd.f32 %v3975, %v4199
      %v4201 = vpop.f32.mrb[0].mxu0
      %4202 = vmatprep.mubr.f32.mxu0 %v998
      %4203 = vmatmul.mubr.f32.gmra.mrb[0].mxu0 %v966
      %v4204 = vpop.f32.mrb[0].mxu0
      %v4205 = vadd.f32 %v3980, %v4204
      %v4206 = vpop.f32.mrb[0].mxu0
      %4207 = vmatprep.mubr.f32.mxu0 %v999
      %4208 = vmatmul.mubr.f32.gmra.mrb[0].mxu0 %v967
      %v4209 = vpop.f32.mrb[0].mxu0
      %v4210 = vadd.f32 %v3985, %v4209
      %v4211 = vpop.f32.mrb[0].mxu0
      %4212 = vmatprep.mubr.f32.mxu0 %v1000
      %4213 = vmatmul.mubr.f32.gmra.mrb[0].mxu0 %v968
      %v4214 = vpop.f32.mrb[0].mxu0
      %v4215 = vadd.f32 %v3990, %v4214
      %v4216 = vpop.f32.mrb[0].mxu0
      %4217 = vmatprep.mubr.f32.mxu0 %v1001
      %4218 = vmatmul.mubr.f32.gmra.mrb[0].mxu0 %v969
      %v4219 = vpop.f32.mrb[0].mxu0
      %v4220 = vadd.f32 %v3995, %v4219
      %v4221 = vpop.f32.mrb[0].mxu0
      %4222 = vmatprep.mubr.f32.mxu0 %v1002
      %4223 = vmatmul.mubr.f32.gmra.mrb[0].mxu0 %v970
      %v4224 = vpop.f32.mrb[0].mxu0
      %v4225 = vadd.f32 %v4000, %v4224
      %v4226 = vpop.f32.mrb[0].mxu0
      %4227 = vmatprep.mubr.f32.mxu0 %v1003
      %4228 = vmatmul.mubr.f32.gmra.mrb[0].mxu0 %v971
      %v4229 = vpop.f32.mrb[0].mxu0
      %v4230 = vadd.f32 %v4005, %v4229
      %v4231 = vpop.f32.mrb[0].mxu0
      %4232 = vdwg.mxu0
      %4233 = vmatprep.subr.mxu0 0.0
      %4234 = vmatpush1.msra.mxu0 %v1485
      %4235 = vmatprep.subr.mxu0 0.0
      %4236 = vmatpush1.msra.mxu0 %v1486
      %4237 = vmatprep.subr.mxu0 0.0
      %4238 = vmatpush1.msra.mxu0 %v1487
      %4239 = vmatprep.subr.mxu0 0.0
      %4240 = vmatpush1.msra.mxu0 %v1488
      %4241 = vmatprep.subr.mxu0 0.0
      %4242 = vmatpush1.msra.mxu0 %v1489
      %4243 = vmatprep.subr.mxu0 0.0
      %4244 = vmatpush1.msra.mxu0 %v1490
      %4245 = vmatprep.subr.mxu0 0.0
      %4246 = vmatpush1.msra.mxu0 %v1491
      %4247 = vmatprep.subr.mxu0 0.0
      %4248 = vmatpush1.msra.mxu0 %v1492
      %4249 = vmatprep.subr.mxu0 0.0
      %4250 = vmatpush1.msra.mxu0 %v1493
      %4251 = vmatprep.subr.mxu0 0.0
      %4252 = vmatpush1.msra.mxu0 %v1494
      %4253 = vmatprep.subr.mxu0 0.0
      %4254 = vmatpush1.msra.mxu0 %v1495
      %4255 = vmatprep.subr.mxu0 0.0
      %4256 = vmatpush1.msra.mxu0 %v1496
      %4257 = vmatprep.subr.mxu0 0.0
      %4258 = vmatpush1.msra.mxu0 %v1497
      %4259 = vmatprep.subr.mxu0 0.0
      %4260 = vmatpush1.msra.mxu0 %v1498
      %4261 = vmatprep.subr.mxu0 0.0
      %4262 = vmatpush1.msra.mxu0 %v1499
      %4263 = vmatprep.subr.mxu0 0.0
      %4264 = vmatpush1.msra.mxu0 %v1500
      %4265 = vmatprep.subr.mxu0 0.0
      %4266 = vmatpush1.msra.mxu0 %v1501
      %4267 = vmatprep.subr.mxu0 0.0
      %4268 = vmatpush1.msra.mxu0 %v1502
      %4269 = vmatprep.subr.mxu0 0.0
      %4270 = vmatpush1.msra.mxu0 %v1503
      %4271 = vmatprep.subr.mxu0 0.0
      %4272 = vmatpush1.msra.mxu0 %v1504
      %4273 = vmatprep.subr.mxu0 0.0
      %4274 = vmatpush1.msra.mxu0 %v1505
      %4275 = vmatprep.subr.mxu0 0.0
      %4276 = vmatpush1.msra.mxu0 %v1506
      %4277 = vmatprep.subr.mxu0 0.0
      %4278 = vmatpush1.msra.mxu0 %v1507
      %4279 = vmatprep.subr.mxu0 0.0
      %4280 = vmatpush1.msra.mxu0 %v1508
      %4281 = vmatprep.subr.mxu0 0.0
      %4282 = vmatpush1.msra.mxu0 %v1509
      %4283 = vmatprep.subr.mxu0 0.0
      %4284 = vmatpush1.msra.mxu0 %v1510
      %4285 = vmatprep.subr.mxu0 0.0
      %4286 = vmatpush1.msra.mxu0 %v1511
      %4287 = vmatprep.subr.mxu0 0.0
      %4288 = vmatpush1.msra.mxu0 %v1512
      %4289 = vmatprep.subr.mxu0 0.0
      %4290 = vmatpush1.msra.mxu0 %v1513
      %4291 = vmatprep.subr.mxu0 0.0
      %4292 = vmatpush1.msra.mxu0 %v1514
      %4293 = vmatprep.subr.mxu0 0.0
      %4294 = vmatpush1.msra.mxu0 %v1515
      %4295 = vmatprep.subr.mxu0 0.0
      %4296 = vmatpush1.msra.mxu0 %v1516
      %4297 = vmatprep.mubr.f32.mxu0 %v1037
      %4298 = vmatmul.mubr.f32.gmra.mrb[0].mxu0 %v1005
      %v4299 = vpop.f32.mrb[0].mxu0
      %v4300 = vadd.f32 %v4075, %v4299
      %v4301 = vpop.f32.mrb[0].mxu0
      %4302 = vmatprep.mubr.f32.mxu0 %v1038
      %4303 = vmatmul.mubr.f32.gmra.mrb[0].mxu0 %v1006
      %v4304 = vpop.f32.mrb[0].mxu0
      %v4305 = vadd.f32 %v4080, %v4304
      %v4306 = vpop.f32.mrb[0].mxu0
      %4307 = vmatprep.mubr.f32.mxu0 %v1039
      %4308 = vmatmul.mubr.f32.gmra.mrb[0].mxu0 %v1007
      %v4309 = vpop.f32.mrb[0].mxu0
      %v4310 = vadd.f32 %v4085, %v4309
      %v4311 = vpop.f32.mrb[0].mxu0
      %4312 = vmatprep.mubr.f32.mxu0 %v1040
      %4313 = vmatmul.mubr.f32.gmra.mrb[0].mxu0 %v1008
      %v4314 = vpop.f32.mrb[0].mxu0
      %v4315 = vadd.f32 %v4090, %v4314
      %v4316 = vpop.f32.mrb[0].mxu0
      %4317 = vmatprep.mubr.f32.mxu0 %v1041
      %4318 = vmatmul.mubr.f32.gmra.mrb[0].mxu0 %v1009
      %v4319 = vpop.f32.mrb[0].mxu0
      %v4320 = vadd.f32 %v4095, %v4319
      %v4321 = vpop.f32.mrb[0].mxu0
      %4322 = vmatprep.mubr.f32.mxu0 %v1042
      %4323 = vmatmul.mubr.f32.gmra.mrb[0].mxu0 %v1010
      %v4324 = vpop.f32.mrb[0].mxu0
      %v4325 = vadd.f32 %v4100, %v4324
      %v4326 = vpop.f32.mrb[0].mxu0
      %4327 = vmatprep.mubr.f32.mxu0 %v1043
      %4328 = vmatmul.mubr.f32.gmra.mrb[0].mxu0 %v1011
      %v4329 = vpop.f32.mrb[0].mxu0
      %v4330 = vadd.f32 %v4105, %v4329
      %v4331 = vpop.f32.mrb[0].mxu0
      %4332 = vmatprep.mubr.f32.mxu0 %v1044
      %4333 = vmatmul.mubr.f32.gmra.mrb[0].mxu0 %v1012
      %v4334 = vpop.f32.mrb[0].mxu0
      %v4335 = vadd.f32 %v4110, %v4334
      %v4336 = vpop.f32.mrb[0].mxu0
      %4337 = vmatprep.mubr.f32.mxu0 %v1045
      %4338 = vmatmul.mubr.f32.gmra.mrb[0].mxu0 %v1013
      %v4339 = vpop.f32.mrb[0].mxu0
      %v4340 = vadd.f32 %v4115, %v4339
      %v4341 = vpop.f32.mrb[0].mxu0
      %4342 = vmatprep.mubr.f32.mxu0 %v1046
      %4343 = vmatmul.mubr.f32.gmra.mrb[0].mxu0 %v1014
      %v4344 = vpop.f32.mrb[0].mxu0
      %v4345 = vadd.f32 %v4120, %v4344
      %v4346 = vpop.f32.mrb[0].mxu0
      %4347 = vmatprep.mubr.f32.mxu0 %v1047
      %4348 = vmatmul.mubr.f32.gmra.mrb[0].mxu0 %v1015
      %v4349 = vpop.f32.mrb[0].mxu0
      %v4350 = vadd.f32 %v4125, %v4349
      %v4351 = vpop.f32.mrb[0].mxu0
      %4352 = vmatprep.mubr.f32.mxu0 %v1048
      %4353 = vmatmul.mubr.f32.gmra.mrb[0].mxu0 %v1016
      %v4354 = vpop.f32.mrb[0].mxu0
      %v4355 = vadd.f32 %v4130, %v4354
      %v4356 = vpop.f32.mrb[0].mxu0
      %4357 = vmatprep.mubr.f32.mxu0 %v1049
      %4358 = vmatmul.mubr.f32.gmra.mrb[0].mxu0 %v1017
      %v4359 = vpop.f32.mrb[0].mxu0
      %v4360 = vadd.f32 %v4135, %v4359
      %v4361 = vpop.f32.mrb[0].mxu0
      %4362 = vmatprep.mubr.f32.mxu0 %v1050
      %4363 = vmatmul.mubr.f32.gmra.mrb[0].mxu0 %v1018
      %v4364 = vpop.f32.mrb[0].mxu0
      %v4365 = vadd.f32 %v4140, %v4364
      %v4366 = vpop.f32.mrb[0].mxu0
      %4367 = vmatprep.mubr.f32.mxu0 %v1051
      %4368 = vmatmul.mubr.f32.gmra.mrb[0].mxu0 %v1019
      %v4369 = vpop.f32.mrb[0].mxu0
      %v4370 = vadd.f32 %v4145, %v4369
      %v4371 = vpop.f32.mrb[0].mxu0
      %4372 = vmatprep.mubr.f32.mxu0 %v1052
      %4373 = vmatmul.mubr.f32.gmra.mrb[0].mxu0 %v1020
      %v4374 = vpop.f32.mrb[0].mxu0
      %v4375 = vadd.f32 %v4150, %v4374
      %v4376 = vpop.f32.mrb[0].mxu0
      %4377 = vmatprep.mubr.f32.mxu0 %v1053
      %4378 = vmatmul.mubr.f32.gmra.mrb[0].mxu0 %v1021
      %v4379 = vpop.f32.mrb[0].mxu0
      %v4380 = vadd.f32 %v4155, %v4379
      %v4381 = vpop.f32.mrb[0].mxu0
      %4382 = vmatprep.mubr.f32.mxu0 %v1054
      %4383 = vmatmul.mubr.f32.gmra.mrb[0].mxu0 %v1022
      %v4384 = vpop.f32.mrb[0].mxu0
      %v4385 = vadd.f32 %v4160, %v4384
      %v4386 = vpop.f32.mrb[0].mxu0
      %4387 = vmatprep.mubr.f32.mxu0 %v1055
      %4388 = vmatmul.mubr.f32.gmra.mrb[0].mxu0 %v1023
      %v4389 = vpop.f32.mrb[0].mxu0
      %v4390 = vadd.f32 %v4165, %v4389
      %v4391 = vpop.f32.mrb[0].mxu0
      %4392 = vmatprep.mubr.f32.mxu0 %v1056
      %4393 = vmatmul.mubr.f32.gmra.mrb[0].mxu0 %v1024
      %v4394 = vpop.f32.mrb[0].mxu0
      %v4395 = vadd.f32 %v4170, %v4394
      %v4396 = vpop.f32.mrb[0].mxu0
      %4397 = vmatprep.mubr.f32.mxu0 %v1057
      %4398 = vmatmul.mubr.f32.gmra.mrb[0].mxu0 %v1025
      %v4399 = vpop.f32.mrb[0].mxu0
      %v4400 = vadd.f32 %v4175, %v4399
      %v4401 = vpop.f32.mrb[0].mxu0
      %4402 = vmatprep.mubr.f32.mxu0 %v1058
      %4403 = vmatmul.mubr.f32.gmra.mrb[0].mxu0 %v1026
      %v4404 = vpop.f32.mrb[0].mxu0
      %v4405 = vadd.f32 %v4180, %v4404
      %v4406 = vpop.f32.mrb[0].mxu0
      %4407 = vmatprep.mubr.f32.mxu0 %v1059
      %4408 = vmatmul.mubr.f32.gmra.mrb[0].mxu0 %v1027
      %v4409 = vpop.f32.mrb[0].mxu0
      %v4410 = vadd.f32 %v4185, %v4409
      %v4411 = vpop.f32.mrb[0].mxu0
      %4412 = vmatprep.mubr.f32.mxu0 %v1060
      %4413 = vmatmul.mubr.f32.gmra.mrb[0].mxu0 %v1028
      %v4414 = vpop.f32.mrb[0].mxu0
      %v4415 = vadd.f32 %v4190, %v4414
      %v4416 = vpop.f32.mrb[0].mxu0
      %4417 = vmatprep.mubr.f32.mxu0 %v1061
      %4418 = vmatmul.mubr.f32.gmra.mrb[0].mxu0 %v1029
      %v4419 = vpop.f32.mrb[0].mxu0
      %v4420 = vadd.f32 %v4195, %v4419
      %v4421 = vpop.f32.mrb[0].mxu0
      %4422 = vmatprep.mubr.f32.mxu0 %v1062
      %4423 = vmatmul.mubr.f32.gmra.mrb[0].mxu0 %v1030
      %v4424 = vpop.f32.mrb[0].mxu0
      %v4425 = vadd.f32 %v4200, %v4424
      %v4426 = vpop.f32.mrb[0].mxu0
      %4427 = vmatprep.mubr.f32.mxu0 %v1063
      %4428 = vmatmul.mubr.f32.gmra.mrb[0].mxu0 %v1031
      %v4429 = vpop.f32.mrb[0].mxu0
      %v4430 = vadd.f32 %v4205, %v4429
      %v4431 = vpop.f32.mrb[0].mxu0
      %4432 = vmatprep.mubr.f32.mxu0 %v1064
      %4433 = vmatmul.mubr.f32.gmra.mrb[0].mxu0 %v1032
      %v4434 = vpop.f32.mrb[0].mxu0
      %v4435 = vadd.f32 %v4210, %v4434
      %v4436 = vpop.f32.mrb[0].mxu0
      %4437 = vmatprep.mubr.f32.mxu0 %v1065
      %4438 = vmatmul.mubr.f32.gmra.mrb[0].mxu0 %v1033
      %v4439 = vpop.f32.mrb[0].mxu0
      %v4440 = vadd.f32 %v4215, %v4439
      %v4441 = vpop.f32.mrb[0].mxu0
      %4442 = vmatprep.mubr.f32.mxu0 %v1066
      %4443 = vmatmul.mubr.f32.gmra.mrb[0].mxu0 %v1034
      %v4444 = vpop.f32.mrb[0].mxu0
      %v4445 = vadd.f32 %v4220, %v4444
      %v4446 = vpop.f32.mrb[0].mxu0
      %4447 = vmatprep.mubr.f32.mxu0 %v1067
      %4448 = vmatmul.mubr.f32.gmra.mrb[0].mxu0 %v1035
      %v4449 = vpop.f32.mrb[0].mxu0
      %v4450 = vadd.f32 %v4225, %v4449
      %v4451 = vpop.f32.mrb[0].mxu0
      %4452 = vmatprep.mubr.f32.mxu0 %v1068
      %4453 = vmatmul.mubr.f32.gmra.mrb[0].mxu0 %v1036
      %v4454 = vpop.f32.mrb[0].mxu0
      %v4455 = vadd.f32 %v4230, %v4454
      %v4456 = vpop.f32.mrb[0].mxu0
      %4457 = vdwg.mxu0
      %4458 = vmatprep.subr.mxu0 0.0
      %4459 = vmatpush1.msra.mxu0 %v1517
      %4460 = vmatprep.subr.mxu0 0.0
      %4461 = vmatpush1.msra.mxu0 %v1518
      %4462 = vmatprep.subr.mxu0 0.0
      %4463 = vmatpush1.msra.mxu0 %v1519
      %4464 = vmatprep.subr.mxu0 0.0
      %4465 = vmatpush1.msra.mxu0 %v1520
      %4466 = vmatprep.subr.mxu0 0.0
      %4467 = vmatpush1.msra.mxu0 %v1521
      %4468 = vmatprep.subr.mxu0 0.0
      %4469 = vmatpush1.msra.mxu0 %v1522
      %4470 = vmatprep.subr.mxu0 0.0
      %4471 = vmatpush1.msra.mxu0 %v1523
      %4472 = vmatprep.subr.mxu0 0.0
      %4473 = vmatpush1.msra.mxu0 %v1524
      %4474 = vmatprep.subr.mxu0 0.0
      %4475 = vmatpush1.msra.mxu0 %v1525
      %4476 = vmatprep.subr.mxu0 0.0
      %4477 = vmatpush1.msra.mxu0 %v1526
      %4478 = vmatprep.subr.mxu0 0.0
      %4479 = vmatpush1.msra.mxu0 %v1527
      %4480 = vmatprep.subr.mxu0 0.0
      %4481 = vmatpush1.msra.mxu0 %v1528
      %4482 = vmatprep.subr.mxu0 0.0
      %4483 = vmatpush1.msra.mxu0 %v1529
      %4484 = vmatprep.subr.mxu0 0.0
      %4485 = vmatpush1.msra.mxu0 %v1530
      %4486 = vmatprep.subr.mxu0 0.0
      %4487 = vmatpush1.msra.mxu0 %v1531
      %4488 = vmatprep.subr.mxu0 0.0
      %4489 = vmatpush1.msra.mxu0 %v1532
      %4490 = vmatprep.subr.mxu0 0.0
      %4491 = vmatpush1.msra.mxu0 0.0
      %4492 = vmatprep.subr.mxu0 0.0
      %4493 = vmatpush1.msra.mxu0 0.0
      %4494 = vmatprep.subr.mxu0 0.0
      %4495 = vmatpush1.msra.mxu0 0.0
      %4496 = vmatprep.subr.mxu0 0.0
      %4497 = vmatpush1.msra.mxu0 0.0
      %4498 = vmatprep.subr.mxu0 0.0
      %4499 = vmatpush1.msra.mxu0 0.0
      %4500 = vmatprep.subr.mxu0 0.0
      %4501 = vmatpush1.msra.mxu0 0.0
      %4502 = vmatprep.subr.mxu0 0.0
      %4503 = vmatpush1.msra.mxu0 0.0
      %4504 = vmatprep.subr.mxu0 0.0
      %4505 = vmatpush1.msra.mxu0 0.0
      %4506 = vmatprep.subr.mxu0 0.0
      %4507 = vmatpush1.msra.mxu0 0.0
      %4508 = vmatprep.subr.mxu0 0.0
      %4509 = vmatpush1.msra.mxu0 0.0
      %4510 = vmatprep.subr.mxu0 0.0
      %4511 = vmatpush1.msra.mxu0 0.0
      %4512 = vmatprep.subr.mxu0 0.0
      %4513 = vmatpush1.msra.mxu0 0.0
      %4514 = vmatprep.subr.mxu0 0.0
      %4515 = vmatpush1.msra.mxu0 0.0
      %4516 = vmatprep.subr.mxu0 0.0
      %4517 = vmatpush1.msra.mxu0 0.0
      %4518 = vmatprep.subr.mxu0 0.0
      %4519 = vmatpush1.msra.mxu0 0.0
      %4520 = vmatprep.subr.mxu0 0.0
      %4521 = vmatpush1.msra.mxu0 0.0
      %4522 = vmatprep.mubr.f32.mxu0 0.0
      %4523 = vmatmul.mubr.f32.gmra.mrb[0].mxu0 %v1069
      %v4524 = vpop.f32.mrb[0].mxu0
      %v4525 = vadd.f32 %v4300, %v4524
      %v4526 = vpop.f32.mrb[0].mxu0
      %4527 = vmatprep.mubr.f32.mxu0 0.0
      %4528 = vmatmul.mubr.f32.gmra.mrb[0].mxu0 %v1070
      %v4529 = vpop.f32.mrb[0].mxu0
      %v4530 = vadd.f32 %v4305, %v4529
      %v4531 = vpop.f32.mrb[0].mxu0
      %4532 = vmatprep.mubr.f32.mxu0 0.0
      %4533 = vmatmul.mubr.f32.gmra.mrb[0].mxu0 %v1071
      %v4534 = vpop.f32.mrb[0].mxu0
      %v4535 = vadd.f32 %v4310, %v4534
      %v4536 = vpop.f32.mrb[0].mxu0
      %4537 = vmatprep.mubr.f32.mxu0 0.0
      %4538 = vmatmul.mubr.f32.gmra.mrb[0].mxu0 %v1072
      %v4539 = vpop.f32.mrb[0].mxu0
      %v4540 = vadd.f32 %v4315, %v4539
      %v4541 = vpop.f32.mrb[0].mxu0
      %4542 = vmatprep.mubr.f32.mxu0 0.0
      %4543 = vmatmul.mubr.f32.gmra.mrb[0].mxu0 %v1073
      %v4544 = vpop.f32.mrb[0].mxu0
      %v4545 = vadd.f32 %v4320, %v4544
      %v4546 = vpop.f32.mrb[0].mxu0
      %4547 = vmatprep.mubr.f32.mxu0 0.0
      %4548 = vmatmul.mubr.f32.gmra.mrb[0].mxu0 %v1074
      %v4549 = vpop.f32.mrb[0].mxu0
      %v4550 = vadd.f32 %v4325, %v4549
      %v4551 = vpop.f32.mrb[0].mxu0
      %4552 = vmatprep.mubr.f32.mxu0 0.0
      %4553 = vmatmul.mubr.f32.gmra.mrb[0].mxu0 %v1075
      %v4554 = vpop.f32.mrb[0].mxu0
      %v4555 = vadd.f32 %v4330, %v4554
      %v4556 = vpop.f32.mrb[0].mxu0
      %4557 = vmatprep.mubr.f32.mxu0 0.0
      %4558 = vmatmul.mubr.f32.gmra.mrb[0].mxu0 %v1076
      %v4559 = vpop.f32.mrb[0].mxu0
      %v4560 = vadd.f32 %v4335, %v4559
      %v4561 = vpop.f32.mrb[0].mxu0
      %4562 = vmatprep.mubr.f32.mxu0 0.0
      %4563 = vmatmul.mubr.f32.gmra.mrb[0].mxu0 %v1077
      %v4564 = vpop.f32.mrb[0].mxu0
      %v4565 = vadd.f32 %v4340, %v4564
      %v4566 = vpop.f32.mrb[0].mxu0
      %4567 = vmatprep.mubr.f32.mxu0 0.0
      %4568 = vmatmul.mubr.f32.gmra.mrb[0].mxu0 %v1078
      %v4569 = vpop.f32.mrb[0].mxu0
      %v4570 = vadd.f32 %v4345, %v4569
      %v4571 = vpop.f32.mrb[0].mxu0
      %4572 = vmatprep.mubr.f32.mxu0 0.0
      %4573 = vmatmul.mubr.f32.gmra.mrb[0].mxu0 %v1079
      %v4574 = vpop.f32.mrb[0].mxu0
      %v4575 = vadd.f32 %v4350, %v4574
      %v4576 = vpop.f32.mrb[0].mxu0
      %4577 = vmatprep.mubr.f32.mxu0 0.0
      %4578 = vmatmul.mubr.f32.gmra.mrb[0].mxu0 %v1080
      %v4579 = vpop.f32.mrb[0].mxu0
      %v4580 = vadd.f32 %v4355, %v4579
      %v4581 = vpop.f32.mrb[0].mxu0
      %4582 = vmatprep.mubr.f32.mxu0 0.0
      %4583 = vmatmul.mubr.f32.gmra.mrb[0].mxu0 %v1081
      %v4584 = vpop.f32.mrb[0].mxu0
      %v4585 = vadd.f32 %v4360, %v4584
      %v4586 = vpop.f32.mrb[0].mxu0
      %4587 = vmatprep.mubr.f32.mxu0 0.0
      %4588 = vmatmul.mubr.f32.gmra.mrb[0].mxu0 %v1082
      %v4589 = vpop.f32.mrb[0].mxu0
      %v4590 = vadd.f32 %v4365, %v4589
      %v4591 = vpop.f32.mrb[0].mxu0
      %4592 = vmatprep.mubr.f32.mxu0 0.0
      %4593 = vmatmul.mubr.f32.gmra.mrb[0].mxu0 %v1083
      %v4594 = vpop.f32.mrb[0].mxu0
      %v4595 = vadd.f32 %v4370, %v4594
      %v4596 = vpop.f32.mrb[0].mxu0
      %4597 = vmatprep.mubr.f32.mxu0 0.0
      %4598 = vmatmul.mubr.f32.gmra.mrb[0].mxu0 %v1084
      %v4599 = vpop.f32.mrb[0].mxu0
      %v4600 = vadd.f32 %v4375, %v4599
      %v4601 = vpop.f32.mrb[0].mxu0
      %4602 = vmatprep.mubr.f32.mxu0 0.0
      %4603 = vmatmul.mubr.f32.gmra.mrb[0].mxu0 %v1085
      %v4604 = vpop.f32.mrb[0].mxu0
      %v4605 = vadd.f32 %v4380, %v4604
      %v4606 = vpop.f32.mrb[0].mxu0
      %4607 = vmatprep.mubr.f32.mxu0 0.0
      %4608 = vmatmul.mubr.f32.gmra.mrb[0].mxu0 %v1086
      %v4609 = vpop.f32.mrb[0].mxu0
      %v4610 = vadd.f32 %v4385, %v4609
      %v4611 = vpop.f32.mrb[0].mxu0
      %4612 = vmatprep.mubr.f32.mxu0 0.0
      %4613 = vmatmul.mubr.f32.gmra.mrb[0].mxu0 %v1087
      %v4614 = vpop.f32.mrb[0].mxu0
      %v4615 = vadd.f32 %v4390, %v4614
      %v4616 = vpop.f32.mrb[0].mxu0
      %4617 = vmatprep.mubr.f32.mxu0 0.0
      %4618 = vmatmul.mubr.f32.gmra.mrb[0].mxu0 %v1088
      %v4619 = vpop.f32.mrb[0].mxu0
      %v4620 = vadd.f32 %v4395, %v4619
      %v4621 = vpop.f32.mrb[0].mxu0
      %4622 = vmatprep.mubr.f32.mxu0 0.0
      %4623 = vmatmul.mubr.f32.gmra.mrb[0].mxu0 %v1089
      %v4624 = vpop.f32.mrb[0].mxu0
      %v4625 = vadd.f32 %v4400, %v4624
      %v4626 = vpop.f32.mrb[0].mxu0
      %4627 = vmatprep.mubr.f32.mxu0 0.0
      %4628 = vmatmul.mubr.f32.gmra.mrb[0].mxu0 %v1090
      %v4629 = vpop.f32.mrb[0].mxu0
      %v4630 = vadd.f32 %v4405, %v4629
      %v4631 = vpop.f32.mrb[0].mxu0
      %4632 = vmatprep.mubr.f32.mxu0 0.0
      %4633 = vmatmul.mubr.f32.gmra.mrb[0].mxu0 %v1091
      %v4634 = vpop.f32.mrb[0].mxu0
      %v4635 = vadd.f32 %v4410, %v4634
      %v4636 = vpop.f32.mrb[0].mxu0
      %4637 = vmatprep.mubr.f32.mxu0 0.0
      %4638 = vmatmul.mubr.f32.gmra.mrb[0].mxu0 %v1092
      %v4639 = vpop.f32.mrb[0].mxu0
      %v4640 = vadd.f32 %v4415, %v4639
      %v4641 = vpop.f32.mrb[0].mxu0
      %4642 = vmatprep.mubr.f32.mxu0 0.0
      %4643 = vmatmul.mubr.f32.gmra.mrb[0].mxu0 %v1093
      %v4644 = vpop.f32.mrb[0].mxu0
      %v4645 = vadd.f32 %v4420, %v4644
      %v4646 = vpop.f32.mrb[0].mxu0
      %4647 = vmatprep.mubr.f32.mxu0 0.0
      %4648 = vmatmul.mubr.f32.gmra.mrb[0].mxu0 %v1094
      %v4649 = vpop.f32.mrb[0].mxu0
      %v4650 = vadd.f32 %v4425, %v4649
      %v4651 = vpop.f32.mrb[0].mxu0
      %4652 = vmatprep.mubr.f32.mxu0 0.0
      %4653 = vmatmul.mubr.f32.gmra.mrb[0].mxu0 %v1095
      %v4654 = vpop.f32.mrb[0].mxu0
      %v4655 = vadd.f32 %v4430, %v4654
      %v4656 = vpop.f32.mrb[0].mxu0
      %4657 = vmatprep.mubr.f32.mxu0 0.0
      %4658 = vmatmul.mubr.f32.gmra.mrb[0].mxu0 %v1096
      %v4659 = vpop.f32.mrb[0].mxu0
      %v4660 = vadd.f32 %v4435, %v4659
      %v4661 = vpop.f32.mrb[0].mxu0
      %4662 = vmatprep.mubr.f32.mxu0 0.0
      %4663 = vmatmul.mubr.f32.gmra.mrb[0].mxu0 %v1097
      %v4664 = vpop.f32.mrb[0].mxu0
      %v4665 = vadd.f32 %v4440, %v4664
      %v4666 = vpop.f32.mrb[0].mxu0
      %4667 = vmatprep.mubr.f32.mxu0 0.0
      %4668 = vmatmul.mubr.f32.gmra.mrb[0].mxu0 %v1098
      %v4669 = vpop.f32.mrb[0].mxu0
      %v4670 = vadd.f32 %v4445, %v4669
      %v4671 = vpop.f32.mrb[0].mxu0
      %4672 = vmatprep.mubr.f32.mxu0 0.0
      %4673 = vmatmul.mubr.f32.gmra.mrb[0].mxu0 %v1099
      %v4674 = vpop.f32.mrb[0].mxu0
      %v4675 = vadd.f32 %v4450, %v4674
      %v4676 = vpop.f32.mrb[0].mxu0
      %4677 = vmatprep.mubr.f32.mxu0 0.0
      %4678 = vmatmul.mubr.f32.gmra.mrb[0].mxu0 %v1100
      %v4679 = vpop.f32.mrb[0].mxu0
      %v4680 = vadd.f32 %v4455, %v4679
      %v4681 = vpop.f32.mrb[0].mxu0
      %4682 = vdwg.mxu0
      %4683 = vst [vmem:[%s217] sm:$0xff] %v4525
      %4684 = vst [vmem:[%s217 + $0x8] sm:$0xff] %v4530
      %4685 = vst [vmem:[%s217 + $0x10] sm:$0xff] %v4535
      %4686 = vst [vmem:[%s217 + $0x18] sm:$0xff] %v4540
      %4687 = vst [vmem:[%s217 + $0x20] sm:$0xff] %v4545
      %4688 = vst [vmem:[%s217 + $0x28] sm:$0xff] %v4550
      %4689 = vst [vmem:[%s217 + $0x30] sm:$0xff] %v4555
      %4690 = vst [vmem:[%s217 + $0x38] sm:$0xff] %v4560
      %4691 = vst [vmem:[%s217 + $0x40] sm:$0xff] %v4565
      %4692 = vst [vmem:[%s217 + $0x48] sm:$0xff] %v4570
      %4693 = vst [vmem:[%s217 + $0x50] sm:$0xff] %v4575
      %4694 = vst [vmem:[%s217 + $0x58] sm:$0xff] %v4580
      %4695 = vst [vmem:[%s217 + $0x60] sm:$0xff] %v4585
      %4696 = vst [vmem:[%s217 + $0x68] sm:$0xff] %v4590
      %4697 = vst [vmem:[%s217 + $0x70] sm:$0xff] %v4595
      %4698 = vst [vmem:[%s217 + $0x78] sm:$0xff] %v4600
      %4699 = vst [vmem:[%s217 + $0x80] sm:$0xff] %v4605
      %4700 = vst [vmem:[%s217 + $0x88] sm:$0xff] %v4610
      %4701 = vst [vmem:[%s217 + $0x90] sm:$0xff] %v4615
      %4702 = vst [vmem:[%s217 + $0x98] sm:$0xff] %v4620
      %4703 = vst [vmem:[%s217 + $0xa0] sm:$0xff] %v4625
      %4704 = vst [vmem:[%s217 + $0xa8] sm:$0xff] %v4630
      %4705 = vst [vmem:[%s217 + $0xb0] sm:$0xff] %v4635
      %4706 = vst [vmem:[%s217 + $0xb8] sm:$0xff] %v4640
      %4707 = vst [vmem:[%s217 + $0xc0] sm:$0xff] %v4645
      %4708 = vst [vmem:[%s217 + $0xc8] sm:$0xff] %v4650
      %4709 = vst [vmem:[%s217 + $0xd0] sm:$0xff] %v4655
      %4710 = vst [vmem:[%s217 + $0xd8] sm:$0xff] %v4660
      %4711 = vst [vmem:[%s217 + $0xe0] sm:$0xff] %v4665
      %4712 = vst [vmem:[%s217 + $0xe8] sm:$0xff] %v4670
      %4713 = vst [vmem:[%s217 + $0xf0] sm:$0xff] %v4675
      %4714 = vst [vmem:[%s217 + $0xf8] sm:$0xff] %v4680
      %v4715 = vadd.f32 %v4525, %v4530
      %v4716 = vadd.f32 %v4715, %v4535
      %v4717 = vadd.f32 %v4716, %v4540
      %v4718 = vadd.f32 %v4717, %v4545
      %v4719 = vadd.f32 %v4718, %v4550
      %v4720 = vadd.f32 %v4719, %v4555
      %v4721 = vadd.f32 %v4720, %v4560
      %v4722 = vadd.f32 %v4721, %v4565
      %v4723 = vadd.f32 %v4722, %v4570
      %v4724 = vadd.f32 %v4723, %v4575
      %v4725 = vadd.f32 %v4724, %v4580
      %v4726 = vadd.f32 %v4725, %v4585
      %v4727 = vadd.f32 %v4726, %v4590
      %v4728 = vadd.f32 %v4727, %v4595
      %v4729 = vadd.f32 %v4728, %v4600
      %v4730 = vadd.f32 %v4729, %v4605
      %v4731 = vadd.f32 %v4730, %v4610
      %v4732 = vadd.f32 %v4731, %v4615
      %v4733 = vadd.f32 %v4732, %v4620
      %v4734 = vadd.f32 %v4733, %v4625
      %v4735 = vadd.f32 %v4734, %v4630
      %v4736 = vadd.f32 %v4735, %v4635
      %v4737 = vadd.f32 %v4736, %v4640
      %v4738 = vadd.f32 %v4737, %v4645
      %v4739 = vadd.f32 %v4738, %v4650
      %v4740 = vadd.f32 %v4739, %v4655
      %v4741 = vadd.f32 %v4740, %v4660
      %v4742 = vadd.f32 %v4741, %v4665
      %v4743 = vadd.f32 %v4742, %v4670
      %v4744 = vadd.f32 %v4743, %v4675
      %v4745 = vadd.f32 %v4744, %v4680
      %v4746 = vrot.slane %v4745, 4
      %v4747 = vadd.f32 %v4745, %v4746
      %v4748 = vrot.slane %v4747, 2
      %v4749 = vadd.f32 %v4747, %v4748
      %v4750 = vrot.slane %v4749, 1
      %v4751 = vadd.f32 %v4749, %v4750
      %v4752 = vmul.f32 %v4751, 0.00390625
      %v4753 = vsub.f32 %v4525, %v4752
      %v4754 = vsub.f32 %v4530, %v4752
      %v4755 = vsub.f32 %v4535, %v4752
      %v4756 = vsub.f32 %v4540, %v4752
      %v4757 = vsub.f32 %v4545, %v4752
      %v4758 = vsub.f32 %v4550, %v4752
      %v4759 = vsub.f32 %v4555, %v4752
      %v4760 = vsub.f32 %v4560, %v4752
      %v4761 = vsub.f32 %v4565, %v4752
      %v4762 = vsub.f32 %v4570, %v4752
      %v4763 = vsub.f32 %v4575, %v4752
      %v4764 = vsub.f32 %v4580, %v4752
      %v4765 = vsub.f32 %v4585, %v4752
      %v4766 = vsub.f32 %v4590, %v4752
      %v4767 = vsub.f32 %v4595, %v4752
      %v4768 = vsub.f32 %v4600, %v4752
      %v4769 = vsub.f32 %v4605, %v4752
      %v4770 = vsub.f32 %v4610, %v4752
      %v4771 = vsub.f32 %v4615, %v4752
      %v4772 = vsub.f32 %v4620, %v4752
      %v4773 = vsub.f32 %v4625, %v4752
      %v4774 = vsub.f32 %v4630, %v4752
      %v4775 = vsub.f32 %v4635, %v4752
      %v4776 = vsub.f32 %v4640, %v4752
      %v4777 = vsub.f32 %v4645, %v4752
      %v4778 = vsub.f32 %v4650, %v4752
      %v4779 = vsub.f32 %v4655, %v4752
      %v4780 = vsub.f32 %v4660, %v4752
      %v4781 = vsub.f32 %v4665, %v4752
      %v4782 = vsub.f32 %v4670, %v4752
      %v4783 = vsub.f32 %v4675, %v4752
      %v4784 = vsub.f32 %v4680, %v4752
      %4785 = vst [vmem:[%s226] sm:$0x1] %v4751
      %v4786 = vmul.f32 %v4753, %v4753
      %v4787 = vmul.f32 %v4754, %v4754
      %v4788 = vmul.f32 %v4755, %v4755
      %v4789 = vmul.f32 %v4756, %v4756
      %v4790 = vmul.f32 %v4757, %v4757
      %v4791 = vmul.f32 %v4758, %v4758
      %v4792 = vmul.f32 %v4759, %v4759
      %v4793 = vmul.f32 %v4760, %v4760
      %v4794 = vmul.f32 %v4761, %v4761
      %v4795 = vmul.f32 %v4762, %v4762
      %v4796 = vmul.f32 %v4763, %v4763
      %v4797 = vmul.f32 %v4764, %v4764
      %v4798 = vmul.f32 %v4765, %v4765
      %v4799 = vmul.f32 %v4766, %v4766
      %v4800 = vmul.f32 %v4767, %v4767
      %v4801 = vmul.f32 %v4768, %v4768
      %v4802 = vmul.f32 %v4769, %v4769
      %v4803 = vmul.f32 %v4770, %v4770
      %v4804 = vmul.f32 %v4771, %v4771
      %v4805 = vmul.f32 %v4772, %v4772
      %v4806 = vmul.f32 %v4773, %v4773
      %v4807 = vmul.f32 %v4774, %v4774
      %v4808 = vmul.f32 %v4775, %v4775
      %v4809 = vmul.f32 %v4776, %v4776
      %v4810 = vmul.f32 %v4777, %v4777
      %v4811 = vmul.f32 %v4778, %v4778
      %v4812 = vmul.f32 %v4779, %v4779
      %v4813 = vmul.f32 %v4780, %v4780
      %v4814 = vmul.f32 %v4781, %v4781
      %v4815 = vmul.f32 %v4782, %v4782
      %v4816 = vmul.f32 %v4783, %v4783
      %v4817 = vmul.f32 %v4784, %v4784
      %v4818 = vadd.f32 %v4786, %v4787
      %v4819 = vadd.f32 %v4818, %v4788
      %v4820 = vadd.f32 %v4819, %v4789
      %v4821 = vadd.f32 %v4820, %v4790
      %v4822 = vadd.f32 %v4821, %v4791
      %v4823 = vadd.f32 %v4822, %v4792
      %v4824 = vadd.f32 %v4823, %v4793
      %v4825 = vadd.f32 %v4824, %v4794
      %v4826 = vadd.f32 %v4825, %v4795
      %v4827 = vadd.f32 %v4826, %v4796
      %v4828 = vadd.f32 %v4827, %v4797
      %v4829 = vadd.f32 %v4828, %v4798
      %v4830 = vadd.f32 %v4829, %v4799
      %v4831 = vadd.f32 %v4830, %v4800
      %v4832 = vadd.f32 %v4831, %v4801
      %v4833 = vadd.f32 %v4832, %v4802
      %v4834 = vadd.f32 %v4833, %v4803
      %v4835 = vadd.f32 %v4834, %v4804
      %v4836 = vadd.f32 %v4835, %v4805
      %v4837 = vadd.f32 %v4836, %v4806
      %v4838 = vadd.f32 %v4837, %v4807
      %v4839 = vadd.f32 %v4838, %v4808
      %v4840 = vadd.f32 %v4839, %v4809
      %v4841 = vadd.f32 %v4840, %v4810
      %v4842 = vadd.f32 %v4841, %v4811
      %v4843 = vadd.f32 %v4842, %v4812
      %v4844 = vadd.f32 %v4843, %v4813
      %v4845 = vadd.f32 %v4844, %v4814
      %v4846 = vadd.f32 %v4845, %v4815
      %v4847 = vadd.f32 %v4846, %v4816
      %v4848 = vadd.f32 %v4847, %v4817
      %v4849 = vrot.slane %v4848, 4
      %v4850 = vadd.f32 %v4848, %v4849
      %v4851 = vrot.slane %v4850, 2
      %v4852 = vadd.f32 %v4850, %v4851
      %v4853 = vrot.slane %v4852, 1
      %v4854 = vadd.f32 %v4852, %v4853
      %4855 = vst [vmem:[%s226 + $0x1] sm:$0x1] %v4854
      %s4856 = smul.u32 %s19, 2
      %s4857 = sadd.s32 %s4856, %s20
      %s4858 = smul.u32 32, %s4857
      %p4859 = scmp.lt.s32.totalorder %s4858, 127
      %s4860 = scalar_select %p4859, %s4858, 127
      %s4861 = smul.addr %s4860, 8
      %s4862 = scalar_lea.vmem %s2, %s4861
      %s4863 = smul.u32 %s19, 2
      %s4864 = sadd.s32 %s4863, %s20
      %p4865 = scmp.lt.s32.totalorder %s4864, 3
      %s4866 = scalar_select %p4865, %s4864, 3
      %s4867 = smul.addr %s4866, 2
      %s4868 = scalar_lea.vmem %s3, %s4867
      // Predicated region
      $region29: #{separable_conv_block_3d.2} parent=27 // pred_check
        %p4869 = pneg %p98
      $region30: #{separable_conv_block_3d.2} parent=27 // pred_check_branch
        %4871 = sbr.rel (%p4869) target = $region32
      $region31: #{separable_conv_block_3d.2} parent=27 // pred_region
        %s4872 = smul.u32 %s19, 2
        %s4873 = sadd.s32 %s4872, %s20
        %s4874 = smul.u32 32, %s4873
      $region32: #{separable_conv_block_3d.2} parent=27 // pred_fallthru
        _
      // Predicated region
      $region33: #{separable_conv_block_3d.2} parent=27 // pred_check
        %p4875 = pneg %p128
      $region34: #{separable_conv_block_3d.2} parent=27 // pred_check_branch
        %4877 = sbr.rel (%p4875) target = $region36
      $region35: #{separable_conv_block_3d.2} parent=27 // pred_region
        %s4878 = smul.u32 %s19, 2
        %s4879 = sadd.s32 %s4878, %s20
      $region36: #{separable_conv_block_3d.2} parent=27 // pred_fallthru
        _
    $region28: #{separable_conv_block_3d.2} parent=5 // pred_fallthru
      _
    %p4880 = scmp.le.s32.totalorder 2, %s10
    // Predicated region
    $region37: #{separable_conv_block_3d.2} parent=5 // pred_check
      %p4881 = pneg %p4880
    $region38: #{separable_conv_block_3d.2} parent=5 // pred_check_branch
      %4883 = sbr.rel (%p4881) target = $region40
    $region39: #{separable_conv_block_3d.2} parent=5 // pred_region
      %s4884 = ssub.s32 %s10, 2
      // Predicated region
      $region41: #{separable_conv_block_3d.2} parent=39 // pred_check
        %p4885 = pneg %p104
      $region42: #{separable_conv_block_3d.2} parent=39 // pred_check_branch
        %4887 = sbr.rel (%p4885) target = $region44
      $region43: #{separable_conv_block_3d.2} parent=39 // pred_region
        %s4888 = smul.u32 %s21, 2
        %s4889 = sadd.s32 %s4888, %s22
        %s4890 = smul.u32 32, %s4889
        %p4891 = scmp.lt.s32.totalorder %s4890, 127
        %s4892 = scalar_select %p4891, %s4890, 127
        %s4893 = smul.addr %s4892, 8
        %s4894 = scalar_lea.vmem %s2, %s4893
      $region44: #{separable_conv_block_3d.2} parent=39 // pred_fallthru
        _
      // Predicated region
      $region45: #{separable_conv_block_3d.2} parent=39 // pred_check
        %p4895 = pneg %p134
      $region46: #{separable_conv_block_3d.2} parent=39 // pred_check_branch
        %4897 = sbr.rel (%p4895) target = $region48
      $region47: #{separable_conv_block_3d.2} parent=39 // pred_region
        %s4898 = smul.u32 %s21, 2
        %s4899 = sadd.s32 %s4898, %s22
        %p4900 = scmp.lt.s32.totalorder %s4899, 3
        %s4901 = scalar_select %p4900, %s4899, 3
        %s4902 = smul.addr %s4901, 2
        %s4903 = scalar_lea.vmem %s3, %s4902
      $region48: #{separable_conv_block_3d.2} parent=39 // pred_fallthru
        _
    $region40: #{separable_conv_block_3d.2} parent=5 // pred_fallthru
      _
  $region6: #{separable_conv_block_3d.2} parent=0 // loop_footer
    %s14 = sadd.s32 1, %s10
  $region7: #{separable_conv_block_3d.2} parent=0 // loop_footer_branch
    %9 = sbr.rel target = $region3
  $region8: #{separable_conv_block_3d.2} parent=0 // loop_exit
    _

</llo_original>
